<compile_context>
chip_gen: v5e
topology: v5e:2x2
jax: 0.10.0
libtpu: 0.0.40
codegen_flags: <defaults>
</compile_context>

<pallas_src>
import jax
import jax.numpy as jnp
from jax.experimental import pallas as pl
from jax.experimental.pallas import tpu as pltpu

OUT_DIM = 18    # TODO(synk): original module reads self.out_dim but never sets it; 18 = last Linear width.
EPSILON = 0.1


# ---------------------------------------------------------------------------
# Kernel 1: fused conv stack (conv1 8x8/s4 -> conv2 4x4/s2 -> conv3 3x3/s1, each + ReLU)
# Input is space-to-depth'd + W-parity-split: x[b, r*21 + h, q, m] = xs[b, h, 2q+r, m]
# with xs the (21,21,64) space-to-depth image, m = dh*16 + dw*4 + cin.
# ---------------------------------------------------------------------------
def _conv_stack_kernel(x_ref, w1_ref, b1_ref, w2_ref, b2_ref, w3_ref, b3_ref,
                       out_ref, x1_ref, x2_ref):
    # ---- conv1: 2x2 stride-1 over 64 ch -> (20,20,32), stored W-parity-split in x1_ref
    #      x1_ref[r*20 + h, w//2, c] = relu(conv1)[h, w, c] with r = w % 2
    def conv1_row(oh, carry):
        for rw in range(2):                       # output-column parity
            acc = jnp.zeros((10, 32), jnp.float32)
            for kh in range(2):
                for kw in range(2):
                    r = (rw + kw) % 2             # input-column parity plane
                    s = (rw + kw) // 2            # offset within that plane
                    lhs = x_ref[0, r * 21 + oh + kh, pl.ds(s, 10), :]   # (10, 64)
                    acc = acc + jnp.dot(lhs, w1_ref[kh * 2 + kw],
                                        preferred_element_type=jnp.float32)
            x1_ref[rw * 20 + oh, :, :] = jnp.maximum(acc + b1_ref[...], 0.0)
        return carry

    jax.lax.fori_loop(0, 20, conv1_row, None)

    # ---- conv2: 4x4 stride-2 over 32 ch -> (9,9,64); stride-2 is unit-stride thanks to
    #      the parity-split layout of x1_ref.
    def conv2_row(oh, carry):
        acc = jnp.zeros((9, 64), jnp.float32)
        for kh in range(4):
            for kw in range(4):
                lhs = x1_ref[(kw % 2) * 20 + 2 * oh + kh, pl.ds(kw // 2, 9), :]  # (9, 32)
                acc = acc + jnp.dot(lhs, w2_ref[kh * 4 + kw],
                                    preferred_element_type=jnp.float32)
        x2_ref[oh, :, :] = jnp.maximum(acc + b2_ref[...], 0.0)
        return carry

    jax.lax.fori_loop(0, 9, conv2_row, None)

    # ---- conv3: 3x3 stride-1 over 64 ch -> (7,7,64), written straight to the output block
    def conv3_row(oh, carry):
        acc = jnp.zeros((7, 64), jnp.float32)
        for kh in range(3):
            for kw in range(3):
                lhs = x2_ref[oh + kh, pl.ds(kw, 7), :]                  # (7, 64)
                acc = acc + jnp.dot(lhs, w3_ref[kh * 3 + kw],
                                    preferred_element_type=jnp.float32)
        out_ref[0, oh, :, :] = jnp.maximum(acc + b3_ref[...], 0.0)
        return carry

    jax.lax.fori_loop(0, 7, conv3_row, None)


def _conv_stack_call(x_par, params):
    B = x_par.shape[0]
    return pl.pallas_call(
        _conv_stack_kernel,
        out_shape=jax.ShapeDtypeStruct((B, 7, 7, 64), jnp.float32),
        grid=(B,),
        in_specs=[
            pl.BlockSpec((1, 42, 11, 64), lambda b: (b, 0, 0, 0)),   # parity-split s2d image
            pl.BlockSpec((4, 64, 32), lambda b: (0, 0, 0)),          # conv1 taps (resident)
            pl.BlockSpec((1, 32), lambda b: (0, 0)),
            pl.BlockSpec((16, 32, 64), lambda b: (0, 0, 0)),         # conv2 taps (resident)
            pl.BlockSpec((1, 64), lambda b: (0, 0)),
            pl.BlockSpec((9, 64, 64), lambda b: (0, 0, 0)),          # conv3 taps (resident)
            pl.BlockSpec((1, 64), lambda b: (0, 0)),
        ],
        out_specs=pl.BlockSpec((1, 7, 7, 64), lambda b: (b, 0, 0, 0)),
        scratch_shapes=[
            pltpu.VMEM((40, 10, 32), jnp.float32),   # conv1 out, W-parity split: [r*20+h, w//2, c]
            pltpu.VMEM((9, 9, 64), jnp.float32),     # conv2 out
        ],
        compiler_params=pltpu.CompilerParams(dimension_semantics=("parallel",)),
    )(x_par, params["w1"], params["b1"], params["w2"], params["b2"],
      params["w3"], params["b3"])


# ---------------------------------------------------------------------------
# Kernel 2: fc1 + ReLU + fc2 + argmax (weights resident in VMEM across grid steps)
# ---------------------------------------------------------------------------
def _fc_head_kernel(x_ref, w1_ref, b1_ref, w2_ref, b2_ref, act_ref, q_ref):
    h = jnp.dot(x_ref[...], w1_ref[...], preferred_element_type=jnp.float32)
    h = jnp.maximum(h + b1_ref[...], 0.0)
    q = jnp.dot(h, w2_ref[...], preferred_element_type=jnp.float32) + b2_ref[...]
    q_ref[...] = q
    n = q.shape[1]
    idx = jax.lax.broadcasted_iota(jnp.int32, q.shape, 1)
    cand = jnp.where(q == jnp.max(q, axis=1, keepdims=True), idx, n)   # first-max tie-break
    act_ref[...] = jnp.min(cand, axis=1, keepdims=True).astype(jnp.int32)


def _fc_head_call(flat, params):
    B, K = flat.shape
    N1 = params["fc1_w"].shape[1]
    N2 = params["fc2_w"].shape[1]
    if B <= 256:
        block_b, Bp = B, B                      # single block, no padding at small batch
    else:
        block_b = 256
        Bp = pl.cdiv(B, block_b) * block_b
        if Bp != B:
            flat = jnp.pad(flat, ((0, Bp - B), (0, 0)))
    acts, qvals = pl.pallas_call(
        _fc_head_kernel,
        out_shape=(jax.ShapeDtypeStruct((Bp, 1), jnp.int32),
                   jax.ShapeDtypeStruct((Bp, N2), jnp.float32)),
        grid=(Bp // block_b,),
        in_specs=[
            pl.BlockSpec((block_b, K), lambda i: (i, 0)),
            pl.BlockSpec((K, N1), lambda i: (0, 0)),     # fc1 weight resident in VMEM
            pl.BlockSpec((1, N1), lambda i: (0, 0)),
            pl.BlockSpec((N1, N2), lambda i: (0, 0)),    # fc2 weight resident in VMEM
            pl.BlockSpec((1, N2), lambda i: (0, 0)),
        ],
        out_specs=(pl.BlockSpec((block_b, 1), lambda i: (i, 0)),
                   pl.BlockSpec((block_b, N2), lambda i: (i, 0))),
        compiler_params=pltpu.CompilerParams(
            dimension_semantics=("parallel",),
            vmem_limit_bytes=32 * 1024 * 1024,   # ~13-20 MiB actually used; < v7x 64 MiB physical
        ),
    )(flat, params["fc1_w"], params["fc1_b"], params["fc2_w"], params["fc2_b"])
    return acts[:B, 0], qvals[:B]


# ---------------------------------------------------------------------------
# One-time parameter preparation (PyTorch layouts -> kernel layouts)
# ---------------------------------------------------------------------------
def prep_conv1_weight(w_oihw):
    """(32,4,8,8) OIHW 8x8/stride-4 conv -> (4, 64, 32) per 2x2 space-to-depth tap."""
    o, c, _, _ = w_oihw.shape
    w = jnp.transpose(w_oihw, (2, 3, 1, 0))          # (8,8,c,o)  [kh8, kw8, c, o]
    w = w.reshape(2, 4, 2, 4, c, o)                  # [kh, dh, kw, dw, c, o]
    w = jnp.transpose(w, (0, 2, 1, 3, 4, 5))         # [kh, kw, dh, dw, c, o]
    return w.reshape(4, 16 * c, o)                   # tap = kh*2+kw, chan = dh*16+dw*4+c


def prep_conv_weight(w_oihw):
    """(O,C,K,K) OIHW -> (K*K, C, O): per-tap (Cin,Cout) matmul weights."""
    o, c, kh, kw = w_oihw.shape
    return jnp.transpose(w_oihw, (2, 3, 1, 0)).reshape(kh * kw, c, o)


def prep_fc1_weight(w_torch):
    """torch Linear(3136,512) weight (512,3136) with NCHW-flatten columns -> (3136,512)
    with rows in NHWC-flatten order, so no runtime transpose is needed before fc1."""
    w = w_torch.reshape(512, 64, 7, 7)               # (n, c, h, w)
    w = jnp.transpose(w, (2, 3, 1, 0))               # (h, w, c, n)
    return w.reshape(7 * 7 * 64, 512)


def prepare_params(raw):
    return {
        "w1": prep_conv1_weight(raw["c1_w"]), "b1": raw["c1_b"].reshape(1, 32),
        "w2": prep_conv_weight(raw["c2_w"]), "b2": raw["c2_b"].reshape(1, 64),
        "w3": prep_conv_weight(raw["c3_w"]), "b3": raw["c3_b"].reshape(1, 64),
        "fc1_w": prep_fc1_weight(raw["fc1_w"]), "fc1_b": raw["fc1_b"].reshape(1, 512),
        "fc2_w": jnp.transpose(raw["fc2_w"]), "fc2_b": raw["fc2_b"].reshape(1, OUT_DIM),
    }


def init_raw_params(key):
    """Synthetic params in PyTorch layouts (as AtariPolicy.get_params() would produce)."""
    def init(k, shape, fan_in):
        bound = 1.0 / float(fan_in) ** 0.5
        return jax.random.uniform(k, shape, jnp.float32, -bound, bound)

    ks = jax.random.split(key, 10)
    return {
        "c1_w": init(ks[0], (32, 4, 8, 8), 4 * 8 * 8),
        "c1_b": init(ks[1], (32,), 4 * 8 * 8),
        "c2_w": init(ks[2], (64, 32, 4, 4), 32 * 4 * 4),
        "c2_b": init(ks[3], (64,), 32 * 4 * 4),
        "c3_w": init(ks[4], (64, 64, 3, 3), 64 * 3 * 3),
        "c3_b": init(ks[5], (64,), 64 * 3 * 3),
        "fc1_w": init(ks[6], (512, 3136), 3136),
        "fc1_b": init(ks[7], (512,), 3136),
        "fc2_w": init(ks[8], (18, 512), 512),
        "fc2_b": init(ks[9], (18,), 512),
    }


# ---------------------------------------------------------------------------
# Forward pass
# ---------------------------------------------------------------------------
def _space_to_depth_parity(obs_nchw):
    """(B,4,84,84) NCHW -> (B, 2*21, 11, 64): space-to-depth by 4 (conv1 becomes a 2x2
    stride-1 conv over 64 channels) plus even/odd split of the new W axis (so conv2's
    stride-2 access is unit-stride in-kernel).  Row = parity*21 + h, chan = dh*16+dw*4+c."""
    B, C, H, W = obs_nchw.shape
    assert (C, H, W) == (4, 84, 84), "AtariPolicy expects (B, 4, 84, 84) observations"
    x = obs_nchw.astype(jnp.float32).reshape(B, 4, 21, 4, 21, 4)
    x = jnp.transpose(x, (0, 2, 4, 3, 5, 1)).reshape(B, 21, 21, 64)   # space-to-depth, NHWC
    x = jnp.pad(x, ((0, 0), (0, 0), (0, 1), (0, 0)))                  # W: 21 -> 22 (pad col unused)
    x = x.reshape(B, 21, 11, 2, 64)
    x = jnp.transpose(x, (0, 3, 1, 2, 4))                             # (B, 2, 21, 11, 64)
    return x.reshape(B, 42, 11, 64)


def policy_network(params, obs_nchw):
    """Returns (greedy_actions (B,), q_values (B,18), conv_features (B,7,7,64))."""
    x_par = _space_to_depth_parity(obs_nchw)
    feats = _conv_stack_call(x_par, params)                  # (B,7,7,64), Pallas kernel 1
    flat = feats.reshape(feats.shape[0], 7 * 7 * 64)         # free reshape (NHWC-flatten order)
    greedy, qvals = _fc_head_call(flat, params)              # Pallas kernel 2
    return greedy, qvals, feats


def atari_policy_forward(params, obs_nchw, rng_key):
    greedy, _, _ = policy_network(params, obs_nchw)
    B = obs_nchw.shape[0]
    # TODO(synk): epsilon-greedy randomness uses jax.random; not bit-exact to torch.rand/randint.
    k1, k2 = jax.random.split(rng_key)
    rand_vals = jax.random.randint(k1, (B,), 0, OUT_DIM, dtype=jnp.int32)
    pick_rand = jax.random.uniform(k2, (B,)) < EPSILON
    return jnp.where(pick_rand, rand_vals, greedy)


# ---------------------------------------------------------------------------
# Pure-JAX reference (mirrors the PyTorch module) for in-script verification
# ---------------------------------------------------------------------------
def _reference_forward(raw, obs):
    dn = ("NCHW", "OIHW", "NCHW")
    prec = jax.lax.Precision.HIGHEST
    x = obs.astype(jnp.float32)
    x = jax.lax.conv_general_dilated(x, raw["c1_w"], (4, 4), "VALID",
                                     dimension_numbers=dn, precision=prec)
    x = jax.nn.relu(x + raw["c1_b"][None, :, None, None])
    x = jax.lax.conv_general_dilated(x, raw["c2_w"], (2, 2), "VALID",
                                     dimension_numbers=dn, precision=prec)
    x = jax.nn.relu(x + raw["c2_b"][None, :, None, None])
    x = jax.lax.conv_general_dilated(x, raw["c3_w"], (1, 1), "VALID",
                                     dimension_numbers=dn, precision=prec)
    x = jax.nn.relu(x + raw["c3_b"][None, :, None, None])            # (B,64,7,7)
    feats_nhwc = jnp.transpose(x, (0, 2, 3, 1))                      # (B,7,7,64)
    flat = x.reshape(x.shape[0], -1)                                 # NCHW flatten (torch intent)
    h = jax.nn.relu(jnp.dot(flat, raw["fc1_w"].T, precision=prec) + raw["fc1_b"])
    q = jnp.dot(h, raw["fc2_w"].T, precision=prec) + raw["fc2_b"]
    return jnp.argmax(q, axis=1).astype(jnp.int32), q, feats_nhwc


if __name__ == "__main__":
    key = jax.random.PRNGKey(0)
    pkey, okey, akey = jax.random.split(key, 3)
    raw = init_raw_params(pkey)
    params = prepare_params(raw)            # one-time weight permutation, no runtime transposes
    # batch=2; spatial must be 84x84 so the conv stack yields 7*7*64 = 3136 features.
    obs = jax.random.uniform(okey, (2, 4, 84, 84), jnp.float32)

    greedy, qvals, feats = jax.jit(policy_network)(params, obs)
    jax.block_until_ready((greedy, qvals, feats))

    # correctness check against a pure-JAX reference of the PyTorch module
    ref_greedy, ref_q, ref_feats = jax.jit(_reference_forward)(raw, obs)
    assert jnp.allclose(feats, ref_feats, rtol=5e-2, atol=5e-3), "conv stack mismatch vs reference"
    assert jnp.allclose(qvals, ref_q, rtol=5e-2, atol=5e-3), "fc head mismatch vs reference"
    assert jnp.array_equal(greedy, jnp.argmax(qvals, axis=1).astype(jnp.int32))

    actions = jax.jit(atari_policy_forward)(params, obs, akey)
    actions = jax.block_until_ready(actions)
    assert actions.shape == (2,) and actions.dtype == jnp.int32
    assert bool(jnp.all((actions >= 0) & (actions < OUT_DIM)))
    print("KERNEL_OK")
</pallas_src>

<mosaic_0001>
module attributes {stable_mosaic.version = 11 : i64} {
  func.func @_conv_stack_kernel(%arg0: i32, %arg1: memref<1x42x11x64xf32, #tpu.memory_space<vmem>>, %arg2: memref<4x64x32xf32, #tpu.memory_space<vmem>>, %arg3: memref<1x32xf32, #tpu.memory_space<vmem>>, %arg4: memref<16x32x64xf32, #tpu.memory_space<vmem>>, %arg5: memref<1x64xf32, #tpu.memory_space<vmem>>, %arg6: memref<9x64x64xf32, #tpu.memory_space<vmem>>, %arg7: memref<1x64xf32, #tpu.memory_space<vmem>>, %arg8: memref<1x7x7x64xf32, #tpu.memory_space<vmem>>, %arg9: memref<40x10x32xf32, #tpu.memory_space<vmem>>, %arg10: memref<9x9x64xf32, #tpu.memory_space<vmem>>) attributes {dimension_semantics = [#tpu.dimension_semantics<parallel>], iteration_bounds = array<i64: 2>, scalar_prefetch = 0 : i64, scratch_operands = 2 : i64, tpu.core_type = #tpu.core_type<tc>, window_params = [{transform_indices = @transform_0, window_bounds = array<i64: 1, 42, 11, 64>}, {pipeline_mode = #tpu.pipeline_mode<synchronous>, transform_indices = @transform_1, window_bounds = array<i64: 4, 64, 32>}, {pipeline_mode = #tpu.pipeline_mode<synchronous>, transform_indices = @transform_2, window_bounds = array<i64: 1, 32>}, {pipeline_mode = #tpu.pipeline_mode<synchronous>, transform_indices = @transform_3, window_bounds = array<i64: 16, 32, 64>}, {pipeline_mode = #tpu.pipeline_mode<synchronous>, transform_indices = @transform_4, window_bounds = array<i64: 1, 64>}, {pipeline_mode = #tpu.pipeline_mode<synchronous>, transform_indices = @transform_5, window_bounds = array<i64: 9, 64, 64>}, {pipeline_mode = #tpu.pipeline_mode<synchronous>, transform_indices = @transform_6, window_bounds = array<i64: 1, 64>}, {transform_indices = @transform_7, window_bounds = array<i64: 1, 7, 7, 64>}]} {
    %c0_i32 = arith.constant 0 : i32
    %c20_i32 = arith.constant 20 : i32
    %0 = arith.addi %c0_i32, %c20_i32 : i32
    %c1_i32 = arith.constant 1 : i32
    scf.for %arg11 = %c0_i32 to %0 step %c1_i32  : i32 {
      %cst = arith.constant 0.000000e+00 : f32
      %3 = vector.broadcast %cst : f32 to vector<10x32xf32>
      %c0_i32_7 = arith.constant 0 : i32
      %4 = arith.addi %c0_i32_7, %arg11 : i32
      %c0_i32_8 = arith.constant 0 : i32
      %5 = arith.addi %4, %c0_i32_8 : i32
      %c0 = arith.constant 0 : index
      %6 = arith.index_cast %5 : i32 to index
      %c0_9 = arith.constant 0 : index
      %c0_10 = arith.constant 0 : index
      %7 = vector.load %arg1[%c0, %6, %c0_9, %c0_10] : memref<1x42x11x64xf32, #tpu.memory_space<vmem>>, vector<1x1x10x64xf32>
      %8 = vector.shape_cast %7 : vector<1x1x10x64xf32> to vector<10x64xf32>
      %c0_11 = arith.constant 0 : index
      %c0_12 = arith.constant 0 : index
      %c0_13 = arith.constant 0 : index
      %9 = vector.load %arg2[%c0_11, %c0_12, %c0_13] : memref<4x64x32xf32, #tpu.memory_space<vmem>>, vector<1x64x32xf32>
      %10 = vector.shape_cast %9 : vector<1x64x32xf32> to vector<64x32xf32>
      %cst_14 = arith.constant dense<0.000000e+00> : vector<10x32xf32>
      %11 = tpu.matmul %8, %10, %cst_14 {dimension_numbers = #tpu.dot_dimension_numbers<[1], [0], [0], [1], [0, 0, 1, 1], [], []>} : vector<10x64xf32>, vector<64x32xf32>, vector<10x32xf32> -> vector<10x32xf32>
      %12 = arith.addf %3, %11 : vector<10x32xf32>
      %c21_i32 = arith.constant 21 : i32
      %13 = arith.addi %c21_i32, %arg11 : i32
      %c0_i32_15 = arith.constant 0 : i32
      %14 = arith.addi %13, %c0_i32_15 : i32
      %c0_16 = arith.constant 0 : index
      %15 = arith.index_cast %14 : i32 to index
      %c0_17 = arith.constant 0 : index
      %c0_18 = arith.constant 0 : index
      %16 = vector.load %arg1[%c0_16, %15, %c0_17, %c0_18] : memref<1x42x11x64xf32, #tpu.memory_space<vmem>>, vector<1x1x10x64xf32>
      %17 = vector.shape_cast %16 : vector<1x1x10x64xf32> to vector<10x64xf32>
      %c1 = arith.constant 1 : index
      %c0_19 = arith.constant 0 : index
      %c0_20 = arith.constant 0 : index
      %18 = vector.load %arg2[%c1, %c0_19, %c0_20] : memref<4x64x32xf32, #tpu.memory_space<vmem>>, vector<1x64x32xf32>
      %19 = vector.shape_cast %18 : vector<1x64x32xf32> to vector<64x32xf32>
      %cst_21 = arith.constant dense<0.000000e+00> : vector<10x32xf32>
      %20 = tpu.matmul %17, %19, %cst_21 {dimension_numbers = #tpu.dot_dimension_numbers<[1], [0], [0], [1], [0, 0, 1, 1], [], []>} : vector<10x64xf32>, vector<64x32xf32>, vector<10x32xf32> -> vector<10x32xf32>
      %21 = arith.addf %12, %20 : vector<10x32xf32>
      %c0_i32_22 = arith.constant 0 : i32
      %22 = arith.addi %c0_i32_22, %arg11 : i32
      %c1_i32_23 = arith.constant 1 : i32
      %23 = arith.addi %22, %c1_i32_23 : i32
      %c0_24 = arith.constant 0 : index
      %24 = arith.index_cast %23 : i32 to index
      %c0_25 = arith.constant 0 : index
      %c0_26 = arith.constant 0 : index
      %25 = vector.load %arg1[%c0_24, %24, %c0_25, %c0_26] : memref<1x42x11x64xf32, #tpu.memory_space<vmem>>, vector<1x1x10x64xf32>
      %26 = vector.shape_cast %25 : vector<1x1x10x64xf32> to vector<10x64xf32>
      %c2 = arith.constant 2 : index
      %c0_27 = arith.constant 0 : index
      %c0_28 = arith.constant 0 : index
      %27 = vector.load %arg2[%c2, %c0_27, %c0_28] : memref<4x64x32xf32, #tpu.memory_space<vmem>>, vector<1x64x32xf32>
      %28 = vector.shape_cast %27 : vector<1x64x32xf32> to vector<64x32xf32>
      %cst_29 = arith.constant dense<0.000000e+00> : vector<10x32xf32>
      %29 = tpu.matmul %26, %28, %cst_29 {dimension_numbers = #tpu.dot_dimension_numbers<[1], [0], [0], [1], [0, 0, 1, 1], [], []>} : vector<10x64xf32>, vector<64x32xf32>, vector<10x32xf32> -> vector<10x32xf32>
      %30 = arith.addf %21, %29 : vector<10x32xf32>
      %c21_i32_30 = arith.constant 21 : i32
      %31 = arith.addi %c21_i32_30, %arg11 : i32
      %c1_i32_31 = arith.constant 1 : i32
      %32 = arith.addi %31, %c1_i32_31 : i32
      %c0_32 = arith.constant 0 : index
      %33 = arith.index_cast %32 : i32 to index
      %c0_33 = arith.constant 0 : index
      %c0_34 = arith.constant 0 : index
      %34 = vector.load %arg1[%c0_32, %33, %c0_33, %c0_34] : memref<1x42x11x64xf32, #tpu.memory_space<vmem>>, vector<1x1x10x64xf32>
      %35 = vector.shape_cast %34 : vector<1x1x10x64xf32> to vector<10x64xf32>
      %c3 = arith.constant 3 : index
      %c0_35 = arith.constant 0 : index
      %c0_36 = arith.constant 0 : index
      %36 = vector.load %arg2[%c3, %c0_35, %c0_36] : memref<4x64x32xf32, #tpu.memory_space<vmem>>, vector<1x64x32xf32>
      %37 = vector.shape_cast %36 : vector<1x64x32xf32> to vector<64x32xf32>
      %cst_37 = arith.constant dense<0.000000e+00> : vector<10x32xf32>
      %38 = tpu.matmul %35, %37, %cst_37 {dimension_numbers = #tpu.dot_dimension_numbers<[1], [0], [0], [1], [0, 0, 1, 1], [], []>} : vector<10x64xf32>, vector<64x32xf32>, vector<10x32xf32> -> vector<10x32xf32>
      %39 = arith.addf %30, %38 : vector<10x32xf32>
      %c0_38 = arith.constant 0 : index
      %c0_39 = arith.constant 0 : index
      %40 = vector.load %arg3[%c0_38, %c0_39] : memref<1x32xf32, #tpu.memory_space<vmem>>, vector<1x32xf32>
      %41 = vector.broadcast %40 : vector<1x32xf32> to vector<10x32xf32>
      %42 = arith.addf %39, %41 : vector<10x32xf32>
      %cst_40 = arith.constant 0.000000e+00 : f32
      %43 = vector.broadcast %cst_40 : f32 to vector<10x32xf32>
      %44 = arith.maximumf %42, %43 : vector<10x32xf32>
      %c0_i32_41 = arith.constant 0 : i32
      %45 = arith.addi %c0_i32_41, %arg11 : i32
      %46 = arith.index_cast %45 : i32 to index
      %c0_42 = arith.constant 0 : index
      %c0_43 = arith.constant 0 : index
      %47 = vector.load %arg9[%46, %c0_42, %c0_43] : memref<40x10x32xf32, #tpu.memory_space<vmem>>, vector<1x10x32xf32>
      %48 = vector.shape_cast %47 : vector<1x10x32xf32> to vector<10x32xf32>
      %49 = vector.shape_cast %44 : vector<10x32xf32> to vector<1x10x32xf32>
      tpu.vector_store %arg9[%46, %c0_42, %c0_43], %49 {strides = array<i32>} : memref<40x10x32xf32, #tpu.memory_space<vmem>>, vector<1x10x32xf32>,
      %cst_44 = arith.constant 0.000000e+00 : f32
      %50 = vector.broadcast %cst_44 : f32 to vector<10x32xf32>
      %c21_i32_45 = arith.constant 21 : i32
      %51 = arith.addi %c21_i32_45, %arg11 : i32
      %c0_i32_46 = arith.constant 0 : i32
      %52 = arith.addi %51, %c0_i32_46 : i32
      %c0_47 = arith.constant 0 : index
      %53 = arith.index_cast %52 : i32 to index
      %c0_48 = arith.constant 0 : index
      %c0_49 = arith.constant 0 : index
      %54 = vector.load %arg1[%c0_47, %53, %c0_48, %c0_49] : memref<1x42x11x64xf32, #tpu.memory_space<vmem>>, vector<1x1x10x64xf32>
      %55 = vector.shape_cast %54 : vector<1x1x10x64xf32> to vector<10x64xf32>
      %c0_50 = arith.constant 0 : index
      %c0_51 = arith.constant 0 : index
      %c0_52 = arith.constant 0 : index
      %56 = vector.load %arg2[%c0_50, %c0_51, %c0_52] : memref<4x64x32xf32, #tpu.memory_space<vmem>>, vector<1x64x32xf32>
      %57 = vector.shape_cast %56 : vector<1x64x32xf32> to vector<64x32xf32>
      %cst_53 = arith.constant dense<0.000000e+00> : vector<10x32xf32>
      %58 = tpu.matmul %55, %57, %cst_53 {dimension_numbers = #tpu.dot_dimension_numbers<[1], [0], [0], [1], [0, 0, 1, 1], [], []>} : vector<10x64xf32>, vector<64x32xf32>, vector<10x32xf32> -> vector<10x32xf32>
      %59 = arith.addf %50, %58 : vector<10x32xf32>
      %c0_i32_54 = arith.constant 0 : i32
      %60 = arith.addi %c0_i32_54, %arg11 : i32
      %c0_i32_55 = arith.constant 0 : i32
      %61 = arith.addi %60, %c0_i32_55 : i32
      %c0_56 = arith.constant 0 : index
      %62 = arith.index_cast %61 : i32 to index
      %c1_57 = arith.constant 1 : index
      %c0_58 = arith.constant 0 : index
      %63 = vector.load %arg1[%c0_56, %62, %c1_57, %c0_58] : memref<1x42x11x64xf32, #tpu.memory_space<vmem>>, vector<1x1x10x64xf32>
      %64 = vector.shape_cast %63 : vector<1x1x10x64xf32> to vector<10x64xf32>
      %c1_59 = arith.constant 1 : index
      %c0_60 = arith.constant 0 : index
      %c0_61 = arith.constant 0 : index
      %65 = vector.load %arg2[%c1_59, %c0_60, %c0_61] : memref<4x64x32xf32, #tpu.memory_space<vmem>>, vector<1x64x32xf32>
      %66 = vector.shape_cast %65 : vector<1x64x32xf32> to vector<64x32xf32>
      %cst_62 = arith.constant dense<0.000000e+00> : vector<10x32xf32>
      %67 = tpu.matmul %64, %66, %cst_62 {dimension_numbers = #tpu.dot_dimension_numbers<[1], [0], [0], [1], [0, 0, 1, 1], [], []>} : vector<10x64xf32>, vector<64x32xf32>, vector<10x32xf32> -> vector<10x32xf32>
      %68 = arith.addf %59, %67 : vector<10x32xf32>
      %c21_i32_63 = arith.constant 21 : i32
      %69 = arith.addi %c21_i32_63, %arg11 : i32
      %c1_i32_64 = arith.constant 1 : i32
      %70 = arith.addi %69, %c1_i32_64 : i32
      %c0_65 = arith.constant 0 : index
      %71 = arith.index_cast %70 : i32 to index
      %c0_66 = arith.constant 0 : index
      %c0_67 = arith.constant 0 : index
      %72 = vector.load %arg1[%c0_65, %71, %c0_66, %c0_67] : memref<1x42x11x64xf32, #tpu.memory_space<vmem>>, vector<1x1x10x64xf32>
      %73 = vector.shape_cast %72 : vector<1x1x10x64xf32> to vector<10x64xf32>
      %c2_68 = arith.constant 2 : index
      %c0_69 = arith.constant 0 : index
      %c0_70 = arith.constant 0 : index
      %74 = vector.load %arg2[%c2_68, %c0_69, %c0_70] : memref<4x64x32xf32, #tpu.memory_space<vmem>>, vector<1x64x32xf32>
      %75 = vector.shape_cast %74 : vector<1x64x32xf32> to vector<64x32xf32>
      %cst_71 = arith.constant dense<0.000000e+00> : vector<10x32xf32>
      %76 = tpu.matmul %73, %75, %cst_71 {dimension_numbers = #tpu.dot_dimension_numbers<[1], [0], [0], [1], [0, 0, 1, 1], [], []>} : vector<10x64xf32>, vector<64x32xf32>, vector<10x32xf32> -> vector<10x32xf32>
      %77 = arith.addf %68, %76 : vector<10x32xf32>
      %c0_i32_72 = arith.constant 0 : i32
      %78 = arith.addi %c0_i32_72, %arg11 : i32
      %c1_i32_73 = arith.constant 1 : i32
      %79 = arith.addi %78, %c1_i32_73 : i32
      %c0_74 = arith.constant 0 : index
      %80 = arith.index_cast %79 : i32 to index
      %c1_75 = arith.constant 1 : index
      %c0_76 = arith.constant 0 : index
      %81 = vector.load %arg1[%c0_74, %80, %c1_75, %c0_76] : memref<1x42x11x64xf32, #tpu.memory_space<vmem>>, vector<1x1x10x64xf32>
      %82 = vector.shape_cast %81 : vector<1x1x10x64xf32> to vector<10x64xf32>
      %c3_77 = arith.constant 3 : index
      %c0_78 = arith.constant 0 : index
      %c0_79 = arith.constant 0 : index
      %83 = vector.load %arg2[%c3_77, %c0_78, %c0_79] : memref<4x64x32xf32, #tpu.memory_space<vmem>>, vector<1x64x32xf32>
      %84 = vector.shape_cast %83 : vector<1x64x32xf32> to vector<64x32xf32>
      %cst_80 = arith.constant dense<0.000000e+00> : vector<10x32xf32>
      %85 = tpu.matmul %82, %84, %cst_80 {dimension_numbers = #tpu.dot_dimension_numbers<[1], [0], [0], [1], [0, 0, 1, 1], [], []>} : vector<10x64xf32>, vector<64x32xf32>, vector<10x32xf32> -> vector<10x32xf32>
      %86 = arith.addf %77, %85 : vector<10x32xf32>
      %c0_81 = arith.constant 0 : index
      %c0_82 = arith.constant 0 : index
      %87 = vector.load %arg3[%c0_81, %c0_82] : memref<1x32xf32, #tpu.memory_space<vmem>>, vector<1x32xf32>
      %88 = vector.broadcast %87 : vector<1x32xf32> to vector<10x32xf32>
      %89 = arith.addf %86, %88 : vector<10x32xf32>
      %cst_83 = arith.constant 0.000000e+00 : f32
      %90 = vector.broadcast %cst_83 : f32 to vector<10x32xf32>
      %91 = arith.maximumf %89, %90 : vector<10x32xf32>
      %c20_i32_84 = arith.constant 20 : i32
      %92 = arith.addi %c20_i32_84, %arg11 : i32
      %93 = arith.index_cast %92 : i32 to index
      %c0_85 = arith.constant 0 : index
      %c0_86 = arith.constant 0 : index
      %94 = vector.load %arg9[%93, %c0_85, %c0_86] : memref<40x10x32xf32, #tpu.memory_space<vmem>>, vector<1x10x32xf32>
      %95 = vector.shape_cast %94 : vector<1x10x32xf32> to vector<10x32xf32>
      %96 = vector.shape_cast %91 : vector<10x32xf32> to vector<1x10x32xf32>
      tpu.vector_store %arg9[%93, %c0_85, %c0_86], %96 {strides = array<i32>} : memref<40x10x32xf32, #tpu.memory_space<vmem>>, vector<1x10x32xf32>,
    }
    %c20_i32_0 = arith.constant 20 : i32
    %c0_i32_1 = arith.constant 0 : i32
    %c9_i32 = arith.constant 9 : i32
    %1 = arith.addi %c0_i32_1, %c9_i32 : i32
    %c1_i32_2 = arith.constant 1 : i32
    scf.for %arg11 = %c0_i32_1 to %1 step %c1_i32_2  : i32 {
      %cst = arith.constant 0.000000e+00 : f32
      %3 = vector.broadcast %cst : f32 to vector<9x64xf32>
      %c2_i32 = arith.constant 2 : i32
      %4 = arith.muli %c2_i32, %arg11 : i32
      %c0_i32_7 = arith.constant 0 : i32
      %5 = arith.addi %c0_i32_7, %4 : i32
      %c0_i32_8 = arith.constant 0 : i32
      %6 = arith.addi %5, %c0_i32_8 : i32
      %7 = arith.index_cast %6 : i32 to index
      %c0 = arith.constant 0 : index
      %c0_9 = arith.constant 0 : index
      %8 = vector.load %arg9[%7, %c0, %c0_9] : memref<40x10x32xf32, #tpu.memory_space<vmem>>, vector<1x9x32xf32>
      %9 = vector.shape_cast %8 : vector<1x9x32xf32> to vector<9x32xf32>
      %c0_10 = arith.constant 0 : index
      %c0_11 = arith.constant 0 : index
      %c0_12 = arith.constant 0 : index
      %10 = vector.load %arg4[%c0_10, %c0_11, %c0_12] : memref<16x32x64xf32, #tpu.memory_space<vmem>>, vector<1x32x64xf32>
      %11 = vector.shape_cast %10 : vector<1x32x64xf32> to vector<32x64xf32>
      %cst_13 = arith.constant dense<0.000000e+00> : vector<9x64xf32>
      %12 = tpu.matmul %9, %11, %cst_13 {dimension_numbers = #tpu.dot_dimension_numbers<[1], [0], [0], [1], [0, 0, 1, 1], [], []>} : vector<9x32xf32>, vector<32x64xf32>, vector<9x64xf32> -> vector<9x64xf32>
      %13 = arith.addf %3, %12 : vector<9x64xf32>
      %c2_i32_14 = arith.constant 2 : i32
      %14 = arith.muli %c2_i32_14, %arg11 : i32
      %c20_i32_15 = arith.constant 20 : i32
      %15 = arith.addi %c20_i32_15, %14 : i32
      %c0_i32_16 = arith.constant 0 : i32
      %16 = arith.addi %15, %c0_i32_16 : i32
      %17 = arith.index_cast %16 : i32 to index
      %c0_17 = arith.constant 0 : index
      %c0_18 = arith.constant 0 : index
      %18 = vector.load %arg9[%17, %c0_17, %c0_18] : memref<40x10x32xf32, #tpu.memory_space<vmem>>, vector<1x9x32xf32>
      %19 = vector.shape_cast %18 : vector<1x9x32xf32> to vector<9x32xf32>
      %c1 = arith.constant 1 : index
      %c0_19 = arith.constant 0 : index
      %c0_20 = arith.constant 0 : index
      %20 = vector.load %arg4[%c1, %c0_19, %c0_20] : memref<16x32x64xf32, #tpu.memory_space<vmem>>, vector<1x32x64xf32>
      %21 = vector.shape_cast %20 : vector<1x32x64xf32> to vector<32x64xf32>
      %cst_21 = arith.constant dense<0.000000e+00> : vector<9x64xf32>
      %22 = tpu.matmul %19, %21, %cst_21 {dimension_numbers = #tpu.dot_dimension_numbers<[1], [0], [0], [1], [0, 0, 1, 1], [], []>} : vector<9x32xf32>, vector<32x64xf32>, vector<9x64xf32> -> vector<9x64xf32>
      %23 = arith.addf %13, %22 : vector<9x64xf32>
      %c2_i32_22 = arith.constant 2 : i32
      %24 = arith.muli %c2_i32_22, %arg11 : i32
      %c0_i32_23 = arith.constant 0 : i32
      %25 = arith.addi %c0_i32_23, %24 : i32
      %c0_i32_24 = arith.constant 0 : i32
      %26 = arith.addi %25, %c0_i32_24 : i32
      %27 = arith.index_cast %26 : i32 to index
      %c1_25 = arith.constant 1 : index
      %c0_26 = arith.constant 0 : index
      %28 = vector.load %arg9[%27, %c1_25, %c0_26] : memref<40x10x32xf32, #tpu.memory_space<vmem>>, vector<1x9x32xf32>
      %29 = vector.shape_cast %28 : vector<1x9x32xf32> to vector<9x32xf32>
      %c2 = arith.constant 2 : index
      %c0_27 = arith.constant 0 : index
      %c0_28 = arith.constant 0 : index
      %30 = vector.load %arg4[%c2, %c0_27, %c0_28] : memref<16x32x64xf32, #tpu.memory_space<vmem>>, vector<1x32x64xf32>
      %31 = vector.shape_cast %30 : vector<1x32x64xf32> to vector<32x64xf32>
      %cst_29 = arith.constant dense<0.000000e+00> : vector<9x64xf32>
      %32 = tpu.matmul %29, %31, %cst_29 {dimension_numbers = #tpu.dot_dimension_numbers<[1], [0], [0], [1], [0, 0, 1, 1], [], []>} : vector<9x32xf32>, vector<32x64xf32>, vector<9x64xf32> -> vector<9x64xf32>
      %33 = arith.addf %23, %32 : vector<9x64xf32>
      %c2_i32_30 = arith.constant 2 : i32
      %34 = arith.muli %c2_i32_30, %arg11 : i32
      %c20_i32_31 = arith.constant 20 : i32
      %35 = arith.addi %c20_i32_31, %34 : i32
      %c0_i32_32 = arith.constant 0 : i32
      %36 = arith.addi %35, %c0_i32_32 : i32
      %37 = arith.index_cast %36 : i32 to index
      %c1_33 = arith.constant 1 : index
      %c0_34 = arith.constant 0 : index
      %38 = vector.load %arg9[%37, %c1_33, %c0_34] : memref<40x10x32xf32, #tpu.memory_space<vmem>>, vector<1x9x32xf32>
      %39 = vector.shape_cast %38 : vector<1x9x32xf32> to vector<9x32xf32>
      %c3 = arith.constant 3 : index
      %c0_35 = arith.constant 0 : index
      %c0_36 = arith.constant 0 : index
      %40 = vector.load %arg4[%c3, %c0_35, %c0_36] : memref<16x32x64xf32, #tpu.memory_space<vmem>>, vector<1x32x64xf32>
      %41 = vector.shape_cast %40 : vector<1x32x64xf32> to vector<32x64xf32>
      %cst_37 = arith.constant dense<0.000000e+00> : vector<9x64xf32>
      %42 = tpu.matmul %39, %41, %cst_37 {dimension_numbers = #tpu.dot_dimension_numbers<[1], [0], [0], [1], [0, 0, 1, 1], [], []>} : vector<9x32xf32>, vector<32x64xf32>, vector<9x64xf32> -> vector<9x64xf32>
      %43 = arith.addf %33, %42 : vector<9x64xf32>
      %c2_i32_38 = arith.constant 2 : i32
      %44 = arith.muli %c2_i32_38, %arg11 : i32
      %c0_i32_39 = arith.constant 0 : i32
      %45 = arith.addi %c0_i32_39, %44 : i32
      %c1_i32_40 = arith.constant 1 : i32
      %46 = arith.addi %45, %c1_i32_40 : i32
      %47 = arith.index_cast %46 : i32 to index
      %c0_41 = arith.constant 0 : index
      %c0_42 = arith.constant 0 : index
      %48 = vector.load %arg9[%47, %c0_41, %c0_42] : memref<40x10x32xf32, #tpu.memory_space<vmem>>, vector<1x9x32xf32>
      %49 = vector.shape_cast %48 : vector<1x9x32xf32> to vector<9x32xf32>
      %c4 = arith.constant 4 : index
      %c0_43 = arith.constant 0 : index
      %c0_44 = arith.constant 0 : index
      %50 = vector.load %arg4[%c4, %c0_43, %c0_44] : memref<16x32x64xf32, #tpu.memory_space<vmem>>, vector<1x32x64xf32>
      %51 = vector.shape_cast %50 : vector<1x32x64xf32> to vector<32x64xf32>
      %cst_45 = arith.constant dense<0.000000e+00> : vector<9x64xf32>
      %52 = tpu.matmul %49, %51, %cst_45 {dimension_numbers = #tpu.dot_dimension_numbers<[1], [0], [0], [1], [0, 0, 1, 1], [], []>} : vector<9x32xf32>, vector<32x64xf32>, vector<9x64xf32> -> vector<9x64xf32>
      %53 = arith.addf %43, %52 : vector<9x64xf32>
      %c2_i32_46 = arith.constant 2 : i32
      %54 = arith.muli %c2_i32_46, %arg11 : i32
      %c20_i32_47 = arith.constant 20 : i32
      %55 = arith.addi %c20_i32_47, %54 : i32
      %c1_i32_48 = arith.constant 1 : i32
      %56 = arith.addi %55, %c1_i32_48 : i32
      %57 = arith.index_cast %56 : i32 to index
      %c0_49 = arith.constant 0 : index
      %c0_50 = arith.constant 0 : index
      %58 = vector.load %arg9[%57, %c0_49, %c0_50] : memref<40x10x32xf32, #tpu.memory_space<vmem>>, vector<1x9x32xf32>
      %59 = vector.shape_cast %58 : vector<1x9x32xf32> to vector<9x32xf32>
      %c5 = arith.constant 5 : index
      %c0_51 = arith.constant 0 : index
      %c0_52 = arith.constant 0 : index
      %60 = vector.load %arg4[%c5, %c0_51, %c0_52] : memref<16x32x64xf32, #tpu.memory_space<vmem>>, vector<1x32x64xf32>
      %61 = vector.shape_cast %60 : vector<1x32x64xf32> to vector<32x64xf32>
      %cst_53 = arith.constant dense<0.000000e+00> : vector<9x64xf32>
      %62 = tpu.matmul %59, %61, %cst_53 {dimension_numbers = #tpu.dot_dimension_numbers<[1], [0], [0], [1], [0, 0, 1, 1], [], []>} : vector<9x32xf32>, vector<32x64xf32>, vector<9x64xf32> -> vector<9x64xf32>
      %63 = arith.addf %53, %62 : vector<9x64xf32>
      %c2_i32_54 = arith.constant 2 : i32
      %64 = arith.muli %c2_i32_54, %arg11 : i32
      %c0_i32_55 = arith.constant 0 : i32
      %65 = arith.addi %c0_i32_55, %64 : i32
      %c1_i32_56 = arith.constant 1 : i32
      %66 = arith.addi %65, %c1_i32_56 : i32
      %67 = arith.index_cast %66 : i32 to index
      %c1_57 = arith.constant 1 : index
      %c0_58 = arith.constant 0 : index
      %68 = vector.load %arg9[%67, %c1_57, %c0_58] : memref<40x10x32xf32, #tpu.memory_space<vmem>>, vector<1x9x32xf32>
      %69 = vector.shape_cast %68 : vector<1x9x32xf32> to vector<9x32xf32>
      %c6 = arith.constant 6 : index
      %c0_59 = arith.constant 0 : index
      %c0_60 = arith.constant 0 : index
      %70 = vector.load %arg4[%c6, %c0_59, %c0_60] : memref<16x32x64xf32, #tpu.memory_space<vmem>>, vector<1x32x64xf32>
      %71 = vector.shape_cast %70 : vector<1x32x64xf32> to vector<32x64xf32>
      %cst_61 = arith.constant dense<0.000000e+00> : vector<9x64xf32>
      %72 = tpu.matmul %69, %71, %cst_61 {dimension_numbers = #tpu.dot_dimension_numbers<[1], [0], [0], [1], [0, 0, 1, 1], [], []>} : vector<9x32xf32>, vector<32x64xf32>, vector<9x64xf32> -> vector<9x64xf32>
      %73 = arith.addf %63, %72 : vector<9x64xf32>
      %c2_i32_62 = arith.constant 2 : i32
      %74 = arith.muli %c2_i32_62, %arg11 : i32
      %c20_i32_63 = arith.constant 20 : i32
      %75 = arith.addi %c20_i32_63, %74 : i32
      %c1_i32_64 = arith.constant 1 : i32
      %76 = arith.addi %75, %c1_i32_64 : i32
      %77 = arith.index_cast %76 : i32 to index
      %c1_65 = arith.constant 1 : index
      %c0_66 = arith.constant 0 : index
      %78 = vector.load %arg9[%77, %c1_65, %c0_66] : memref<40x10x32xf32, #tpu.memory_space<vmem>>, vector<1x9x32xf32>
      %79 = vector.shape_cast %78 : vector<1x9x32xf32> to vector<9x32xf32>
      %c7 = arith.constant 7 : index
      %c0_67 = arith.constant 0 : index
      %c0_68 = arith.constant 0 : index
      %80 = vector.load %arg4[%c7, %c0_67, %c0_68] : memref<16x32x64xf32, #tpu.memory_space<vmem>>, vector<1x32x64xf32>
      %81 = vector.shape_cast %80 : vector<1x32x64xf32> to vector<32x64xf32>
      %cst_69 = arith.constant dense<0.000000e+00> : vector<9x64xf32>
      %82 = tpu.matmul %79, %81, %cst_69 {dimension_numbers = #tpu.dot_dimension_numbers<[1], [0], [0], [1], [0, 0, 1, 1], [], []>} : vector<9x32xf32>, vector<32x64xf32>, vector<9x64xf32> -> vector<9x64xf32>
      %83 = arith.addf %73, %82 : vector<9x64xf32>
      %c2_i32_70 = arith.constant 2 : i32
      %84 = arith.muli %c2_i32_70, %arg11 : i32
      %c0_i32_71 = arith.constant 0 : i32
      %85 = arith.addi %c0_i32_71, %84 : i32
      %c2_i32_72 = arith.constant 2 : i32
      %86 = arith.addi %85, %c2_i32_72 : i32
      %87 = arith.index_cast %86 : i32 to index
      %c0_73 = arith.constant 0 : index
      %c0_74 = arith.constant 0 : index
      %88 = vector.load %arg9[%87, %c0_73, %c0_74] : memref<40x10x32xf32, #tpu.memory_space<vmem>>, vector<1x9x32xf32>
      %89 = vector.shape_cast %88 : vector<1x9x32xf32> to vector<9x32xf32>
      %c8 = arith.constant 8 : index
      %c0_75 = arith.constant 0 : index
      %c0_76 = arith.constant 0 : index
      %90 = vector.load %arg4[%c8, %c0_75, %c0_76] : memref<16x32x64xf32, #tpu.memory_space<vmem>>, vector<1x32x64xf32>
      %91 = vector.shape_cast %90 : vector<1x32x64xf32> to vector<32x64xf32>
      %cst_77 = arith.constant dense<0.000000e+00> : vector<9x64xf32>
      %92 = tpu.matmul %89, %91, %cst_77 {dimension_numbers = #tpu.dot_dimension_numbers<[1], [0], [0], [1], [0, 0, 1, 1], [], []>} : vector<9x32xf32>, vector<32x64xf32>, vector<9x64xf32> -> vector<9x64xf32>
      %93 = arith.addf %83, %92 : vector<9x64xf32>
      %c2_i32_78 = arith.constant 2 : i32
      %94 = arith.muli %c2_i32_78, %arg11 : i32
      %c20_i32_79 = arith.constant 20 : i32
      %95 = arith.addi %c20_i32_79, %94 : i32
      %c2_i32_80 = arith.constant 2 : i32
      %96 = arith.addi %95, %c2_i32_80 : i32
      %97 = arith.index_cast %96 : i32 to index
      %c0_81 = arith.constant 0 : index
      %c0_82 = arith.constant 0 : index
      %98 = vector.load %arg9[%97, %c0_81, %c0_82] : memref<40x10x32xf32, #tpu.memory_space<vmem>>, vector<1x9x32xf32>
      %99 = vector.shape_cast %98 : vector<1x9x32xf32> to vector<9x32xf32>
      %c9 = arith.constant 9 : index
      %c0_83 = arith.constant 0 : index
      %c0_84 = arith.constant 0 : index
      %100 = vector.load %arg4[%c9, %c0_83, %c0_84] : memref<16x32x64xf32, #tpu.memory_space<vmem>>, vector<1x32x64xf32>
      %101 = vector.shape_cast %100 : vector<1x32x64xf32> to vector<32x64xf32>
      %cst_85 = arith.constant dense<0.000000e+00> : vector<9x64xf32>
      %102 = tpu.matmul %99, %101, %cst_85 {dimension_numbers = #tpu.dot_dimension_numbers<[1], [0], [0], [1], [0, 0, 1, 1], [], []>} : vector<9x32xf32>, vector<32x64xf32>, vector<9x64xf32> -> vector<9x64xf32>
      %103 = arith.addf %93, %102 : vector<9x64xf32>
      %c2_i32_86 = arith.constant 2 : i32
      %104 = arith.muli %c2_i32_86, %arg11 : i32
      %c0_i32_87 = arith.constant 0 : i32
      %105 = arith.addi %c0_i32_87, %104 : i32
      %c2_i32_88 = arith.constant 2 : i32
      %106 = arith.addi %105, %c2_i32_88 : i32
      %107 = arith.index_cast %106 : i32 to index
      %c1_89 = arith.constant 1 : index
      %c0_90 = arith.constant 0 : index
      %108 = vector.load %arg9[%107, %c1_89, %c0_90] : memref<40x10x32xf32, #tpu.memory_space<vmem>>, vector<1x9x32xf32>
      %109 = vector.shape_cast %108 : vector<1x9x32xf32> to vector<9x32xf32>
      %c10 = arith.constant 10 : index
      %c0_91 = arith.constant 0 : index
      %c0_92 = arith.constant 0 : index
      %110 = vector.load %arg4[%c10, %c0_91, %c0_92] : memref<16x32x64xf32, #tpu.memory_space<vmem>>, vector<1x32x64xf32>
      %111 = vector.shape_cast %110 : vector<1x32x64xf32> to vector<32x64xf32>
      %cst_93 = arith.constant dense<0.000000e+00> : vector<9x64xf32>
      %112 = tpu.matmul %109, %111, %cst_93 {dimension_numbers = #tpu.dot_dimension_numbers<[1], [0], [0], [1], [0, 0, 1, 1], [], []>} : vector<9x32xf32>, vector<32x64xf32>, vector<9x64xf32> -> vector<9x64xf32>
      %113 = arith.addf %103, %112 : vector<9x64xf32>
      %c2_i32_94 = arith.constant 2 : i32
      %114 = arith.muli %c2_i32_94, %arg11 : i32
      %c20_i32_95 = arith.constant 20 : i32
      %115 = arith.addi %c20_i32_95, %114 : i32
      %c2_i32_96 = arith.constant 2 : i32
      %116 = arith.addi %115, %c2_i32_96 : i32
      %117 = arith.index_cast %116 : i32 to index
      %c1_97 = arith.constant 1 : index
      %c0_98 = arith.constant 0 : index
      %118 = vector.load %arg9[%117, %c1_97, %c0_98] : memref<40x10x32xf32, #tpu.memory_space<vmem>>, vector<1x9x32xf32>
      %119 = vector.shape_cast %118 : vector<1x9x32xf32> to vector<9x32xf32>
      %c11 = arith.constant 11 : index
      %c0_99 = arith.constant 0 : index
      %c0_100 = arith.constant 0 : index
      %120 = vector.load %arg4[%c11, %c0_99, %c0_100] : memref<16x32x64xf32, #tpu.memory_space<vmem>>, vector<1x32x64xf32>
      %121 = vector.shape_cast %120 : vector<1x32x64xf32> to vector<32x64xf32>
      %cst_101 = arith.constant dense<0.000000e+00> : vector<9x64xf32>
      %122 = tpu.matmul %119, %121, %cst_101 {dimension_numbers = #tpu.dot_dimension_numbers<[1], [0], [0], [1], [0, 0, 1, 1], [], []>} : vector<9x32xf32>, vector<32x64xf32>, vector<9x64xf32> -> vector<9x64xf32>
      %123 = arith.addf %113, %122 : vector<9x64xf32>
      %c2_i32_102 = arith.constant 2 : i32
      %124 = arith.muli %c2_i32_102, %arg11 : i32
      %c0_i32_103 = arith.constant 0 : i32
      %125 = arith.addi %c0_i32_103, %124 : i32
      %c3_i32 = arith.constant 3 : i32
      %126 = arith.addi %125, %c3_i32 : i32
      %127 = arith.index_cast %126 : i32 to index
      %c0_104 = arith.constant 0 : index
      %c0_105 = arith.constant 0 : index
      %128 = vector.load %arg9[%127, %c0_104, %c0_105] : memref<40x10x32xf32, #tpu.memory_space<vmem>>, vector<1x9x32xf32>
      %129 = vector.shape_cast %128 : vector<1x9x32xf32> to vector<9x32xf32>
      %c12 = arith.constant 12 : index
      %c0_106 = arith.constant 0 : index
      %c0_107 = arith.constant 0 : index
      %130 = vector.load %arg4[%c12, %c0_106, %c0_107] : memref<16x32x64xf32, #tpu.memory_space<vmem>>, vector<1x32x64xf32>
      %131 = vector.shape_cast %130 : vector<1x32x64xf32> to vector<32x64xf32>
      %cst_108 = arith.constant dense<0.000000e+00> : vector<9x64xf32>
      %132 = tpu.matmul %129, %131, %cst_108 {dimension_numbers = #tpu.dot_dimension_numbers<[1], [0], [0], [1], [0, 0, 1, 1], [], []>} : vector<9x32xf32>, vector<32x64xf32>, vector<9x64xf32> -> vector<9x64xf32>
      %133 = arith.addf %123, %132 : vector<9x64xf32>
      %c2_i32_109 = arith.constant 2 : i32
      %134 = arith.muli %c2_i32_109, %arg11 : i32
      %c20_i32_110 = arith.constant 20 : i32
      %135 = arith.addi %c20_i32_110, %134 : i32
      %c3_i32_111 = arith.constant 3 : i32
      %136 = arith.addi %135, %c3_i32_111 : i32
      %137 = arith.index_cast %136 : i32 to index
      %c0_112 = arith.constant 0 : index
      %c0_113 = arith.constant 0 : index
      %138 = vector.load %arg9[%137, %c0_112, %c0_113] : memref<40x10x32xf32, #tpu.memory_space<vmem>>, vector<1x9x32xf32>
      %139 = vector.shape_cast %138 : vector<1x9x32xf32> to vector<9x32xf32>
      %c13 = arith.constant 13 : index
      %c0_114 = arith.constant 0 : index
      %c0_115 = arith.constant 0 : index
      %140 = vector.load %arg4[%c13, %c0_114, %c0_115] : memref<16x32x64xf32, #tpu.memory_space<vmem>>, vector<1x32x64xf32>
      %141 = vector.shape_cast %140 : vector<1x32x64xf32> to vector<32x64xf32>
      %cst_116 = arith.constant dense<0.000000e+00> : vector<9x64xf32>
      %142 = tpu.matmul %139, %141, %cst_116 {dimension_numbers = #tpu.dot_dimension_numbers<[1], [0], [0], [1], [0, 0, 1, 1], [], []>} : vector<9x32xf32>, vector<32x64xf32>, vector<9x64xf32> -> vector<9x64xf32>
      %143 = arith.addf %133, %142 : vector<9x64xf32>
      %c2_i32_117 = arith.constant 2 : i32
      %144 = arith.muli %c2_i32_117, %arg11 : i32
      %c0_i32_118 = arith.constant 0 : i32
      %145 = arith.addi %c0_i32_118, %144 : i32
      %c3_i32_119 = arith.constant 3 : i32
      %146 = arith.addi %145, %c3_i32_119 : i32
      %147 = arith.index_cast %146 : i32 to index
      %c1_120 = arith.constant 1 : index
      %c0_121 = arith.constant 0 : index
      %148 = vector.load %arg9[%147, %c1_120, %c0_121] : memref<40x10x32xf32, #tpu.memory_space<vmem>>, vector<1x9x32xf32>
      %149 = vector.shape_cast %148 : vector<1x9x32xf32> to vector<9x32xf32>
      %c14 = arith.constant 14 : index
      %c0_122 = arith.constant 0 : index
      %c0_123 = arith.constant 0 : index
      %150 = vector.load %arg4[%c14, %c0_122, %c0_123] : memref<16x32x64xf32, #tpu.memory_space<vmem>>, vector<1x32x64xf32>
      %151 = vector.shape_cast %150 : vector<1x32x64xf32> to vector<32x64xf32>
      %cst_124 = arith.constant dense<0.000000e+00> : vector<9x64xf32>
      %152 = tpu.matmul %149, %151, %cst_124 {dimension_numbers = #tpu.dot_dimension_numbers<[1], [0], [0], [1], [0, 0, 1, 1], [], []>} : vector<9x32xf32>, vector<32x64xf32>, vector<9x64xf32> -> vector<9x64xf32>
      %153 = arith.addf %143, %152 : vector<9x64xf32>
      %c2_i32_125 = arith.constant 2 : i32
      %154 = arith.muli %c2_i32_125, %arg11 : i32
      %c20_i32_126 = arith.constant 20 : i32
      %155 = arith.addi %c20_i32_126, %154 : i32
      %c3_i32_127 = arith.constant 3 : i32
      %156 = arith.addi %155, %c3_i32_127 : i32
      %157 = arith.index_cast %156 : i32 to index
      %c1_128 = arith.constant 1 : index
      %c0_129 = arith.constant 0 : index
      %158 = vector.load %arg9[%157, %c1_128, %c0_129] : memref<40x10x32xf32, #tpu.memory_space<vmem>>, vector<1x9x32xf32>
      %159 = vector.shape_cast %158 : vector<1x9x32xf32> to vector<9x32xf32>
      %c15 = arith.constant 15 : index
      %c0_130 = arith.constant 0 : index
      %c0_131 = arith.constant 0 : index
      %160 = vector.load %arg4[%c15, %c0_130, %c0_131] : memref<16x32x64xf32, #tpu.memory_space<vmem>>, vector<1x32x64xf32>
      %161 = vector.shape_cast %160 : vector<1x32x64xf32> to vector<32x64xf32>
      %cst_132 = arith.constant dense<0.000000e+00> : vector<9x64xf32>
      %162 = tpu.matmul %159, %161, %cst_132 {dimension_numbers = #tpu.dot_dimension_numbers<[1], [0], [0], [1], [0, 0, 1, 1], [], []>} : vector<9x32xf32>, vector<32x64xf32>, vector<9x64xf32> -> vector<9x64xf32>
      %163 = arith.addf %153, %162 : vector<9x64xf32>
      %c0_133 = arith.constant 0 : index
      %c0_134 = arith.constant 0 : index
      %164 = vector.load %arg5[%c0_133, %c0_134] : memref<1x64xf32, #tpu.memory_space<vmem>>, vector<1x64xf32>
      %165 = vector.broadcast %164 : vector<1x64xf32> to vector<9x64xf32>
      %166 = arith.addf %163, %165 : vector<9x64xf32>
      %cst_135 = arith.constant 0.000000e+00 : f32
      %167 = vector.broadcast %cst_135 : f32 to vector<9x64xf32>
      %168 = arith.maximumf %166, %167 : vector<9x64xf32>
      %169 = arith.index_cast %arg11 : i32 to index
      %c0_136 = arith.constant 0 : index
      %c0_137 = arith.constant 0 : index
      %170 = vector.load %arg10[%169, %c0_136, %c0_137] : memref<9x9x64xf32, #tpu.memory_space<vmem>>, vector<1x9x64xf32>
      %171 = vector.shape_cast %170 : vector<1x9x64xf32> to vector<9x64xf32>
      %172 = vector.shape_cast %168 : vector<9x64xf32> to vector<1x9x64xf32>
      tpu.vector_store %arg10[%169, %c0_136, %c0_137], %172 {strides = array<i32>} : memref<9x9x64xf32, #tpu.memory_space<vmem>>, vector<1x9x64xf32>,
    }
    %c9_i32_3 = arith.constant 9 : i32
    %c0_i32_4 = arith.constant 0 : i32
    %c7_i32 = arith.constant 7 : i32
    %2 = arith.addi %c0_i32_4, %c7_i32 : i32
    %c1_i32_5 = arith.constant 1 : i32
    scf.for %arg11 = %c0_i32_4 to %2 step %c1_i32_5  : i32 {
      %cst = arith.constant 0.000000e+00 : f32
      %3 = vector.broadcast %cst : f32 to vector<7x64xf32>
      %c0_i32_7 = arith.constant 0 : i32
      %4 = arith.addi %arg11, %c0_i32_7 : i32
      %5 = arith.index_cast %4 : i32 to index
      %c0 = arith.constant 0 : index
      %c0_8 = arith.constant 0 : index
      %6 = vector.load %arg10[%5, %c0, %c0_8] : memref<9x9x64xf32, #tpu.memory_space<vmem>>, vector<1x7x64xf32>
      %7 = vector.shape_cast %6 : vector<1x7x64xf32> to vector<7x64xf32>
      %c0_9 = arith.constant 0 : index
      %c0_10 = arith.constant 0 : index
      %c0_11 = arith.constant 0 : index
      %8 = vector.load %arg6[%c0_9, %c0_10, %c0_11] : memref<9x64x64xf32, #tpu.memory_space<vmem>>, vector<1x64x64xf32>
      %9 = vector.shape_cast %8 : vector<1x64x64xf32> to vector<64x64xf32>
      %cst_12 = arith.constant dense<0.000000e+00> : vector<7x64xf32>
      %10 = tpu.matmul %7, %9, %cst_12 {dimension_numbers = #tpu.dot_dimension_numbers<[1], [0], [0], [1], [0, 0, 1, 1], [], []>} : vector<7x64xf32>, vector<64x64xf32>, vector<7x64xf32> -> vector<7x64xf32>
      %11 = arith.addf %3, %10 : vector<7x64xf32>
      %c0_i32_13 = arith.constant 0 : i32
      %12 = arith.addi %arg11, %c0_i32_13 : i32
      %13 = arith.index_cast %12 : i32 to index
      %c1 = arith.constant 1 : index
      %c0_14 = arith.constant 0 : index
      %14 = vector.load %arg10[%13, %c1, %c0_14] : memref<9x9x64xf32, #tpu.memory_space<vmem>>, vector<1x7x64xf32>
      %15 = vector.shape_cast %14 : vector<1x7x64xf32> to vector<7x64xf32>
      %c1_15 = arith.constant 1 : index
      %c0_16 = arith.constant 0 : index
      %c0_17 = arith.constant 0 : index
      %16 = vector.load %arg6[%c1_15, %c0_16, %c0_17] : memref<9x64x64xf32, #tpu.memory_space<vmem>>, vector<1x64x64xf32>
      %17 = vector.shape_cast %16 : vector<1x64x64xf32> to vector<64x64xf32>
      %cst_18 = arith.constant dense<0.000000e+00> : vector<7x64xf32>
      %18 = tpu.matmul %15, %17, %cst_18 {dimension_numbers = #tpu.dot_dimension_numbers<[1], [0], [0], [1], [0, 0, 1, 1], [], []>} : vector<7x64xf32>, vector<64x64xf32>, vector<7x64xf32> -> vector<7x64xf32>
      %19 = arith.addf %11, %18 : vector<7x64xf32>
      %c0_i32_19 = arith.constant 0 : i32
      %20 = arith.addi %arg11, %c0_i32_19 : i32
      %21 = arith.index_cast %20 : i32 to index
      %c2 = arith.constant 2 : index
      %c0_20 = arith.constant 0 : index
      %22 = vector.load %arg10[%21, %c2, %c0_20] : memref<9x9x64xf32, #tpu.memory_space<vmem>>, vector<1x7x64xf32>
      %23 = vector.shape_cast %22 : vector<1x7x64xf32> to vector<7x64xf32>
      %c2_21 = arith.constant 2 : index
      %c0_22 = arith.constant 0 : index
      %c0_23 = arith.constant 0 : index
      %24 = vector.load %arg6[%c2_21, %c0_22, %c0_23] : memref<9x64x64xf32, #tpu.memory_space<vmem>>, vector<1x64x64xf32>
      %25 = vector.shape_cast %24 : vector<1x64x64xf32> to vector<64x64xf32>
      %cst_24 = arith.constant dense<0.000000e+00> : vector<7x64xf32>
      %26 = tpu.matmul %23, %25, %cst_24 {dimension_numbers = #tpu.dot_dimension_numbers<[1], [0], [0], [1], [0, 0, 1, 1], [], []>} : vector<7x64xf32>, vector<64x64xf32>, vector<7x64xf32> -> vector<7x64xf32>
      %27 = arith.addf %19, %26 : vector<7x64xf32>
      %c1_i32_25 = arith.constant 1 : i32
      %28 = arith.addi %arg11, %c1_i32_25 : i32
      %29 = arith.index_cast %28 : i32 to index
      %c0_26 = arith.constant 0 : index
      %c0_27 = arith.constant 0 : index
      %30 = vector.load %arg10[%29, %c0_26, %c0_27] : memref<9x9x64xf32, #tpu.memory_space<vmem>>, vector<1x7x64xf32>
      %31 = vector.shape_cast %30 : vector<1x7x64xf32> to vector<7x64xf32>
      %c3 = arith.constant 3 : index
      %c0_28 = arith.constant 0 : index
      %c0_29 = arith.constant 0 : index
      %32 = vector.load %arg6[%c3, %c0_28, %c0_29] : memref<9x64x64xf32, #tpu.memory_space<vmem>>, vector<1x64x64xf32>
      %33 = vector.shape_cast %32 : vector<1x64x64xf32> to vector<64x64xf32>
      %cst_30 = arith.constant dense<0.000000e+00> : vector<7x64xf32>
      %34 = tpu.matmul %31, %33, %cst_30 {dimension_numbers = #tpu.dot_dimension_numbers<[1], [0], [0], [1], [0, 0, 1, 1], [], []>} : vector<7x64xf32>, vector<64x64xf32>, vector<7x64xf32> -> vector<7x64xf32>
      %35 = arith.addf %27, %34 : vector<7x64xf32>
      %c1_i32_31 = arith.constant 1 : i32
      %36 = arith.addi %arg11, %c1_i32_31 : i32
      %37 = arith.index_cast %36 : i32 to index
      %c1_32 = arith.constant 1 : index
      %c0_33 = arith.constant 0 : index
      %38 = vector.load %arg10[%37, %c1_32, %c0_33] : memref<9x9x64xf32, #tpu.memory_space<vmem>>, vector<1x7x64xf32>
      %39 = vector.shape_cast %38 : vector<1x7x64xf32> to vector<7x64xf32>
      %c4 = arith.constant 4 : index
      %c0_34 = arith.constant 0 : index
      %c0_35 = arith.constant 0 : index
      %40 = vector.load %arg6[%c4, %c0_34, %c0_35] : memref<9x64x64xf32, #tpu.memory_space<vmem>>, vector<1x64x64xf32>
      %41 = vector.shape_cast %40 : vector<1x64x64xf32> to vector<64x64xf32>
      %cst_36 = arith.constant dense<0.000000e+00> : vector<7x64xf32>
      %42 = tpu.matmul %39, %41, %cst_36 {dimension_numbers = #tpu.dot_dimension_numbers<[1], [0], [0], [1], [0, 0, 1, 1], [], []>} : vector<7x64xf32>, vector<64x64xf32>, vector<7x64xf32> -> vector<7x64xf32>
      %43 = arith.addf %35, %42 : vector<7x64xf32>
      %c1_i32_37 = arith.constant 1 : i32
      %44 = arith.addi %arg11, %c1_i32_37 : i32
      %45 = arith.index_cast %44 : i32 to index
      %c2_38 = arith.constant 2 : index
      %c0_39 = arith.constant 0 : index
      %46 = vector.load %arg10[%45, %c2_38, %c0_39] : memref<9x9x64xf32, #tpu.memory_space<vmem>>, vector<1x7x64xf32>
      %47 = vector.shape_cast %46 : vector<1x7x64xf32> to vector<7x64xf32>
      %c5 = arith.constant 5 : index
      %c0_40 = arith.constant 0 : index
      %c0_41 = arith.constant 0 : index
      %48 = vector.load %arg6[%c5, %c0_40, %c0_41] : memref<9x64x64xf32, #tpu.memory_space<vmem>>, vector<1x64x64xf32>
      %49 = vector.shape_cast %48 : vector<1x64x64xf32> to vector<64x64xf32>
      %cst_42 = arith.constant dense<0.000000e+00> : vector<7x64xf32>
      %50 = tpu.matmul %47, %49, %cst_42 {dimension_numbers = #tpu.dot_dimension_numbers<[1], [0], [0], [1], [0, 0, 1, 1], [], []>} : vector<7x64xf32>, vector<64x64xf32>, vector<7x64xf32> -> vector<7x64xf32>
      %51 = arith.addf %43, %50 : vector<7x64xf32>
      %c2_i32 = arith.constant 2 : i32
      %52 = arith.addi %arg11, %c2_i32 : i32
      %53 = arith.index_cast %52 : i32 to index
      %c0_43 = arith.constant 0 : index
      %c0_44 = arith.constant 0 : index
      %54 = vector.load %arg10[%53, %c0_43, %c0_44] : memref<9x9x64xf32, #tpu.memory_space<vmem>>, vector<1x7x64xf32>
      %55 = vector.shape_cast %54 : vector<1x7x64xf32> to vector<7x64xf32>
      %c6 = arith.constant 6 : index
      %c0_45 = arith.constant 0 : index
      %c0_46 = arith.constant 0 : index
      %56 = vector.load %arg6[%c6, %c0_45, %c0_46] : memref<9x64x64xf32, #tpu.memory_space<vmem>>, vector<1x64x64xf32>
      %57 = vector.shape_cast %56 : vector<1x64x64xf32> to vector<64x64xf32>
      %cst_47 = arith.constant dense<0.000000e+00> : vector<7x64xf32>
      %58 = tpu.matmul %55, %57, %cst_47 {dimension_numbers = #tpu.dot_dimension_numbers<[1], [0], [0], [1], [0, 0, 1, 1], [], []>} : vector<7x64xf32>, vector<64x64xf32>, vector<7x64xf32> -> vector<7x64xf32>
      %59 = arith.addf %51, %58 : vector<7x64xf32>
      %c2_i32_48 = arith.constant 2 : i32
      %60 = arith.addi %arg11, %c2_i32_48 : i32
      %61 = arith.index_cast %60 : i32 to index
      %c1_49 = arith.constant 1 : index
      %c0_50 = arith.constant 0 : index
      %62 = vector.load %arg10[%61, %c1_49, %c0_50] : memref<9x9x64xf32, #tpu.memory_space<vmem>>, vector<1x7x64xf32>
      %63 = vector.shape_cast %62 : vector<1x7x64xf32> to vector<7x64xf32>
      %c7 = arith.constant 7 : index
      %c0_51 = arith.constant 0 : index
      %c0_52 = arith.constant 0 : index
      %64 = vector.load %arg6[%c7, %c0_51, %c0_52] : memref<9x64x64xf32, #tpu.memory_space<vmem>>, vector<1x64x64xf32>
      %65 = vector.shape_cast %64 : vector<1x64x64xf32> to vector<64x64xf32>
      %cst_53 = arith.constant dense<0.000000e+00> : vector<7x64xf32>
      %66 = tpu.matmul %63, %65, %cst_53 {dimension_numbers = #tpu.dot_dimension_numbers<[1], [0], [0], [1], [0, 0, 1, 1], [], []>} : vector<7x64xf32>, vector<64x64xf32>, vector<7x64xf32> -> vector<7x64xf32>
      %67 = arith.addf %59, %66 : vector<7x64xf32>
      %c2_i32_54 = arith.constant 2 : i32
      %68 = arith.addi %arg11, %c2_i32_54 : i32
      %69 = arith.index_cast %68 : i32 to index
      %c2_55 = arith.constant 2 : index
      %c0_56 = arith.constant 0 : index
      %70 = vector.load %arg10[%69, %c2_55, %c0_56] : memref<9x9x64xf32, #tpu.memory_space<vmem>>, vector<1x7x64xf32>
      %71 = vector.shape_cast %70 : vector<1x7x64xf32> to vector<7x64xf32>
      %c8 = arith.constant 8 : index
      %c0_57 = arith.constant 0 : index
      %c0_58 = arith.constant 0 : index
      %72 = vector.load %arg6[%c8, %c0_57, %c0_58] : memref<9x64x64xf32, #tpu.memory_space<vmem>>, vector<1x64x64xf32>
      %73 = vector.shape_cast %72 : vector<1x64x64xf32> to vector<64x64xf32>
      %cst_59 = arith.constant dense<0.000000e+00> : vector<7x64xf32>
      %74 = tpu.matmul %71, %73, %cst_59 {dimension_numbers = #tpu.dot_dimension_numbers<[1], [0], [0], [1], [0, 0, 1, 1], [], []>} : vector<7x64xf32>, vector<64x64xf32>, vector<7x64xf32> -> vector<7x64xf32>
      %75 = arith.addf %67, %74 : vector<7x64xf32>
      %c0_60 = arith.constant 0 : index
      %c0_61 = arith.constant 0 : index
      %76 = vector.load %arg7[%c0_60, %c0_61] : memref<1x64xf32, #tpu.memory_space<vmem>>, vector<1x64xf32>
      %77 = vector.broadcast %76 : vector<1x64xf32> to vector<7x64xf32>
      %78 = arith.addf %75, %77 : vector<7x64xf32>
      %cst_62 = arith.constant 0.000000e+00 : f32
      %79 = vector.broadcast %cst_62 : f32 to vector<7x64xf32>
      %80 = arith.maximumf %78, %79 : vector<7x64xf32>
      %c0_63 = arith.constant 0 : index
      %81 = arith.index_cast %arg11 : i32 to index
      %c0_64 = arith.constant 0 : index
      %c0_65 = arith.constant 0 : index
      %82 = vector.load %arg8[%c0_63, %81, %c0_64, %c0_65] : memref<1x7x7x64xf32, #tpu.memory_space<vmem>>, vector<1x1x7x64xf32>
      %83 = vector.shape_cast %82 : vector<1x1x7x64xf32> to vector<7x64xf32>
      %84 = vector.shape_cast %80 : vector<7x64xf32> to vector<1x1x7x64xf32>
      tpu.vector_store %arg8[%c0_63, %81, %c0_64, %c0_65], %84 {strides = array<i32>} : memref<1x7x7x64xf32, #tpu.memory_space<vmem>>, vector<1x1x7x64xf32>,
    }
    %c7_i32_6 = arith.constant 7 : i32
    return
  }
  func.func @transform_0(%arg0: i32) -> (i32, i32, i32, i32) {
    %c0_i32 = arith.constant 0 : i32
    %c0_i32_0 = arith.constant 0 : i32
    %c0_i32_1 = arith.constant 0 : i32
    %c0_i32_2 = arith.constant 0 : i32
    return %arg0, %c0_i32, %c0_i32_0, %c0_i32_1 : i32, i32, i32, i32
  }
  func.func @transform_1(%arg0: i32) -> (i32, i32, i32) {
    %c0_i32 = arith.constant 0 : i32
    %c0_i32_0 = arith.constant 0 : i32
    %c0_i32_1 = arith.constant 0 : i32
    %c0_i32_2 = arith.constant 0 : i32
    return %c0_i32, %c0_i32_0, %c0_i32_1 : i32, i32, i32
  }
  func.func @transform_2(%arg0: i32) -> (i32, i32) {
    %c0_i32 = arith.constant 0 : i32
    %c0_i32_0 = arith.constant 0 : i32
    %c0_i32_1 = arith.constant 0 : i32
    return %c0_i32, %c0_i32_0 : i32, i32
  }
  func.func @transform_3(%arg0: i32) -> (i32, i32, i32) {
    %c0_i32 = arith.constant 0 : i32
    %c0_i32_0 = arith.constant 0 : i32
    %c0_i32_1 = arith.constant 0 : i32
    %c0_i32_2 = arith.constant 0 : i32
    return %c0_i32, %c0_i32_0, %c0_i32_1 : i32, i32, i32
  }
  func.func @transform_4(%arg0: i32) -> (i32, i32) {
    %c0_i32 = arith.constant 0 : i32
    %c0_i32_0 = arith.constant 0 : i32
    %c0_i32_1 = arith.constant 0 : i32
    return %c0_i32, %c0_i32_0 : i32, i32
  }
  func.func @transform_5(%arg0: i32) -> (i32, i32, i32) {
    %c0_i32 = arith.constant 0 : i32
    %c0_i32_0 = arith.constant 0 : i32
    %c0_i32_1 = arith.constant 0 : i32
    %c0_i32_2 = arith.constant 0 : i32
    return %c0_i32, %c0_i32_0, %c0_i32_1 : i32, i32, i32
  }
  func.func @transform_6(%arg0: i32) -> (i32, i32) {
    %c0_i32 = arith.constant 0 : i32
    %c0_i32_0 = arith.constant 0 : i32
    %c0_i32_1 = arith.constant 0 : i32
    return %c0_i32, %c0_i32_0 : i32, i32
  }
  func.func @transform_7(%arg0: i32) -> (i32, i32, i32, i32) {
    %c0_i32 = arith.constant 0 : i32
    %c0_i32_0 = arith.constant 0 : i32
    %c0_i32_1 = arith.constant 0 : i32
    %c0_i32_2 = arith.constant 0 : i32
    return %arg0, %c0_i32, %c0_i32_0, %c0_i32_1 : i32, i32, i32, i32
  }
}

module attributes {stable_mosaic.version = 11 : i64} {
  func.func @_fc_head_kernel(%arg0: i32, %arg1: memref<2x3136xf32, #tpu.memory_space<vmem>>, %arg2: memref<3136x512xf32, #tpu.memory_space<vmem>>, %arg3: memref<1x512xf32, #tpu.memory_space<vmem>>, %arg4: memref<512x18xf32, #tpu.memory_space<vmem>>, %arg5: memref<1x18xf32, #tpu.memory_space<vmem>>, %arg6: memref<2x1xi32, #tpu.memory_space<vmem>>, %arg7: memref<2x18xf32, #tpu.memory_space<vmem>>) attributes {dimension_semantics = [#tpu.dimension_semantics<parallel>], iteration_bounds = array<i64: 1>, scalar_prefetch = 0 : i64, scratch_operands = 0 : i64, tpu.core_type = #tpu.core_type<tc>, window_params = [{transform_indices = @transform_0, window_bounds = array<i64: 2, 3136>}, {pipeline_mode = #tpu.pipeline_mode<synchronous>, transform_indices = @transform_1, window_bounds = array<i64: 3136, 512>}, {pipeline_mode = #tpu.pipeline_mode<synchronous>, transform_indices = @transform_2, window_bounds = array<i64: 1, 512>}, {pipeline_mode = #tpu.pipeline_mode<synchronous>, transform_indices = @transform_3, window_bounds = array<i64: 512, 18>}, {pipeline_mode = #tpu.pipeline_mode<synchronous>, transform_indices = @transform_4, window_bounds = array<i64: 1, 18>}, {transform_indices = @transform_5, window_bounds = array<i64: 2, 1>}, {transform_indices = @transform_6, window_bounds = array<i64: 2, 18>}]} {
    %c0 = arith.constant 0 : index
    %c0_0 = arith.constant 0 : index
    %0 = vector.load %arg1[%c0, %c0_0] : memref<2x3136xf32, #tpu.memory_space<vmem>>, vector<2x3136xf32>
    %c0_1 = arith.constant 0 : index
    %c0_2 = arith.constant 0 : index
    %1 = vector.load %arg2[%c0_1, %c0_2] : memref<3136x512xf32, #tpu.memory_space<vmem>>, vector<3136x512xf32>
    %cst = arith.constant dense<0.000000e+00> : vector<2x512xf32>
    %2 = tpu.matmul %0, %1, %cst {dimension_numbers = #tpu.dot_dimension_numbers<[1], [0], [0], [1], [0, 0, 1, 1], [], []>} : vector<2x3136xf32>, vector<3136x512xf32>, vector<2x512xf32> -> vector<2x512xf32>
    %c0_3 = arith.constant 0 : index
    %c0_4 = arith.constant 0 : index
    %3 = vector.load %arg3[%c0_3, %c0_4] : memref<1x512xf32, #tpu.memory_space<vmem>>, vector<1x512xf32>
    %4 = vector.broadcast %3 : vector<1x512xf32> to vector<2x512xf32>
    %5 = arith.addf %2, %4 : vector<2x512xf32>
    %cst_5 = arith.constant 0.000000e+00 : f32
    %6 = vector.broadcast %cst_5 : f32 to vector<2x512xf32>
    %7 = arith.maximumf %5, %6 : vector<2x512xf32>
    %c0_6 = arith.constant 0 : index
    %c0_7 = arith.constant 0 : index
    %8 = vector.load %arg4[%c0_6, %c0_7] : memref<512x18xf32, #tpu.memory_space<vmem>>, vector<512x18xf32>
    %cst_8 = arith.constant dense<0.000000e+00> : vector<2x18xf32>
    %9 = tpu.matmul %7, %8, %cst_8 {dimension_numbers = #tpu.dot_dimension_numbers<[1], [0], [0], [1], [0, 0, 1, 1], [], []>} : vector<2x512xf32>, vector<512x18xf32>, vector<2x18xf32> -> vector<2x18xf32>
    %c0_9 = arith.constant 0 : index
    %c0_10 = arith.constant 0 : index
    %10 = vector.load %arg5[%c0_9, %c0_10] : memref<1x18xf32, #tpu.memory_space<vmem>>, vector<1x18xf32>
    %11 = vector.broadcast %10 : vector<1x18xf32> to vector<2x18xf32>
    %12 = arith.addf %9, %11 : vector<2x18xf32>
    %c0_11 = arith.constant 0 : index
    %c0_12 = arith.constant 0 : index
    %13 = vector.load %arg7[%c0_11, %c0_12] : memref<2x18xf32, #tpu.memory_space<vmem>>, vector<2x18xf32>
    tpu.vector_store %arg7[%c0_11, %c0_12], %12 {strides = array<i32>} : memref<2x18xf32, #tpu.memory_space<vmem>>, vector<2x18xf32>,
    %14 = tpu.iota {dimensions = array<i32: 1>} : vector<2x18xi32>
    %cst_13 = arith.constant dense<0xFF800000> : vector<2xf32>
    %15 = vector.multi_reduction <maximumf>, %12, %cst_13 [1] : vector<2x18xf32> to vector<2xf32>
    %16 = vector.shape_cast %15 : vector<2xf32> to vector<2x1xf32>
    %17 = vector.broadcast %16 : vector<2x1xf32> to vector<2x18xf32>
    %18 = arith.cmpf oeq, %12, %17 : vector<2x18xf32>
    %c18_i32 = arith.constant 18 : i32
    %19 = vector.broadcast %c18_i32 : i32 to vector<2x18xi32>
    %20 = arith.select %18, %14, %19 : vector<2x18xi1>, vector<2x18xi32>
    %cst_14 = arith.constant dense<2147483647> : vector<2xi32>
    %21 = vector.multi_reduction <minsi>, %20, %cst_14 [1] : vector<2x18xi32> to vector<2xi32>
    %22 = vector.shape_cast %21 : vector<2xi32> to vector<2x1xi32>
    %c0_15 = arith.constant 0 : index
    %c0_16 = arith.constant 0 : index
    %23 = vector.load %arg6[%c0_15, %c0_16] : memref<2x1xi32, #tpu.memory_space<vmem>>, vector<2x1xi32>
    tpu.vector_store %arg6[%c0_15, %c0_16], %22 {strides = array<i32>} : memref<2x1xi32, #tpu.memory_space<vmem>>, vector<2x1xi32>,
    return
  }
  func.func @transform_0(%arg0: i32) -> (i32, i32) {
    %c0_i32 = arith.constant 0 : i32
    %c0_i32_0 = arith.constant 0 : i32
    return %arg0, %c0_i32 : i32, i32
  }
  func.func @transform_1(%arg0: i32) -> (i32, i32) {
    %c0_i32 = arith.constant 0 : i32
    %c0_i32_0 = arith.constant 0 : i32
    %c0_i32_1 = arith.constant 0 : i32
    return %c0_i32, %c0_i32_0 : i32, i32
  }
  func.func @transform_2(%arg0: i32) -> (i32, i32) {
    %c0_i32 = arith.constant 0 : i32
    %c0_i32_0 = arith.constant 0 : i32
    %c0_i32_1 = arith.constant 0 : i32
    return %c0_i32, %c0_i32_0 : i32, i32
  }
  func.func @transform_3(%arg0: i32) -> (i32, i32) {
    %c0_i32 = arith.constant 0 : i32
    %c0_i32_0 = arith.constant 0 : i32
    %c0_i32_1 = arith.constant 0 : i32
    return %c0_i32, %c0_i32_0 : i32, i32
  }
  func.func @transform_4(%arg0: i32) -> (i32, i32) {
    %c0_i32 = arith.constant 0 : i32
    %c0_i32_0 = arith.constant 0 : i32
    %c0_i32_1 = arith.constant 0 : i32
    return %c0_i32, %c0_i32_0 : i32, i32
  }
  func.func @transform_5(%arg0: i32) -> (i32, i32) {
    %c0_i32 = arith.constant 0 : i32
    %c0_i32_0 = arith.constant 0 : i32
    return %arg0, %c0_i32 : i32, i32
  }
  func.func @transform_6(%arg0: i32) -> (i32, i32) {
    %c0_i32 = arith.constant 0 : i32
    %c0_i32_0 = arith.constant 0 : i32
    return %arg0, %c0_i32 : i32, i32
  }
}

</mosaic_0001>

<llo_original>
// kernel: policy_network.2
$region0: #{policy_network.2}
  #allocation0 [shape = 'u32[]', space=smem, size = 0x4, offset = 0x4, fixed_abs, tag = 'smem constant byte address 0x4 - core index']
  #allocation1 [shape = 'u32[72,128]{1,0:T(1,128)}', space=vmem, size = 0x9000, scoped, tag = 'internal scratch']
  #allocation2 [shape = 'f32[40,10,32]{2,1,0:T(8,128)}', space=vmem, size = 0x50000, scoped, tag = 'scratch operand']
  #allocation3 [shape = 'f32[9,9,64]{2,1,0:T(8,128)}', space=vmem, size = 0x12000, scoped, tag = 'scratch operand']
  %s0 = inlined_call_operand.vmem [shape: f32[2,42,11,64], index: 0, kind: input, shape index: {}]
  %s1 = inlined_call_operand.vmem [shape: f32[4,64,32], index: 1, kind: input, shape index: {}]
  %s2 = inlined_call_operand.vmem [shape: f32[1,32], index: 2, kind: input, shape index: {}]
  %s3 = inlined_call_operand.vmem [shape: f32[16,32,64], index: 3, kind: input, shape index: {}]
  %s4 = inlined_call_operand.vmem [shape: f32[1,64], index: 4, kind: input, shape index: {}]
  %s5 = inlined_call_operand.vmem [shape: f32[9,64,64], index: 5, kind: input, shape index: {}]
  %s6 = inlined_call_operand.vmem [shape: f32[1,64], index: 6, kind: input, shape index: {}]
  %s7 = inlined_call_operand.vmem [shape: f32[2,7,7,64], index: 7, kind: output, shape index: {}]
  %s8 = sld [smem:[#allocation0]]
  $region82: #{policy_network.2} parent=0
    _
  %s10 = ssub.s32 1, %s8
  %s11 = scalar_select 0, %s10, %s8
  loop: start=0, step=1, limit=4
  $region2: #{policy_network.2} parent=0 // loop_pre_header
    _
  $region3: #{policy_network.2} parent=0 // loop_header
    %s13 = sphi 0, %s17
    %p14 = scmp.ge.s32.totalorder %s13, 4
    %s23 = sphi 0, %s25
    %s26 = sphi 0, %s23
    %s27 = sphi 0, %s26
    %s43 = sphi 0, %s27
    %s47 = sphi 0, %s47
    %s49 = sphi 0, %s47
    %s50 = sphi 0, %s49
    %s64 = sphi 0, %s50
    %s68 = sphi 0, %s68
    %s70 = sphi 0, %s68
    %s71 = sphi 0, %s70
    %s85 = sphi 0, %s71
    %s89 = sphi 0, %s89
    %s91 = sphi 0, %s89
    %s92 = sphi 0, %s91
    %s106 = sphi 0, %s92
    %s110 = sphi 0, %s110
    %s112 = sphi 0, %s110
    %s113 = sphi 0, %s112
    %s127 = sphi 0, %s113
    %s131 = sphi 0, %s131
    %s133 = sphi 0, %s131
    %s134 = sphi 0, %s133
    %s148 = sphi 0, %s134
    %s152 = sphi 0, %s152
    %s154 = sphi 0, %s152
    %s155 = sphi 0, %s154
    %s169 = sphi 0, %s155
    %s175 = sphi 0, %s177
    %s178 = sphi 0, %s175
    %s179 = sphi 0, %s178
    %s195 = sphi 0, %s179
  $region4: #{policy_network.2} parent=0 // loop_header_branch
    %16 = sbr.rel (%p14) target = $region8
  $region5: #{policy_network.2} parent=0 // loop_body
    %s18 = ssub.s32 %s13, 1
    %s19 = ssub.s32 %s13, 2
    %s20 = sadd.s32 %s13, 1
    %s21 = ssub.s32 %s13, %s20
    %p22 = scmp.eq.s32.totalorder %s21, 0
    %s24 = sadd.s32 %s23, 1
    %s25 = scalar_select %p22, %s23, %s24
    %p28 = pneg %p22
    %p29 = scmp.eq.s32.totalorder %s13, 1
    %p30 = por %p28, %p29
    %p31 = scmp.ne.s32.totalorder %s23, %s26
    %p32 = scmp.eq.s32.totalorder %s13, 0
    %p33 = por %p31, %p32
    %p34 = scmp.ne.s32.totalorder %s23, %s26
    %p35 = scmp.eq.s32.totalorder %s18, 1
    %p36 = por %p34, %p35
    %p37 = scmp.ne.s32.totalorder %s26, %s27
    %p38 = scmp.eq.s32.totalorder %s18, 0
    %p39 = por %p37, %p38
    %p40 = scmp.ne.s32.totalorder %s26, %s27
    %p41 = scmp.eq.s32.totalorder %s19, 1
    %p42 = por %p40, %p41
    %p44 = scmp.ne.s32.totalorder %s27, %s43
    %p45 = scmp.eq.s32.totalorder %s19, 0
    %p46 = por %p44, %p45
    %s48 = sadd.s32 %s47, 1
    %p51 = scmp.eq.s32.totalorder %s13, 1
    %p52 = scmp.ne.s32.totalorder %s47, %s49
    %p53 = scmp.eq.s32.totalorder %s13, 0
    %p54 = por %p52, %p53
    %p55 = scmp.ne.s32.totalorder %s47, %s49
    %p56 = scmp.eq.s32.totalorder %s18, 1
    %p57 = por %p55, %p56
    %p58 = scmp.ne.s32.totalorder %s49, %s50
    %p59 = scmp.eq.s32.totalorder %s18, 0
    %p60 = por %p58, %p59
    %p61 = scmp.ne.s32.totalorder %s49, %s50
    %p62 = scmp.eq.s32.totalorder %s19, 1
    %p63 = por %p61, %p62
    %p65 = scmp.ne.s32.totalorder %s50, %s64
    %p66 = scmp.eq.s32.totalorder %s19, 0
    %p67 = por %p65, %p66
    %s69 = sadd.s32 %s68, 1
    %p72 = scmp.eq.s32.totalorder %s13, 1
    %p73 = scmp.ne.s32.totalorder %s68, %s70
    %p74 = scmp.eq.s32.totalorder %s13, 0
    %p75 = por %p73, %p74
    %p76 = scmp.ne.s32.totalorder %s68, %s70
    %p77 = scmp.eq.s32.totalorder %s18, 1
    %p78 = por %p76, %p77
    %p79 = scmp.ne.s32.totalorder %s70, %s71
    %p80 = scmp.eq.s32.totalorder %s18, 0
    %p81 = por %p79, %p80
    %p82 = scmp.ne.s32.totalorder %s70, %s71
    %p83 = scmp.eq.s32.totalorder %s19, 1
    %p84 = por %p82, %p83
    %p86 = scmp.ne.s32.totalorder %s71, %s85
    %p87 = scmp.eq.s32.totalorder %s19, 0
    %p88 = por %p86, %p87
    %s90 = sadd.s32 %s89, 1
    %p93 = scmp.eq.s32.totalorder %s13, 1
    %p94 = scmp.ne.s32.totalorder %s89, %s91
    %p95 = scmp.eq.s32.totalorder %s13, 0
    %p96 = por %p94, %p95
    %p97 = scmp.ne.s32.totalorder %s89, %s91
    %p98 = scmp.eq.s32.totalorder %s18, 1
    %p99 = por %p97, %p98
    %p100 = scmp.ne.s32.totalorder %s91, %s92
    %p101 = scmp.eq.s32.totalorder %s18, 0
    %p102 = por %p100, %p101
    %p103 = scmp.ne.s32.totalorder %s91, %s92
    %p104 = scmp.eq.s32.totalorder %s19, 1
    %p105 = por %p103, %p104
    %p107 = scmp.ne.s32.totalorder %s92, %s106
    %p108 = scmp.eq.s32.totalorder %s19, 0
    %p109 = por %p107, %p108
    %s111 = sadd.s32 %s110, 1
    %p114 = scmp.eq.s32.totalorder %s13, 1
    %p115 = scmp.ne.s32.totalorder %s110, %s112
    %p116 = scmp.eq.s32.totalorder %s13, 0
    %p117 = por %p115, %p116
    %p118 = scmp.ne.s32.totalorder %s110, %s112
    %p119 = scmp.eq.s32.totalorder %s18, 1
    %p120 = por %p118, %p119
    %p121 = scmp.ne.s32.totalorder %s112, %s113
    %p122 = scmp.eq.s32.totalorder %s18, 0
    %p123 = por %p121, %p122
    %p124 = scmp.ne.s32.totalorder %s112, %s113
    %p125 = scmp.eq.s32.totalorder %s19, 1
    %p126 = por %p124, %p125
    %p128 = scmp.ne.s32.totalorder %s113, %s127
    %p129 = scmp.eq.s32.totalorder %s19, 0
    %p130 = por %p128, %p129
    %s132 = sadd.s32 %s131, 1
    %p135 = scmp.eq.s32.totalorder %s13, 1
    %p136 = scmp.ne.s32.totalorder %s131, %s133
    %p137 = scmp.eq.s32.totalorder %s13, 0
    %p138 = por %p136, %p137
    %p139 = scmp.ne.s32.totalorder %s131, %s133
    %p140 = scmp.eq.s32.totalorder %s18, 1
    %p141 = por %p139, %p140
    %p142 = scmp.ne.s32.totalorder %s133, %s134
    %p143 = scmp.eq.s32.totalorder %s18, 0
    %p144 = por %p142, %p143
    %p145 = scmp.ne.s32.totalorder %s133, %s134
    %p146 = scmp.eq.s32.totalorder %s19, 1
    %p147 = por %p145, %p146
    %p149 = scmp.ne.s32.totalorder %s134, %s148
    %p150 = scmp.eq.s32.totalorder %s19, 0
    %p151 = por %p149, %p150
    %s153 = sadd.s32 %s152, 1
    %p156 = scmp.eq.s32.totalorder %s13, 1
    %p157 = scmp.ne.s32.totalorder %s152, %s154
    %p158 = scmp.eq.s32.totalorder %s13, 0
    %p159 = por %p157, %p158
    %p160 = scmp.ne.s32.totalorder %s152, %s154
    %p161 = scmp.eq.s32.totalorder %s18, 1
    %p162 = por %p160, %p161
    %p163 = scmp.ne.s32.totalorder %s154, %s155
    %p164 = scmp.eq.s32.totalorder %s18, 0
    %p165 = por %p163, %p164
    %p166 = scmp.ne.s32.totalorder %s154, %s155
    %p167 = scmp.eq.s32.totalorder %s19, 1
    %p168 = por %p166, %p167
    %p170 = scmp.ne.s32.totalorder %s155, %s169
    %p171 = scmp.eq.s32.totalorder %s19, 0
    %p172 = por %p170, %p171
    %s173 = ssub.s32 %s13, %s20
    %p174 = scmp.eq.s32.totalorder %s173, 0
    %s176 = sadd.s32 %s175, 1
    %s177 = scalar_select %p174, %s175, %s176
    %p180 = pneg %p174
    %p181 = scmp.eq.s32.totalorder %s13, 1
    %p182 = por %p180, %p181
    %p183 = scmp.ne.s32.totalorder %s175, %s178
    %p184 = scmp.eq.s32.totalorder %s13, 0
    %p185 = por %p183, %p184
    %p186 = scmp.ne.s32.totalorder %s175, %s178
    %p187 = scmp.eq.s32.totalorder %s18, 1
    %p188 = por %p186, %p187
    %p189 = scmp.ne.s32.totalorder %s178, %s179
    %p190 = scmp.eq.s32.totalorder %s18, 0
    %p191 = por %p189, %p190
    %p192 = scmp.ne.s32.totalorder %s178, %s179
    %p193 = scmp.eq.s32.totalorder %s19, 1
    %p194 = por %p192, %p193
    %p196 = scmp.ne.s32.totalorder %s179, %s195
    %p197 = scmp.eq.s32.totalorder %s19, 0
    %p198 = por %p196, %p197
    %p199 = scmp.le.s32.totalorder 1, %s13
    %p200 = scmp.lt.s32.totalorder %s13, 3
    %p201 = pnand %p199, %p200
    %p202 = pneg %p201
    // Predicated region
    $region9: #{policy_network.2} parent=5 // pred_check
      _
    $region10: #{policy_network.2} parent=5 // pred_check_branch
      %204 = sbr.rel (%p201) target = $region12
    $region11: #{policy_network.2} parent=5 // pred_region
      %s205 = ssub.s32 %s13, 1
      // Predicated region
      $region13: #{policy_network.2} parent=11 // pred_check
        %p206 = pneg %p60
      $region14: #{policy_network.2} parent=11 // pred_check_branch
        %208 = sbr.rel (%p206) target = $region16
      $region15: #{policy_network.2} parent=11 // pred_region
        _
      $region16: #{policy_network.2} parent=11 // pred_fallthru
        _
      // Predicated region
      $region17: #{policy_network.2} parent=11 // pred_check
        %p209 = pneg %p81
      $region18: #{policy_network.2} parent=11 // pred_check_branch
        %211 = sbr.rel (%p209) target = $region20
      $region19: #{policy_network.2} parent=11 // pred_region
        _
      $region20: #{policy_network.2} parent=11 // pred_fallthru
        _
      // Predicated region
      $region21: #{policy_network.2} parent=11 // pred_check
        %p212 = pneg %p102
      $region22: #{policy_network.2} parent=11 // pred_check_branch
        %214 = sbr.rel (%p212) target = $region24
      $region23: #{policy_network.2} parent=11 // pred_region
        _
      $region24: #{policy_network.2} parent=11 // pred_fallthru
        _
      // Predicated region
      $region25: #{policy_network.2} parent=11 // pred_check
        %p215 = pneg %p123
      $region26: #{policy_network.2} parent=11 // pred_check_branch
        %217 = sbr.rel (%p215) target = $region28
      $region27: #{policy_network.2} parent=11 // pred_region
        _
      $region28: #{policy_network.2} parent=11 // pred_fallthru
        _
      // Predicated region
      $region29: #{policy_network.2} parent=11 // pred_check
        %p218 = pneg %p144
      $region30: #{policy_network.2} parent=11 // pred_check_branch
        %220 = sbr.rel (%p218) target = $region32
      $region31: #{policy_network.2} parent=11 // pred_region
        _
      $region32: #{policy_network.2} parent=11 // pred_fallthru
        _
      // Predicated region
      $region33: #{policy_network.2} parent=11 // pred_check
        %p221 = pneg %p165
      $region34: #{policy_network.2} parent=11 // pred_check_branch
        %223 = sbr.rel (%p221) target = $region36
      $region35: #{policy_network.2} parent=11 // pred_region
        _
      $region36: #{policy_network.2} parent=11 // pred_fallthru
        _
    $region12: #{policy_network.2} parent=5 // pred_fallthru
      _
    %p224 = scmp.lt.s32.totalorder %s13, 2
    // Predicated region
    $region37: #{policy_network.2} parent=5 // pred_check
      %p225 = pneg %p224
    $region38: #{policy_network.2} parent=5 // pred_check_branch
      %227 = sbr.rel (%p225) target = $region40
    $region39: #{policy_network.2} parent=5 // pred_region
      // Predicated region
      $region41: #{policy_network.2} parent=39 // pred_check
        %p228 = pneg %p33
      $region42: #{policy_network.2} parent=39 // pred_check_branch
        %230 = sbr.rel (%p228) target = $region44
      $region43: #{policy_network.2} parent=39 // pred_region
        %p231 = scmp.lt.s32.totalorder %s13, 1
        %s232 = scalar_select %p231, %s13, 1
        %s233 = smul.addr %s232, 84
        %s234 = smul.addr %s233, 8
        %s235 = scalar_lea.vmem %s0, %s234
      $region44: #{policy_network.2} parent=39 // pred_fallthru
        _
    $region40: #{policy_network.2} parent=5 // pred_fallthru
      _
    %p236 = scmp.le.s32.totalorder 1, %s13
    %p237 = scmp.lt.s32.totalorder %s13, 3
    %p238 = pnand %p236, %p237
    %p239 = pneg %p238
    // Predicated region
    $region45: #{policy_network.2} parent=5 // pred_check
      _
    $region46: #{policy_network.2} parent=5 // pred_check_branch
      %241 = sbr.rel (%p238) target = $region48
    $region47: #{policy_network.2} parent=5 // pred_region
      %s242 = ssub.s32 %s13, 1
      %p243 = scmp.lt.s32.totalorder %s18, 1
      %s244 = scalar_select %p243, %s18, 1
      %s245 = smul.addr %s244, 84
      %s246 = smul.addr %s245, 8
      %s247 = scalar_lea.vmem %s0, %s246
      %p248 = pneg %p39
      %p249 = pneg %p36
      %p250 = pneg %p60
      %p251 = pneg %p57
      %p252 = pneg %p81
      %p253 = pneg %p78
      %p254 = pneg %p102
      %p255 = pneg %p99
      %p256 = pneg %p123
      %p257 = pneg %p120
      %p258 = pneg %p144
      %p259 = pneg %p141
      %p260 = pneg %p165
      %p261 = pneg %p162
      %p262 = pneg %p191
      %p263 = pneg %p188
      %p264 = scmp.lt.s32.totalorder %s18, 1
      %s265 = scalar_select %p264, %s18, 1
      %s266 = smul.addr %s265, 7
      %s267 = smul.addr %s266, 8
      %s268 = scalar_lea.vmem %s7, %s267
      %p269 = scmp.lt.s32.totalorder %s18, 1
      %s270 = scalar_select %p269, %s18, 1
      %s271 = smul.addr %s270, 84
      %s272 = smul.addr %s271, 8
      %s273 = scalar_lea.vmem %s0, %s272
      %p274 = scmp.lt.s32.totalorder %s18, 1
      %s275 = scalar_select %p274, %s18, 1
      %s276 = smul.addr %s275, 7
      %s277 = smul.addr %s276, 8
      %s278 = scalar_lea.vmem %s7, %s277
      loop: start=0, step=1, limit=20
      $region49: #{policy_network.2} parent=47 // loop_pre_header
        _
      $region50: #{policy_network.2} parent=47 // loop_header
        %s280 = sphi 0, %s284
        %p281 = scmp.ge.s32.totalorder %s280, 20
      $region51: #{policy_network.2} parent=47 // loop_header_branch
        %283 = sbr.rel (%p281) target = $region55
      $region52: #{policy_network.2} parent=47 // loop_body
        %s285 = smul.u32 %s280, 16
        %s286 = scalar_lea.vmem %s273, %s285
        %v287 = vld [vmem:[%s286] sm:$0xff]
        %v288 = vld [vmem:[%s286 + $0x8] sm:$0x3]
        %v289 = vld [vmem:[%s1] sm:$0xff]
        %v290 = vld [vmem:[%s1 + $0x8] sm:$0xff]
        %v291 = vld [vmem:[%s1 + $0x10] sm:$0xff]
        %v292 = vld [vmem:[%s1 + $0x18] sm:$0xff]
        %v293 = vld [vmem:[%s1 + $0x20] sm:$0xff]
        %v294 = vld [vmem:[%s1 + $0x28] sm:$0xff]
        %v295 = vld [vmem:[%s1 + $0x30] sm:$0xff]
        %v296 = vld [vmem:[%s1 + $0x38] sm:$0xff]
        %s297 = sadd.s32 %s280, 21
        %s298 = smul.u32 %s297, 16
        %s299 = scalar_lea.vmem %s273, %s298
        %v300 = vld [vmem:[%s299] sm:$0xff]
        %v301 = vld [vmem:[%s299 + $0x8] sm:$0x3]
        %s302 = scalar_lea.vmem %s1, 64
        %v303 = vld [vmem:[%s302] sm:$0xff]
        %v304 = vld [vmem:[%s302 + $0x8] sm:$0xff]
        %v305 = vld [vmem:[%s302 + $0x10] sm:$0xff]
        %v306 = vld [vmem:[%s302 + $0x18] sm:$0xff]
        %v307 = vld [vmem:[%s302 + $0x20] sm:$0xff]
        %v308 = vld [vmem:[%s302 + $0x28] sm:$0xff]
        %v309 = vld [vmem:[%s302 + $0x30] sm:$0xff]
        %v310 = vld [vmem:[%s302 + $0x38] sm:$0xff]
        %vm311 = vcmask 523264
        %v313 = vsel %vm311, %v300, 0
        %v316 = vsel %vm311, %v301, 0
        %318 = vmatpush.msra.mxu0 0.0
        %319 = vmatpush.msra.mxu0 0.0
        %320 = vmatpush.msra.mxu0 0.0
        %321 = vmatpush.msra.mxu0 0.0
        %322 = vmatpush.msra.mxu0 0.0
        %323 = vmatpush.msra.mxu0 0.0
        %324 = vmatpush.msra.mxu0 0.0
        %325 = vmatpush.msra.mxu0 0.0
        %326 = vmatpush.msra.mxu0 %v310
        %327 = vmatpush.msra.mxu0 %v309
        %328 = vmatpush.msra.mxu0 %v308
        %329 = vmatpush.msra.mxu0 %v307
        %330 = vmatpush.msra.mxu0 %v306
        %331 = vmatpush.msra.mxu0 %v305
        %332 = vmatpush.msra.mxu0 %v304
        %333 = vmatpush.msra.mxu0 %v303
        %334 = vmatmul.f32.gmra.mxu0 %v313
        %v335 = vpop.f32.mrf.mxu0
        %v336 = vadd.f32 0.0, %v335
        %337 = vmatmul.f32.gmra.mxu0 %v316
        %v338 = vpop.f32.mrf.mxu0
        %v339 = vadd.f32 0.0, %v338
        %340 = vdwg.mxu0
        %v342 = vsel %vm311, %v287, 0
        %v345 = vsel %vm311, %v288, 0
        %347 = vmatpush.msra.mxu0 0.0
        %348 = vmatpush.msra.mxu0 0.0
        %349 = vmatpush.msra.mxu0 0.0
        %350 = vmatpush.msra.mxu0 0.0
        %351 = vmatpush.msra.mxu0 0.0
        %352 = vmatpush.msra.mxu0 0.0
        %353 = vmatpush.msra.mxu0 0.0
        %354 = vmatpush.msra.mxu0 0.0
        %355 = vmatpush.msra.mxu0 %v296
        %356 = vmatpush.msra.mxu0 %v295
        %357 = vmatpush.msra.mxu0 %v294
        %358 = vmatpush.msra.mxu0 %v293
        %359 = vmatpush.msra.mxu0 %v292
        %360 = vmatpush.msra.mxu0 %v291
        %361 = vmatpush.msra.mxu0 %v290
        %362 = vmatpush.msra.mxu0 %v289
        %363 = vmatmul.f32.gmra.mxu0 %v342
        %v364 = vpop.f32.mrf.mxu0
        %v365 = vadd.f32 %v336, %v364
        %366 = vmatmul.f32.gmra.mxu0 %v345
        %v367 = vpop.f32.mrf.mxu0
        %v368 = vadd.f32 %v339, %v367
        %369 = vdwg.mxu0
        %s370 = sadd.s32 %s280, 1
        %s371 = smul.u32 %s370, 16
        %s372 = scalar_lea.vmem %s273, %s371
        %v373 = vld [vmem:[%s372] sm:$0xff]
        %v374 = vld [vmem:[%s372 + $0x8] sm:$0x3]
        %s375 = scalar_lea.vmem %s1, 128
        %v376 = vld [vmem:[%s375] sm:$0xff]
        %v377 = vld [vmem:[%s375 + $0x8] sm:$0xff]
        %v378 = vld [vmem:[%s375 + $0x10] sm:$0xff]
        %v379 = vld [vmem:[%s375 + $0x18] sm:$0xff]
        %v380 = vld [vmem:[%s375 + $0x20] sm:$0xff]
        %v381 = vld [vmem:[%s375 + $0x28] sm:$0xff]
        %v382 = vld [vmem:[%s375 + $0x30] sm:$0xff]
        %v383 = vld [vmem:[%s375 + $0x38] sm:$0xff]
        %v385 = vsel %vm311, %v373, 0
        %v388 = vsel %vm311, %v374, 0
        %390 = vmatpush.msra.mxu0 0.0
        %391 = vmatpush.msra.mxu0 0.0
        %392 = vmatpush.msra.mxu0 0.0
        %393 = vmatpush.msra.mxu0 0.0
        %394 = vmatpush.msra.mxu0 0.0
        %395 = vmatpush.msra.mxu0 0.0
        %396 = vmatpush.msra.mxu0 0.0
        %397 = vmatpush.msra.mxu0 0.0
        %398 = vmatpush.msra.mxu0 %v383
        %399 = vmatpush.msra.mxu0 %v382
        %400 = vmatpush.msra.mxu0 %v381
        %401 = vmatpush.msra.mxu0 %v380
        %402 = vmatpush.msra.mxu0 %v379
        %403 = vmatpush.msra.mxu0 %v378
        %404 = vmatpush.msra.mxu0 %v377
        %405 = vmatpush.msra.mxu0 %v376
        %406 = vmatmul.f32.gmra.mxu0 %v385
        %v407 = vpop.f32.mrf.mxu0
        %v408 = vadd.f32 0.0, %v407
        %409 = vmatmul.f32.gmra.mxu0 %v388
        %v410 = vpop.f32.mrf.mxu0
        %v411 = vadd.f32 0.0, %v410
        %412 = vdwg.mxu0
        %v413 = vadd.f32 %v365, %v408
        %v414 = vadd.f32 %v368, %v411
        %s415 = sadd.s32 %s280, 22
        %s416 = smul.u32 %s415, 16
        %s417 = scalar_lea.vmem %s273, %s416
        %v418 = vld [vmem:[%s417] sm:$0xff]
        %v419 = vld [vmem:[%s417 + $0x8] sm:$0x3]
        %s420 = scalar_lea.vmem %s1, 192
        %v421 = vld [vmem:[%s420] sm:$0xff]
        %v422 = vld [vmem:[%s420 + $0x8] sm:$0xff]
        %v423 = vld [vmem:[%s420 + $0x10] sm:$0xff]
        %v424 = vld [vmem:[%s420 + $0x18] sm:$0xff]
        %v425 = vld [vmem:[%s420 + $0x20] sm:$0xff]
        %v426 = vld [vmem:[%s420 + $0x28] sm:$0xff]
        %v427 = vld [vmem:[%s420 + $0x30] sm:$0xff]
        %v428 = vld [vmem:[%s420 + $0x38] sm:$0xff]
        %v430 = vsel %vm311, %v418, 0
        %v433 = vsel %vm311, %v419, 0
        %435 = vmatpush.msra.mxu0 0.0
        %436 = vmatpush.msra.mxu0 0.0
        %437 = vmatpush.msra.mxu0 0.0
        %438 = vmatpush.msra.mxu0 0.0
        %439 = vmatpush.msra.mxu0 0.0
        %440 = vmatpush.msra.mxu0 0.0
        %441 = vmatpush.msra.mxu0 0.0
        %442 = vmatpush.msra.mxu0 0.0
        %443 = vmatpush.msra.mxu0 %v428
        %444 = vmatpush.msra.mxu0 %v427
        %445 = vmatpush.msra.mxu0 %v426
        %446 = vmatpush.msra.mxu0 %v425
        %447 = vmatpush.msra.mxu0 %v424
        %448 = vmatpush.msra.mxu0 %v423
        %449 = vmatpush.msra.mxu0 %v422
        %450 = vmatpush.msra.mxu0 %v421
        %451 = vmatmul.f32.gmra.mxu0 %v430
        %v452 = vpop.f32.mrf.mxu0
        %v453 = vadd.f32 0.0, %v452
        %454 = vmatmul.f32.gmra.mxu0 %v433
        %v455 = vpop.f32.mrf.mxu0
        %v456 = vadd.f32 0.0, %v455
        %457 = vdwg.mxu0
        %v458 = vadd.f32 %v413, %v453
        %v459 = vadd.f32 %v414, %v456
        %v460 = vld [vmem:[%s2] sm:$0x1]
        %v462 = vperm.slane %v460, 0
        %v464 = vadd.f32 %v458, %v462
        %v465 = vadd.f32 %v459, %v462
        %v466 = vmax.f32 %v464, 0.0
        %v467 = vmax.f32 %v465, 0.0
        %s468 = scalar_lea.vmem [#allocation2], %s285
        %vm469 = vcmask 261120
        %470 = vst.msk [vmem:[%s468] sm:$0xff] %vm469, %v466
        %vm471 = vcmask 254976
        %472 = vst.msk [vmem:[%s468 + $0x8] sm:$0x3] %vm471, %v467
        %v473 = vld [vmem:[%s299] sm:$0xff]
        %v474 = vld [vmem:[%s299 + $0x8] sm:$0x3]
        %v475 = vld [vmem:[%s1] sm:$0xff]
        %v476 = vld [vmem:[%s1 + $0x8] sm:$0xff]
        %v477 = vld [vmem:[%s1 + $0x10] sm:$0xff]
        %v478 = vld [vmem:[%s1 + $0x18] sm:$0xff]
        %v479 = vld [vmem:[%s1 + $0x20] sm:$0xff]
        %v480 = vld [vmem:[%s1 + $0x28] sm:$0xff]
        %v481 = vld [vmem:[%s1 + $0x30] sm:$0xff]
        %v482 = vld [vmem:[%s1 + $0x38] sm:$0xff]
        %v483 = vld [vmem:[%s286 + $0x1] sm:$0xff]
        %v484 = vld [vmem:[%s286 + $0x9] sm:$0x3]
        %v485 = vld [vmem:[%s302] sm:$0xff]
        %v486 = vld [vmem:[%s302 + $0x8] sm:$0xff]
        %v487 = vld [vmem:[%s302 + $0x10] sm:$0xff]
        %v488 = vld [vmem:[%s302 + $0x18] sm:$0xff]
        %v489 = vld [vmem:[%s302 + $0x20] sm:$0xff]
        %v490 = vld [vmem:[%s302 + $0x28] sm:$0xff]
        %v491 = vld [vmem:[%s302 + $0x30] sm:$0xff]
        %v492 = vld [vmem:[%s302 + $0x38] sm:$0xff]
        %v494 = vsel %vm311, %v483, 0
        %v497 = vsel %vm311, %v484, 0
        %499 = vmatpush.msra.mxu0 0.0
        %500 = vmatpush.msra.mxu0 0.0
        %501 = vmatpush.msra.mxu0 0.0
        %502 = vmatpush.msra.mxu0 0.0
        %503 = vmatpush.msra.mxu0 0.0
        %504 = vmatpush.msra.mxu0 0.0
        %505 = vmatpush.msra.mxu0 0.0
        %506 = vmatpush.msra.mxu0 0.0
        %507 = vmatpush.msra.mxu0 %v492
        %508 = vmatpush.msra.mxu0 %v491
        %509 = vmatpush.msra.mxu0 %v490
        %510 = vmatpush.msra.mxu0 %v489
        %511 = vmatpush.msra.mxu0 %v488
        %512 = vmatpush.msra.mxu0 %v487
        %513 = vmatpush.msra.mxu0 %v486
        %514 = vmatpush.msra.mxu0 %v485
        %515 = vmatmul.f32.gmra.mxu0 %v494
        %v516 = vpop.f32.mrf.mxu0
        %v517 = vadd.f32 0.0, %v516
        %518 = vmatmul.f32.gmra.mxu0 %v497
        %v519 = vpop.f32.mrf.mxu0
        %v520 = vadd.f32 0.0, %v519
        %521 = vdwg.mxu0
        %v523 = vsel %vm311, %v473, 0
        %v526 = vsel %vm311, %v474, 0
        %528 = vmatpush.msra.mxu0 0.0
        %529 = vmatpush.msra.mxu0 0.0
        %530 = vmatpush.msra.mxu0 0.0
        %531 = vmatpush.msra.mxu0 0.0
        %532 = vmatpush.msra.mxu0 0.0
        %533 = vmatpush.msra.mxu0 0.0
        %534 = vmatpush.msra.mxu0 0.0
        %535 = vmatpush.msra.mxu0 0.0
        %536 = vmatpush.msra.mxu0 %v482
        %537 = vmatpush.msra.mxu0 %v481
        %538 = vmatpush.msra.mxu0 %v480
        %539 = vmatpush.msra.mxu0 %v479
        %540 = vmatpush.msra.mxu0 %v478
        %541 = vmatpush.msra.mxu0 %v477
        %542 = vmatpush.msra.mxu0 %v476
        %543 = vmatpush.msra.mxu0 %v475
        %544 = vmatmul.f32.gmra.mxu0 %v523
        %v545 = vpop.f32.mrf.mxu0
        %v546 = vadd.f32 %v517, %v545
        %547 = vmatmul.f32.gmra.mxu0 %v526
        %v548 = vpop.f32.mrf.mxu0
        %v549 = vadd.f32 %v520, %v548
        %550 = vdwg.mxu0
        %v551 = vld [vmem:[%s417] sm:$0xff]
        %v552 = vld [vmem:[%s417 + $0x8] sm:$0x3]
        %v553 = vld [vmem:[%s375] sm:$0xff]
        %v554 = vld [vmem:[%s375 + $0x8] sm:$0xff]
        %v555 = vld [vmem:[%s375 + $0x10] sm:$0xff]
        %v556 = vld [vmem:[%s375 + $0x18] sm:$0xff]
        %v557 = vld [vmem:[%s375 + $0x20] sm:$0xff]
        %v558 = vld [vmem:[%s375 + $0x28] sm:$0xff]
        %v559 = vld [vmem:[%s375 + $0x30] sm:$0xff]
        %v560 = vld [vmem:[%s375 + $0x38] sm:$0xff]
        %v562 = vsel %vm311, %v551, 0
        %v565 = vsel %vm311, %v552, 0
        %567 = vmatpush.msra.mxu0 0.0
        %568 = vmatpush.msra.mxu0 0.0
        %569 = vmatpush.msra.mxu0 0.0
        %570 = vmatpush.msra.mxu0 0.0
        %571 = vmatpush.msra.mxu0 0.0
        %572 = vmatpush.msra.mxu0 0.0
        %573 = vmatpush.msra.mxu0 0.0
        %574 = vmatpush.msra.mxu0 0.0
        %575 = vmatpush.msra.mxu0 %v560
        %576 = vmatpush.msra.mxu0 %v559
        %577 = vmatpush.msra.mxu0 %v558
        %578 = vmatpush.msra.mxu0 %v557
        %579 = vmatpush.msra.mxu0 %v556
        %580 = vmatpush.msra.mxu0 %v555
        %581 = vmatpush.msra.mxu0 %v554
        %582 = vmatpush.msra.mxu0 %v553
        %583 = vmatmul.f32.gmra.mxu0 %v562
        %v584 = vpop.f32.mrf.mxu0
        %v585 = vadd.f32 0.0, %v584
        %586 = vmatmul.f32.gmra.mxu0 %v565
        %v587 = vpop.f32.mrf.mxu0
        %v588 = vadd.f32 0.0, %v587
        %589 = vdwg.mxu0
        %v590 = vadd.f32 %v546, %v585
        %v591 = vadd.f32 %v549, %v588
        %v592 = vld [vmem:[%s372 + $0x1] sm:$0xff]
        %v593 = vld [vmem:[%s372 + $0x9] sm:$0x3]
        %v594 = vld [vmem:[%s420] sm:$0xff]
        %v595 = vld [vmem:[%s420 + $0x8] sm:$0xff]
        %v596 = vld [vmem:[%s420 + $0x10] sm:$0xff]
        %v597 = vld [vmem:[%s420 + $0x18] sm:$0xff]
        %v598 = vld [vmem:[%s420 + $0x20] sm:$0xff]
        %v599 = vld [vmem:[%s420 + $0x28] sm:$0xff]
        %v600 = vld [vmem:[%s420 + $0x30] sm:$0xff]
        %v601 = vld [vmem:[%s420 + $0x38] sm:$0xff]
        %v603 = vsel %vm311, %v592, 0
        %v606 = vsel %vm311, %v593, 0
        %608 = vmatpush.msra.mxu0 0.0
        %609 = vmatpush.msra.mxu0 0.0
        %610 = vmatpush.msra.mxu0 0.0
        %611 = vmatpush.msra.mxu0 0.0
        %612 = vmatpush.msra.mxu0 0.0
        %613 = vmatpush.msra.mxu0 0.0
        %614 = vmatpush.msra.mxu0 0.0
        %615 = vmatpush.msra.mxu0 0.0
        %616 = vmatpush.msra.mxu0 %v601
        %617 = vmatpush.msra.mxu0 %v600
        %618 = vmatpush.msra.mxu0 %v599
        %619 = vmatpush.msra.mxu0 %v598
        %620 = vmatpush.msra.mxu0 %v597
        %621 = vmatpush.msra.mxu0 %v596
        %622 = vmatpush.msra.mxu0 %v595
        %623 = vmatpush.msra.mxu0 %v594
        %624 = vmatmul.f32.gmra.mxu0 %v603
        %v625 = vpop.f32.mrf.mxu0
        %v626 = vadd.f32 0.0, %v625
        %627 = vmatmul.f32.gmra.mxu0 %v606
        %v628 = vpop.f32.mrf.mxu0
        %v629 = vadd.f32 0.0, %v628
        %630 = vdwg.mxu0
        %v631 = vadd.f32 %v590, %v626
        %v632 = vadd.f32 %v591, %v629
        %v633 = vld [vmem:[%s2] sm:$0x1]
        %v635 = vperm.slane %v633, 0
        %v637 = vadd.f32 %v631, %v635
        %v638 = vadd.f32 %v632, %v635
        %v639 = vmax.f32 %v637, 0.0
        %v640 = vmax.f32 %v638, 0.0
        %s641 = sadd.s32 %s280, 20
        %s642 = smul.u32 %s641, 16
        %s643 = scalar_lea.vmem [#allocation2], %s642
        %644 = vst.msk [vmem:[%s643] sm:$0xff] %vm469, %v639
        %645 = vst.msk [vmem:[%s643 + $0x8] sm:$0x3] %vm471, %v640
      $region53: #{policy_network.2} parent=47 // loop_footer
        %s284 = sadd.s32 1, %s280
      $region54: #{policy_network.2} parent=47 // loop_footer_branch
        %279 = sbr.rel target = $region50
      $region55: #{policy_network.2} parent=47 // loop_exit
        _
      loop: start=0, step=1, limit=9
      $region56: #{policy_network.2} parent=47 // loop_pre_header
        _
      $region57: #{policy_network.2} parent=47 // loop_header
        %s647 = sphi 0, %s651
        %p648 = scmp.ge.s32.totalorder %s647, 9
      $region58: #{policy_network.2} parent=47 // loop_header_branch
        %650 = sbr.rel (%p648) target = $region62
      $region59: #{policy_network.2} parent=47 // loop_body
        %s652 = smul.u32 %s647, 2
        %s653 = smul.u32 %s652, 16
        %s654 = scalar_lea.vmem [#allocation2], %s653
        %v655 = vld [vmem:[%s654] sm:$0xff]
        %v656 = vld [vmem:[%s654 + $0x8] sm:$0x1]
        %v657 = vld [vmem:[%s3] sm:$0xff]
        %v658 = vld [vmem:[%s3 + $0x8] sm:$0xff]
        %v659 = vld [vmem:[%s3 + $0x10] sm:$0xff]
        %v660 = vld [vmem:[%s3 + $0x18] sm:$0xff]
        %s661 = sadd.s32 %s652, 20
        %s662 = smul.u32 %s661, 16
        %s663 = scalar_lea.vmem [#allocation2], %s662
        %v664 = vld [vmem:[%s663] sm:$0xff]
        %v665 = vld [vmem:[%s663 + $0x8] sm:$0x1]
        %s666 = scalar_lea.vmem %s3, 32
        %v667 = vld [vmem:[%s666] sm:$0xff]
        %v668 = vld [vmem:[%s666 + $0x8] sm:$0xff]
        %v669 = vld [vmem:[%s666 + $0x10] sm:$0xff]
        %v670 = vld [vmem:[%s666 + $0x18] sm:$0xff]
        %vm671 = vcmask 261120
        %v673 = vsel %vm671, %v664, 0
        %v676 = vsel %vm671, %v665, 0
        %678 = vmatpush.msra.mxu0 0.0
        %679 = vmatpush.msra.mxu0 0.0
        %680 = vmatpush.msra.mxu0 0.0
        %681 = vmatpush.msra.mxu0 0.0
        %682 = vmatpush.msra.mxu0 0.0
        %683 = vmatpush.msra.mxu0 0.0
        %684 = vmatpush.msra.mxu0 0.0
        %685 = vmatpush.msra.mxu0 0.0
        %686 = vmatpush.msra.mxu0 0.0
        %687 = vmatpush.msra.mxu0 0.0
        %688 = vmatpush.msra.mxu0 0.0
        %689 = vmatpush.msra.mxu0 0.0
        %690 = vmatpush.msra.mxu0 %v670
        %691 = vmatpush.msra.mxu0 %v669
        %692 = vmatpush.msra.mxu0 %v668
        %693 = vmatpush.msra.mxu0 %v667
        %694 = vmatmul.f32.gmra.mxu0 %v673
        %v695 = vpop.f32.mrf.mxu0
        %v696 = vadd.f32 0.0, %v695
        %697 = vmatmul.f32.gmra.mxu0 %v676
        %v698 = vpop.f32.mrf.mxu0
        %v699 = vadd.f32 0.0, %v698
        %700 = vdwg.mxu0
        %v702 = vsel %vm671, %v655, 0
        %v705 = vsel %vm671, %v656, 0
        %707 = vmatpush.msra.mxu0 0.0
        %708 = vmatpush.msra.mxu0 0.0
        %709 = vmatpush.msra.mxu0 0.0
        %710 = vmatpush.msra.mxu0 0.0
        %711 = vmatpush.msra.mxu0 0.0
        %712 = vmatpush.msra.mxu0 0.0
        %713 = vmatpush.msra.mxu0 0.0
        %714 = vmatpush.msra.mxu0 0.0
        %715 = vmatpush.msra.mxu0 0.0
        %716 = vmatpush.msra.mxu0 0.0
        %717 = vmatpush.msra.mxu0 0.0
        %718 = vmatpush.msra.mxu0 0.0
        %719 = vmatpush.msra.mxu0 %v660
        %720 = vmatpush.msra.mxu0 %v659
        %721 = vmatpush.msra.mxu0 %v658
        %722 = vmatpush.msra.mxu0 %v657
        %723 = vmatmul.f32.gmra.mxu0 %v702
        %v724 = vpop.f32.mrf.mxu0
        %v725 = vadd.f32 %v696, %v724
        %726 = vmatmul.f32.gmra.mxu0 %v705
        %v727 = vpop.f32.mrf.mxu0
        %v728 = vadd.f32 %v699, %v727
        %729 = vdwg.mxu0
        %v730 = vld [vmem:[%s654 + $0x1] sm:$0xff]
        %v731 = vld [vmem:[%s654 + $0x9] sm:$0x1]
        %s732 = scalar_lea.vmem %s3, 64
        %v733 = vld [vmem:[%s732] sm:$0xff]
        %v734 = vld [vmem:[%s732 + $0x8] sm:$0xff]
        %v735 = vld [vmem:[%s732 + $0x10] sm:$0xff]
        %v736 = vld [vmem:[%s732 + $0x18] sm:$0xff]
        %v738 = vsel %vm671, %v730, 0
        %v741 = vsel %vm671, %v731, 0
        %743 = vmatpush.msra.mxu0 0.0
        %744 = vmatpush.msra.mxu0 0.0
        %745 = vmatpush.msra.mxu0 0.0
        %746 = vmatpush.msra.mxu0 0.0
        %747 = vmatpush.msra.mxu0 0.0
        %748 = vmatpush.msra.mxu0 0.0
        %749 = vmatpush.msra.mxu0 0.0
        %750 = vmatpush.msra.mxu0 0.0
        %751 = vmatpush.msra.mxu0 0.0
        %752 = vmatpush.msra.mxu0 0.0
        %753 = vmatpush.msra.mxu0 0.0
        %754 = vmatpush.msra.mxu0 0.0
        %755 = vmatpush.msra.mxu0 %v736
        %756 = vmatpush.msra.mxu0 %v735
        %757 = vmatpush.msra.mxu0 %v734
        %758 = vmatpush.msra.mxu0 %v733
        %759 = vmatmul.f32.gmra.mxu0 %v738
        %v760 = vpop.f32.mrf.mxu0
        %v761 = vadd.f32 0.0, %v760
        %762 = vmatmul.f32.gmra.mxu0 %v741
        %v763 = vpop.f32.mrf.mxu0
        %v764 = vadd.f32 0.0, %v763
        %765 = vdwg.mxu0
        %v766 = vadd.f32 %v725, %v761
        %v767 = vadd.f32 %v728, %v764
        %v768 = vld [vmem:[%s663 + $0x1] sm:$0xff]
        %v769 = vld [vmem:[%s663 + $0x9] sm:$0x1]
        %s770 = scalar_lea.vmem %s3, 96
        %v771 = vld [vmem:[%s770] sm:$0xff]
        %v772 = vld [vmem:[%s770 + $0x8] sm:$0xff]
        %v773 = vld [vmem:[%s770 + $0x10] sm:$0xff]
        %v774 = vld [vmem:[%s770 + $0x18] sm:$0xff]
        %v776 = vsel %vm671, %v768, 0
        %v779 = vsel %vm671, %v769, 0
        %781 = vmatpush.msra.mxu0 0.0
        %782 = vmatpush.msra.mxu0 0.0
        %783 = vmatpush.msra.mxu0 0.0
        %784 = vmatpush.msra.mxu0 0.0
        %785 = vmatpush.msra.mxu0 0.0
        %786 = vmatpush.msra.mxu0 0.0
        %787 = vmatpush.msra.mxu0 0.0
        %788 = vmatpush.msra.mxu0 0.0
        %789 = vmatpush.msra.mxu0 0.0
        %790 = vmatpush.msra.mxu0 0.0
        %791 = vmatpush.msra.mxu0 0.0
        %792 = vmatpush.msra.mxu0 0.0
        %793 = vmatpush.msra.mxu0 %v774
        %794 = vmatpush.msra.mxu0 %v773
        %795 = vmatpush.msra.mxu0 %v772
        %796 = vmatpush.msra.mxu0 %v771
        %797 = vmatmul.f32.gmra.mxu0 %v776
        %v798 = vpop.f32.mrf.mxu0
        %v799 = vadd.f32 0.0, %v798
        %800 = vmatmul.f32.gmra.mxu0 %v779
        %v801 = vpop.f32.mrf.mxu0
        %v802 = vadd.f32 0.0, %v801
        %803 = vdwg.mxu0
        %v804 = vadd.f32 %v766, %v799
        %v805 = vadd.f32 %v767, %v802
        %s806 = sadd.s32 %s652, 1
        %s807 = smul.u32 %s806, 16
        %s808 = scalar_lea.vmem [#allocation2], %s807
        %v809 = vld [vmem:[%s808] sm:$0xff]
        %v810 = vld [vmem:[%s808 + $0x8] sm:$0x1]
        %s811 = scalar_lea.vmem %s3, 128
        %v812 = vld [vmem:[%s811] sm:$0xff]
        %v813 = vld [vmem:[%s811 + $0x8] sm:$0xff]
        %v814 = vld [vmem:[%s811 + $0x10] sm:$0xff]
        %v815 = vld [vmem:[%s811 + $0x18] sm:$0xff]
        %v817 = vsel %vm671, %v809, 0
        %v820 = vsel %vm671, %v810, 0
        %822 = vmatpush.msra.mxu0 0.0
        %823 = vmatpush.msra.mxu0 0.0
        %824 = vmatpush.msra.mxu0 0.0
        %825 = vmatpush.msra.mxu0 0.0
        %826 = vmatpush.msra.mxu0 0.0
        %827 = vmatpush.msra.mxu0 0.0
        %828 = vmatpush.msra.mxu0 0.0
        %829 = vmatpush.msra.mxu0 0.0
        %830 = vmatpush.msra.mxu0 0.0
        %831 = vmatpush.msra.mxu0 0.0
        %832 = vmatpush.msra.mxu0 0.0
        %833 = vmatpush.msra.mxu0 0.0
        %834 = vmatpush.msra.mxu0 %v815
        %835 = vmatpush.msra.mxu0 %v814
        %836 = vmatpush.msra.mxu0 %v813
        %837 = vmatpush.msra.mxu0 %v812
        %838 = vmatmul.f32.gmra.mxu0 %v817
        %v839 = vpop.f32.mrf.mxu0
        %v840 = vadd.f32 0.0, %v839
        %841 = vmatmul.f32.gmra.mxu0 %v820
        %v842 = vpop.f32.mrf.mxu0
        %v843 = vadd.f32 0.0, %v842
        %844 = vdwg.mxu0
        %v845 = vadd.f32 %v804, %v840
        %v846 = vadd.f32 %v805, %v843
        %s847 = sadd.s32 %s652, 21
        %s848 = smul.u32 %s847, 16
        %s849 = scalar_lea.vmem [#allocation2], %s848
        %v850 = vld [vmem:[%s849] sm:$0xff]
        %v851 = vld [vmem:[%s849 + $0x8] sm:$0x1]
        %s852 = scalar_lea.vmem %s3, 160
        %v853 = vld [vmem:[%s852] sm:$0xff]
        %v854 = vld [vmem:[%s852 + $0x8] sm:$0xff]
        %v855 = vld [vmem:[%s852 + $0x10] sm:$0xff]
        %v856 = vld [vmem:[%s852 + $0x18] sm:$0xff]
        %v858 = vsel %vm671, %v850, 0
        %v861 = vsel %vm671, %v851, 0
        %863 = vmatpush.msra.mxu0 0.0
        %864 = vmatpush.msra.mxu0 0.0
        %865 = vmatpush.msra.mxu0 0.0
        %866 = vmatpush.msra.mxu0 0.0
        %867 = vmatpush.msra.mxu0 0.0
        %868 = vmatpush.msra.mxu0 0.0
        %869 = vmatpush.msra.mxu0 0.0
        %870 = vmatpush.msra.mxu0 0.0
        %871 = vmatpush.msra.mxu0 0.0
        %872 = vmatpush.msra.mxu0 0.0
        %873 = vmatpush.msra.mxu0 0.0
        %874 = vmatpush.msra.mxu0 0.0
        %875 = vmatpush.msra.mxu0 %v856
        %876 = vmatpush.msra.mxu0 %v855
        %877 = vmatpush.msra.mxu0 %v854
        %878 = vmatpush.msra.mxu0 %v853
        %879 = vmatmul.f32.gmra.mxu0 %v858
        %v880 = vpop.f32.mrf.mxu0
        %v881 = vadd.f32 0.0, %v880
        %882 = vmatmul.f32.gmra.mxu0 %v861
        %v883 = vpop.f32.mrf.mxu0
        %v884 = vadd.f32 0.0, %v883
        %885 = vdwg.mxu0
        %v886 = vadd.f32 %v845, %v881
        %v887 = vadd.f32 %v846, %v884
        %v888 = vld [vmem:[%s808 + $0x1] sm:$0xff]
        %v889 = vld [vmem:[%s808 + $0x9] sm:$0x1]
        %s890 = scalar_lea.vmem %s3, 192
        %v891 = vld [vmem:[%s890] sm:$0xff]
        %v892 = vld [vmem:[%s890 + $0x8] sm:$0xff]
        %v893 = vld [vmem:[%s890 + $0x10] sm:$0xff]
        %v894 = vld [vmem:[%s890 + $0x18] sm:$0xff]
        %v896 = vsel %vm671, %v888, 0
        %v899 = vsel %vm671, %v889, 0
        %901 = vmatpush.msra.mxu0 0.0
        %902 = vmatpush.msra.mxu0 0.0
        %903 = vmatpush.msra.mxu0 0.0
        %904 = vmatpush.msra.mxu0 0.0
        %905 = vmatpush.msra.mxu0 0.0
        %906 = vmatpush.msra.mxu0 0.0
        %907 = vmatpush.msra.mxu0 0.0
        %908 = vmatpush.msra.mxu0 0.0
        %909 = vmatpush.msra.mxu0 0.0
        %910 = vmatpush.msra.mxu0 0.0
        %911 = vmatpush.msra.mxu0 0.0
        %912 = vmatpush.msra.mxu0 0.0
        %913 = vmatpush.msra.mxu0 %v894
        %914 = vmatpush.msra.mxu0 %v893
        %915 = vmatpush.msra.mxu0 %v892
        %916 = vmatpush.msra.mxu0 %v891
        %917 = vmatmul.f32.gmra.mxu0 %v896
        %v918 = vpop.f32.mrf.mxu0
        %v919 = vadd.f32 0.0, %v918
        %920 = vmatmul.f32.gmra.mxu0 %v899
        %v921 = vpop.f32.mrf.mxu0
        %v922 = vadd.f32 0.0, %v921
        %923 = vdwg.mxu0
        %v924 = vadd.f32 %v886, %v919
        %v925 = vadd.f32 %v887, %v922
        %v926 = vld [vmem:[%s849 + $0x1] sm:$0xff]
        %v927 = vld [vmem:[%s849 + $0x9] sm:$0x1]
        %s928 = scalar_lea.vmem %s3, 224
        %v929 = vld [vmem:[%s928] sm:$0xff]
        %v930 = vld [vmem:[%s928 + $0x8] sm:$0xff]
        %v931 = vld [vmem:[%s928 + $0x10] sm:$0xff]
        %v932 = vld [vmem:[%s928 + $0x18] sm:$0xff]
        %v934 = vsel %vm671, %v926, 0
        %v937 = vsel %vm671, %v927, 0
        %939 = vmatpush.msra.mxu0 0.0
        %940 = vmatpush.msra.mxu0 0.0
        %941 = vmatpush.msra.mxu0 0.0
        %942 = vmatpush.msra.mxu0 0.0
        %943 = vmatpush.msra.mxu0 0.0
        %944 = vmatpush.msra.mxu0 0.0
        %945 = vmatpush.msra.mxu0 0.0
        %946 = vmatpush.msra.mxu0 0.0
        %947 = vmatpush.msra.mxu0 0.0
        %948 = vmatpush.msra.mxu0 0.0
        %949 = vmatpush.msra.mxu0 0.0
        %950 = vmatpush.msra.mxu0 0.0
        %951 = vmatpush.msra.mxu0 %v932
        %952 = vmatpush.msra.mxu0 %v931
        %953 = vmatpush.msra.mxu0 %v930
        %954 = vmatpush.msra.mxu0 %v929
        %955 = vmatmul.f32.gmra.mxu0 %v934
        %v956 = vpop.f32.mrf.mxu0
        %v957 = vadd.f32 0.0, %v956
        %958 = vmatmul.f32.gmra.mxu0 %v937
        %v959 = vpop.f32.mrf.mxu0
        %v960 = vadd.f32 0.0, %v959
        %961 = vdwg.mxu0
        %v962 = vadd.f32 %v924, %v957
        %v963 = vadd.f32 %v925, %v960
        %s964 = sadd.s32 %s652, 2
        %s965 = smul.u32 %s964, 16
        %s966 = scalar_lea.vmem [#allocation2], %s965
        %v967 = vld [vmem:[%s966] sm:$0xff]
        %v968 = vld [vmem:[%s966 + $0x8] sm:$0x1]
        %s969 = scalar_lea.vmem %s3, 256
        %v970 = vld [vmem:[%s969] sm:$0xff]
        %v971 = vld [vmem:[%s969 + $0x8] sm:$0xff]
        %v972 = vld [vmem:[%s969 + $0x10] sm:$0xff]
        %v973 = vld [vmem:[%s969 + $0x18] sm:$0xff]
        %v975 = vsel %vm671, %v967, 0
        %v978 = vsel %vm671, %v968, 0
        %980 = vmatpush.msra.mxu0 0.0
        %981 = vmatpush.msra.mxu0 0.0
        %982 = vmatpush.msra.mxu0 0.0
        %983 = vmatpush.msra.mxu0 0.0
        %984 = vmatpush.msra.mxu0 0.0
        %985 = vmatpush.msra.mxu0 0.0
        %986 = vmatpush.msra.mxu0 0.0
        %987 = vmatpush.msra.mxu0 0.0
        %988 = vmatpush.msra.mxu0 0.0
        %989 = vmatpush.msra.mxu0 0.0
        %990 = vmatpush.msra.mxu0 0.0
        %991 = vmatpush.msra.mxu0 0.0
        %992 = vmatpush.msra.mxu0 %v973
        %993 = vmatpush.msra.mxu0 %v972
        %994 = vmatpush.msra.mxu0 %v971
        %995 = vmatpush.msra.mxu0 %v970
        %996 = vmatmul.f32.gmra.mxu0 %v975
        %v997 = vpop.f32.mrf.mxu0
        %v998 = vadd.f32 0.0, %v997
        %999 = vmatmul.f32.gmra.mxu0 %v978
        %v1000 = vpop.f32.mrf.mxu0
        %v1001 = vadd.f32 0.0, %v1000
        %1002 = vdwg.mxu0
        %v1003 = vadd.f32 %v962, %v998
        %v1004 = vadd.f32 %v963, %v1001
        %s1005 = sadd.s32 %s652, 22
        %s1006 = smul.u32 %s1005, 16
        %s1007 = scalar_lea.vmem [#allocation2], %s1006
        %v1008 = vld [vmem:[%s1007] sm:$0xff]
        %v1009 = vld [vmem:[%s1007 + $0x8] sm:$0x1]
        %s1010 = scalar_lea.vmem %s3, 288
        %v1011 = vld [vmem:[%s1010] sm:$0xff]
        %v1012 = vld [vmem:[%s1010 + $0x8] sm:$0xff]
        %v1013 = vld [vmem:[%s1010 + $0x10] sm:$0xff]
        %v1014 = vld [vmem:[%s1010 + $0x18] sm:$0xff]
        %v1016 = vsel %vm671, %v1008, 0
        %v1019 = vsel %vm671, %v1009, 0
        %1021 = vmatpush.msra.mxu0 0.0
        %1022 = vmatpush.msra.mxu0 0.0
        %1023 = vmatpush.msra.mxu0 0.0
        %1024 = vmatpush.msra.mxu0 0.0
        %1025 = vmatpush.msra.mxu0 0.0
        %1026 = vmatpush.msra.mxu0 0.0
        %1027 = vmatpush.msra.mxu0 0.0
        %1028 = vmatpush.msra.mxu0 0.0
        %1029 = vmatpush.msra.mxu0 0.0
        %1030 = vmatpush.msra.mxu0 0.0
        %1031 = vmatpush.msra.mxu0 0.0
        %1032 = vmatpush.msra.mxu0 0.0
        %1033 = vmatpush.msra.mxu0 %v1014
        %1034 = vmatpush.msra.mxu0 %v1013
        %1035 = vmatpush.msra.mxu0 %v1012
        %1036 = vmatpush.msra.mxu0 %v1011
        %1037 = vmatmul.f32.gmra.mxu0 %v1016
        %v1038 = vpop.f32.mrf.mxu0
        %v1039 = vadd.f32 0.0, %v1038
        %1040 = vmatmul.f32.gmra.mxu0 %v1019
        %v1041 = vpop.f32.mrf.mxu0
        %v1042 = vadd.f32 0.0, %v1041
        %1043 = vdwg.mxu0
        %v1044 = vadd.f32 %v1003, %v1039
        %v1045 = vadd.f32 %v1004, %v1042
        %v1046 = vld [vmem:[%s966 + $0x1] sm:$0xff]
        %v1047 = vld [vmem:[%s966 + $0x9] sm:$0x1]
        %s1048 = scalar_lea.vmem %s3, 320
        %v1049 = vld [vmem:[%s1048] sm:$0xff]
        %v1050 = vld [vmem:[%s1048 + $0x8] sm:$0xff]
        %v1051 = vld [vmem:[%s1048 + $0x10] sm:$0xff]
        %v1052 = vld [vmem:[%s1048 + $0x18] sm:$0xff]
        %v1054 = vsel %vm671, %v1046, 0
        %v1057 = vsel %vm671, %v1047, 0
        %1059 = vmatpush.msra.mxu0 0.0
        %1060 = vmatpush.msra.mxu0 0.0
        %1061 = vmatpush.msra.mxu0 0.0
        %1062 = vmatpush.msra.mxu0 0.0
        %1063 = vmatpush.msra.mxu0 0.0
        %1064 = vmatpush.msra.mxu0 0.0
        %1065 = vmatpush.msra.mxu0 0.0
        %1066 = vmatpush.msra.mxu0 0.0
        %1067 = vmatpush.msra.mxu0 0.0
        %1068 = vmatpush.msra.mxu0 0.0
        %1069 = vmatpush.msra.mxu0 0.0
        %1070 = vmatpush.msra.mxu0 0.0
        %1071 = vmatpush.msra.mxu0 %v1052
        %1072 = vmatpush.msra.mxu0 %v1051
        %1073 = vmatpush.msra.mxu0 %v1050
        %1074 = vmatpush.msra.mxu0 %v1049
        %1075 = vmatmul.f32.gmra.mxu0 %v1054
        %v1076 = vpop.f32.mrf.mxu0
        %v1077 = vadd.f32 0.0, %v1076
        %1078 = vmatmul.f32.gmra.mxu0 %v1057
        %v1079 = vpop.f32.mrf.mxu0
        %v1080 = vadd.f32 0.0, %v1079
        %1081 = vdwg.mxu0
        %v1082 = vadd.f32 %v1044, %v1077
        %v1083 = vadd.f32 %v1045, %v1080
        %v1084 = vld [vmem:[%s1007 + $0x1] sm:$0xff]
        %v1085 = vld [vmem:[%s1007 + $0x9] sm:$0x1]
        %s1086 = scalar_lea.vmem %s3, 352
        %v1087 = vld [vmem:[%s1086] sm:$0xff]
        %v1088 = vld [vmem:[%s1086 + $0x8] sm:$0xff]
        %v1089 = vld [vmem:[%s1086 + $0x10] sm:$0xff]
        %v1090 = vld [vmem:[%s1086 + $0x18] sm:$0xff]
        %v1092 = vsel %vm671, %v1084, 0
        %v1095 = vsel %vm671, %v1085, 0
        %1097 = vmatpush.msra.mxu0 0.0
        %1098 = vmatpush.msra.mxu0 0.0
        %1099 = vmatpush.msra.mxu0 0.0
        %1100 = vmatpush.msra.mxu0 0.0
        %1101 = vmatpush.msra.mxu0 0.0
        %1102 = vmatpush.msra.mxu0 0.0
        %1103 = vmatpush.msra.mxu0 0.0
        %1104 = vmatpush.msra.mxu0 0.0
        %1105 = vmatpush.msra.mxu0 0.0
        %1106 = vmatpush.msra.mxu0 0.0
        %1107 = vmatpush.msra.mxu0 0.0
        %1108 = vmatpush.msra.mxu0 0.0
        %1109 = vmatpush.msra.mxu0 %v1090
        %1110 = vmatpush.msra.mxu0 %v1089
        %1111 = vmatpush.msra.mxu0 %v1088
        %1112 = vmatpush.msra.mxu0 %v1087
        %1113 = vmatmul.f32.gmra.mxu0 %v1092
        %v1114 = vpop.f32.mrf.mxu0
        %v1115 = vadd.f32 0.0, %v1114
        %1116 = vmatmul.f32.gmra.mxu0 %v1095
        %v1117 = vpop.f32.mrf.mxu0
        %v1118 = vadd.f32 0.0, %v1117
        %1119 = vdwg.mxu0
        %v1120 = vadd.f32 %v1082, %v1115
        %v1121 = vadd.f32 %v1083, %v1118
        %s1122 = sadd.s32 %s652, 3
        %s1123 = smul.u32 %s1122, 16
        %s1124 = scalar_lea.vmem [#allocation2], %s1123
        %v1125 = vld [vmem:[%s1124] sm:$0xff]
        %v1126 = vld [vmem:[%s1124 + $0x8] sm:$0x1]
        %s1127 = scalar_lea.vmem %s3, 384
        %v1128 = vld [vmem:[%s1127] sm:$0xff]
        %v1129 = vld [vmem:[%s1127 + $0x8] sm:$0xff]
        %v1130 = vld [vmem:[%s1127 + $0x10] sm:$0xff]
        %v1131 = vld [vmem:[%s1127 + $0x18] sm:$0xff]
        %v1133 = vsel %vm671, %v1125, 0
        %v1136 = vsel %vm671, %v1126, 0
        %1138 = vmatpush.msra.mxu0 0.0
        %1139 = vmatpush.msra.mxu0 0.0
        %1140 = vmatpush.msra.mxu0 0.0
        %1141 = vmatpush.msra.mxu0 0.0
        %1142 = vmatpush.msra.mxu0 0.0
        %1143 = vmatpush.msra.mxu0 0.0
        %1144 = vmatpush.msra.mxu0 0.0
        %1145 = vmatpush.msra.mxu0 0.0
        %1146 = vmatpush.msra.mxu0 0.0
        %1147 = vmatpush.msra.mxu0 0.0
        %1148 = vmatpush.msra.mxu0 0.0
        %1149 = vmatpush.msra.mxu0 0.0
        %1150 = vmatpush.msra.mxu0 %v1131
        %1151 = vmatpush.msra.mxu0 %v1130
        %1152 = vmatpush.msra.mxu0 %v1129
        %1153 = vmatpush.msra.mxu0 %v1128
        %1154 = vmatmul.f32.gmra.mxu0 %v1133
        %v1155 = vpop.f32.mrf.mxu0
        %v1156 = vadd.f32 0.0, %v1155
        %1157 = vmatmul.f32.gmra.mxu0 %v1136
        %v1158 = vpop.f32.mrf.mxu0
        %v1159 = vadd.f32 0.0, %v1158
        %1160 = vdwg.mxu0
        %v1161 = vadd.f32 %v1120, %v1156
        %v1162 = vadd.f32 %v1121, %v1159
        %s1163 = sadd.s32 %s652, 23
        %s1164 = smul.u32 %s1163, 16
        %s1165 = scalar_lea.vmem [#allocation2], %s1164
        %v1166 = vld [vmem:[%s1165] sm:$0xff]
        %v1167 = vld [vmem:[%s1165 + $0x8] sm:$0x1]
        %s1168 = scalar_lea.vmem %s3, 416
        %v1169 = vld [vmem:[%s1168] sm:$0xff]
        %v1170 = vld [vmem:[%s1168 + $0x8] sm:$0xff]
        %v1171 = vld [vmem:[%s1168 + $0x10] sm:$0xff]
        %v1172 = vld [vmem:[%s1168 + $0x18] sm:$0xff]
        %v1174 = vsel %vm671, %v1166, 0
        %v1177 = vsel %vm671, %v1167, 0
        %1179 = vmatpush.msra.mxu0 0.0
        %1180 = vmatpush.msra.mxu0 0.0
        %1181 = vmatpush.msra.mxu0 0.0
        %1182 = vmatpush.msra.mxu0 0.0
        %1183 = vmatpush.msra.mxu0 0.0
        %1184 = vmatpush.msra.mxu0 0.0
        %1185 = vmatpush.msra.mxu0 0.0
        %1186 = vmatpush.msra.mxu0 0.0
        %1187 = vmatpush.msra.mxu0 0.0
        %1188 = vmatpush.msra.mxu0 0.0
        %1189 = vmatpush.msra.mxu0 0.0
        %1190 = vmatpush.msra.mxu0 0.0
        %1191 = vmatpush.msra.mxu0 %v1172
        %1192 = vmatpush.msra.mxu0 %v1171
        %1193 = vmatpush.msra.mxu0 %v1170
        %1194 = vmatpush.msra.mxu0 %v1169
        %1195 = vmatmul.f32.gmra.mxu0 %v1174
        %v1196 = vpop.f32.mrf.mxu0
        %v1197 = vadd.f32 0.0, %v1196
        %1198 = vmatmul.f32.gmra.mxu0 %v1177
        %v1199 = vpop.f32.mrf.mxu0
        %v1200 = vadd.f32 0.0, %v1199
        %1201 = vdwg.mxu0
        %v1202 = vadd.f32 %v1161, %v1197
        %v1203 = vadd.f32 %v1162, %v1200
        %v1204 = vld [vmem:[%s1124 + $0x1] sm:$0xff]
        %v1205 = vld [vmem:[%s1124 + $0x9] sm:$0x1]
        %s1206 = scalar_lea.vmem %s3, 448
        %v1207 = vld [vmem:[%s1206] sm:$0xff]
        %v1208 = vld [vmem:[%s1206 + $0x8] sm:$0xff]
        %v1209 = vld [vmem:[%s1206 + $0x10] sm:$0xff]
        %v1210 = vld [vmem:[%s1206 + $0x18] sm:$0xff]
        %v1212 = vsel %vm671, %v1204, 0
        %v1215 = vsel %vm671, %v1205, 0
        %1217 = vmatpush.msra.mxu0 0.0
        %1218 = vmatpush.msra.mxu0 0.0
        %1219 = vmatpush.msra.mxu0 0.0
        %1220 = vmatpush.msra.mxu0 0.0
        %1221 = vmatpush.msra.mxu0 0.0
        %1222 = vmatpush.msra.mxu0 0.0
        %1223 = vmatpush.msra.mxu0 0.0
        %1224 = vmatpush.msra.mxu0 0.0
        %1225 = vmatpush.msra.mxu0 0.0
        %1226 = vmatpush.msra.mxu0 0.0
        %1227 = vmatpush.msra.mxu0 0.0
        %1228 = vmatpush.msra.mxu0 0.0
        %1229 = vmatpush.msra.mxu0 %v1210
        %1230 = vmatpush.msra.mxu0 %v1209
        %1231 = vmatpush.msra.mxu0 %v1208
        %1232 = vmatpush.msra.mxu0 %v1207
        %1233 = vmatmul.f32.gmra.mxu0 %v1212
        %v1234 = vpop.f32.mrf.mxu0
        %v1235 = vadd.f32 0.0, %v1234
        %1236 = vmatmul.f32.gmra.mxu0 %v1215
        %v1237 = vpop.f32.mrf.mxu0
        %v1238 = vadd.f32 0.0, %v1237
        %1239 = vdwg.mxu0
        %v1240 = vadd.f32 %v1202, %v1235
        %v1241 = vadd.f32 %v1203, %v1238
        %v1242 = vld [vmem:[%s1165 + $0x1] sm:$0xff]
        %v1243 = vld [vmem:[%s1165 + $0x9] sm:$0x1]
        %s1244 = scalar_lea.vmem %s3, 480
        %v1245 = vld [vmem:[%s1244] sm:$0xff]
        %v1246 = vld [vmem:[%s1244 + $0x8] sm:$0xff]
        %v1247 = vld [vmem:[%s1244 + $0x10] sm:$0xff]
        %v1248 = vld [vmem:[%s1244 + $0x18] sm:$0xff]
        %v1250 = vsel %vm671, %v1242, 0
        %v1253 = vsel %vm671, %v1243, 0
        %1255 = vmatpush.msra.mxu0 0.0
        %1256 = vmatpush.msra.mxu0 0.0
        %1257 = vmatpush.msra.mxu0 0.0
        %1258 = vmatpush.msra.mxu0 0.0
        %1259 = vmatpush.msra.mxu0 0.0
        %1260 = vmatpush.msra.mxu0 0.0
        %1261 = vmatpush.msra.mxu0 0.0
        %1262 = vmatpush.msra.mxu0 0.0
        %1263 = vmatpush.msra.mxu0 0.0
        %1264 = vmatpush.msra.mxu0 0.0
        %1265 = vmatpush.msra.mxu0 0.0
        %1266 = vmatpush.msra.mxu0 0.0
        %1267 = vmatpush.msra.mxu0 %v1248
        %1268 = vmatpush.msra.mxu0 %v1247
        %1269 = vmatpush.msra.mxu0 %v1246
        %1270 = vmatpush.msra.mxu0 %v1245
        %1271 = vmatmul.f32.gmra.mxu0 %v1250
        %v1272 = vpop.f32.mrf.mxu0
        %v1273 = vadd.f32 0.0, %v1272
        %1274 = vmatmul.f32.gmra.mxu0 %v1253
        %v1275 = vpop.f32.mrf.mxu0
        %v1276 = vadd.f32 0.0, %v1275
        %1277 = vdwg.mxu0
        %v1278 = vadd.f32 %v1240, %v1273
        %v1279 = vadd.f32 %v1241, %v1276
        %v1280 = vld [vmem:[%s4] sm:$0x1]
        %v1282 = vperm.slane %v1280, 0
        %v1284 = vadd.f32 %v1278, %v1282
        %v1285 = vadd.f32 %v1279, %v1282
        %v1286 = vmax.f32 %v1284, 0.0
        %v1287 = vmax.f32 %v1285, 0.0
        %s1288 = smul.u32 %s647, 16
        %s1289 = scalar_lea.vmem [#allocation3], %s1288
        %vm1290 = vcmask 523264
        %1291 = vst.msk [vmem:[%s1289] sm:$0xff] %vm1290, %v1286
        %vm1292 = vcmask 516096
        %1293 = vst.msk [vmem:[%s1289 + $0x8] sm:$0x1] %vm1292, %v1287
      $region60: #{policy_network.2} parent=47 // loop_footer
        %s651 = sadd.s32 1, %s647
      $region61: #{policy_network.2} parent=47 // loop_footer_branch
        %646 = sbr.rel target = $region57
      $region62: #{policy_network.2} parent=47 // loop_exit
        _
      loop: start=0, step=1, limit=7
      $region63: #{policy_network.2} parent=47 // loop_pre_header
        _
      $region64: #{policy_network.2} parent=47 // loop_header
        %s1295 = sphi 0, %s1299
        %p1296 = scmp.ge.s32.totalorder %s1295, 7
      $region65: #{policy_network.2} parent=47 // loop_header_branch
        %1298 = sbr.rel (%p1296) target = $region69
      $region66: #{policy_network.2} parent=47 // loop_body
        %s1300 = smul.u32 %s1295, 16
        %s1301 = scalar_lea.vmem [#allocation3], %s1300
        %v1302 = vld [vmem:[%s1301] sm:$0x7f]
        %v1303 = vld [vmem:[%s5] sm:$0xff]
        %v1304 = vld [vmem:[%s5 + $0x8] sm:$0xff]
        %v1305 = vld [vmem:[%s5 + $0x10] sm:$0xff]
        %v1306 = vld [vmem:[%s5 + $0x18] sm:$0xff]
        %v1307 = vld [vmem:[%s5 + $0x20] sm:$0xff]
        %v1308 = vld [vmem:[%s5 + $0x28] sm:$0xff]
        %v1309 = vld [vmem:[%s5 + $0x30] sm:$0xff]
        %v1310 = vld [vmem:[%s5 + $0x38] sm:$0xff]
        %v1311 = vld [vmem:[%s1301 + $0x1] sm:$0x7f]
        %s1312 = scalar_lea.vmem %s5, 64
        %v1313 = vld [vmem:[%s1312] sm:$0xff]
        %v1314 = vld [vmem:[%s1312 + $0x8] sm:$0xff]
        %v1315 = vld [vmem:[%s1312 + $0x10] sm:$0xff]
        %v1316 = vld [vmem:[%s1312 + $0x18] sm:$0xff]
        %v1317 = vld [vmem:[%s1312 + $0x20] sm:$0xff]
        %v1318 = vld [vmem:[%s1312 + $0x28] sm:$0xff]
        %v1319 = vld [vmem:[%s1312 + $0x30] sm:$0xff]
        %v1320 = vld [vmem:[%s1312 + $0x38] sm:$0xff]
        %vm1321 = vcmask 523264
        %v1323 = vsel %vm1321, %v1311, 0
        %1325 = vmatpush.msra.mxu0 0.0
        %1326 = vmatpush.msra.mxu0 0.0
        %1327 = vmatpush.msra.mxu0 0.0
        %1328 = vmatpush.msra.mxu0 0.0
        %1329 = vmatpush.msra.mxu0 0.0
        %1330 = vmatpush.msra.mxu0 0.0
        %1331 = vmatpush.msra.mxu0 0.0
        %1332 = vmatpush.msra.mxu0 0.0
        %1333 = vmatpush.msra.mxu0 %v1320
        %1334 = vmatpush.msra.mxu0 %v1319
        %1335 = vmatpush.msra.mxu0 %v1318
        %1336 = vmatpush.msra.mxu0 %v1317
        %1337 = vmatpush.msra.mxu0 %v1316
        %1338 = vmatpush.msra.mxu0 %v1315
        %1339 = vmatpush.msra.mxu0 %v1314
        %1340 = vmatpush.msra.mxu0 %v1313
        %1341 = vmatmul.f32.gmra.mxu0 %v1323
        %v1342 = vpop.f32.mrf.mxu0
        %v1343 = vadd.f32 0.0, %v1342
        %1344 = vdwg.mxu0
        %v1346 = vsel %vm1321, %v1302, 0
        %1348 = vmatpush.msra.mxu0 0.0
        %1349 = vmatpush.msra.mxu0 0.0
        %1350 = vmatpush.msra.mxu0 0.0
        %1351 = vmatpush.msra.mxu0 0.0
        %1352 = vmatpush.msra.mxu0 0.0
        %1353 = vmatpush.msra.mxu0 0.0
        %1354 = vmatpush.msra.mxu0 0.0
        %1355 = vmatpush.msra.mxu0 0.0
        %1356 = vmatpush.msra.mxu0 %v1310
        %1357 = vmatpush.msra.mxu0 %v1309
        %1358 = vmatpush.msra.mxu0 %v1308
        %1359 = vmatpush.msra.mxu0 %v1307
        %1360 = vmatpush.msra.mxu0 %v1306
        %1361 = vmatpush.msra.mxu0 %v1305
        %1362 = vmatpush.msra.mxu0 %v1304
        %1363 = vmatpush.msra.mxu0 %v1303
        %1364 = vmatmul.f32.gmra.mxu0 %v1346
        %v1365 = vpop.f32.mrf.mxu0
        %v1366 = vadd.f32 %v1343, %v1365
        %1367 = vdwg.mxu0
        %v1368 = vld [vmem:[%s1301 + $0x2] sm:$0x7f]
        %s1369 = scalar_lea.vmem %s5, 128
        %v1370 = vld [vmem:[%s1369] sm:$0xff]
        %v1371 = vld [vmem:[%s1369 + $0x8] sm:$0xff]
        %v1372 = vld [vmem:[%s1369 + $0x10] sm:$0xff]
        %v1373 = vld [vmem:[%s1369 + $0x18] sm:$0xff]
        %v1374 = vld [vmem:[%s1369 + $0x20] sm:$0xff]
        %v1375 = vld [vmem:[%s1369 + $0x28] sm:$0xff]
        %v1376 = vld [vmem:[%s1369 + $0x30] sm:$0xff]
        %v1377 = vld [vmem:[%s1369 + $0x38] sm:$0xff]
        %v1379 = vsel %vm1321, %v1368, 0
        %1381 = vmatpush.msra.mxu0 0.0
        %1382 = vmatpush.msra.mxu0 0.0
        %1383 = vmatpush.msra.mxu0 0.0
        %1384 = vmatpush.msra.mxu0 0.0
        %1385 = vmatpush.msra.mxu0 0.0
        %1386 = vmatpush.msra.mxu0 0.0
        %1387 = vmatpush.msra.mxu0 0.0
        %1388 = vmatpush.msra.mxu0 0.0
        %1389 = vmatpush.msra.mxu0 %v1377
        %1390 = vmatpush.msra.mxu0 %v1376
        %1391 = vmatpush.msra.mxu0 %v1375
        %1392 = vmatpush.msra.mxu0 %v1374
        %1393 = vmatpush.msra.mxu0 %v1373
        %1394 = vmatpush.msra.mxu0 %v1372
        %1395 = vmatpush.msra.mxu0 %v1371
        %1396 = vmatpush.msra.mxu0 %v1370
        %1397 = vmatmul.f32.gmra.mxu0 %v1379
        %v1398 = vpop.f32.mrf.mxu0
        %v1399 = vadd.f32 0.0, %v1398
        %1400 = vdwg.mxu0
        %v1401 = vadd.f32 %v1366, %v1399
        %s1402 = sadd.s32 %s1295, 1
        %s1403 = smul.u32 %s1402, 16
        %s1404 = scalar_lea.vmem [#allocation3], %s1403
        %v1405 = vld [vmem:[%s1404] sm:$0x7f]
        %s1406 = scalar_lea.vmem %s5, 192
        %v1407 = vld [vmem:[%s1406] sm:$0xff]
        %v1408 = vld [vmem:[%s1406 + $0x8] sm:$0xff]
        %v1409 = vld [vmem:[%s1406 + $0x10] sm:$0xff]
        %v1410 = vld [vmem:[%s1406 + $0x18] sm:$0xff]
        %v1411 = vld [vmem:[%s1406 + $0x20] sm:$0xff]
        %v1412 = vld [vmem:[%s1406 + $0x28] sm:$0xff]
        %v1413 = vld [vmem:[%s1406 + $0x30] sm:$0xff]
        %v1414 = vld [vmem:[%s1406 + $0x38] sm:$0xff]
        %v1416 = vsel %vm1321, %v1405, 0
        %1418 = vmatpush.msra.mxu0 0.0
        %1419 = vmatpush.msra.mxu0 0.0
        %1420 = vmatpush.msra.mxu0 0.0
        %1421 = vmatpush.msra.mxu0 0.0
        %1422 = vmatpush.msra.mxu0 0.0
        %1423 = vmatpush.msra.mxu0 0.0
        %1424 = vmatpush.msra.mxu0 0.0
        %1425 = vmatpush.msra.mxu0 0.0
        %1426 = vmatpush.msra.mxu0 %v1414
        %1427 = vmatpush.msra.mxu0 %v1413
        %1428 = vmatpush.msra.mxu0 %v1412
        %1429 = vmatpush.msra.mxu0 %v1411
        %1430 = vmatpush.msra.mxu0 %v1410
        %1431 = vmatpush.msra.mxu0 %v1409
        %1432 = vmatpush.msra.mxu0 %v1408
        %1433 = vmatpush.msra.mxu0 %v1407
        %1434 = vmatmul.f32.gmra.mxu0 %v1416
        %v1435 = vpop.f32.mrf.mxu0
        %v1436 = vadd.f32 0.0, %v1435
        %1437 = vdwg.mxu0
        %v1438 = vadd.f32 %v1401, %v1436
        %v1439 = vld [vmem:[%s1404 + $0x1] sm:$0x7f]
        %s1440 = scalar_lea.vmem %s5, 256
        %v1441 = vld [vmem:[%s1440] sm:$0xff]
        %v1442 = vld [vmem:[%s1440 + $0x8] sm:$0xff]
        %v1443 = vld [vmem:[%s1440 + $0x10] sm:$0xff]
        %v1444 = vld [vmem:[%s1440 + $0x18] sm:$0xff]
        %v1445 = vld [vmem:[%s1440 + $0x20] sm:$0xff]
        %v1446 = vld [vmem:[%s1440 + $0x28] sm:$0xff]
        %v1447 = vld [vmem:[%s1440 + $0x30] sm:$0xff]
        %v1448 = vld [vmem:[%s1440 + $0x38] sm:$0xff]
        %v1450 = vsel %vm1321, %v1439, 0
        %1452 = vmatpush.msra.mxu0 0.0
        %1453 = vmatpush.msra.mxu0 0.0
        %1454 = vmatpush.msra.mxu0 0.0
        %1455 = vmatpush.msra.mxu0 0.0
        %1456 = vmatpush.msra.mxu0 0.0
        %1457 = vmatpush.msra.mxu0 0.0
        %1458 = vmatpush.msra.mxu0 0.0
        %1459 = vmatpush.msra.mxu0 0.0
        %1460 = vmatpush.msra.mxu0 %v1448
        %1461 = vmatpush.msra.mxu0 %v1447
        %1462 = vmatpush.msra.mxu0 %v1446
        %1463 = vmatpush.msra.mxu0 %v1445
        %1464 = vmatpush.msra.mxu0 %v1444
        %1465 = vmatpush.msra.mxu0 %v1443
        %1466 = vmatpush.msra.mxu0 %v1442
        %1467 = vmatpush.msra.mxu0 %v1441
        %1468 = vmatmul.f32.gmra.mxu0 %v1450
        %v1469 = vpop.f32.mrf.mxu0
        %v1470 = vadd.f32 0.0, %v1469
        %1471 = vdwg.mxu0
        %v1472 = vadd.f32 %v1438, %v1470
        %v1473 = vld [vmem:[%s1404 + $0x2] sm:$0x7f]
        %s1474 = scalar_lea.vmem %s5, 320
        %v1475 = vld [vmem:[%s1474] sm:$0xff]
        %v1476 = vld [vmem:[%s1474 + $0x8] sm:$0xff]
        %v1477 = vld [vmem:[%s1474 + $0x10] sm:$0xff]
        %v1478 = vld [vmem:[%s1474 + $0x18] sm:$0xff]
        %v1479 = vld [vmem:[%s1474 + $0x20] sm:$0xff]
        %v1480 = vld [vmem:[%s1474 + $0x28] sm:$0xff]
        %v1481 = vld [vmem:[%s1474 + $0x30] sm:$0xff]
        %v1482 = vld [vmem:[%s1474 + $0x38] sm:$0xff]
        %v1484 = vsel %vm1321, %v1473, 0
        %1486 = vmatpush.msra.mxu0 0.0
        %1487 = vmatpush.msra.mxu0 0.0
        %1488 = vmatpush.msra.mxu0 0.0
        %1489 = vmatpush.msra.mxu0 0.0
        %1490 = vmatpush.msra.mxu0 0.0
        %1491 = vmatpush.msra.mxu0 0.0
        %1492 = vmatpush.msra.mxu0 0.0
        %1493 = vmatpush.msra.mxu0 0.0
        %1494 = vmatpush.msra.mxu0 %v1482
        %1495 = vmatpush.msra.mxu0 %v1481
        %1496 = vmatpush.msra.mxu0 %v1480
        %1497 = vmatpush.msra.mxu0 %v1479
        %1498 = vmatpush.msra.mxu0 %v1478
        %1499 = vmatpush.msra.mxu0 %v1477
        %1500 = vmatpush.msra.mxu0 %v1476
        %1501 = vmatpush.msra.mxu0 %v1475
        %1502 = vmatmul.f32.gmra.mxu0 %v1484
        %v1503 = vpop.f32.mrf.mxu0
        %v1504 = vadd.f32 0.0, %v1503
        %1505 = vdwg.mxu0
        %v1506 = vadd.f32 %v1472, %v1504
        %s1507 = sadd.s32 %s1295, 2
        %s1508 = smul.u32 %s1507, 16
        %s1509 = scalar_lea.vmem [#allocation3], %s1508
        %v1510 = vld [vmem:[%s1509] sm:$0x7f]
        %s1511 = scalar_lea.vmem %s5, 384
        %v1512 = vld [vmem:[%s1511] sm:$0xff]
        %v1513 = vld [vmem:[%s1511 + $0x8] sm:$0xff]
        %v1514 = vld [vmem:[%s1511 + $0x10] sm:$0xff]
        %v1515 = vld [vmem:[%s1511 + $0x18] sm:$0xff]
        %v1516 = vld [vmem:[%s1511 + $0x20] sm:$0xff]
        %v1517 = vld [vmem:[%s1511 + $0x28] sm:$0xff]
        %v1518 = vld [vmem:[%s1511 + $0x30] sm:$0xff]
        %v1519 = vld [vmem:[%s1511 + $0x38] sm:$0xff]
        %v1521 = vsel %vm1321, %v1510, 0
        %1523 = vmatpush.msra.mxu0 0.0
        %1524 = vmatpush.msra.mxu0 0.0
        %1525 = vmatpush.msra.mxu0 0.0
        %1526 = vmatpush.msra.mxu0 0.0
        %1527 = vmatpush.msra.mxu0 0.0
        %1528 = vmatpush.msra.mxu0 0.0
        %1529 = vmatpush.msra.mxu0 0.0
        %1530 = vmatpush.msra.mxu0 0.0
        %1531 = vmatpush.msra.mxu0 %v1519
        %1532 = vmatpush.msra.mxu0 %v1518
        %1533 = vmatpush.msra.mxu0 %v1517
        %1534 = vmatpush.msra.mxu0 %v1516
        %1535 = vmatpush.msra.mxu0 %v1515
        %1536 = vmatpush.msra.mxu0 %v1514
        %1537 = vmatpush.msra.mxu0 %v1513
        %1538 = vmatpush.msra.mxu0 %v1512
        %1539 = vmatmul.f32.gmra.mxu0 %v1521
        %v1540 = vpop.f32.mrf.mxu0
        %v1541 = vadd.f32 0.0, %v1540
        %1542 = vdwg.mxu0
        %v1543 = vadd.f32 %v1506, %v1541
        %v1544 = vld [vmem:[%s1509 + $0x1] sm:$0x7f]
        %s1545 = scalar_lea.vmem %s5, 448
        %v1546 = vld [vmem:[%s1545] sm:$0xff]
        %v1547 = vld [vmem:[%s1545 + $0x8] sm:$0xff]
        %v1548 = vld [vmem:[%s1545 + $0x10] sm:$0xff]
        %v1549 = vld [vmem:[%s1545 + $0x18] sm:$0xff]
        %v1550 = vld [vmem:[%s1545 + $0x20] sm:$0xff]
        %v1551 = vld [vmem:[%s1545 + $0x28] sm:$0xff]
        %v1552 = vld [vmem:[%s1545 + $0x30] sm:$0xff]
        %v1553 = vld [vmem:[%s1545 + $0x38] sm:$0xff]
        %v1555 = vsel %vm1321, %v1544, 0
        %1557 = vmatpush.msra.mxu0 0.0
        %1558 = vmatpush.msra.mxu0 0.0
        %1559 = vmatpush.msra.mxu0 0.0
        %1560 = vmatpush.msra.mxu0 0.0
        %1561 = vmatpush.msra.mxu0 0.0
        %1562 = vmatpush.msra.mxu0 0.0
        %1563 = vmatpush.msra.mxu0 0.0
        %1564 = vmatpush.msra.mxu0 0.0
        %1565 = vmatpush.msra.mxu0 %v1553
        %1566 = vmatpush.msra.mxu0 %v1552
        %1567 = vmatpush.msra.mxu0 %v1551
        %1568 = vmatpush.msra.mxu0 %v1550
        %1569 = vmatpush.msra.mxu0 %v1549
        %1570 = vmatpush.msra.mxu0 %v1548
        %1571 = vmatpush.msra.mxu0 %v1547
        %1572 = vmatpush.msra.mxu0 %v1546
        %1573 = vmatmul.f32.gmra.mxu0 %v1555
        %v1574 = vpop.f32.mrf.mxu0
        %v1575 = vadd.f32 0.0, %v1574
        %1576 = vdwg.mxu0
        %v1577 = vadd.f32 %v1543, %v1575
        %v1578 = vld [vmem:[%s1509 + $0x2] sm:$0x7f]
        %s1579 = scalar_lea.vmem %s5, 512
        %v1580 = vld [vmem:[%s1579] sm:$0xff]
        %v1581 = vld [vmem:[%s1579 + $0x8] sm:$0xff]
        %v1582 = vld [vmem:[%s1579 + $0x10] sm:$0xff]
        %v1583 = vld [vmem:[%s1579 + $0x18] sm:$0xff]
        %v1584 = vld [vmem:[%s1579 + $0x20] sm:$0xff]
        %v1585 = vld [vmem:[%s1579 + $0x28] sm:$0xff]
        %v1586 = vld [vmem:[%s1579 + $0x30] sm:$0xff]
        %v1587 = vld [vmem:[%s1579 + $0x38] sm:$0xff]
        %v1589 = vsel %vm1321, %v1578, 0
        %1591 = vmatpush.msra.mxu0 0.0
        %1592 = vmatpush.msra.mxu0 0.0
        %1593 = vmatpush.msra.mxu0 0.0
        %1594 = vmatpush.msra.mxu0 0.0
        %1595 = vmatpush.msra.mxu0 0.0
        %1596 = vmatpush.msra.mxu0 0.0
        %1597 = vmatpush.msra.mxu0 0.0
        %1598 = vmatpush.msra.mxu0 0.0
        %1599 = vmatpush.msra.mxu0 %v1587
        %1600 = vmatpush.msra.mxu0 %v1586
        %1601 = vmatpush.msra.mxu0 %v1585
        %1602 = vmatpush.msra.mxu0 %v1584
        %1603 = vmatpush.msra.mxu0 %v1583
        %1604 = vmatpush.msra.mxu0 %v1582
        %1605 = vmatpush.msra.mxu0 %v1581
        %1606 = vmatpush.msra.mxu0 %v1580
        %1607 = vmatmul.f32.gmra.mxu0 %v1589
        %v1608 = vpop.f32.mrf.mxu0
        %v1609 = vadd.f32 0.0, %v1608
        %1610 = vdwg.mxu0
        %v1611 = vadd.f32 %v1577, %v1609
        %v1612 = vld [vmem:[%s6] sm:$0x1]
        %v1614 = vperm.slane %v1612, 0
        %v1616 = vadd.f32 %v1611, %v1614
        %v1617 = vmax.f32 %v1616, 0.0
        %s1618 = smul.u32 %s1295, 8
        %s1619 = scalar_lea.vmem %s278, %s1618
        %vm1620 = vcmask 522240
        %1621 = vst.msk [vmem:[%s1619] sm:$0x7f] %vm1620, %v1617
      $region67: #{policy_network.2} parent=47 // loop_footer
        %s1299 = sadd.s32 1, %s1295
      $region68: #{policy_network.2} parent=47 // loop_footer_branch
        %1294 = sbr.rel target = $region64
      $region69: #{policy_network.2} parent=47 // loop_exit
        _
      %p1622 = scmp.lt.s32.totalorder %s18, 1
      %s1623 = scalar_select %p1622, %s18, 1
      %s1624 = smul.addr %s1623, 7
      %s1625 = smul.addr %s1624, 8
      %s1626 = scalar_lea.vmem %s7, %s1625
      // Predicated region
      $region70: #{policy_network.2} parent=47 // pred_check
        %p1627 = pneg %p188
      $region71: #{policy_network.2} parent=47 // pred_check_branch
        %1629 = sbr.rel (%p1627) target = $region73
      $region72: #{policy_network.2} parent=47 // pred_region
        _
      $region73: #{policy_network.2} parent=47 // pred_fallthru
        _
    $region48: #{policy_network.2} parent=5 // pred_fallthru
      _
    %p1630 = scmp.le.s32.totalorder 2, %s13
    // Predicated region
    $region74: #{policy_network.2} parent=5 // pred_check
      %p1631 = pneg %p1630
    $region75: #{policy_network.2} parent=5 // pred_check_branch
      %1633 = sbr.rel (%p1631) target = $region77
    $region76: #{policy_network.2} parent=5 // pred_region
      %s1634 = ssub.s32 %s13, 2
      // Predicated region
      $region78: #{policy_network.2} parent=76 // pred_check
        %p1635 = pneg %p194
      $region79: #{policy_network.2} parent=76 // pred_check_branch
        %1637 = sbr.rel (%p1635) target = $region81
      $region80: #{policy_network.2} parent=76 // pred_region
        %p1638 = scmp.lt.s32.totalorder %s19, 1
        %s1639 = scalar_select %p1638, %s19, 1
        %s1640 = smul.addr %s1639, 7
        %s1641 = smul.addr %s1640, 8
        %s1642 = scalar_lea.vmem %s7, %s1641
      $region81: #{policy_network.2} parent=76 // pred_fallthru
        _
    $region77: #{policy_network.2} parent=5 // pred_fallthru
      _
  $region6: #{policy_network.2} parent=0 // loop_footer
    %s17 = sadd.s32 1, %s13
  $region7: #{policy_network.2} parent=0 // loop_footer_branch
    %12 = sbr.rel target = $region3
  $region8: #{policy_network.2} parent=0 // loop_exit
    _

// kernel: policy_network.3
$region0: #{policy_network.3}
  #allocation0 [shape = 'u32[]', space=smem, size = 0x4, offset = 0x4, fixed_abs, tag = 'smem constant byte address 0x4 - core index']
  #allocation1 [shape = 'u32[72,128]{1,0:T(1,128)}', space=vmem, size = 0x9000, scoped, tag = 'internal scratch']
  %s0 = inlined_call_operand.vmem [shape: f32[2,3136], index: 0, kind: input, shape index: {}]
  %s1 = inlined_call_operand.vmem [shape: f32[3136,512], index: 1, kind: input, shape index: {}]
  %s2 = inlined_call_operand.vmem [shape: f32[1,512], index: 2, kind: input, shape index: {}]
  %s3 = inlined_call_operand.vmem [shape: f32[512,18], index: 3, kind: input, shape index: {}]
  %s4 = inlined_call_operand.vmem [shape: f32[1,18], index: 4, kind: input, shape index: {}]
  %s5 = inlined_call_operand.vmem [shape: s32[2,1], index: 5, kind: output, shape index: {0}]
  %s6 = inlined_call_operand.hbm [shape: f32[2,18], index: 6, kind: output, shape index: {1}]
  %7 = xla_tuple %s5, %s6
  %s8 = sld [smem:[#allocation0]]
  $region38: #{policy_network.3} parent=0
    _
  %s10 = ssub.s32 1, %s8
  %s11 = scalar_select 0, %s10, %s8
  $region1: #{policy_network.3} parent=0
    #allocation2 [shape = 'u8[1024]{0}', space=vmem, size = 0x400, scoped, tag = 'output window, operand 1, single buffered']
    #allocation3 [shape = 's32[1]{0}', space=sflag, size = 0x4, scoped, tag = 'scoped memory for policy_network.3']
    %12 = vsyncpa [#allocation3], 0
    // Predicated region
    $region2: #{policy_network.3} parent=1 // pred_check
      _
    $region3: #{policy_network.3} parent=1 // pred_check_branch
      %14 = sbr.rel (0) target = $region5
    $region4: #{policy_network.3} parent=1 // pred_region
      _
    $region5: #{policy_network.3} parent=1 // pred_fallthru
      _
    // Predicated region
    $region6: #{policy_network.3} parent=1 // pred_check
      _
    $region7: #{policy_network.3} parent=1 // pred_check_branch
      %16 = sbr.rel (0) target = $region9
    $region8: #{policy_network.3} parent=1 // pred_region
      _
    $region9: #{policy_network.3} parent=1 // pred_fallthru
      _
    // Predicated region
    $region10: #{policy_network.3} parent=1 // pred_check
      _
    $region11: #{policy_network.3} parent=1 // pred_check_branch
      %18 = sbr.rel (0) target = $region13
    $region12: #{policy_network.3} parent=1 // pred_region
      _
    $region13: #{policy_network.3} parent=1 // pred_fallthru
      _
    // Predicated region
    $region14: #{policy_network.3} parent=1 // pred_check
      _
    $region15: #{policy_network.3} parent=1 // pred_check_branch
      %20 = sbr.rel (0) target = $region17
    $region16: #{policy_network.3} parent=1 // pred_region
      _
    $region17: #{policy_network.3} parent=1 // pred_fallthru
      _
    // Predicated region
    $region18: #{policy_network.3} parent=1 // pred_check
      _
    $region19: #{policy_network.3} parent=1 // pred_check_branch
      %22 = sbr.rel (0) target = $region21
    $region20: #{policy_network.3} parent=1 // pred_region
      _
    $region21: #{policy_network.3} parent=1 // pred_fallthru
      _
    %v23 = vld [vmem:[%s0] sm:$0xff]
    %v24 = vld [vmem:[%s0 + $0x8] sm:$0xff]
    %v25 = vld [vmem:[%s0 + $0x10] sm:$0xff]
    %v26 = vld [vmem:[%s0 + $0x18] sm:$0xff]
    %v27 = vld [vmem:[%s0 + $0x20] sm:$0xff]
    %v28 = vld [vmem:[%s0 + $0x28] sm:$0xff]
    %v29 = vld [vmem:[%s0 + $0x30] sm:$0x3]
    %v30 = vld [vmem:[%s1] sm:$0xff]
    %v31 = vld [vmem:[%s1 + $0x8] sm:$0xff]
    %v32 = vld [vmem:[%s1 + $0x10] sm:$0xff]
    %v33 = vld [vmem:[%s1 + $0x18] sm:$0xff]
    %v34 = vld [vmem:[%s1 + $0x20] sm:$0xff]
    %v35 = vld [vmem:[%s1 + $0x28] sm:$0xff]
    %v36 = vld [vmem:[%s1 + $0x30] sm:$0xff]
    %v37 = vld [vmem:[%s1 + $0x38] sm:$0xff]
    %v38 = vld [vmem:[%s1 + $0x40] sm:$0xff]
    %v39 = vld [vmem:[%s1 + $0x48] sm:$0xff]
    %v40 = vld [vmem:[%s1 + $0x50] sm:$0xff]
    %v41 = vld [vmem:[%s1 + $0x58] sm:$0xff]
    %v42 = vld [vmem:[%s1 + $0x60] sm:$0xff]
    %v43 = vld [vmem:[%s1 + $0x68] sm:$0xff]
    %v44 = vld [vmem:[%s1 + $0x70] sm:$0xff]
    %v45 = vld [vmem:[%s1 + $0x78] sm:$0xff]
    %v46 = vld [vmem:[%s1 + $0x80] sm:$0xff]
    %v47 = vld [vmem:[%s1 + $0x88] sm:$0xff]
    %v48 = vld [vmem:[%s1 + $0x90] sm:$0xff]
    %v49 = vld [vmem:[%s1 + $0x98] sm:$0xff]
    %v50 = vld [vmem:[%s1 + $0xa0] sm:$0xff]
    %v51 = vld [vmem:[%s1 + $0xa8] sm:$0xff]
    %v52 = vld [vmem:[%s1 + $0xb0] sm:$0xff]
    %v53 = vld [vmem:[%s1 + $0xb8] sm:$0xff]
    %v54 = vld [vmem:[%s1 + $0xc0] sm:$0xff]
    %v55 = vld [vmem:[%s1 + $0xc8] sm:$0xff]
    %v56 = vld [vmem:[%s1 + $0xd0] sm:$0xff]
    %v57 = vld [vmem:[%s1 + $0xd8] sm:$0xff]
    %v58 = vld [vmem:[%s1 + $0xe0] sm:$0xff]
    %v59 = vld [vmem:[%s1 + $0xe8] sm:$0xff]
    %v60 = vld [vmem:[%s1 + $0xf0] sm:$0xff]
    %v61 = vld [vmem:[%s1 + $0xf8] sm:$0xff]
    %v62 = vld [vmem:[%s1 + $0x100] sm:$0xff]
    %v63 = vld [vmem:[%s1 + $0x108] sm:$0xff]
    %v64 = vld [vmem:[%s1 + $0x110] sm:$0xff]
    %v65 = vld [vmem:[%s1 + $0x118] sm:$0xff]
    %v66 = vld [vmem:[%s1 + $0x120] sm:$0xff]
    %v67 = vld [vmem:[%s1 + $0x128] sm:$0xff]
    %v68 = vld [vmem:[%s1 + $0x130] sm:$0xff]
    %v69 = vld [vmem:[%s1 + $0x138] sm:$0xff]
    %v70 = vld [vmem:[%s1 + $0x140] sm:$0xff]
    %v71 = vld [vmem:[%s1 + $0x148] sm:$0xff]
    %v72 = vld [vmem:[%s1 + $0x150] sm:$0xff]
    %v73 = vld [vmem:[%s1 + $0x158] sm:$0xff]
    %v74 = vld [vmem:[%s1 + $0x160] sm:$0xff]
    %v75 = vld [vmem:[%s1 + $0x168] sm:$0xff]
    %v76 = vld [vmem:[%s1 + $0x170] sm:$0xff]
    %v77 = vld [vmem:[%s1 + $0x178] sm:$0xff]
    %v78 = vld [vmem:[%s1 + $0x180] sm:$0xff]
    %v79 = vld [vmem:[%s1 + $0x188] sm:$0xff]
    %v80 = vld [vmem:[%s1 + $0x190] sm:$0xff]
    %v81 = vld [vmem:[%s1 + $0x198] sm:$0xff]
    %v82 = vld [vmem:[%s1 + $0x1a0] sm:$0xff]
    %v83 = vld [vmem:[%s1 + $0x1a8] sm:$0xff]
    %v84 = vld [vmem:[%s1 + $0x1b0] sm:$0xff]
    %v85 = vld [vmem:[%s1 + $0x1b8] sm:$0xff]
    %v86 = vld [vmem:[%s1 + $0x1c0] sm:$0xff]
    %v87 = vld [vmem:[%s1 + $0x1c8] sm:$0xff]
    %v88 = vld [vmem:[%s1 + $0x1d0] sm:$0xff]
    %v89 = vld [vmem:[%s1 + $0x1d8] sm:$0xff]
    %v90 = vld [vmem:[%s1 + $0x1e0] sm:$0xff]
    %v91 = vld [vmem:[%s1 + $0x1e8] sm:$0xff]
    %v92 = vld [vmem:[%s1 + $0x1f0] sm:$0xff]
    %v93 = vld [vmem:[%s1 + $0x1f8] sm:$0xff]
    %v94 = vld [vmem:[%s1 + $0x200] sm:$0xff]
    %v95 = vld [vmem:[%s1 + $0x208] sm:$0xff]
    %v96 = vld [vmem:[%s1 + $0x210] sm:$0xff]
    %v97 = vld [vmem:[%s1 + $0x218] sm:$0xff]
    %v98 = vld [vmem:[%s1 + $0x220] sm:$0xff]
    %v99 = vld [vmem:[%s1 + $0x228] sm:$0xff]
    %v100 = vld [vmem:[%s1 + $0x230] sm:$0xff]
    %v101 = vld [vmem:[%s1 + $0x238] sm:$0xff]
    %v102 = vld [vmem:[%s1 + $0x240] sm:$0xff]
    %v103 = vld [vmem:[%s1 + $0x248] sm:$0xff]
    %v104 = vld [vmem:[%s1 + $0x250] sm:$0xff]
    %v105 = vld [vmem:[%s1 + $0x258] sm:$0xff]
    %v106 = vld [vmem:[%s1 + $0x260] sm:$0xff]
    %v107 = vld [vmem:[%s1 + $0x268] sm:$0xff]
    %v108 = vld [vmem:[%s1 + $0x270] sm:$0xff]
    %v109 = vld [vmem:[%s1 + $0x278] sm:$0xff]
    %v110 = vld [vmem:[%s1 + $0x280] sm:$0xff]
    %v111 = vld [vmem:[%s1 + $0x288] sm:$0xff]
    %v112 = vld [vmem:[%s1 + $0x290] sm:$0xff]
    %v113 = vld [vmem:[%s1 + $0x298] sm:$0xff]
    %v114 = vld [vmem:[%s1 + $0x2a0] sm:$0xff]
    %v115 = vld [vmem:[%s1 + $0x2a8] sm:$0xff]
    %v116 = vld [vmem:[%s1 + $0x2b0] sm:$0xff]
    %v117 = vld [vmem:[%s1 + $0x2b8] sm:$0xff]
    %v118 = vld [vmem:[%s1 + $0x2c0] sm:$0xff]
    %v119 = vld [vmem:[%s1 + $0x2c8] sm:$0xff]
    %v120 = vld [vmem:[%s1 + $0x2d0] sm:$0xff]
    %v121 = vld [vmem:[%s1 + $0x2d8] sm:$0xff]
    %v122 = vld [vmem:[%s1 + $0x2e0] sm:$0xff]
    %v123 = vld [vmem:[%s1 + $0x2e8] sm:$0xff]
    %v124 = vld [vmem:[%s1 + $0x2f0] sm:$0xff]
    %v125 = vld [vmem:[%s1 + $0x2f8] sm:$0xff]
    %v126 = vld [vmem:[%s1 + $0x300] sm:$0xff]
    %v127 = vld [vmem:[%s1 + $0x308] sm:$0xff]
    %v128 = vld [vmem:[%s1 + $0x310] sm:$0xff]
    %v129 = vld [vmem:[%s1 + $0x318] sm:$0xff]
    %v130 = vld [vmem:[%s1 + $0x320] sm:$0xff]
    %v131 = vld [vmem:[%s1 + $0x328] sm:$0xff]
    %v132 = vld [vmem:[%s1 + $0x330] sm:$0xff]
    %v133 = vld [vmem:[%s1 + $0x338] sm:$0xff]
    %v134 = vld [vmem:[%s1 + $0x340] sm:$0xff]
    %v135 = vld [vmem:[%s1 + $0x348] sm:$0xff]
    %v136 = vld [vmem:[%s1 + $0x350] sm:$0xff]
    %v137 = vld [vmem:[%s1 + $0x358] sm:$0xff]
    %v138 = vld [vmem:[%s1 + $0x360] sm:$0xff]
    %v139 = vld [vmem:[%s1 + $0x368] sm:$0xff]
    %v140 = vld [vmem:[%s1 + $0x370] sm:$0xff]
    %v141 = vld [vmem:[%s1 + $0x378] sm:$0xff]
    %v142 = vld [vmem:[%s1 + $0x380] sm:$0xff]
    %v143 = vld [vmem:[%s1 + $0x388] sm:$0xff]
    %v144 = vld [vmem:[%s1 + $0x390] sm:$0xff]
    %v145 = vld [vmem:[%s1 + $0x398] sm:$0xff]
    %v146 = vld [vmem:[%s1 + $0x3a0] sm:$0xff]
    %v147 = vld [vmem:[%s1 + $0x3a8] sm:$0xff]
    %v148 = vld [vmem:[%s1 + $0x3b0] sm:$0xff]
    %v149 = vld [vmem:[%s1 + $0x3b8] sm:$0xff]
    %v150 = vld [vmem:[%s1 + $0x3c0] sm:$0xff]
    %v151 = vld [vmem:[%s1 + $0x3c8] sm:$0xff]
    %v152 = vld [vmem:[%s1 + $0x3d0] sm:$0xff]
    %v153 = vld [vmem:[%s1 + $0x3d8] sm:$0xff]
    %v154 = vld [vmem:[%s1 + $0x3e0] sm:$0xff]
    %v155 = vld [vmem:[%s1 + $0x3e8] sm:$0xff]
    %v156 = vld [vmem:[%s1 + $0x3f0] sm:$0xff]
    %v157 = vld [vmem:[%s1 + $0x3f8] sm:$0xff]
    %v158 = vld [vmem:[%s1 + $0x400] sm:$0xff]
    %v159 = vld [vmem:[%s1 + $0x408] sm:$0xff]
    %v160 = vld [vmem:[%s1 + $0x410] sm:$0xff]
    %v161 = vld [vmem:[%s1 + $0x418] sm:$0xff]
    %v162 = vld [vmem:[%s1 + $0x420] sm:$0xff]
    %v163 = vld [vmem:[%s1 + $0x428] sm:$0xff]
    %v164 = vld [vmem:[%s1 + $0x430] sm:$0xff]
    %v165 = vld [vmem:[%s1 + $0x438] sm:$0xff]
    %v166 = vld [vmem:[%s1 + $0x440] sm:$0xff]
    %v167 = vld [vmem:[%s1 + $0x448] sm:$0xff]
    %v168 = vld [vmem:[%s1 + $0x450] sm:$0xff]
    %v169 = vld [vmem:[%s1 + $0x458] sm:$0xff]
    %v170 = vld [vmem:[%s1 + $0x460] sm:$0xff]
    %v171 = vld [vmem:[%s1 + $0x468] sm:$0xff]
    %v172 = vld [vmem:[%s1 + $0x470] sm:$0xff]
    %v173 = vld [vmem:[%s1 + $0x478] sm:$0xff]
    %v174 = vld [vmem:[%s1 + $0x480] sm:$0xff]
    %v175 = vld [vmem:[%s1 + $0x488] sm:$0xff]
    %v176 = vld [vmem:[%s1 + $0x490] sm:$0xff]
    %v177 = vld [vmem:[%s1 + $0x498] sm:$0xff]
    %v178 = vld [vmem:[%s1 + $0x4a0] sm:$0xff]
    %v179 = vld [vmem:[%s1 + $0x4a8] sm:$0xff]
    %v180 = vld [vmem:[%s1 + $0x4b0] sm:$0xff]
    %v181 = vld [vmem:[%s1 + $0x4b8] sm:$0xff]
    %v182 = vld [vmem:[%s1 + $0x4c0] sm:$0xff]
    %v183 = vld [vmem:[%s1 + $0x4c8] sm:$0xff]
    %v184 = vld [vmem:[%s1 + $0x4d0] sm:$0xff]
    %v185 = vld [vmem:[%s1 + $0x4d8] sm:$0xff]
    %v186 = vld [vmem:[%s1 + $0x4e0] sm:$0xff]
    %v187 = vld [vmem:[%s1 + $0x4e8] sm:$0xff]
    %v188 = vld [vmem:[%s1 + $0x4f0] sm:$0xff]
    %v189 = vld [vmem:[%s1 + $0x4f8] sm:$0xff]
    %v190 = vld [vmem:[%s1 + $0x500] sm:$0xff]
    %v191 = vld [vmem:[%s1 + $0x508] sm:$0xff]
    %v192 = vld [vmem:[%s1 + $0x510] sm:$0xff]
    %v193 = vld [vmem:[%s1 + $0x518] sm:$0xff]
    %v194 = vld [vmem:[%s1 + $0x520] sm:$0xff]
    %v195 = vld [vmem:[%s1 + $0x528] sm:$0xff]
    %v196 = vld [vmem:[%s1 + $0x530] sm:$0xff]
    %v197 = vld [vmem:[%s1 + $0x538] sm:$0xff]
    %v198 = vld [vmem:[%s1 + $0x540] sm:$0xff]
    %v199 = vld [vmem:[%s1 + $0x548] sm:$0xff]
    %v200 = vld [vmem:[%s1 + $0x550] sm:$0xff]
    %v201 = vld [vmem:[%s1 + $0x558] sm:$0xff]
    %v202 = vld [vmem:[%s1 + $0x560] sm:$0xff]
    %v203 = vld [vmem:[%s1 + $0x568] sm:$0xff]
    %v204 = vld [vmem:[%s1 + $0x570] sm:$0xff]
    %v205 = vld [vmem:[%s1 + $0x578] sm:$0xff]
    %v206 = vld [vmem:[%s1 + $0x580] sm:$0xff]
    %v207 = vld [vmem:[%s1 + $0x588] sm:$0xff]
    %v208 = vld [vmem:[%s1 + $0x590] sm:$0xff]
    %v209 = vld [vmem:[%s1 + $0x598] sm:$0xff]
    %v210 = vld [vmem:[%s1 + $0x5a0] sm:$0xff]
    %v211 = vld [vmem:[%s1 + $0x5a8] sm:$0xff]
    %v212 = vld [vmem:[%s1 + $0x5b0] sm:$0xff]
    %v213 = vld [vmem:[%s1 + $0x5b8] sm:$0xff]
    %v214 = vld [vmem:[%s1 + $0x5c0] sm:$0xff]
    %v215 = vld [vmem:[%s1 + $0x5c8] sm:$0xff]
    %v216 = vld [vmem:[%s1 + $0x5d0] sm:$0xff]
    %v217 = vld [vmem:[%s1 + $0x5d8] sm:$0xff]
    %v218 = vld [vmem:[%s1 + $0x5e0] sm:$0xff]
    %v219 = vld [vmem:[%s1 + $0x5e8] sm:$0xff]
    %v220 = vld [vmem:[%s1 + $0x5f0] sm:$0xff]
    %v221 = vld [vmem:[%s1 + $0x5f8] sm:$0xff]
    %v222 = vld [vmem:[%s1 + $0x600] sm:$0xff]
    %v223 = vld [vmem:[%s1 + $0x608] sm:$0xff]
    %v224 = vld [vmem:[%s1 + $0x610] sm:$0xff]
    %v225 = vld [vmem:[%s1 + $0x618] sm:$0xff]
    %v226 = vld [vmem:[%s1 + $0x620] sm:$0xff]
    %v227 = vld [vmem:[%s1 + $0x628] sm:$0xff]
    %v228 = vld [vmem:[%s1 + $0x630] sm:$0xff]
    %v229 = vld [vmem:[%s1 + $0x638] sm:$0xff]
    %v230 = vld [vmem:[%s1 + $0x640] sm:$0xff]
    %v231 = vld [vmem:[%s1 + $0x648] sm:$0xff]
    %v232 = vld [vmem:[%s1 + $0x650] sm:$0xff]
    %v233 = vld [vmem:[%s1 + $0x658] sm:$0xff]
    %v234 = vld [vmem:[%s1 + $0x660] sm:$0xff]
    %v235 = vld [vmem:[%s1 + $0x668] sm:$0xff]
    %v236 = vld [vmem:[%s1 + $0x670] sm:$0xff]
    %v237 = vld [vmem:[%s1 + $0x678] sm:$0xff]
    %v238 = vld [vmem:[%s1 + $0x680] sm:$0xff]
    %v239 = vld [vmem:[%s1 + $0x688] sm:$0xff]
    %v240 = vld [vmem:[%s1 + $0x690] sm:$0xff]
    %v241 = vld [vmem:[%s1 + $0x698] sm:$0xff]
    %v242 = vld [vmem:[%s1 + $0x6a0] sm:$0xff]
    %v243 = vld [vmem:[%s1 + $0x6a8] sm:$0xff]
    %v244 = vld [vmem:[%s1 + $0x6b0] sm:$0xff]
    %v245 = vld [vmem:[%s1 + $0x6b8] sm:$0xff]
    %v246 = vld [vmem:[%s1 + $0x6c0] sm:$0xff]
    %v247 = vld [vmem:[%s1 + $0x6c8] sm:$0xff]
    %v248 = vld [vmem:[%s1 + $0x6d0] sm:$0xff]
    %v249 = vld [vmem:[%s1 + $0x6d8] sm:$0xff]
    %v250 = vld [vmem:[%s1 + $0x6e0] sm:$0xff]
    %v251 = vld [vmem:[%s1 + $0x6e8] sm:$0xff]
    %v252 = vld [vmem:[%s1 + $0x6f0] sm:$0xff]
    %v253 = vld [vmem:[%s1 + $0x6f8] sm:$0xff]
    %v254 = vld [vmem:[%s1 + $0x700] sm:$0xff]
    %v255 = vld [vmem:[%s1 + $0x708] sm:$0xff]
    %v256 = vld [vmem:[%s1 + $0x710] sm:$0xff]
    %v257 = vld [vmem:[%s1 + $0x718] sm:$0xff]
    %v258 = vld [vmem:[%s1 + $0x720] sm:$0xff]
    %v259 = vld [vmem:[%s1 + $0x728] sm:$0xff]
    %v260 = vld [vmem:[%s1 + $0x730] sm:$0xff]
    %v261 = vld [vmem:[%s1 + $0x738] sm:$0xff]
    %v262 = vld [vmem:[%s1 + $0x740] sm:$0xff]
    %v263 = vld [vmem:[%s1 + $0x748] sm:$0xff]
    %v264 = vld [vmem:[%s1 + $0x750] sm:$0xff]
    %v265 = vld [vmem:[%s1 + $0x758] sm:$0xff]
    %v266 = vld [vmem:[%s1 + $0x760] sm:$0xff]
    %v267 = vld [vmem:[%s1 + $0x768] sm:$0xff]
    %v268 = vld [vmem:[%s1 + $0x770] sm:$0xff]
    %v269 = vld [vmem:[%s1 + $0x778] sm:$0xff]
    %v270 = vld [vmem:[%s1 + $0x780] sm:$0xff]
    %v271 = vld [vmem:[%s1 + $0x788] sm:$0xff]
    %v272 = vld [vmem:[%s1 + $0x790] sm:$0xff]
    %v273 = vld [vmem:[%s1 + $0x798] sm:$0xff]
    %v274 = vld [vmem:[%s1 + $0x7a0] sm:$0xff]
    %v275 = vld [vmem:[%s1 + $0x7a8] sm:$0xff]
    %v276 = vld [vmem:[%s1 + $0x7b0] sm:$0xff]
    %v277 = vld [vmem:[%s1 + $0x7b8] sm:$0xff]
    %v278 = vld [vmem:[%s1 + $0x7c0] sm:$0xff]
    %v279 = vld [vmem:[%s1 + $0x7c8] sm:$0xff]
    %v280 = vld [vmem:[%s1 + $0x7d0] sm:$0xff]
    %v281 = vld [vmem:[%s1 + $0x7d8] sm:$0xff]
    %v282 = vld [vmem:[%s1 + $0x7e0] sm:$0xff]
    %v283 = vld [vmem:[%s1 + $0x7e8] sm:$0xff]
    %v284 = vld [vmem:[%s1 + $0x7f0] sm:$0xff]
    %v285 = vld [vmem:[%s1 + $0x7f8] sm:$0xff]
    %v286 = vld [vmem:[%s1 + $0x800] sm:$0xff]
    %v287 = vld [vmem:[%s1 + $0x808] sm:$0xff]
    %v288 = vld [vmem:[%s1 + $0x810] sm:$0xff]
    %v289 = vld [vmem:[%s1 + $0x818] sm:$0xff]
    %v290 = vld [vmem:[%s1 + $0x820] sm:$0xff]
    %v291 = vld [vmem:[%s1 + $0x828] sm:$0xff]
    %v292 = vld [vmem:[%s1 + $0x830] sm:$0xff]
    %v293 = vld [vmem:[%s1 + $0x838] sm:$0xff]
    %v294 = vld [vmem:[%s1 + $0x840] sm:$0xff]
    %v295 = vld [vmem:[%s1 + $0x848] sm:$0xff]
    %v296 = vld [vmem:[%s1 + $0x850] sm:$0xff]
    %v297 = vld [vmem:[%s1 + $0x858] sm:$0xff]
    %v298 = vld [vmem:[%s1 + $0x860] sm:$0xff]
    %v299 = vld [vmem:[%s1 + $0x868] sm:$0xff]
    %v300 = vld [vmem:[%s1 + $0x870] sm:$0xff]
    %v301 = vld [vmem:[%s1 + $0x878] sm:$0xff]
    %v302 = vld [vmem:[%s1 + $0x880] sm:$0xff]
    %v303 = vld [vmem:[%s1 + $0x888] sm:$0xff]
    %v304 = vld [vmem:[%s1 + $0x890] sm:$0xff]
    %v305 = vld [vmem:[%s1 + $0x898] sm:$0xff]
    %v306 = vld [vmem:[%s1 + $0x8a0] sm:$0xff]
    %v307 = vld [vmem:[%s1 + $0x8a8] sm:$0xff]
    %v308 = vld [vmem:[%s1 + $0x8b0] sm:$0xff]
    %v309 = vld [vmem:[%s1 + $0x8b8] sm:$0xff]
    %v310 = vld [vmem:[%s1 + $0x8c0] sm:$0xff]
    %v311 = vld [vmem:[%s1 + $0x8c8] sm:$0xff]
    %v312 = vld [vmem:[%s1 + $0x8d0] sm:$0xff]
    %v313 = vld [vmem:[%s1 + $0x8d8] sm:$0xff]
    %v314 = vld [vmem:[%s1 + $0x8e0] sm:$0xff]
    %v315 = vld [vmem:[%s1 + $0x8e8] sm:$0xff]
    %v316 = vld [vmem:[%s1 + $0x8f0] sm:$0xff]
    %v317 = vld [vmem:[%s1 + $0x8f8] sm:$0xff]
    %v318 = vld [vmem:[%s1 + $0x900] sm:$0xff]
    %v319 = vld [vmem:[%s1 + $0x908] sm:$0xff]
    %v320 = vld [vmem:[%s1 + $0x910] sm:$0xff]
    %v321 = vld [vmem:[%s1 + $0x918] sm:$0xff]
    %v322 = vld [vmem:[%s1 + $0x920] sm:$0xff]
    %v323 = vld [vmem:[%s1 + $0x928] sm:$0xff]
    %v324 = vld [vmem:[%s1 + $0x930] sm:$0xff]
    %v325 = vld [vmem:[%s1 + $0x938] sm:$0xff]
    %v326 = vld [vmem:[%s1 + $0x940] sm:$0xff]
    %v327 = vld [vmem:[%s1 + $0x948] sm:$0xff]
    %v328 = vld [vmem:[%s1 + $0x950] sm:$0xff]
    %v329 = vld [vmem:[%s1 + $0x958] sm:$0xff]
    %v330 = vld [vmem:[%s1 + $0x960] sm:$0xff]
    %v331 = vld [vmem:[%s1 + $0x968] sm:$0xff]
    %v332 = vld [vmem:[%s1 + $0x970] sm:$0xff]
    %v333 = vld [vmem:[%s1 + $0x978] sm:$0xff]
    %v334 = vld [vmem:[%s1 + $0x980] sm:$0xff]
    %v335 = vld [vmem:[%s1 + $0x988] sm:$0xff]
    %v336 = vld [vmem:[%s1 + $0x990] sm:$0xff]
    %v337 = vld [vmem:[%s1 + $0x998] sm:$0xff]
    %v338 = vld [vmem:[%s1 + $0x9a0] sm:$0xff]
    %v339 = vld [vmem:[%s1 + $0x9a8] sm:$0xff]
    %v340 = vld [vmem:[%s1 + $0x9b0] sm:$0xff]
    %v341 = vld [vmem:[%s1 + $0x9b8] sm:$0xff]
    %v342 = vld [vmem:[%s1 + $0x9c0] sm:$0xff]
    %v343 = vld [vmem:[%s1 + $0x9c8] sm:$0xff]
    %v344 = vld [vmem:[%s1 + $0x9d0] sm:$0xff]
    %v345 = vld [vmem:[%s1 + $0x9d8] sm:$0xff]
    %v346 = vld [vmem:[%s1 + $0x9e0] sm:$0xff]
    %v347 = vld [vmem:[%s1 + $0x9e8] sm:$0xff]
    %v348 = vld [vmem:[%s1 + $0x9f0] sm:$0xff]
    %v349 = vld [vmem:[%s1 + $0x9f8] sm:$0xff]
    %v350 = vld [vmem:[%s1 + $0xa00] sm:$0xff]
    %v351 = vld [vmem:[%s1 + $0xa08] sm:$0xff]
    %v352 = vld [vmem:[%s1 + $0xa10] sm:$0xff]
    %v353 = vld [vmem:[%s1 + $0xa18] sm:$0xff]
    %v354 = vld [vmem:[%s1 + $0xa20] sm:$0xff]
    %v355 = vld [vmem:[%s1 + $0xa28] sm:$0xff]
    %v356 = vld [vmem:[%s1 + $0xa30] sm:$0xff]
    %v357 = vld [vmem:[%s1 + $0xa38] sm:$0xff]
    %v358 = vld [vmem:[%s1 + $0xa40] sm:$0xff]
    %v359 = vld [vmem:[%s1 + $0xa48] sm:$0xff]
    %v360 = vld [vmem:[%s1 + $0xa50] sm:$0xff]
    %v361 = vld [vmem:[%s1 + $0xa58] sm:$0xff]
    %v362 = vld [vmem:[%s1 + $0xa60] sm:$0xff]
    %v363 = vld [vmem:[%s1 + $0xa68] sm:$0xff]
    %v364 = vld [vmem:[%s1 + $0xa70] sm:$0xff]
    %v365 = vld [vmem:[%s1 + $0xa78] sm:$0xff]
    %v366 = vld [vmem:[%s1 + $0xa80] sm:$0xff]
    %v367 = vld [vmem:[%s1 + $0xa88] sm:$0xff]
    %v368 = vld [vmem:[%s1 + $0xa90] sm:$0xff]
    %v369 = vld [vmem:[%s1 + $0xa98] sm:$0xff]
    %v370 = vld [vmem:[%s1 + $0xaa0] sm:$0xff]
    %v371 = vld [vmem:[%s1 + $0xaa8] sm:$0xff]
    %v372 = vld [vmem:[%s1 + $0xab0] sm:$0xff]
    %v373 = vld [vmem:[%s1 + $0xab8] sm:$0xff]
    %v374 = vld [vmem:[%s1 + $0xac0] sm:$0xff]
    %v375 = vld [vmem:[%s1 + $0xac8] sm:$0xff]
    %v376 = vld [vmem:[%s1 + $0xad0] sm:$0xff]
    %v377 = vld [vmem:[%s1 + $0xad8] sm:$0xff]
    %v378 = vld [vmem:[%s1 + $0xae0] sm:$0xff]
    %v379 = vld [vmem:[%s1 + $0xae8] sm:$0xff]
    %v380 = vld [vmem:[%s1 + $0xaf0] sm:$0xff]
    %v381 = vld [vmem:[%s1 + $0xaf8] sm:$0xff]
    %v382 = vld [vmem:[%s1 + $0xb00] sm:$0xff]
    %v383 = vld [vmem:[%s1 + $0xb08] sm:$0xff]
    %v384 = vld [vmem:[%s1 + $0xb10] sm:$0xff]
    %v385 = vld [vmem:[%s1 + $0xb18] sm:$0xff]
    %v386 = vld [vmem:[%s1 + $0xb20] sm:$0xff]
    %v387 = vld [vmem:[%s1 + $0xb28] sm:$0xff]
    %v388 = vld [vmem:[%s1 + $0xb30] sm:$0xff]
    %v389 = vld [vmem:[%s1 + $0xb38] sm:$0xff]
    %v390 = vld [vmem:[%s1 + $0xb40] sm:$0xff]
    %v391 = vld [vmem:[%s1 + $0xb48] sm:$0xff]
    %v392 = vld [vmem:[%s1 + $0xb50] sm:$0xff]
    %v393 = vld [vmem:[%s1 + $0xb58] sm:$0xff]
    %v394 = vld [vmem:[%s1 + $0xb60] sm:$0xff]
    %v395 = vld [vmem:[%s1 + $0xb68] sm:$0xff]
    %v396 = vld [vmem:[%s1 + $0xb70] sm:$0xff]
    %v397 = vld [vmem:[%s1 + $0xb78] sm:$0xff]
    %v398 = vld [vmem:[%s1 + $0xb80] sm:$0xff]
    %v399 = vld [vmem:[%s1 + $0xb88] sm:$0xff]
    %v400 = vld [vmem:[%s1 + $0xb90] sm:$0xff]
    %v401 = vld [vmem:[%s1 + $0xb98] sm:$0xff]
    %v402 = vld [vmem:[%s1 + $0xba0] sm:$0xff]
    %v403 = vld [vmem:[%s1 + $0xba8] sm:$0xff]
    %v404 = vld [vmem:[%s1 + $0xbb0] sm:$0xff]
    %v405 = vld [vmem:[%s1 + $0xbb8] sm:$0xff]
    %v406 = vld [vmem:[%s1 + $0xbc0] sm:$0xff]
    %v407 = vld [vmem:[%s1 + $0xbc8] sm:$0xff]
    %v408 = vld [vmem:[%s1 + $0xbd0] sm:$0xff]
    %v409 = vld [vmem:[%s1 + $0xbd8] sm:$0xff]
    %v410 = vld [vmem:[%s1 + $0xbe0] sm:$0xff]
    %v411 = vld [vmem:[%s1 + $0xbe8] sm:$0xff]
    %v412 = vld [vmem:[%s1 + $0xbf0] sm:$0xff]
    %v413 = vld [vmem:[%s1 + $0xbf8] sm:$0xff]
    %v414 = vld [vmem:[%s1 + $0xc00] sm:$0xff]
    %v415 = vld [vmem:[%s1 + $0xc08] sm:$0xff]
    %v416 = vld [vmem:[%s1 + $0xc10] sm:$0xff]
    %v417 = vld [vmem:[%s1 + $0xc18] sm:$0xff]
    %v418 = vld [vmem:[%s1 + $0xc20] sm:$0xff]
    %v419 = vld [vmem:[%s1 + $0xc28] sm:$0xff]
    %v420 = vld [vmem:[%s1 + $0xc30] sm:$0xff]
    %v421 = vld [vmem:[%s1 + $0xc38] sm:$0xff]
    %v422 = vld [vmem:[%s1 + $0xc40] sm:$0xff]
    %v423 = vld [vmem:[%s1 + $0xc48] sm:$0xff]
    %v424 = vld [vmem:[%s1 + $0xc50] sm:$0xff]
    %v425 = vld [vmem:[%s1 + $0xc58] sm:$0xff]
    %v426 = vld [vmem:[%s1 + $0xc60] sm:$0xff]
    %v427 = vld [vmem:[%s1 + $0xc68] sm:$0xff]
    %v428 = vld [vmem:[%s1 + $0xc70] sm:$0xff]
    %v429 = vld [vmem:[%s1 + $0xc78] sm:$0xff]
    %v430 = vld [vmem:[%s1 + $0xc80] sm:$0xff]
    %v431 = vld [vmem:[%s1 + $0xc88] sm:$0xff]
    %v432 = vld [vmem:[%s1 + $0xc90] sm:$0xff]
    %v433 = vld [vmem:[%s1 + $0xc98] sm:$0xff]
    %v434 = vld [vmem:[%s1 + $0xca0] sm:$0xff]
    %v435 = vld [vmem:[%s1 + $0xca8] sm:$0xff]
    %v436 = vld [vmem:[%s1 + $0xcb0] sm:$0xff]
    %v437 = vld [vmem:[%s1 + $0xcb8] sm:$0xff]
    %v438 = vld [vmem:[%s1 + $0xcc0] sm:$0xff]
    %v439 = vld [vmem:[%s1 + $0xcc8] sm:$0xff]
    %v440 = vld [vmem:[%s1 + $0xcd0] sm:$0xff]
    %v441 = vld [vmem:[%s1 + $0xcd8] sm:$0xff]
    %v442 = vld [vmem:[%s1 + $0xce0] sm:$0xff]
    %v443 = vld [vmem:[%s1 + $0xce8] sm:$0xff]
    %v444 = vld [vmem:[%s1 + $0xcf0] sm:$0xff]
    %v445 = vld [vmem:[%s1 + $0xcf8] sm:$0xff]
    %v446 = vld [vmem:[%s1 + $0xd00] sm:$0xff]
    %v447 = vld [vmem:[%s1 + $0xd08] sm:$0xff]
    %v448 = vld [vmem:[%s1 + $0xd10] sm:$0xff]
    %v449 = vld [vmem:[%s1 + $0xd18] sm:$0xff]
    %v450 = vld [vmem:[%s1 + $0xd20] sm:$0xff]
    %v451 = vld [vmem:[%s1 + $0xd28] sm:$0xff]
    %v452 = vld [vmem:[%s1 + $0xd30] sm:$0xff]
    %v453 = vld [vmem:[%s1 + $0xd38] sm:$0xff]
    %v454 = vld [vmem:[%s1 + $0xd40] sm:$0xff]
    %v455 = vld [vmem:[%s1 + $0xd48] sm:$0xff]
    %v456 = vld [vmem:[%s1 + $0xd50] sm:$0xff]
    %v457 = vld [vmem:[%s1 + $0xd58] sm:$0xff]
    %v458 = vld [vmem:[%s1 + $0xd60] sm:$0xff]
    %v459 = vld [vmem:[%s1 + $0xd68] sm:$0xff]
    %v460 = vld [vmem:[%s1 + $0xd70] sm:$0xff]
    %v461 = vld [vmem:[%s1 + $0xd78] sm:$0xff]
    %v462 = vld [vmem:[%s1 + $0xd80] sm:$0xff]
    %v463 = vld [vmem:[%s1 + $0xd88] sm:$0xff]
    %v464 = vld [vmem:[%s1 + $0xd90] sm:$0xff]
    %v465 = vld [vmem:[%s1 + $0xd98] sm:$0xff]
    %v466 = vld [vmem:[%s1 + $0xda0] sm:$0xff]
    %v467 = vld [vmem:[%s1 + $0xda8] sm:$0xff]
    %v468 = vld [vmem:[%s1 + $0xdb0] sm:$0xff]
    %v469 = vld [vmem:[%s1 + $0xdb8] sm:$0xff]
    %v470 = vld [vmem:[%s1 + $0xdc0] sm:$0xff]
    %v471 = vld [vmem:[%s1 + $0xdc8] sm:$0xff]
    %v472 = vld [vmem:[%s1 + $0xdd0] sm:$0xff]
    %v473 = vld [vmem:[%s1 + $0xdd8] sm:$0xff]
    %v474 = vld [vmem:[%s1 + $0xde0] sm:$0xff]
    %v475 = vld [vmem:[%s1 + $0xde8] sm:$0xff]
    %v476 = vld [vmem:[%s1 + $0xdf0] sm:$0xff]
    %v477 = vld [vmem:[%s1 + $0xdf8] sm:$0xff]
    %v478 = vld [vmem:[%s1 + $0xe00] sm:$0xff]
    %v479 = vld [vmem:[%s1 + $0xe08] sm:$0xff]
    %v480 = vld [vmem:[%s1 + $0xe10] sm:$0xff]
    %v481 = vld [vmem:[%s1 + $0xe18] sm:$0xff]
    %v482 = vld [vmem:[%s1 + $0xe20] sm:$0xff]
    %v483 = vld [vmem:[%s1 + $0xe28] sm:$0xff]
    %v484 = vld [vmem:[%s1 + $0xe30] sm:$0xff]
    %v485 = vld [vmem:[%s1 + $0xe38] sm:$0xff]
    %v486 = vld [vmem:[%s1 + $0xe40] sm:$0xff]
    %v487 = vld [vmem:[%s1 + $0xe48] sm:$0xff]
    %v488 = vld [vmem:[%s1 + $0xe50] sm:$0xff]
    %v489 = vld [vmem:[%s1 + $0xe58] sm:$0xff]
    %v490 = vld [vmem:[%s1 + $0xe60] sm:$0xff]
    %v491 = vld [vmem:[%s1 + $0xe68] sm:$0xff]
    %v492 = vld [vmem:[%s1 + $0xe70] sm:$0xff]
    %v493 = vld [vmem:[%s1 + $0xe78] sm:$0xff]
    %v494 = vld [vmem:[%s1 + $0xe80] sm:$0xff]
    %v495 = vld [vmem:[%s1 + $0xe88] sm:$0xff]
    %v496 = vld [vmem:[%s1 + $0xe90] sm:$0xff]
    %v497 = vld [vmem:[%s1 + $0xe98] sm:$0xff]
    %v498 = vld [vmem:[%s1 + $0xea0] sm:$0xff]
    %v499 = vld [vmem:[%s1 + $0xea8] sm:$0xff]
    %v500 = vld [vmem:[%s1 + $0xeb0] sm:$0xff]
    %v501 = vld [vmem:[%s1 + $0xeb8] sm:$0xff]
    %v502 = vld [vmem:[%s1 + $0xec0] sm:$0xff]
    %v503 = vld [vmem:[%s1 + $0xec8] sm:$0xff]
    %v504 = vld [vmem:[%s1 + $0xed0] sm:$0xff]
    %v505 = vld [vmem:[%s1 + $0xed8] sm:$0xff]
    %v506 = vld [vmem:[%s1 + $0xee0] sm:$0xff]
    %v507 = vld [vmem:[%s1 + $0xee8] sm:$0xff]
    %v508 = vld [vmem:[%s1 + $0xef0] sm:$0xff]
    %v509 = vld [vmem:[%s1 + $0xef8] sm:$0xff]
    %v510 = vld [vmem:[%s1 + $0xf00] sm:$0xff]
    %v511 = vld [vmem:[%s1 + $0xf08] sm:$0xff]
    %v512 = vld [vmem:[%s1 + $0xf10] sm:$0xff]
    %v513 = vld [vmem:[%s1 + $0xf18] sm:$0xff]
    %v514 = vld [vmem:[%s1 + $0xf20] sm:$0xff]
    %v515 = vld [vmem:[%s1 + $0xf28] sm:$0xff]
    %v516 = vld [vmem:[%s1 + $0xf30] sm:$0xff]
    %v517 = vld [vmem:[%s1 + $0xf38] sm:$0xff]
    %v518 = vld [vmem:[%s1 + $0xf40] sm:$0xff]
    %v519 = vld [vmem:[%s1 + $0xf48] sm:$0xff]
    %v520 = vld [vmem:[%s1 + $0xf50] sm:$0xff]
    %v521 = vld [vmem:[%s1 + $0xf58] sm:$0xff]
    %v522 = vld [vmem:[%s1 + $0xf60] sm:$0xff]
    %v523 = vld [vmem:[%s1 + $0xf68] sm:$0xff]
    %v524 = vld [vmem:[%s1 + $0xf70] sm:$0xff]
    %v525 = vld [vmem:[%s1 + $0xf78] sm:$0xff]
    %v526 = vld [vmem:[%s1 + $0xf80] sm:$0xff]
    %v527 = vld [vmem:[%s1 + $0xf88] sm:$0xff]
    %v528 = vld [vmem:[%s1 + $0xf90] sm:$0xff]
    %v529 = vld [vmem:[%s1 + $0xf98] sm:$0xff]
    %v530 = vld [vmem:[%s1 + $0xfa0] sm:$0xff]
    %v531 = vld [vmem:[%s1 + $0xfa8] sm:$0xff]
    %v532 = vld [vmem:[%s1 + $0xfb0] sm:$0xff]
    %v533 = vld [vmem:[%s1 + $0xfb8] sm:$0xff]
    %v534 = vld [vmem:[%s1 + $0xfc0] sm:$0xff]
    %v535 = vld [vmem:[%s1 + $0xfc8] sm:$0xff]
    %v536 = vld [vmem:[%s1 + $0xfd0] sm:$0xff]
    %v537 = vld [vmem:[%s1 + $0xfd8] sm:$0xff]
    %v538 = vld [vmem:[%s1 + $0xfe0] sm:$0xff]
    %v539 = vld [vmem:[%s1 + $0xfe8] sm:$0xff]
    %v540 = vld [vmem:[%s1 + $0xff0] sm:$0xff]
    %v541 = vld [vmem:[%s1 + $0xff8] sm:$0xff]
    %v542 = vld [vmem:[%s1 + $0x1000] sm:$0xff]
    %v543 = vld [vmem:[%s1 + $0x1008] sm:$0xff]
    %v544 = vld [vmem:[%s1 + $0x1010] sm:$0xff]
    %v545 = vld [vmem:[%s1 + $0x1018] sm:$0xff]
    %v546 = vld [vmem:[%s1 + $0x1020] sm:$0xff]
    %v547 = vld [vmem:[%s1 + $0x1028] sm:$0xff]
    %v548 = vld [vmem:[%s1 + $0x1030] sm:$0xff]
    %v549 = vld [vmem:[%s1 + $0x1038] sm:$0xff]
    %v550 = vld [vmem:[%s1 + $0x1040] sm:$0xff]
    %v551 = vld [vmem:[%s1 + $0x1048] sm:$0xff]
    %v552 = vld [vmem:[%s1 + $0x1050] sm:$0xff]
    %v553 = vld [vmem:[%s1 + $0x1058] sm:$0xff]
    %v554 = vld [vmem:[%s1 + $0x1060] sm:$0xff]
    %v555 = vld [vmem:[%s1 + $0x1068] sm:$0xff]
    %v556 = vld [vmem:[%s1 + $0x1070] sm:$0xff]
    %v557 = vld [vmem:[%s1 + $0x1078] sm:$0xff]
    %v558 = vld [vmem:[%s1 + $0x1080] sm:$0xff]
    %v559 = vld [vmem:[%s1 + $0x1088] sm:$0xff]
    %v560 = vld [vmem:[%s1 + $0x1090] sm:$0xff]
    %v561 = vld [vmem:[%s1 + $0x1098] sm:$0xff]
    %v562 = vld [vmem:[%s1 + $0x10a0] sm:$0xff]
    %v563 = vld [vmem:[%s1 + $0x10a8] sm:$0xff]
    %v564 = vld [vmem:[%s1 + $0x10b0] sm:$0xff]
    %v565 = vld [vmem:[%s1 + $0x10b8] sm:$0xff]
    %v566 = vld [vmem:[%s1 + $0x10c0] sm:$0xff]
    %v567 = vld [vmem:[%s1 + $0x10c8] sm:$0xff]
    %v568 = vld [vmem:[%s1 + $0x10d0] sm:$0xff]
    %v569 = vld [vmem:[%s1 + $0x10d8] sm:$0xff]
    %v570 = vld [vmem:[%s1 + $0x10e0] sm:$0xff]
    %v571 = vld [vmem:[%s1 + $0x10e8] sm:$0xff]
    %v572 = vld [vmem:[%s1 + $0x10f0] sm:$0xff]
    %v573 = vld [vmem:[%s1 + $0x10f8] sm:$0xff]
    %v574 = vld [vmem:[%s1 + $0x1100] sm:$0xff]
    %v575 = vld [vmem:[%s1 + $0x1108] sm:$0xff]
    %v576 = vld [vmem:[%s1 + $0x1110] sm:$0xff]
    %v577 = vld [vmem:[%s1 + $0x1118] sm:$0xff]
    %v578 = vld [vmem:[%s1 + $0x1120] sm:$0xff]
    %v579 = vld [vmem:[%s1 + $0x1128] sm:$0xff]
    %v580 = vld [vmem:[%s1 + $0x1130] sm:$0xff]
    %v581 = vld [vmem:[%s1 + $0x1138] sm:$0xff]
    %v582 = vld [vmem:[%s1 + $0x1140] sm:$0xff]
    %v583 = vld [vmem:[%s1 + $0x1148] sm:$0xff]
    %v584 = vld [vmem:[%s1 + $0x1150] sm:$0xff]
    %v585 = vld [vmem:[%s1 + $0x1158] sm:$0xff]
    %v586 = vld [vmem:[%s1 + $0x1160] sm:$0xff]
    %v587 = vld [vmem:[%s1 + $0x1168] sm:$0xff]
    %v588 = vld [vmem:[%s1 + $0x1170] sm:$0xff]
    %v589 = vld [vmem:[%s1 + $0x1178] sm:$0xff]
    %v590 = vld [vmem:[%s1 + $0x1180] sm:$0xff]
    %v591 = vld [vmem:[%s1 + $0x1188] sm:$0xff]
    %v592 = vld [vmem:[%s1 + $0x1190] sm:$0xff]
    %v593 = vld [vmem:[%s1 + $0x1198] sm:$0xff]
    %v594 = vld [vmem:[%s1 + $0x11a0] sm:$0xff]
    %v595 = vld [vmem:[%s1 + $0x11a8] sm:$0xff]
    %v596 = vld [vmem:[%s1 + $0x11b0] sm:$0xff]
    %v597 = vld [vmem:[%s1 + $0x11b8] sm:$0xff]
    %v598 = vld [vmem:[%s1 + $0x11c0] sm:$0xff]
    %v599 = vld [vmem:[%s1 + $0x11c8] sm:$0xff]
    %v600 = vld [vmem:[%s1 + $0x11d0] sm:$0xff]
    %v601 = vld [vmem:[%s1 + $0x11d8] sm:$0xff]
    %v602 = vld [vmem:[%s1 + $0x11e0] sm:$0xff]
    %v603 = vld [vmem:[%s1 + $0x11e8] sm:$0xff]
    %v604 = vld [vmem:[%s1 + $0x11f0] sm:$0xff]
    %v605 = vld [vmem:[%s1 + $0x11f8] sm:$0xff]
    %v606 = vld [vmem:[%s1 + $0x1200] sm:$0xff]
    %v607 = vld [vmem:[%s1 + $0x1208] sm:$0xff]
    %v608 = vld [vmem:[%s1 + $0x1210] sm:$0xff]
    %v609 = vld [vmem:[%s1 + $0x1218] sm:$0xff]
    %v610 = vld [vmem:[%s1 + $0x1220] sm:$0xff]
    %v611 = vld [vmem:[%s1 + $0x1228] sm:$0xff]
    %v612 = vld [vmem:[%s1 + $0x1230] sm:$0xff]
    %v613 = vld [vmem:[%s1 + $0x1238] sm:$0xff]
    %v614 = vld [vmem:[%s1 + $0x1240] sm:$0xff]
    %v615 = vld [vmem:[%s1 + $0x1248] sm:$0xff]
    %v616 = vld [vmem:[%s1 + $0x1250] sm:$0xff]
    %v617 = vld [vmem:[%s1 + $0x1258] sm:$0xff]
    %v618 = vld [vmem:[%s1 + $0x1260] sm:$0xff]
    %v619 = vld [vmem:[%s1 + $0x1268] sm:$0xff]
    %v620 = vld [vmem:[%s1 + $0x1270] sm:$0xff]
    %v621 = vld [vmem:[%s1 + $0x1278] sm:$0xff]
    %v622 = vld [vmem:[%s1 + $0x1280] sm:$0xff]
    %v623 = vld [vmem:[%s1 + $0x1288] sm:$0xff]
    %v624 = vld [vmem:[%s1 + $0x1290] sm:$0xff]
    %v625 = vld [vmem:[%s1 + $0x1298] sm:$0xff]
    %v626 = vld [vmem:[%s1 + $0x12a0] sm:$0xff]
    %v627 = vld [vmem:[%s1 + $0x12a8] sm:$0xff]
    %v628 = vld [vmem:[%s1 + $0x12b0] sm:$0xff]
    %v629 = vld [vmem:[%s1 + $0x12b8] sm:$0xff]
    %v630 = vld [vmem:[%s1 + $0x12c0] sm:$0xff]
    %v631 = vld [vmem:[%s1 + $0x12c8] sm:$0xff]
    %v632 = vld [vmem:[%s1 + $0x12d0] sm:$0xff]
    %v633 = vld [vmem:[%s1 + $0x12d8] sm:$0xff]
    %v634 = vld [vmem:[%s1 + $0x12e0] sm:$0xff]
    %v635 = vld [vmem:[%s1 + $0x12e8] sm:$0xff]
    %v636 = vld [vmem:[%s1 + $0x12f0] sm:$0xff]
    %v637 = vld [vmem:[%s1 + $0x12f8] sm:$0xff]
    %v638 = vld [vmem:[%s1 + $0x1300] sm:$0xff]
    %v639 = vld [vmem:[%s1 + $0x1308] sm:$0xff]
    %v640 = vld [vmem:[%s1 + $0x1310] sm:$0xff]
    %v641 = vld [vmem:[%s1 + $0x1318] sm:$0xff]
    %v642 = vld [vmem:[%s1 + $0x1320] sm:$0xff]
    %v643 = vld [vmem:[%s1 + $0x1328] sm:$0xff]
    %v644 = vld [vmem:[%s1 + $0x1330] sm:$0xff]
    %v645 = vld [vmem:[%s1 + $0x1338] sm:$0xff]
    %v646 = vld [vmem:[%s1 + $0x1340] sm:$0xff]
    %v647 = vld [vmem:[%s1 + $0x1348] sm:$0xff]
    %v648 = vld [vmem:[%s1 + $0x1350] sm:$0xff]
    %v649 = vld [vmem:[%s1 + $0x1358] sm:$0xff]
    %v650 = vld [vmem:[%s1 + $0x1360] sm:$0xff]
    %v651 = vld [vmem:[%s1 + $0x1368] sm:$0xff]
    %v652 = vld [vmem:[%s1 + $0x1370] sm:$0xff]
    %v653 = vld [vmem:[%s1 + $0x1378] sm:$0xff]
    %v654 = vld [vmem:[%s1 + $0x1380] sm:$0xff]
    %v655 = vld [vmem:[%s1 + $0x1388] sm:$0xff]
    %v656 = vld [vmem:[%s1 + $0x1390] sm:$0xff]
    %v657 = vld [vmem:[%s1 + $0x1398] sm:$0xff]
    %v658 = vld [vmem:[%s1 + $0x13a0] sm:$0xff]
    %v659 = vld [vmem:[%s1 + $0x13a8] sm:$0xff]
    %v660 = vld [vmem:[%s1 + $0x13b0] sm:$0xff]
    %v661 = vld [vmem:[%s1 + $0x13b8] sm:$0xff]
    %v662 = vld [vmem:[%s1 + $0x13c0] sm:$0xff]
    %v663 = vld [vmem:[%s1 + $0x13c8] sm:$0xff]
    %v664 = vld [vmem:[%s1 + $0x13d0] sm:$0xff]
    %v665 = vld [vmem:[%s1 + $0x13d8] sm:$0xff]
    %v666 = vld [vmem:[%s1 + $0x13e0] sm:$0xff]
    %v667 = vld [vmem:[%s1 + $0x13e8] sm:$0xff]
    %v668 = vld [vmem:[%s1 + $0x13f0] sm:$0xff]
    %v669 = vld [vmem:[%s1 + $0x13f8] sm:$0xff]
    %v670 = vld [vmem:[%s1 + $0x1400] sm:$0xff]
    %v671 = vld [vmem:[%s1 + $0x1408] sm:$0xff]
    %v672 = vld [vmem:[%s1 + $0x1410] sm:$0xff]
    %v673 = vld [vmem:[%s1 + $0x1418] sm:$0xff]
    %v674 = vld [vmem:[%s1 + $0x1420] sm:$0xff]
    %v675 = vld [vmem:[%s1 + $0x1428] sm:$0xff]
    %v676 = vld [vmem:[%s1 + $0x1430] sm:$0xff]
    %v677 = vld [vmem:[%s1 + $0x1438] sm:$0xff]
    %v678 = vld [vmem:[%s1 + $0x1440] sm:$0xff]
    %v679 = vld [vmem:[%s1 + $0x1448] sm:$0xff]
    %v680 = vld [vmem:[%s1 + $0x1450] sm:$0xff]
    %v681 = vld [vmem:[%s1 + $0x1458] sm:$0xff]
    %v682 = vld [vmem:[%s1 + $0x1460] sm:$0xff]
    %v683 = vld [vmem:[%s1 + $0x1468] sm:$0xff]
    %v684 = vld [vmem:[%s1 + $0x1470] sm:$0xff]
    %v685 = vld [vmem:[%s1 + $0x1478] sm:$0xff]
    %v686 = vld [vmem:[%s1 + $0x1480] sm:$0xff]
    %v687 = vld [vmem:[%s1 + $0x1488] sm:$0xff]
    %v688 = vld [vmem:[%s1 + $0x1490] sm:$0xff]
    %v689 = vld [vmem:[%s1 + $0x1498] sm:$0xff]
    %v690 = vld [vmem:[%s1 + $0x14a0] sm:$0xff]
    %v691 = vld [vmem:[%s1 + $0x14a8] sm:$0xff]
    %v692 = vld [vmem:[%s1 + $0x14b0] sm:$0xff]
    %v693 = vld [vmem:[%s1 + $0x14b8] sm:$0xff]
    %v694 = vld [vmem:[%s1 + $0x14c0] sm:$0xff]
    %v695 = vld [vmem:[%s1 + $0x14c8] sm:$0xff]
    %v696 = vld [vmem:[%s1 + $0x14d0] sm:$0xff]
    %v697 = vld [vmem:[%s1 + $0x14d8] sm:$0xff]
    %v698 = vld [vmem:[%s1 + $0x14e0] sm:$0xff]
    %v699 = vld [vmem:[%s1 + $0x14e8] sm:$0xff]
    %v700 = vld [vmem:[%s1 + $0x14f0] sm:$0xff]
    %v701 = vld [vmem:[%s1 + $0x14f8] sm:$0xff]
    %v702 = vld [vmem:[%s1 + $0x1500] sm:$0xff]
    %v703 = vld [vmem:[%s1 + $0x1508] sm:$0xff]
    %v704 = vld [vmem:[%s1 + $0x1510] sm:$0xff]
    %v705 = vld [vmem:[%s1 + $0x1518] sm:$0xff]
    %v706 = vld [vmem:[%s1 + $0x1520] sm:$0xff]
    %v707 = vld [vmem:[%s1 + $0x1528] sm:$0xff]
    %v708 = vld [vmem:[%s1 + $0x1530] sm:$0xff]
    %v709 = vld [vmem:[%s1 + $0x1538] sm:$0xff]
    %v710 = vld [vmem:[%s1 + $0x1540] sm:$0xff]
    %v711 = vld [vmem:[%s1 + $0x1548] sm:$0xff]
    %v712 = vld [vmem:[%s1 + $0x1550] sm:$0xff]
    %v713 = vld [vmem:[%s1 + $0x1558] sm:$0xff]
    %v714 = vld [vmem:[%s1 + $0x1560] sm:$0xff]
    %v715 = vld [vmem:[%s1 + $0x1568] sm:$0xff]
    %v716 = vld [vmem:[%s1 + $0x1570] sm:$0xff]
    %v717 = vld [vmem:[%s1 + $0x1578] sm:$0xff]
    %v718 = vld [vmem:[%s1 + $0x1580] sm:$0xff]
    %v719 = vld [vmem:[%s1 + $0x1588] sm:$0xff]
    %v720 = vld [vmem:[%s1 + $0x1590] sm:$0xff]
    %v721 = vld [vmem:[%s1 + $0x1598] sm:$0xff]
    %v722 = vld [vmem:[%s1 + $0x15a0] sm:$0xff]
    %v723 = vld [vmem:[%s1 + $0x15a8] sm:$0xff]
    %v724 = vld [vmem:[%s1 + $0x15b0] sm:$0xff]
    %v725 = vld [vmem:[%s1 + $0x15b8] sm:$0xff]
    %v726 = vld [vmem:[%s1 + $0x15c0] sm:$0xff]
    %v727 = vld [vmem:[%s1 + $0x15c8] sm:$0xff]
    %v728 = vld [vmem:[%s1 + $0x15d0] sm:$0xff]
    %v729 = vld [vmem:[%s1 + $0x15d8] sm:$0xff]
    %v730 = vld [vmem:[%s1 + $0x15e0] sm:$0xff]
    %v731 = vld [vmem:[%s1 + $0x15e8] sm:$0xff]
    %v732 = vld [vmem:[%s1 + $0x15f0] sm:$0xff]
    %v733 = vld [vmem:[%s1 + $0x15f8] sm:$0xff]
    %v734 = vld [vmem:[%s1 + $0x1600] sm:$0xff]
    %v735 = vld [vmem:[%s1 + $0x1608] sm:$0xff]
    %v736 = vld [vmem:[%s1 + $0x1610] sm:$0xff]
    %v737 = vld [vmem:[%s1 + $0x1618] sm:$0xff]
    %v738 = vld [vmem:[%s1 + $0x1620] sm:$0xff]
    %v739 = vld [vmem:[%s1 + $0x1628] sm:$0xff]
    %v740 = vld [vmem:[%s1 + $0x1630] sm:$0xff]
    %v741 = vld [vmem:[%s1 + $0x1638] sm:$0xff]
    %v742 = vld [vmem:[%s1 + $0x1640] sm:$0xff]
    %v743 = vld [vmem:[%s1 + $0x1648] sm:$0xff]
    %v744 = vld [vmem:[%s1 + $0x1650] sm:$0xff]
    %v745 = vld [vmem:[%s1 + $0x1658] sm:$0xff]
    %v746 = vld [vmem:[%s1 + $0x1660] sm:$0xff]
    %v747 = vld [vmem:[%s1 + $0x1668] sm:$0xff]
    %v748 = vld [vmem:[%s1 + $0x1670] sm:$0xff]
    %v749 = vld [vmem:[%s1 + $0x1678] sm:$0xff]
    %v750 = vld [vmem:[%s1 + $0x1680] sm:$0xff]
    %v751 = vld [vmem:[%s1 + $0x1688] sm:$0xff]
    %v752 = vld [vmem:[%s1 + $0x1690] sm:$0xff]
    %v753 = vld [vmem:[%s1 + $0x1698] sm:$0xff]
    %v754 = vld [vmem:[%s1 + $0x16a0] sm:$0xff]
    %v755 = vld [vmem:[%s1 + $0x16a8] sm:$0xff]
    %v756 = vld [vmem:[%s1 + $0x16b0] sm:$0xff]
    %v757 = vld [vmem:[%s1 + $0x16b8] sm:$0xff]
    %v758 = vld [vmem:[%s1 + $0x16c0] sm:$0xff]
    %v759 = vld [vmem:[%s1 + $0x16c8] sm:$0xff]
    %v760 = vld [vmem:[%s1 + $0x16d0] sm:$0xff]
    %v761 = vld [vmem:[%s1 + $0x16d8] sm:$0xff]
    %v762 = vld [vmem:[%s1 + $0x16e0] sm:$0xff]
    %v763 = vld [vmem:[%s1 + $0x16e8] sm:$0xff]
    %v764 = vld [vmem:[%s1 + $0x16f0] sm:$0xff]
    %v765 = vld [vmem:[%s1 + $0x16f8] sm:$0xff]
    %v766 = vld [vmem:[%s1 + $0x1700] sm:$0xff]
    %v767 = vld [vmem:[%s1 + $0x1708] sm:$0xff]
    %v768 = vld [vmem:[%s1 + $0x1710] sm:$0xff]
    %v769 = vld [vmem:[%s1 + $0x1718] sm:$0xff]
    %v770 = vld [vmem:[%s1 + $0x1720] sm:$0xff]
    %v771 = vld [vmem:[%s1 + $0x1728] sm:$0xff]
    %v772 = vld [vmem:[%s1 + $0x1730] sm:$0xff]
    %v773 = vld [vmem:[%s1 + $0x1738] sm:$0xff]
    %v774 = vld [vmem:[%s1 + $0x1740] sm:$0xff]
    %v775 = vld [vmem:[%s1 + $0x1748] sm:$0xff]
    %v776 = vld [vmem:[%s1 + $0x1750] sm:$0xff]
    %v777 = vld [vmem:[%s1 + $0x1758] sm:$0xff]
    %v778 = vld [vmem:[%s1 + $0x1760] sm:$0xff]
    %v779 = vld [vmem:[%s1 + $0x1768] sm:$0xff]
    %v780 = vld [vmem:[%s1 + $0x1770] sm:$0xff]
    %v781 = vld [vmem:[%s1 + $0x1778] sm:$0xff]
    %v782 = vld [vmem:[%s1 + $0x1780] sm:$0xff]
    %v783 = vld [vmem:[%s1 + $0x1788] sm:$0xff]
    %v784 = vld [vmem:[%s1 + $0x1790] sm:$0xff]
    %v785 = vld [vmem:[%s1 + $0x1798] sm:$0xff]
    %v786 = vld [vmem:[%s1 + $0x17a0] sm:$0xff]
    %v787 = vld [vmem:[%s1 + $0x17a8] sm:$0xff]
    %v788 = vld [vmem:[%s1 + $0x17b0] sm:$0xff]
    %v789 = vld [vmem:[%s1 + $0x17b8] sm:$0xff]
    %v790 = vld [vmem:[%s1 + $0x17c0] sm:$0xff]
    %v791 = vld [vmem:[%s1 + $0x17c8] sm:$0xff]
    %v792 = vld [vmem:[%s1 + $0x17d0] sm:$0xff]
    %v793 = vld [vmem:[%s1 + $0x17d8] sm:$0xff]
    %v794 = vld [vmem:[%s1 + $0x17e0] sm:$0xff]
    %v795 = vld [vmem:[%s1 + $0x17e8] sm:$0xff]
    %v796 = vld [vmem:[%s1 + $0x17f0] sm:$0xff]
    %v797 = vld [vmem:[%s1 + $0x17f8] sm:$0xff]
    %v798 = vld [vmem:[%s1 + $0x1800] sm:$0xff]
    %v799 = vld [vmem:[%s1 + $0x1808] sm:$0xff]
    %v800 = vld [vmem:[%s1 + $0x1810] sm:$0xff]
    %v801 = vld [vmem:[%s1 + $0x1818] sm:$0xff]
    %v802 = vld [vmem:[%s1 + $0x1820] sm:$0xff]
    %v803 = vld [vmem:[%s1 + $0x1828] sm:$0xff]
    %v804 = vld [vmem:[%s1 + $0x1830] sm:$0xff]
    %v805 = vld [vmem:[%s1 + $0x1838] sm:$0xff]
    %v806 = vld [vmem:[%s1 + $0x1840] sm:$0xff]
    %v807 = vld [vmem:[%s1 + $0x1848] sm:$0xff]
    %v808 = vld [vmem:[%s1 + $0x1850] sm:$0xff]
    %v809 = vld [vmem:[%s1 + $0x1858] sm:$0xff]
    %v810 = vld [vmem:[%s1 + $0x1860] sm:$0xff]
    %v811 = vld [vmem:[%s1 + $0x1868] sm:$0xff]
    %v812 = vld [vmem:[%s1 + $0x1870] sm:$0xff]
    %v813 = vld [vmem:[%s1 + $0x1878] sm:$0xff]
    %v814 = vld [vmem:[%s1 + $0x1880] sm:$0xff]
    %v815 = vld [vmem:[%s1 + $0x1888] sm:$0xff]
    %v816 = vld [vmem:[%s1 + $0x1890] sm:$0xff]
    %v817 = vld [vmem:[%s1 + $0x1898] sm:$0xff]
    %v818 = vld [vmem:[%s1 + $0x18a0] sm:$0xff]
    %v819 = vld [vmem:[%s1 + $0x18a8] sm:$0xff]
    %v820 = vld [vmem:[%s1 + $0x18b0] sm:$0xff]
    %v821 = vld [vmem:[%s1 + $0x18b8] sm:$0xff]
    %v822 = vld [vmem:[%s1 + $0x18c0] sm:$0xff]
    %v823 = vld [vmem:[%s1 + $0x18c8] sm:$0xff]
    %v824 = vld [vmem:[%s1 + $0x18d0] sm:$0xff]
    %v825 = vld [vmem:[%s1 + $0x18d8] sm:$0xff]
    %v826 = vld [vmem:[%s1 + $0x18e0] sm:$0xff]
    %v827 = vld [vmem:[%s1 + $0x18e8] sm:$0xff]
    %v828 = vld [vmem:[%s1 + $0x18f0] sm:$0xff]
    %v829 = vld [vmem:[%s1 + $0x18f8] sm:$0xff]
    %v830 = vld [vmem:[%s1 + $0x1900] sm:$0xff]
    %v831 = vld [vmem:[%s1 + $0x1908] sm:$0xff]
    %v832 = vld [vmem:[%s1 + $0x1910] sm:$0xff]
    %v833 = vld [vmem:[%s1 + $0x1918] sm:$0xff]
    %v834 = vld [vmem:[%s1 + $0x1920] sm:$0xff]
    %v835 = vld [vmem:[%s1 + $0x1928] sm:$0xff]
    %v836 = vld [vmem:[%s1 + $0x1930] sm:$0xff]
    %v837 = vld [vmem:[%s1 + $0x1938] sm:$0xff]
    %v838 = vld [vmem:[%s1 + $0x1940] sm:$0xff]
    %v839 = vld [vmem:[%s1 + $0x1948] sm:$0xff]
    %v840 = vld [vmem:[%s1 + $0x1950] sm:$0xff]
    %v841 = vld [vmem:[%s1 + $0x1958] sm:$0xff]
    %v842 = vld [vmem:[%s1 + $0x1960] sm:$0xff]
    %v843 = vld [vmem:[%s1 + $0x1968] sm:$0xff]
    %v844 = vld [vmem:[%s1 + $0x1970] sm:$0xff]
    %v845 = vld [vmem:[%s1 + $0x1978] sm:$0xff]
    %v846 = vld [vmem:[%s1 + $0x1980] sm:$0xff]
    %v847 = vld [vmem:[%s1 + $0x1988] sm:$0xff]
    %v848 = vld [vmem:[%s1 + $0x1990] sm:$0xff]
    %v849 = vld [vmem:[%s1 + $0x1998] sm:$0xff]
    %v850 = vld [vmem:[%s1 + $0x19a0] sm:$0xff]
    %v851 = vld [vmem:[%s1 + $0x19a8] sm:$0xff]
    %v852 = vld [vmem:[%s1 + $0x19b0] sm:$0xff]
    %v853 = vld [vmem:[%s1 + $0x19b8] sm:$0xff]
    %v854 = vld [vmem:[%s1 + $0x19c0] sm:$0xff]
    %v855 = vld [vmem:[%s1 + $0x19c8] sm:$0xff]
    %v856 = vld [vmem:[%s1 + $0x19d0] sm:$0xff]
    %v857 = vld [vmem:[%s1 + $0x19d8] sm:$0xff]
    %v858 = vld [vmem:[%s1 + $0x19e0] sm:$0xff]
    %v859 = vld [vmem:[%s1 + $0x19e8] sm:$0xff]
    %v860 = vld [vmem:[%s1 + $0x19f0] sm:$0xff]
    %v861 = vld [vmem:[%s1 + $0x19f8] sm:$0xff]
    %v862 = vld [vmem:[%s1 + $0x1a00] sm:$0xff]
    %v863 = vld [vmem:[%s1 + $0x1a08] sm:$0xff]
    %v864 = vld [vmem:[%s1 + $0x1a10] sm:$0xff]
    %v865 = vld [vmem:[%s1 + $0x1a18] sm:$0xff]
    %v866 = vld [vmem:[%s1 + $0x1a20] sm:$0xff]
    %v867 = vld [vmem:[%s1 + $0x1a28] sm:$0xff]
    %v868 = vld [vmem:[%s1 + $0x1a30] sm:$0xff]
    %v869 = vld [vmem:[%s1 + $0x1a38] sm:$0xff]
    %v870 = vld [vmem:[%s1 + $0x1a40] sm:$0xff]
    %v871 = vld [vmem:[%s1 + $0x1a48] sm:$0xff]
    %v872 = vld [vmem:[%s1 + $0x1a50] sm:$0xff]
    %v873 = vld [vmem:[%s1 + $0x1a58] sm:$0xff]
    %v874 = vld [vmem:[%s1 + $0x1a60] sm:$0xff]
    %v875 = vld [vmem:[%s1 + $0x1a68] sm:$0xff]
    %v876 = vld [vmem:[%s1 + $0x1a70] sm:$0xff]
    %v877 = vld [vmem:[%s1 + $0x1a78] sm:$0xff]
    %v878 = vld [vmem:[%s1 + $0x1a80] sm:$0xff]
    %v879 = vld [vmem:[%s1 + $0x1a88] sm:$0xff]
    %v880 = vld [vmem:[%s1 + $0x1a90] sm:$0xff]
    %v881 = vld [vmem:[%s1 + $0x1a98] sm:$0xff]
    %v882 = vld [vmem:[%s1 + $0x1aa0] sm:$0xff]
    %v883 = vld [vmem:[%s1 + $0x1aa8] sm:$0xff]
    %v884 = vld [vmem:[%s1 + $0x1ab0] sm:$0xff]
    %v885 = vld [vmem:[%s1 + $0x1ab8] sm:$0xff]
    %v886 = vld [vmem:[%s1 + $0x1ac0] sm:$0xff]
    %v887 = vld [vmem:[%s1 + $0x1ac8] sm:$0xff]
    %v888 = vld [vmem:[%s1 + $0x1ad0] sm:$0xff]
    %v889 = vld [vmem:[%s1 + $0x1ad8] sm:$0xff]
    %v890 = vld [vmem:[%s1 + $0x1ae0] sm:$0xff]
    %v891 = vld [vmem:[%s1 + $0x1ae8] sm:$0xff]
    %v892 = vld [vmem:[%s1 + $0x1af0] sm:$0xff]
    %v893 = vld [vmem:[%s1 + $0x1af8] sm:$0xff]
    %v894 = vld [vmem:[%s1 + $0x1b00] sm:$0xff]
    %v895 = vld [vmem:[%s1 + $0x1b08] sm:$0xff]
    %v896 = vld [vmem:[%s1 + $0x1b10] sm:$0xff]
    %v897 = vld [vmem:[%s1 + $0x1b18] sm:$0xff]
    %v898 = vld [vmem:[%s1 + $0x1b20] sm:$0xff]
    %v899 = vld [vmem:[%s1 + $0x1b28] sm:$0xff]
    %v900 = vld [vmem:[%s1 + $0x1b30] sm:$0xff]
    %v901 = vld [vmem:[%s1 + $0x1b38] sm:$0xff]
    %v902 = vld [vmem:[%s1 + $0x1b40] sm:$0xff]
    %v903 = vld [vmem:[%s1 + $0x1b48] sm:$0xff]
    %v904 = vld [vmem:[%s1 + $0x1b50] sm:$0xff]
    %v905 = vld [vmem:[%s1 + $0x1b58] sm:$0xff]
    %v906 = vld [vmem:[%s1 + $0x1b60] sm:$0xff]
    %v907 = vld [vmem:[%s1 + $0x1b68] sm:$0xff]
    %v908 = vld [vmem:[%s1 + $0x1b70] sm:$0xff]
    %v909 = vld [vmem:[%s1 + $0x1b78] sm:$0xff]
    %v910 = vld [vmem:[%s1 + $0x1b80] sm:$0xff]
    %v911 = vld [vmem:[%s1 + $0x1b88] sm:$0xff]
    %v912 = vld [vmem:[%s1 + $0x1b90] sm:$0xff]
    %v913 = vld [vmem:[%s1 + $0x1b98] sm:$0xff]
    %v914 = vld [vmem:[%s1 + $0x1ba0] sm:$0xff]
    %v915 = vld [vmem:[%s1 + $0x1ba8] sm:$0xff]
    %v916 = vld [vmem:[%s1 + $0x1bb0] sm:$0xff]
    %v917 = vld [vmem:[%s1 + $0x1bb8] sm:$0xff]
    %v918 = vld [vmem:[%s1 + $0x1bc0] sm:$0xff]
    %v919 = vld [vmem:[%s1 + $0x1bc8] sm:$0xff]
    %v920 = vld [vmem:[%s1 + $0x1bd0] sm:$0xff]
    %v921 = vld [vmem:[%s1 + $0x1bd8] sm:$0xff]
    %v922 = vld [vmem:[%s1 + $0x1be0] sm:$0xff]
    %v923 = vld [vmem:[%s1 + $0x1be8] sm:$0xff]
    %v924 = vld [vmem:[%s1 + $0x1bf0] sm:$0xff]
    %v925 = vld [vmem:[%s1 + $0x1bf8] sm:$0xff]
    %v926 = vld [vmem:[%s1 + $0x1c00] sm:$0xff]
    %v927 = vld [vmem:[%s1 + $0x1c08] sm:$0xff]
    %v928 = vld [vmem:[%s1 + $0x1c10] sm:$0xff]
    %v929 = vld [vmem:[%s1 + $0x1c18] sm:$0xff]
    %v930 = vld [vmem:[%s1 + $0x1c20] sm:$0xff]
    %v931 = vld [vmem:[%s1 + $0x1c28] sm:$0xff]
    %v932 = vld [vmem:[%s1 + $0x1c30] sm:$0xff]
    %v933 = vld [vmem:[%s1 + $0x1c38] sm:$0xff]
    %v934 = vld [vmem:[%s1 + $0x1c40] sm:$0xff]
    %v935 = vld [vmem:[%s1 + $0x1c48] sm:$0xff]
    %v936 = vld [vmem:[%s1 + $0x1c50] sm:$0xff]
    %v937 = vld [vmem:[%s1 + $0x1c58] sm:$0xff]
    %v938 = vld [vmem:[%s1 + $0x1c60] sm:$0xff]
    %v939 = vld [vmem:[%s1 + $0x1c68] sm:$0xff]
    %v940 = vld [vmem:[%s1 + $0x1c70] sm:$0xff]
    %v941 = vld [vmem:[%s1 + $0x1c78] sm:$0xff]
    %v942 = vld [vmem:[%s1 + $0x1c80] sm:$0xff]
    %v943 = vld [vmem:[%s1 + $0x1c88] sm:$0xff]
    %v944 = vld [vmem:[%s1 + $0x1c90] sm:$0xff]
    %v945 = vld [vmem:[%s1 + $0x1c98] sm:$0xff]
    %v946 = vld [vmem:[%s1 + $0x1ca0] sm:$0xff]
    %v947 = vld [vmem:[%s1 + $0x1ca8] sm:$0xff]
    %v948 = vld [vmem:[%s1 + $0x1cb0] sm:$0xff]
    %v949 = vld [vmem:[%s1 + $0x1cb8] sm:$0xff]
    %v950 = vld [vmem:[%s1 + $0x1cc0] sm:$0xff]
    %v951 = vld [vmem:[%s1 + $0x1cc8] sm:$0xff]
    %v952 = vld [vmem:[%s1 + $0x1cd0] sm:$0xff]
    %v953 = vld [vmem:[%s1 + $0x1cd8] sm:$0xff]
    %v954 = vld [vmem:[%s1 + $0x1ce0] sm:$0xff]
    %v955 = vld [vmem:[%s1 + $0x1ce8] sm:$0xff]
    %v956 = vld [vmem:[%s1 + $0x1cf0] sm:$0xff]
    %v957 = vld [vmem:[%s1 + $0x1cf8] sm:$0xff]
    %v958 = vld [vmem:[%s1 + $0x1d00] sm:$0xff]
    %v959 = vld [vmem:[%s1 + $0x1d08] sm:$0xff]
    %v960 = vld [vmem:[%s1 + $0x1d10] sm:$0xff]
    %v961 = vld [vmem:[%s1 + $0x1d18] sm:$0xff]
    %v962 = vld [vmem:[%s1 + $0x1d20] sm:$0xff]
    %v963 = vld [vmem:[%s1 + $0x1d28] sm:$0xff]
    %v964 = vld [vmem:[%s1 + $0x1d30] sm:$0xff]
    %v965 = vld [vmem:[%s1 + $0x1d38] sm:$0xff]
    %v966 = vld [vmem:[%s1 + $0x1d40] sm:$0xff]
    %v967 = vld [vmem:[%s1 + $0x1d48] sm:$0xff]
    %v968 = vld [vmem:[%s1 + $0x1d50] sm:$0xff]
    %v969 = vld [vmem:[%s1 + $0x1d58] sm:$0xff]
    %v970 = vld [vmem:[%s1 + $0x1d60] sm:$0xff]
    %v971 = vld [vmem:[%s1 + $0x1d68] sm:$0xff]
    %v972 = vld [vmem:[%s1 + $0x1d70] sm:$0xff]
    %v973 = vld [vmem:[%s1 + $0x1d78] sm:$0xff]
    %v974 = vld [vmem:[%s1 + $0x1d80] sm:$0xff]
    %v975 = vld [vmem:[%s1 + $0x1d88] sm:$0xff]
    %v976 = vld [vmem:[%s1 + $0x1d90] sm:$0xff]
    %v977 = vld [vmem:[%s1 + $0x1d98] sm:$0xff]
    %v978 = vld [vmem:[%s1 + $0x1da0] sm:$0xff]
    %v979 = vld [vmem:[%s1 + $0x1da8] sm:$0xff]
    %v980 = vld [vmem:[%s1 + $0x1db0] sm:$0xff]
    %v981 = vld [vmem:[%s1 + $0x1db8] sm:$0xff]
    %v982 = vld [vmem:[%s1 + $0x1dc0] sm:$0xff]
    %v983 = vld [vmem:[%s1 + $0x1dc8] sm:$0xff]
    %v984 = vld [vmem:[%s1 + $0x1dd0] sm:$0xff]
    %v985 = vld [vmem:[%s1 + $0x1dd8] sm:$0xff]
    %v986 = vld [vmem:[%s1 + $0x1de0] sm:$0xff]
    %v987 = vld [vmem:[%s1 + $0x1de8] sm:$0xff]
    %v988 = vld [vmem:[%s1 + $0x1df0] sm:$0xff]
    %v989 = vld [vmem:[%s1 + $0x1df8] sm:$0xff]
    %v990 = vld [vmem:[%s1 + $0x1e00] sm:$0xff]
    %v991 = vld [vmem:[%s1 + $0x1e08] sm:$0xff]
    %v992 = vld [vmem:[%s1 + $0x1e10] sm:$0xff]
    %v993 = vld [vmem:[%s1 + $0x1e18] sm:$0xff]
    %v994 = vld [vmem:[%s1 + $0x1e20] sm:$0xff]
    %v995 = vld [vmem:[%s1 + $0x1e28] sm:$0xff]
    %v996 = vld [vmem:[%s1 + $0x1e30] sm:$0xff]
    %v997 = vld [vmem:[%s1 + $0x1e38] sm:$0xff]
    %v998 = vld [vmem:[%s1 + $0x1e40] sm:$0xff]
    %v999 = vld [vmem:[%s1 + $0x1e48] sm:$0xff]
    %v1000 = vld [vmem:[%s1 + $0x1e50] sm:$0xff]
    %v1001 = vld [vmem:[%s1 + $0x1e58] sm:$0xff]
    %v1002 = vld [vmem:[%s1 + $0x1e60] sm:$0xff]
    %v1003 = vld [vmem:[%s1 + $0x1e68] sm:$0xff]
    %v1004 = vld [vmem:[%s1 + $0x1e70] sm:$0xff]
    %v1005 = vld [vmem:[%s1 + $0x1e78] sm:$0xff]
    %v1006 = vld [vmem:[%s1 + $0x1e80] sm:$0xff]
    %v1007 = vld [vmem:[%s1 + $0x1e88] sm:$0xff]
    %v1008 = vld [vmem:[%s1 + $0x1e90] sm:$0xff]
    %v1009 = vld [vmem:[%s1 + $0x1e98] sm:$0xff]
    %v1010 = vld [vmem:[%s1 + $0x1ea0] sm:$0xff]
    %v1011 = vld [vmem:[%s1 + $0x1ea8] sm:$0xff]
    %v1012 = vld [vmem:[%s1 + $0x1eb0] sm:$0xff]
    %v1013 = vld [vmem:[%s1 + $0x1eb8] sm:$0xff]
    %v1014 = vld [vmem:[%s1 + $0x1ec0] sm:$0xff]
    %v1015 = vld [vmem:[%s1 + $0x1ec8] sm:$0xff]
    %v1016 = vld [vmem:[%s1 + $0x1ed0] sm:$0xff]
    %v1017 = vld [vmem:[%s1 + $0x1ed8] sm:$0xff]
    %v1018 = vld [vmem:[%s1 + $0x1ee0] sm:$0xff]
    %v1019 = vld [vmem:[%s1 + $0x1ee8] sm:$0xff]
    %v1020 = vld [vmem:[%s1 + $0x1ef0] sm:$0xff]
    %v1021 = vld [vmem:[%s1 + $0x1ef8] sm:$0xff]
    %v1022 = vld [vmem:[%s1 + $0x1f00] sm:$0xff]
    %v1023 = vld [vmem:[%s1 + $0x1f08] sm:$0xff]
    %v1024 = vld [vmem:[%s1 + $0x1f10] sm:$0xff]
    %v1025 = vld [vmem:[%s1 + $0x1f18] sm:$0xff]
    %v1026 = vld [vmem:[%s1 + $0x1f20] sm:$0xff]
    %v1027 = vld [vmem:[%s1 + $0x1f28] sm:$0xff]
    %v1028 = vld [vmem:[%s1 + $0x1f30] sm:$0xff]
    %v1029 = vld [vmem:[%s1 + $0x1f38] sm:$0xff]
    %v1030 = vld [vmem:[%s1 + $0x1f40] sm:$0xff]
    %v1031 = vld [vmem:[%s1 + $0x1f48] sm:$0xff]
    %v1032 = vld [vmem:[%s1 + $0x1f50] sm:$0xff]
    %v1033 = vld [vmem:[%s1 + $0x1f58] sm:$0xff]
    %v1034 = vld [vmem:[%s1 + $0x1f60] sm:$0xff]
    %v1035 = vld [vmem:[%s1 + $0x1f68] sm:$0xff]
    %v1036 = vld [vmem:[%s1 + $0x1f70] sm:$0xff]
    %v1037 = vld [vmem:[%s1 + $0x1f78] sm:$0xff]
    %v1038 = vld [vmem:[%s1 + $0x1f80] sm:$0xff]
    %v1039 = vld [vmem:[%s1 + $0x1f88] sm:$0xff]
    %v1040 = vld [vmem:[%s1 + $0x1f90] sm:$0xff]
    %v1041 = vld [vmem:[%s1 + $0x1f98] sm:$0xff]
    %v1042 = vld [vmem:[%s1 + $0x1fa0] sm:$0xff]
    %v1043 = vld [vmem:[%s1 + $0x1fa8] sm:$0xff]
    %v1044 = vld [vmem:[%s1 + $0x1fb0] sm:$0xff]
    %v1045 = vld [vmem:[%s1 + $0x1fb8] sm:$0xff]
    %v1046 = vld [vmem:[%s1 + $0x1fc0] sm:$0xff]
    %v1047 = vld [vmem:[%s1 + $0x1fc8] sm:$0xff]
    %v1048 = vld [vmem:[%s1 + $0x1fd0] sm:$0xff]
    %v1049 = vld [vmem:[%s1 + $0x1fd8] sm:$0xff]
    %v1050 = vld [vmem:[%s1 + $0x1fe0] sm:$0xff]
    %v1051 = vld [vmem:[%s1 + $0x1fe8] sm:$0xff]
    %v1052 = vld [vmem:[%s1 + $0x1ff0] sm:$0xff]
    %v1053 = vld [vmem:[%s1 + $0x1ff8] sm:$0xff]
    %v1054 = vld [vmem:[%s1 + $0x2000] sm:$0xff]
    %v1055 = vld [vmem:[%s1 + $0x2008] sm:$0xff]
    %v1056 = vld [vmem:[%s1 + $0x2010] sm:$0xff]
    %v1057 = vld [vmem:[%s1 + $0x2018] sm:$0xff]
    %v1058 = vld [vmem:[%s1 + $0x2020] sm:$0xff]
    %v1059 = vld [vmem:[%s1 + $0x2028] sm:$0xff]
    %v1060 = vld [vmem:[%s1 + $0x2030] sm:$0xff]
    %v1061 = vld [vmem:[%s1 + $0x2038] sm:$0xff]
    %v1062 = vld [vmem:[%s1 + $0x2040] sm:$0xff]
    %v1063 = vld [vmem:[%s1 + $0x2048] sm:$0xff]
    %v1064 = vld [vmem:[%s1 + $0x2050] sm:$0xff]
    %v1065 = vld [vmem:[%s1 + $0x2058] sm:$0xff]
    %v1066 = vld [vmem:[%s1 + $0x2060] sm:$0xff]
    %v1067 = vld [vmem:[%s1 + $0x2068] sm:$0xff]
    %v1068 = vld [vmem:[%s1 + $0x2070] sm:$0xff]
    %v1069 = vld [vmem:[%s1 + $0x2078] sm:$0xff]
    %v1070 = vld [vmem:[%s1 + $0x2080] sm:$0xff]
    %v1071 = vld [vmem:[%s1 + $0x2088] sm:$0xff]
    %v1072 = vld [vmem:[%s1 + $0x2090] sm:$0xff]
    %v1073 = vld [vmem:[%s1 + $0x2098] sm:$0xff]
    %v1074 = vld [vmem:[%s1 + $0x20a0] sm:$0xff]
    %v1075 = vld [vmem:[%s1 + $0x20a8] sm:$0xff]
    %v1076 = vld [vmem:[%s1 + $0x20b0] sm:$0xff]
    %v1077 = vld [vmem:[%s1 + $0x20b8] sm:$0xff]
    %v1078 = vld [vmem:[%s1 + $0x20c0] sm:$0xff]
    %v1079 = vld [vmem:[%s1 + $0x20c8] sm:$0xff]
    %v1080 = vld [vmem:[%s1 + $0x20d0] sm:$0xff]
    %v1081 = vld [vmem:[%s1 + $0x20d8] sm:$0xff]
    %v1082 = vld [vmem:[%s1 + $0x20e0] sm:$0xff]
    %v1083 = vld [vmem:[%s1 + $0x20e8] sm:$0xff]
    %v1084 = vld [vmem:[%s1 + $0x20f0] sm:$0xff]
    %v1085 = vld [vmem:[%s1 + $0x20f8] sm:$0xff]
    %v1086 = vld [vmem:[%s1 + $0x2100] sm:$0xff]
    %v1087 = vld [vmem:[%s1 + $0x2108] sm:$0xff]
    %v1088 = vld [vmem:[%s1 + $0x2110] sm:$0xff]
    %v1089 = vld [vmem:[%s1 + $0x2118] sm:$0xff]
    %v1090 = vld [vmem:[%s1 + $0x2120] sm:$0xff]
    %v1091 = vld [vmem:[%s1 + $0x2128] sm:$0xff]
    %v1092 = vld [vmem:[%s1 + $0x2130] sm:$0xff]
    %v1093 = vld [vmem:[%s1 + $0x2138] sm:$0xff]
    %v1094 = vld [vmem:[%s1 + $0x2140] sm:$0xff]
    %v1095 = vld [vmem:[%s1 + $0x2148] sm:$0xff]
    %v1096 = vld [vmem:[%s1 + $0x2150] sm:$0xff]
    %v1097 = vld [vmem:[%s1 + $0x2158] sm:$0xff]
    %v1098 = vld [vmem:[%s1 + $0x2160] sm:$0xff]
    %v1099 = vld [vmem:[%s1 + $0x2168] sm:$0xff]
    %v1100 = vld [vmem:[%s1 + $0x2170] sm:$0xff]
    %v1101 = vld [vmem:[%s1 + $0x2178] sm:$0xff]
    %v1102 = vld [vmem:[%s1 + $0x2180] sm:$0xff]
    %v1103 = vld [vmem:[%s1 + $0x2188] sm:$0xff]
    %v1104 = vld [vmem:[%s1 + $0x2190] sm:$0xff]
    %v1105 = vld [vmem:[%s1 + $0x2198] sm:$0xff]
    %v1106 = vld [vmem:[%s1 + $0x21a0] sm:$0xff]
    %v1107 = vld [vmem:[%s1 + $0x21a8] sm:$0xff]
    %v1108 = vld [vmem:[%s1 + $0x21b0] sm:$0xff]
    %v1109 = vld [vmem:[%s1 + $0x21b8] sm:$0xff]
    %v1110 = vld [vmem:[%s1 + $0x21c0] sm:$0xff]
    %v1111 = vld [vmem:[%s1 + $0x21c8] sm:$0xff]
    %v1112 = vld [vmem:[%s1 + $0x21d0] sm:$0xff]
    %v1113 = vld [vmem:[%s1 + $0x21d8] sm:$0xff]
    %v1114 = vld [vmem:[%s1 + $0x21e0] sm:$0xff]
    %v1115 = vld [vmem:[%s1 + $0x21e8] sm:$0xff]
    %v1116 = vld [vmem:[%s1 + $0x21f0] sm:$0xff]
    %v1117 = vld [vmem:[%s1 + $0x21f8] sm:$0xff]
    %v1118 = vld [vmem:[%s1 + $0x2200] sm:$0xff]
    %v1119 = vld [vmem:[%s1 + $0x2208] sm:$0xff]
    %v1120 = vld [vmem:[%s1 + $0x2210] sm:$0xff]
    %v1121 = vld [vmem:[%s1 + $0x2218] sm:$0xff]
    %v1122 = vld [vmem:[%s1 + $0x2220] sm:$0xff]
    %v1123 = vld [vmem:[%s1 + $0x2228] sm:$0xff]
    %v1124 = vld [vmem:[%s1 + $0x2230] sm:$0xff]
    %v1125 = vld [vmem:[%s1 + $0x2238] sm:$0xff]
    %v1126 = vld [vmem:[%s1 + $0x2240] sm:$0xff]
    %v1127 = vld [vmem:[%s1 + $0x2248] sm:$0xff]
    %v1128 = vld [vmem:[%s1 + $0x2250] sm:$0xff]
    %v1129 = vld [vmem:[%s1 + $0x2258] sm:$0xff]
    %v1130 = vld [vmem:[%s1 + $0x2260] sm:$0xff]
    %v1131 = vld [vmem:[%s1 + $0x2268] sm:$0xff]
    %v1132 = vld [vmem:[%s1 + $0x2270] sm:$0xff]
    %v1133 = vld [vmem:[%s1 + $0x2278] sm:$0xff]
    %v1134 = vld [vmem:[%s1 + $0x2280] sm:$0xff]
    %v1135 = vld [vmem:[%s1 + $0x2288] sm:$0xff]
    %v1136 = vld [vmem:[%s1 + $0x2290] sm:$0xff]
    %v1137 = vld [vmem:[%s1 + $0x2298] sm:$0xff]
    %v1138 = vld [vmem:[%s1 + $0x22a0] sm:$0xff]
    %v1139 = vld [vmem:[%s1 + $0x22a8] sm:$0xff]
    %v1140 = vld [vmem:[%s1 + $0x22b0] sm:$0xff]
    %v1141 = vld [vmem:[%s1 + $0x22b8] sm:$0xff]
    %v1142 = vld [vmem:[%s1 + $0x22c0] sm:$0xff]
    %v1143 = vld [vmem:[%s1 + $0x22c8] sm:$0xff]
    %v1144 = vld [vmem:[%s1 + $0x22d0] sm:$0xff]
    %v1145 = vld [vmem:[%s1 + $0x22d8] sm:$0xff]
    %v1146 = vld [vmem:[%s1 + $0x22e0] sm:$0xff]
    %v1147 = vld [vmem:[%s1 + $0x22e8] sm:$0xff]
    %v1148 = vld [vmem:[%s1 + $0x22f0] sm:$0xff]
    %v1149 = vld [vmem:[%s1 + $0x22f8] sm:$0xff]
    %v1150 = vld [vmem:[%s1 + $0x2300] sm:$0xff]
    %v1151 = vld [vmem:[%s1 + $0x2308] sm:$0xff]
    %v1152 = vld [vmem:[%s1 + $0x2310] sm:$0xff]
    %v1153 = vld [vmem:[%s1 + $0x2318] sm:$0xff]
    %v1154 = vld [vmem:[%s1 + $0x2320] sm:$0xff]
    %v1155 = vld [vmem:[%s1 + $0x2328] sm:$0xff]
    %v1156 = vld [vmem:[%s1 + $0x2330] sm:$0xff]
    %v1157 = vld [vmem:[%s1 + $0x2338] sm:$0xff]
    %v1158 = vld [vmem:[%s1 + $0x2340] sm:$0xff]
    %v1159 = vld [vmem:[%s1 + $0x2348] sm:$0xff]
    %v1160 = vld [vmem:[%s1 + $0x2350] sm:$0xff]
    %v1161 = vld [vmem:[%s1 + $0x2358] sm:$0xff]
    %v1162 = vld [vmem:[%s1 + $0x2360] sm:$0xff]
    %v1163 = vld [vmem:[%s1 + $0x2368] sm:$0xff]
    %v1164 = vld [vmem:[%s1 + $0x2370] sm:$0xff]
    %v1165 = vld [vmem:[%s1 + $0x2378] sm:$0xff]
    %v1166 = vld [vmem:[%s1 + $0x2380] sm:$0xff]
    %v1167 = vld [vmem:[%s1 + $0x2388] sm:$0xff]
    %v1168 = vld [vmem:[%s1 + $0x2390] sm:$0xff]
    %v1169 = vld [vmem:[%s1 + $0x2398] sm:$0xff]
    %v1170 = vld [vmem:[%s1 + $0x23a0] sm:$0xff]
    %v1171 = vld [vmem:[%s1 + $0x23a8] sm:$0xff]
    %v1172 = vld [vmem:[%s1 + $0x23b0] sm:$0xff]
    %v1173 = vld [vmem:[%s1 + $0x23b8] sm:$0xff]
    %v1174 = vld [vmem:[%s1 + $0x23c0] sm:$0xff]
    %v1175 = vld [vmem:[%s1 + $0x23c8] sm:$0xff]
    %v1176 = vld [vmem:[%s1 + $0x23d0] sm:$0xff]
    %v1177 = vld [vmem:[%s1 + $0x23d8] sm:$0xff]
    %v1178 = vld [vmem:[%s1 + $0x23e0] sm:$0xff]
    %v1179 = vld [vmem:[%s1 + $0x23e8] sm:$0xff]
    %v1180 = vld [vmem:[%s1 + $0x23f0] sm:$0xff]
    %v1181 = vld [vmem:[%s1 + $0x23f8] sm:$0xff]
    %v1182 = vld [vmem:[%s1 + $0x2400] sm:$0xff]
    %v1183 = vld [vmem:[%s1 + $0x2408] sm:$0xff]
    %v1184 = vld [vmem:[%s1 + $0x2410] sm:$0xff]
    %v1185 = vld [vmem:[%s1 + $0x2418] sm:$0xff]
    %v1186 = vld [vmem:[%s1 + $0x2420] sm:$0xff]
    %v1187 = vld [vmem:[%s1 + $0x2428] sm:$0xff]
    %v1188 = vld [vmem:[%s1 + $0x2430] sm:$0xff]
    %v1189 = vld [vmem:[%s1 + $0x2438] sm:$0xff]
    %v1190 = vld [vmem:[%s1 + $0x2440] sm:$0xff]
    %v1191 = vld [vmem:[%s1 + $0x2448] sm:$0xff]
    %v1192 = vld [vmem:[%s1 + $0x2450] sm:$0xff]
    %v1193 = vld [vmem:[%s1 + $0x2458] sm:$0xff]
    %v1194 = vld [vmem:[%s1 + $0x2460] sm:$0xff]
    %v1195 = vld [vmem:[%s1 + $0x2468] sm:$0xff]
    %v1196 = vld [vmem:[%s1 + $0x2470] sm:$0xff]
    %v1197 = vld [vmem:[%s1 + $0x2478] sm:$0xff]
    %v1198 = vld [vmem:[%s1 + $0x2480] sm:$0xff]
    %v1199 = vld [vmem:[%s1 + $0x2488] sm:$0xff]
    %v1200 = vld [vmem:[%s1 + $0x2490] sm:$0xff]
    %v1201 = vld [vmem:[%s1 + $0x2498] sm:$0xff]
    %v1202 = vld [vmem:[%s1 + $0x24a0] sm:$0xff]
    %v1203 = vld [vmem:[%s1 + $0x24a8] sm:$0xff]
    %v1204 = vld [vmem:[%s1 + $0x24b0] sm:$0xff]
    %v1205 = vld [vmem:[%s1 + $0x24b8] sm:$0xff]
    %v1206 = vld [vmem:[%s1 + $0x24c0] sm:$0xff]
    %v1207 = vld [vmem:[%s1 + $0x24c8] sm:$0xff]
    %v1208 = vld [vmem:[%s1 + $0x24d0] sm:$0xff]
    %v1209 = vld [vmem:[%s1 + $0x24d8] sm:$0xff]
    %v1210 = vld [vmem:[%s1 + $0x24e0] sm:$0xff]
    %v1211 = vld [vmem:[%s1 + $0x24e8] sm:$0xff]
    %v1212 = vld [vmem:[%s1 + $0x24f0] sm:$0xff]
    %v1213 = vld [vmem:[%s1 + $0x24f8] sm:$0xff]
    %v1214 = vld [vmem:[%s1 + $0x2500] sm:$0xff]
    %v1215 = vld [vmem:[%s1 + $0x2508] sm:$0xff]
    %v1216 = vld [vmem:[%s1 + $0x2510] sm:$0xff]
    %v1217 = vld [vmem:[%s1 + $0x2518] sm:$0xff]
    %v1218 = vld [vmem:[%s1 + $0x2520] sm:$0xff]
    %v1219 = vld [vmem:[%s1 + $0x2528] sm:$0xff]
    %v1220 = vld [vmem:[%s1 + $0x2530] sm:$0xff]
    %v1221 = vld [vmem:[%s1 + $0x2538] sm:$0xff]
    %v1222 = vld [vmem:[%s1 + $0x2540] sm:$0xff]
    %v1223 = vld [vmem:[%s1 + $0x2548] sm:$0xff]
    %v1224 = vld [vmem:[%s1 + $0x2550] sm:$0xff]
    %v1225 = vld [vmem:[%s1 + $0x2558] sm:$0xff]
    %v1226 = vld [vmem:[%s1 + $0x2560] sm:$0xff]
    %v1227 = vld [vmem:[%s1 + $0x2568] sm:$0xff]
    %v1228 = vld [vmem:[%s1 + $0x2570] sm:$0xff]
    %v1229 = vld [vmem:[%s1 + $0x2578] sm:$0xff]
    %v1230 = vld [vmem:[%s1 + $0x2580] sm:$0xff]
    %v1231 = vld [vmem:[%s1 + $0x2588] sm:$0xff]
    %v1232 = vld [vmem:[%s1 + $0x2590] sm:$0xff]
    %v1233 = vld [vmem:[%s1 + $0x2598] sm:$0xff]
    %v1234 = vld [vmem:[%s1 + $0x25a0] sm:$0xff]
    %v1235 = vld [vmem:[%s1 + $0x25a8] sm:$0xff]
    %v1236 = vld [vmem:[%s1 + $0x25b0] sm:$0xff]
    %v1237 = vld [vmem:[%s1 + $0x25b8] sm:$0xff]
    %v1238 = vld [vmem:[%s1 + $0x25c0] sm:$0xff]
    %v1239 = vld [vmem:[%s1 + $0x25c8] sm:$0xff]
    %v1240 = vld [vmem:[%s1 + $0x25d0] sm:$0xff]
    %v1241 = vld [vmem:[%s1 + $0x25d8] sm:$0xff]
    %v1242 = vld [vmem:[%s1 + $0x25e0] sm:$0xff]
    %v1243 = vld [vmem:[%s1 + $0x25e8] sm:$0xff]
    %v1244 = vld [vmem:[%s1 + $0x25f0] sm:$0xff]
    %v1245 = vld [vmem:[%s1 + $0x25f8] sm:$0xff]
    %v1246 = vld [vmem:[%s1 + $0x2600] sm:$0xff]
    %v1247 = vld [vmem:[%s1 + $0x2608] sm:$0xff]
    %v1248 = vld [vmem:[%s1 + $0x2610] sm:$0xff]
    %v1249 = vld [vmem:[%s1 + $0x2618] sm:$0xff]
    %v1250 = vld [vmem:[%s1 + $0x2620] sm:$0xff]
    %v1251 = vld [vmem:[%s1 + $0x2628] sm:$0xff]
    %v1252 = vld [vmem:[%s1 + $0x2630] sm:$0xff]
    %v1253 = vld [vmem:[%s1 + $0x2638] sm:$0xff]
    %v1254 = vld [vmem:[%s1 + $0x2640] sm:$0xff]
    %v1255 = vld [vmem:[%s1 + $0x2648] sm:$0xff]
    %v1256 = vld [vmem:[%s1 + $0x2650] sm:$0xff]
    %v1257 = vld [vmem:[%s1 + $0x2658] sm:$0xff]
    %v1258 = vld [vmem:[%s1 + $0x2660] sm:$0xff]
    %v1259 = vld [vmem:[%s1 + $0x2668] sm:$0xff]
    %v1260 = vld [vmem:[%s1 + $0x2670] sm:$0xff]
    %v1261 = vld [vmem:[%s1 + $0x2678] sm:$0xff]
    %v1262 = vld [vmem:[%s1 + $0x2680] sm:$0xff]
    %v1263 = vld [vmem:[%s1 + $0x2688] sm:$0xff]
    %v1264 = vld [vmem:[%s1 + $0x2690] sm:$0xff]
    %v1265 = vld [vmem:[%s1 + $0x2698] sm:$0xff]
    %v1266 = vld [vmem:[%s1 + $0x26a0] sm:$0xff]
    %v1267 = vld [vmem:[%s1 + $0x26a8] sm:$0xff]
    %v1268 = vld [vmem:[%s1 + $0x26b0] sm:$0xff]
    %v1269 = vld [vmem:[%s1 + $0x26b8] sm:$0xff]
    %v1270 = vld [vmem:[%s1 + $0x26c0] sm:$0xff]
    %v1271 = vld [vmem:[%s1 + $0x26c8] sm:$0xff]
    %v1272 = vld [vmem:[%s1 + $0x26d0] sm:$0xff]
    %v1273 = vld [vmem:[%s1 + $0x26d8] sm:$0xff]
    %v1274 = vld [vmem:[%s1 + $0x26e0] sm:$0xff]
    %v1275 = vld [vmem:[%s1 + $0x26e8] sm:$0xff]
    %v1276 = vld [vmem:[%s1 + $0x26f0] sm:$0xff]
    %v1277 = vld [vmem:[%s1 + $0x26f8] sm:$0xff]
    %v1278 = vld [vmem:[%s1 + $0x2700] sm:$0xff]
    %v1279 = vld [vmem:[%s1 + $0x2708] sm:$0xff]
    %v1280 = vld [vmem:[%s1 + $0x2710] sm:$0xff]
    %v1281 = vld [vmem:[%s1 + $0x2718] sm:$0xff]
    %v1282 = vld [vmem:[%s1 + $0x2720] sm:$0xff]
    %v1283 = vld [vmem:[%s1 + $0x2728] sm:$0xff]
    %v1284 = vld [vmem:[%s1 + $0x2730] sm:$0xff]
    %v1285 = vld [vmem:[%s1 + $0x2738] sm:$0xff]
    %v1286 = vld [vmem:[%s1 + $0x2740] sm:$0xff]
    %v1287 = vld [vmem:[%s1 + $0x2748] sm:$0xff]
    %v1288 = vld [vmem:[%s1 + $0x2750] sm:$0xff]
    %v1289 = vld [vmem:[%s1 + $0x2758] sm:$0xff]
    %v1290 = vld [vmem:[%s1 + $0x2760] sm:$0xff]
    %v1291 = vld [vmem:[%s1 + $0x2768] sm:$0xff]
    %v1292 = vld [vmem:[%s1 + $0x2770] sm:$0xff]
    %v1293 = vld [vmem:[%s1 + $0x2778] sm:$0xff]
    %v1294 = vld [vmem:[%s1 + $0x2780] sm:$0xff]
    %v1295 = vld [vmem:[%s1 + $0x2788] sm:$0xff]
    %v1296 = vld [vmem:[%s1 + $0x2790] sm:$0xff]
    %v1297 = vld [vmem:[%s1 + $0x2798] sm:$0xff]
    %v1298 = vld [vmem:[%s1 + $0x27a0] sm:$0xff]
    %v1299 = vld [vmem:[%s1 + $0x27a8] sm:$0xff]
    %v1300 = vld [vmem:[%s1 + $0x27b0] sm:$0xff]
    %v1301 = vld [vmem:[%s1 + $0x27b8] sm:$0xff]
    %v1302 = vld [vmem:[%s1 + $0x27c0] sm:$0xff]
    %v1303 = vld [vmem:[%s1 + $0x27c8] sm:$0xff]
    %v1304 = vld [vmem:[%s1 + $0x27d0] sm:$0xff]
    %v1305 = vld [vmem:[%s1 + $0x27d8] sm:$0xff]
    %v1306 = vld [vmem:[%s1 + $0x27e0] sm:$0xff]
    %v1307 = vld [vmem:[%s1 + $0x27e8] sm:$0xff]
    %v1308 = vld [vmem:[%s1 + $0x27f0] sm:$0xff]
    %v1309 = vld [vmem:[%s1 + $0x27f8] sm:$0xff]
    %v1310 = vld [vmem:[%s1 + $0x2800] sm:$0xff]
    %v1311 = vld [vmem:[%s1 + $0x2808] sm:$0xff]
    %v1312 = vld [vmem:[%s1 + $0x2810] sm:$0xff]
    %v1313 = vld [vmem:[%s1 + $0x2818] sm:$0xff]
    %v1314 = vld [vmem:[%s1 + $0x2820] sm:$0xff]
    %v1315 = vld [vmem:[%s1 + $0x2828] sm:$0xff]
    %v1316 = vld [vmem:[%s1 + $0x2830] sm:$0xff]
    %v1317 = vld [vmem:[%s1 + $0x2838] sm:$0xff]
    %v1318 = vld [vmem:[%s1 + $0x2840] sm:$0xff]
    %v1319 = vld [vmem:[%s1 + $0x2848] sm:$0xff]
    %v1320 = vld [vmem:[%s1 + $0x2850] sm:$0xff]
    %v1321 = vld [vmem:[%s1 + $0x2858] sm:$0xff]
    %v1322 = vld [vmem:[%s1 + $0x2860] sm:$0xff]
    %v1323 = vld [vmem:[%s1 + $0x2868] sm:$0xff]
    %v1324 = vld [vmem:[%s1 + $0x2870] sm:$0xff]
    %v1325 = vld [vmem:[%s1 + $0x2878] sm:$0xff]
    %v1326 = vld [vmem:[%s1 + $0x2880] sm:$0xff]
    %v1327 = vld [vmem:[%s1 + $0x2888] sm:$0xff]
    %v1328 = vld [vmem:[%s1 + $0x2890] sm:$0xff]
    %v1329 = vld [vmem:[%s1 + $0x2898] sm:$0xff]
    %v1330 = vld [vmem:[%s1 + $0x28a0] sm:$0xff]
    %v1331 = vld [vmem:[%s1 + $0x28a8] sm:$0xff]
    %v1332 = vld [vmem:[%s1 + $0x28b0] sm:$0xff]
    %v1333 = vld [vmem:[%s1 + $0x28b8] sm:$0xff]
    %v1334 = vld [vmem:[%s1 + $0x28c0] sm:$0xff]
    %v1335 = vld [vmem:[%s1 + $0x28c8] sm:$0xff]
    %v1336 = vld [vmem:[%s1 + $0x28d0] sm:$0xff]
    %v1337 = vld [vmem:[%s1 + $0x28d8] sm:$0xff]
    %v1338 = vld [vmem:[%s1 + $0x28e0] sm:$0xff]
    %v1339 = vld [vmem:[%s1 + $0x28e8] sm:$0xff]
    %v1340 = vld [vmem:[%s1 + $0x28f0] sm:$0xff]
    %v1341 = vld [vmem:[%s1 + $0x28f8] sm:$0xff]
    %v1342 = vld [vmem:[%s1 + $0x2900] sm:$0xff]
    %v1343 = vld [vmem:[%s1 + $0x2908] sm:$0xff]
    %v1344 = vld [vmem:[%s1 + $0x2910] sm:$0xff]
    %v1345 = vld [vmem:[%s1 + $0x2918] sm:$0xff]
    %v1346 = vld [vmem:[%s1 + $0x2920] sm:$0xff]
    %v1347 = vld [vmem:[%s1 + $0x2928] sm:$0xff]
    %v1348 = vld [vmem:[%s1 + $0x2930] sm:$0xff]
    %v1349 = vld [vmem:[%s1 + $0x2938] sm:$0xff]
    %v1350 = vld [vmem:[%s1 + $0x2940] sm:$0xff]
    %v1351 = vld [vmem:[%s1 + $0x2948] sm:$0xff]
    %v1352 = vld [vmem:[%s1 + $0x2950] sm:$0xff]
    %v1353 = vld [vmem:[%s1 + $0x2958] sm:$0xff]
    %v1354 = vld [vmem:[%s1 + $0x2960] sm:$0xff]
    %v1355 = vld [vmem:[%s1 + $0x2968] sm:$0xff]
    %v1356 = vld [vmem:[%s1 + $0x2970] sm:$0xff]
    %v1357 = vld [vmem:[%s1 + $0x2978] sm:$0xff]
    %v1358 = vld [vmem:[%s1 + $0x2980] sm:$0xff]
    %v1359 = vld [vmem:[%s1 + $0x2988] sm:$0xff]
    %v1360 = vld [vmem:[%s1 + $0x2990] sm:$0xff]
    %v1361 = vld [vmem:[%s1 + $0x2998] sm:$0xff]
    %v1362 = vld [vmem:[%s1 + $0x29a0] sm:$0xff]
    %v1363 = vld [vmem:[%s1 + $0x29a8] sm:$0xff]
    %v1364 = vld [vmem:[%s1 + $0x29b0] sm:$0xff]
    %v1365 = vld [vmem:[%s1 + $0x29b8] sm:$0xff]
    %v1366 = vld [vmem:[%s1 + $0x29c0] sm:$0xff]
    %v1367 = vld [vmem:[%s1 + $0x29c8] sm:$0xff]
    %v1368 = vld [vmem:[%s1 + $0x29d0] sm:$0xff]
    %v1369 = vld [vmem:[%s1 + $0x29d8] sm:$0xff]
    %v1370 = vld [vmem:[%s1 + $0x29e0] sm:$0xff]
    %v1371 = vld [vmem:[%s1 + $0x29e8] sm:$0xff]
    %v1372 = vld [vmem:[%s1 + $0x29f0] sm:$0xff]
    %v1373 = vld [vmem:[%s1 + $0x29f8] sm:$0xff]
    %v1374 = vld [vmem:[%s1 + $0x2a00] sm:$0xff]
    %v1375 = vld [vmem:[%s1 + $0x2a08] sm:$0xff]
    %v1376 = vld [vmem:[%s1 + $0x2a10] sm:$0xff]
    %v1377 = vld [vmem:[%s1 + $0x2a18] sm:$0xff]
    %v1378 = vld [vmem:[%s1 + $0x2a20] sm:$0xff]
    %v1379 = vld [vmem:[%s1 + $0x2a28] sm:$0xff]
    %v1380 = vld [vmem:[%s1 + $0x2a30] sm:$0xff]
    %v1381 = vld [vmem:[%s1 + $0x2a38] sm:$0xff]
    %v1382 = vld [vmem:[%s1 + $0x2a40] sm:$0xff]
    %v1383 = vld [vmem:[%s1 + $0x2a48] sm:$0xff]
    %v1384 = vld [vmem:[%s1 + $0x2a50] sm:$0xff]
    %v1385 = vld [vmem:[%s1 + $0x2a58] sm:$0xff]
    %v1386 = vld [vmem:[%s1 + $0x2a60] sm:$0xff]
    %v1387 = vld [vmem:[%s1 + $0x2a68] sm:$0xff]
    %v1388 = vld [vmem:[%s1 + $0x2a70] sm:$0xff]
    %v1389 = vld [vmem:[%s1 + $0x2a78] sm:$0xff]
    %v1390 = vld [vmem:[%s1 + $0x2a80] sm:$0xff]
    %v1391 = vld [vmem:[%s1 + $0x2a88] sm:$0xff]
    %v1392 = vld [vmem:[%s1 + $0x2a90] sm:$0xff]
    %v1393 = vld [vmem:[%s1 + $0x2a98] sm:$0xff]
    %v1394 = vld [vmem:[%s1 + $0x2aa0] sm:$0xff]
    %v1395 = vld [vmem:[%s1 + $0x2aa8] sm:$0xff]
    %v1396 = vld [vmem:[%s1 + $0x2ab0] sm:$0xff]
    %v1397 = vld [vmem:[%s1 + $0x2ab8] sm:$0xff]
    %v1398 = vld [vmem:[%s1 + $0x2ac0] sm:$0xff]
    %v1399 = vld [vmem:[%s1 + $0x2ac8] sm:$0xff]
    %v1400 = vld [vmem:[%s1 + $0x2ad0] sm:$0xff]
    %v1401 = vld [vmem:[%s1 + $0x2ad8] sm:$0xff]
    %v1402 = vld [vmem:[%s1 + $0x2ae0] sm:$0xff]
    %v1403 = vld [vmem:[%s1 + $0x2ae8] sm:$0xff]
    %v1404 = vld [vmem:[%s1 + $0x2af0] sm:$0xff]
    %v1405 = vld [vmem:[%s1 + $0x2af8] sm:$0xff]
    %v1406 = vld [vmem:[%s1 + $0x2b00] sm:$0xff]
    %v1407 = vld [vmem:[%s1 + $0x2b08] sm:$0xff]
    %v1408 = vld [vmem:[%s1 + $0x2b10] sm:$0xff]
    %v1409 = vld [vmem:[%s1 + $0x2b18] sm:$0xff]
    %v1410 = vld [vmem:[%s1 + $0x2b20] sm:$0xff]
    %v1411 = vld [vmem:[%s1 + $0x2b28] sm:$0xff]
    %v1412 = vld [vmem:[%s1 + $0x2b30] sm:$0xff]
    %v1413 = vld [vmem:[%s1 + $0x2b38] sm:$0xff]
    %v1414 = vld [vmem:[%s1 + $0x2b40] sm:$0xff]
    %v1415 = vld [vmem:[%s1 + $0x2b48] sm:$0xff]
    %v1416 = vld [vmem:[%s1 + $0x2b50] sm:$0xff]
    %v1417 = vld [vmem:[%s1 + $0x2b58] sm:$0xff]
    %v1418 = vld [vmem:[%s1 + $0x2b60] sm:$0xff]
    %v1419 = vld [vmem:[%s1 + $0x2b68] sm:$0xff]
    %v1420 = vld [vmem:[%s1 + $0x2b70] sm:$0xff]
    %v1421 = vld [vmem:[%s1 + $0x2b78] sm:$0xff]
    %v1422 = vld [vmem:[%s1 + $0x2b80] sm:$0xff]
    %v1423 = vld [vmem:[%s1 + $0x2b88] sm:$0xff]
    %v1424 = vld [vmem:[%s1 + $0x2b90] sm:$0xff]
    %v1425 = vld [vmem:[%s1 + $0x2b98] sm:$0xff]
    %v1426 = vld [vmem:[%s1 + $0x2ba0] sm:$0xff]
    %v1427 = vld [vmem:[%s1 + $0x2ba8] sm:$0xff]
    %v1428 = vld [vmem:[%s1 + $0x2bb0] sm:$0xff]
    %v1429 = vld [vmem:[%s1 + $0x2bb8] sm:$0xff]
    %v1430 = vld [vmem:[%s1 + $0x2bc0] sm:$0xff]
    %v1431 = vld [vmem:[%s1 + $0x2bc8] sm:$0xff]
    %v1432 = vld [vmem:[%s1 + $0x2bd0] sm:$0xff]
    %v1433 = vld [vmem:[%s1 + $0x2bd8] sm:$0xff]
    %v1434 = vld [vmem:[%s1 + $0x2be0] sm:$0xff]
    %v1435 = vld [vmem:[%s1 + $0x2be8] sm:$0xff]
    %v1436 = vld [vmem:[%s1 + $0x2bf0] sm:$0xff]
    %v1437 = vld [vmem:[%s1 + $0x2bf8] sm:$0xff]
    %v1438 = vld [vmem:[%s1 + $0x2c00] sm:$0xff]
    %v1439 = vld [vmem:[%s1 + $0x2c08] sm:$0xff]
    %v1440 = vld [vmem:[%s1 + $0x2c10] sm:$0xff]
    %v1441 = vld [vmem:[%s1 + $0x2c18] sm:$0xff]
    %v1442 = vld [vmem:[%s1 + $0x2c20] sm:$0xff]
    %v1443 = vld [vmem:[%s1 + $0x2c28] sm:$0xff]
    %v1444 = vld [vmem:[%s1 + $0x2c30] sm:$0xff]
    %v1445 = vld [vmem:[%s1 + $0x2c38] sm:$0xff]
    %v1446 = vld [vmem:[%s1 + $0x2c40] sm:$0xff]
    %v1447 = vld [vmem:[%s1 + $0x2c48] sm:$0xff]
    %v1448 = vld [vmem:[%s1 + $0x2c50] sm:$0xff]
    %v1449 = vld [vmem:[%s1 + $0x2c58] sm:$0xff]
    %v1450 = vld [vmem:[%s1 + $0x2c60] sm:$0xff]
    %v1451 = vld [vmem:[%s1 + $0x2c68] sm:$0xff]
    %v1452 = vld [vmem:[%s1 + $0x2c70] sm:$0xff]
    %v1453 = vld [vmem:[%s1 + $0x2c78] sm:$0xff]
    %v1454 = vld [vmem:[%s1 + $0x2c80] sm:$0xff]
    %v1455 = vld [vmem:[%s1 + $0x2c88] sm:$0xff]
    %v1456 = vld [vmem:[%s1 + $0x2c90] sm:$0xff]
    %v1457 = vld [vmem:[%s1 + $0x2c98] sm:$0xff]
    %v1458 = vld [vmem:[%s1 + $0x2ca0] sm:$0xff]
    %v1459 = vld [vmem:[%s1 + $0x2ca8] sm:$0xff]
    %v1460 = vld [vmem:[%s1 + $0x2cb0] sm:$0xff]
    %v1461 = vld [vmem:[%s1 + $0x2cb8] sm:$0xff]
    %v1462 = vld [vmem:[%s1 + $0x2cc0] sm:$0xff]
    %v1463 = vld [vmem:[%s1 + $0x2cc8] sm:$0xff]
    %v1464 = vld [vmem:[%s1 + $0x2cd0] sm:$0xff]
    %v1465 = vld [vmem:[%s1 + $0x2cd8] sm:$0xff]
    %v1466 = vld [vmem:[%s1 + $0x2ce0] sm:$0xff]
    %v1467 = vld [vmem:[%s1 + $0x2ce8] sm:$0xff]
    %v1468 = vld [vmem:[%s1 + $0x2cf0] sm:$0xff]
    %v1469 = vld [vmem:[%s1 + $0x2cf8] sm:$0xff]
    %v1470 = vld [vmem:[%s1 + $0x2d00] sm:$0xff]
    %v1471 = vld [vmem:[%s1 + $0x2d08] sm:$0xff]
    %v1472 = vld [vmem:[%s1 + $0x2d10] sm:$0xff]
    %v1473 = vld [vmem:[%s1 + $0x2d18] sm:$0xff]
    %v1474 = vld [vmem:[%s1 + $0x2d20] sm:$0xff]
    %v1475 = vld [vmem:[%s1 + $0x2d28] sm:$0xff]
    %v1476 = vld [vmem:[%s1 + $0x2d30] sm:$0xff]
    %v1477 = vld [vmem:[%s1 + $0x2d38] sm:$0xff]
    %v1478 = vld [vmem:[%s1 + $0x2d40] sm:$0xff]
    %v1479 = vld [vmem:[%s1 + $0x2d48] sm:$0xff]
    %v1480 = vld [vmem:[%s1 + $0x2d50] sm:$0xff]
    %v1481 = vld [vmem:[%s1 + $0x2d58] sm:$0xff]
    %v1482 = vld [vmem:[%s1 + $0x2d60] sm:$0xff]
    %v1483 = vld [vmem:[%s1 + $0x2d68] sm:$0xff]
    %v1484 = vld [vmem:[%s1 + $0x2d70] sm:$0xff]
    %v1485 = vld [vmem:[%s1 + $0x2d78] sm:$0xff]
    %v1486 = vld [vmem:[%s1 + $0x2d80] sm:$0xff]
    %v1487 = vld [vmem:[%s1 + $0x2d88] sm:$0xff]
    %v1488 = vld [vmem:[%s1 + $0x2d90] sm:$0xff]
    %v1489 = vld [vmem:[%s1 + $0x2d98] sm:$0xff]
    %v1490 = vld [vmem:[%s1 + $0x2da0] sm:$0xff]
    %v1491 = vld [vmem:[%s1 + $0x2da8] sm:$0xff]
    %v1492 = vld [vmem:[%s1 + $0x2db0] sm:$0xff]
    %v1493 = vld [vmem:[%s1 + $0x2db8] sm:$0xff]
    %v1494 = vld [vmem:[%s1 + $0x2dc0] sm:$0xff]
    %v1495 = vld [vmem:[%s1 + $0x2dc8] sm:$0xff]
    %v1496 = vld [vmem:[%s1 + $0x2dd0] sm:$0xff]
    %v1497 = vld [vmem:[%s1 + $0x2dd8] sm:$0xff]
    %v1498 = vld [vmem:[%s1 + $0x2de0] sm:$0xff]
    %v1499 = vld [vmem:[%s1 + $0x2de8] sm:$0xff]
    %v1500 = vld [vmem:[%s1 + $0x2df0] sm:$0xff]
    %v1501 = vld [vmem:[%s1 + $0x2df8] sm:$0xff]
    %v1502 = vld [vmem:[%s1 + $0x2e00] sm:$0xff]
    %v1503 = vld [vmem:[%s1 + $0x2e08] sm:$0xff]
    %v1504 = vld [vmem:[%s1 + $0x2e10] sm:$0xff]
    %v1505 = vld [vmem:[%s1 + $0x2e18] sm:$0xff]
    %v1506 = vld [vmem:[%s1 + $0x2e20] sm:$0xff]
    %v1507 = vld [vmem:[%s1 + $0x2e28] sm:$0xff]
    %v1508 = vld [vmem:[%s1 + $0x2e30] sm:$0xff]
    %v1509 = vld [vmem:[%s1 + $0x2e38] sm:$0xff]
    %v1510 = vld [vmem:[%s1 + $0x2e40] sm:$0xff]
    %v1511 = vld [vmem:[%s1 + $0x2e48] sm:$0xff]
    %v1512 = vld [vmem:[%s1 + $0x2e50] sm:$0xff]
    %v1513 = vld [vmem:[%s1 + $0x2e58] sm:$0xff]
    %v1514 = vld [vmem:[%s1 + $0x2e60] sm:$0xff]
    %v1515 = vld [vmem:[%s1 + $0x2e68] sm:$0xff]
    %v1516 = vld [vmem:[%s1 + $0x2e70] sm:$0xff]
    %v1517 = vld [vmem:[%s1 + $0x2e78] sm:$0xff]
    %v1518 = vld [vmem:[%s1 + $0x2e80] sm:$0xff]
    %v1519 = vld [vmem:[%s1 + $0x2e88] sm:$0xff]
    %v1520 = vld [vmem:[%s1 + $0x2e90] sm:$0xff]
    %v1521 = vld [vmem:[%s1 + $0x2e98] sm:$0xff]
    %v1522 = vld [vmem:[%s1 + $0x2ea0] sm:$0xff]
    %v1523 = vld [vmem:[%s1 + $0x2ea8] sm:$0xff]
    %v1524 = vld [vmem:[%s1 + $0x2eb0] sm:$0xff]
    %v1525 = vld [vmem:[%s1 + $0x2eb8] sm:$0xff]
    %v1526 = vld [vmem:[%s1 + $0x2ec0] sm:$0xff]
    %v1527 = vld [vmem:[%s1 + $0x2ec8] sm:$0xff]
    %v1528 = vld [vmem:[%s1 + $0x2ed0] sm:$0xff]
    %v1529 = vld [vmem:[%s1 + $0x2ed8] sm:$0xff]
    %v1530 = vld [vmem:[%s1 + $0x2ee0] sm:$0xff]
    %v1531 = vld [vmem:[%s1 + $0x2ee8] sm:$0xff]
    %v1532 = vld [vmem:[%s1 + $0x2ef0] sm:$0xff]
    %v1533 = vld [vmem:[%s1 + $0x2ef8] sm:$0xff]
    %v1534 = vld [vmem:[%s1 + $0x2f00] sm:$0xff]
    %v1535 = vld [vmem:[%s1 + $0x2f08] sm:$0xff]
    %v1536 = vld [vmem:[%s1 + $0x2f10] sm:$0xff]
    %v1537 = vld [vmem:[%s1 + $0x2f18] sm:$0xff]
    %v1538 = vld [vmem:[%s1 + $0x2f20] sm:$0xff]
    %v1539 = vld [vmem:[%s1 + $0x2f28] sm:$0xff]
    %v1540 = vld [vmem:[%s1 + $0x2f30] sm:$0xff]
    %v1541 = vld [vmem:[%s1 + $0x2f38] sm:$0xff]
    %v1542 = vld [vmem:[%s1 + $0x2f40] sm:$0xff]
    %v1543 = vld [vmem:[%s1 + $0x2f48] sm:$0xff]
    %v1544 = vld [vmem:[%s1 + $0x2f50] sm:$0xff]
    %v1545 = vld [vmem:[%s1 + $0x2f58] sm:$0xff]
    %v1546 = vld [vmem:[%s1 + $0x2f60] sm:$0xff]
    %v1547 = vld [vmem:[%s1 + $0x2f68] sm:$0xff]
    %v1548 = vld [vmem:[%s1 + $0x2f70] sm:$0xff]
    %v1549 = vld [vmem:[%s1 + $0x2f78] sm:$0xff]
    %v1550 = vld [vmem:[%s1 + $0x2f80] sm:$0xff]
    %v1551 = vld [vmem:[%s1 + $0x2f88] sm:$0xff]
    %v1552 = vld [vmem:[%s1 + $0x2f90] sm:$0xff]
    %v1553 = vld [vmem:[%s1 + $0x2f98] sm:$0xff]
    %v1554 = vld [vmem:[%s1 + $0x2fa0] sm:$0xff]
    %v1555 = vld [vmem:[%s1 + $0x2fa8] sm:$0xff]
    %v1556 = vld [vmem:[%s1 + $0x2fb0] sm:$0xff]
    %v1557 = vld [vmem:[%s1 + $0x2fb8] sm:$0xff]
    %v1558 = vld [vmem:[%s1 + $0x2fc0] sm:$0xff]
    %v1559 = vld [vmem:[%s1 + $0x2fc8] sm:$0xff]
    %v1560 = vld [vmem:[%s1 + $0x2fd0] sm:$0xff]
    %v1561 = vld [vmem:[%s1 + $0x2fd8] sm:$0xff]
    %v1562 = vld [vmem:[%s1 + $0x2fe0] sm:$0xff]
    %v1563 = vld [vmem:[%s1 + $0x2fe8] sm:$0xff]
    %v1564 = vld [vmem:[%s1 + $0x2ff0] sm:$0xff]
    %v1565 = vld [vmem:[%s1 + $0x2ff8] sm:$0xff]
    %v1566 = vld [vmem:[%s1 + $0x3000] sm:$0xff]
    %v1567 = vld [vmem:[%s1 + $0x3008] sm:$0xff]
    %v1568 = vld [vmem:[%s1 + $0x3010] sm:$0xff]
    %v1569 = vld [vmem:[%s1 + $0x3018] sm:$0xff]
    %v1570 = vld [vmem:[%s1 + $0x3020] sm:$0xff]
    %v1571 = vld [vmem:[%s1 + $0x3028] sm:$0xff]
    %v1572 = vld [vmem:[%s1 + $0x3030] sm:$0xff]
    %v1573 = vld [vmem:[%s1 + $0x3038] sm:$0xff]
    %v1574 = vld [vmem:[%s1 + $0x3040] sm:$0xff]
    %v1575 = vld [vmem:[%s1 + $0x3048] sm:$0xff]
    %v1576 = vld [vmem:[%s1 + $0x3050] sm:$0xff]
    %v1577 = vld [vmem:[%s1 + $0x3058] sm:$0xff]
    %v1578 = vld [vmem:[%s1 + $0x3060] sm:$0xff]
    %v1579 = vld [vmem:[%s1 + $0x3068] sm:$0xff]
    %v1580 = vld [vmem:[%s1 + $0x3070] sm:$0xff]
    %v1581 = vld [vmem:[%s1 + $0x3078] sm:$0xff]
    %v1582 = vld [vmem:[%s1 + $0x3080] sm:$0xff]
    %v1583 = vld [vmem:[%s1 + $0x3088] sm:$0xff]
    %v1584 = vld [vmem:[%s1 + $0x3090] sm:$0xff]
    %v1585 = vld [vmem:[%s1 + $0x3098] sm:$0xff]
    %v1586 = vld [vmem:[%s1 + $0x30a0] sm:$0xff]
    %v1587 = vld [vmem:[%s1 + $0x30a8] sm:$0xff]
    %v1588 = vld [vmem:[%s1 + $0x30b0] sm:$0xff]
    %v1589 = vld [vmem:[%s1 + $0x30b8] sm:$0xff]
    %v1590 = vld [vmem:[%s1 + $0x30c0] sm:$0xff]
    %v1591 = vld [vmem:[%s1 + $0x30c8] sm:$0xff]
    %v1592 = vld [vmem:[%s1 + $0x30d0] sm:$0xff]
    %v1593 = vld [vmem:[%s1 + $0x30d8] sm:$0xff]
    %v1594 = vld [vmem:[%s1 + $0x30e0] sm:$0xff]
    %v1595 = vld [vmem:[%s1 + $0x30e8] sm:$0xff]
    %v1596 = vld [vmem:[%s1 + $0x30f0] sm:$0xff]
    %v1597 = vld [vmem:[%s1 + $0x30f8] sm:$0xff]
    %v1598 = vld [vmem:[%s2] sm:$0xf]
    %v1600 = vperm.slane %v1598, 0
    %v1601 = vperm.slane %v1598, 1
    %v1602 = vperm.slane %v1598, 2
    %v1603 = vperm.slane %v1598, 3
    %1615 = vst [vmem:[#allocation1] ss:$4 sm:$0xff] %v23
    %s1616 = scalar_lea.vmem [#allocation1], 32
    %1617 = vst [vmem:[%s1616] ss:$4 sm:$0xff] %v24
    %v1618 = vld.sshfl [vmem:[#allocation1] sm:$0xff pattern:$0x73625140]
    %v1619 = vld.sshfl [vmem:[#allocation1 + $0x8] sm:$0xff pattern:$0x73625140]
    %v1620 = vld.sshfl [vmem:[#allocation1 + $0x10] sm:$0xff pattern:$0x73625140]
    %v1621 = vld.sshfl [vmem:[#allocation1 + $0x18] sm:$0xff pattern:$0x73625140]
    %v1622 = vld.sshfl [vmem:[#allocation1 + $0x20] sm:$0xff pattern:$0x73625140]
    %v1623 = vld.sshfl [vmem:[#allocation1 + $0x28] sm:$0xff pattern:$0x73625140]
    %v1624 = vld.sshfl [vmem:[#allocation1 + $0x30] sm:$0xff pattern:$0x73625140]
    %v1625 = vld.sshfl [vmem:[#allocation1 + $0x38] sm:$0xff pattern:$0x73625140]
    %1626 = vst [vmem:[#allocation1] ss:$4 sm:$0xff] %v25
    %1627 = vst [vmem:[%s1616] ss:$4 sm:$0xff] %v26
    %v1628 = vld.sshfl [vmem:[#allocation1] sm:$0xff pattern:$0x73625140]
    %v1629 = vld.sshfl [vmem:[#allocation1 + $0x8] sm:$0xff pattern:$0x73625140]
    %v1630 = vld.sshfl [vmem:[#allocation1 + $0x10] sm:$0xff pattern:$0x73625140]
    %v1631 = vld.sshfl [vmem:[#allocation1 + $0x18] sm:$0xff pattern:$0x73625140]
    %v1632 = vld.sshfl [vmem:[#allocation1 + $0x20] sm:$0xff pattern:$0x73625140]
    %v1633 = vld.sshfl [vmem:[#allocation1 + $0x28] sm:$0xff pattern:$0x73625140]
    %v1634 = vld.sshfl [vmem:[#allocation1 + $0x30] sm:$0xff pattern:$0x73625140]
    %v1635 = vld.sshfl [vmem:[#allocation1 + $0x38] sm:$0xff pattern:$0x73625140]
    %1636 = vst [vmem:[#allocation1] ss:$4 sm:$0xff] %v27
    %1637 = vst [vmem:[%s1616] ss:$4 sm:$0xff] %v28
    %v1638 = vld.sshfl [vmem:[#allocation1] sm:$0xff pattern:$0x73625140]
    %v1639 = vld.sshfl [vmem:[#allocation1 + $0x8] sm:$0xff pattern:$0x73625140]
    %v1640 = vld.sshfl [vmem:[#allocation1 + $0x10] sm:$0xff pattern:$0x73625140]
    %v1641 = vld.sshfl [vmem:[#allocation1 + $0x18] sm:$0xff pattern:$0x73625140]
    %v1642 = vld.sshfl [vmem:[#allocation1 + $0x20] sm:$0xff pattern:$0x73625140]
    %v1643 = vld.sshfl [vmem:[#allocation1 + $0x28] sm:$0xff pattern:$0x73625140]
    %v1644 = vld.sshfl [vmem:[#allocation1 + $0x30] sm:$0xff pattern:$0x73625140]
    %v1645 = vld.sshfl [vmem:[#allocation1 + $0x38] sm:$0xff pattern:$0x73625140]
    %1646 = vst [vmem:[#allocation1] ss:$4 sm:$0xff] %v29
    %v1647 = vld.sshfl [vmem:[#allocation1] sm:$0xff pattern:$0x73625140]
    %vm1672 = vcmask 523264
    %v1673 = vsel %vm1672, %v1647, 0
    %1675 = vmatpush.msra.mxu0 %v90
    %1676 = vmatpush.msra.mxu0 %v86
    %1677 = vmatpush.msra.mxu0 %v82
    %1678 = vmatpush.msra.mxu0 %v78
    %1679 = vmatpush.msra.mxu0 %v74
    %1680 = vmatpush.msra.mxu0 %v70
    %1681 = vmatpush.msra.mxu0 %v66
    %1682 = vmatpush.msra.mxu0 %v62
    %1683 = vmatpush.msra.mxu0 %v58
    %1684 = vmatpush.msra.mxu0 %v54
    %1685 = vmatpush.msra.mxu0 %v50
    %1686 = vmatpush.msra.mxu0 %v46
    %1687 = vmatpush.msra.mxu0 %v42
    %1688 = vmatpush.msra.mxu0 %v38
    %1689 = vmatpush.msra.mxu0 %v34
    %1690 = vmatpush.msra.mxu0 %v30
    %1691 = vmatmul.f32.gmra.mxu0 %v1618
    %v1692 = vpop.f32.mrf.mxu0
    %v1693 = vadd.f32 %v1600, %v1692
    %1694 = vdwg.mxu0
    %1695 = vmatpush.msra.mxu0 %v154
    %1696 = vmatpush.msra.mxu0 %v150
    %1697 = vmatpush.msra.mxu0 %v146
    %1698 = vmatpush.msra.mxu0 %v142
    %1699 = vmatpush.msra.mxu0 %v138
    %1700 = vmatpush.msra.mxu0 %v134
    %1701 = vmatpush.msra.mxu0 %v130
    %1702 = vmatpush.msra.mxu0 %v126
    %1703 = vmatpush.msra.mxu0 %v122
    %1704 = vmatpush.msra.mxu0 %v118
    %1705 = vmatpush.msra.mxu0 %v114
    %1706 = vmatpush.msra.mxu0 %v110
    %1707 = vmatpush.msra.mxu0 %v106
    %1708 = vmatpush.msra.mxu0 %v102
    %1709 = vmatpush.msra.mxu0 %v98
    %1710 = vmatpush.msra.mxu0 %v94
    %1711 = vmatmul.f32.gmra.mxu0 %v1619
    %v1712 = vpop.f32.mrf.mxu0
    %v1713 = vadd.f32 %v1693, %v1712
    %1714 = vdwg.mxu0
    %1715 = vmatpush.msra.mxu0 %v218
    %1716 = vmatpush.msra.mxu0 %v214
    %1717 = vmatpush.msra.mxu0 %v210
    %1718 = vmatpush.msra.mxu0 %v206
    %1719 = vmatpush.msra.mxu0 %v202
    %1720 = vmatpush.msra.mxu0 %v198
    %1721 = vmatpush.msra.mxu0 %v194
    %1722 = vmatpush.msra.mxu0 %v190
    %1723 = vmatpush.msra.mxu0 %v186
    %1724 = vmatpush.msra.mxu0 %v182
    %1725 = vmatpush.msra.mxu0 %v178
    %1726 = vmatpush.msra.mxu0 %v174
    %1727 = vmatpush.msra.mxu0 %v170
    %1728 = vmatpush.msra.mxu0 %v166
    %1729 = vmatpush.msra.mxu0 %v162
    %1730 = vmatpush.msra.mxu0 %v158
    %1731 = vmatmul.f32.gmra.mxu0 %v1620
    %v1732 = vpop.f32.mrf.mxu0
    %v1733 = vadd.f32 %v1713, %v1732
    %1734 = vdwg.mxu0
    %1735 = vmatpush.msra.mxu0 %v282
    %1736 = vmatpush.msra.mxu0 %v278
    %1737 = vmatpush.msra.mxu0 %v274
    %1738 = vmatpush.msra.mxu0 %v270
    %1739 = vmatpush.msra.mxu0 %v266
    %1740 = vmatpush.msra.mxu0 %v262
    %1741 = vmatpush.msra.mxu0 %v258
    %1742 = vmatpush.msra.mxu0 %v254
    %1743 = vmatpush.msra.mxu0 %v250
    %1744 = vmatpush.msra.mxu0 %v246
    %1745 = vmatpush.msra.mxu0 %v242
    %1746 = vmatpush.msra.mxu0 %v238
    %1747 = vmatpush.msra.mxu0 %v234
    %1748 = vmatpush.msra.mxu0 %v230
    %1749 = vmatpush.msra.mxu0 %v226
    %1750 = vmatpush.msra.mxu0 %v222
    %1751 = vmatmul.f32.gmra.mxu0 %v1621
    %v1752 = vpop.f32.mrf.mxu0
    %v1753 = vadd.f32 %v1733, %v1752
    %1754 = vdwg.mxu0
    %1755 = vmatpush.msra.mxu0 %v346
    %1756 = vmatpush.msra.mxu0 %v342
    %1757 = vmatpush.msra.mxu0 %v338
    %1758 = vmatpush.msra.mxu0 %v334
    %1759 = vmatpush.msra.mxu0 %v330
    %1760 = vmatpush.msra.mxu0 %v326
    %1761 = vmatpush.msra.mxu0 %v322
    %1762 = vmatpush.msra.mxu0 %v318
    %1763 = vmatpush.msra.mxu0 %v314
    %1764 = vmatpush.msra.mxu0 %v310
    %1765 = vmatpush.msra.mxu0 %v306
    %1766 = vmatpush.msra.mxu0 %v302
    %1767 = vmatpush.msra.mxu0 %v298
    %1768 = vmatpush.msra.mxu0 %v294
    %1769 = vmatpush.msra.mxu0 %v290
    %1770 = vmatpush.msra.mxu0 %v286
    %1771 = vmatmul.f32.gmra.mxu0 %v1622
    %v1772 = vpop.f32.mrf.mxu0
    %v1773 = vadd.f32 %v1753, %v1772
    %1774 = vdwg.mxu0
    %1775 = vmatpush.msra.mxu0 %v410
    %1776 = vmatpush.msra.mxu0 %v406
    %1777 = vmatpush.msra.mxu0 %v402
    %1778 = vmatpush.msra.mxu0 %v398
    %1779 = vmatpush.msra.mxu0 %v394
    %1780 = vmatpush.msra.mxu0 %v390
    %1781 = vmatpush.msra.mxu0 %v386
    %1782 = vmatpush.msra.mxu0 %v382
    %1783 = vmatpush.msra.mxu0 %v378
    %1784 = vmatpush.msra.mxu0 %v374
    %1785 = vmatpush.msra.mxu0 %v370
    %1786 = vmatpush.msra.mxu0 %v366
    %1787 = vmatpush.msra.mxu0 %v362
    %1788 = vmatpush.msra.mxu0 %v358
    %1789 = vmatpush.msra.mxu0 %v354
    %1790 = vmatpush.msra.mxu0 %v350
    %1791 = vmatmul.f32.gmra.mxu0 %v1623
    %v1792 = vpop.f32.mrf.mxu0
    %v1793 = vadd.f32 %v1773, %v1792
    %1794 = vdwg.mxu0
    %1795 = vmatpush.msra.mxu0 %v474
    %1796 = vmatpush.msra.mxu0 %v470
    %1797 = vmatpush.msra.mxu0 %v466
    %1798 = vmatpush.msra.mxu0 %v462
    %1799 = vmatpush.msra.mxu0 %v458
    %1800 = vmatpush.msra.mxu0 %v454
    %1801 = vmatpush.msra.mxu0 %v450
    %1802 = vmatpush.msra.mxu0 %v446
    %1803 = vmatpush.msra.mxu0 %v442
    %1804 = vmatpush.msra.mxu0 %v438
    %1805 = vmatpush.msra.mxu0 %v434
    %1806 = vmatpush.msra.mxu0 %v430
    %1807 = vmatpush.msra.mxu0 %v426
    %1808 = vmatpush.msra.mxu0 %v422
    %1809 = vmatpush.msra.mxu0 %v418
    %1810 = vmatpush.msra.mxu0 %v414
    %1811 = vmatmul.f32.gmra.mxu0 %v1624
    %v1812 = vpop.f32.mrf.mxu0
    %v1813 = vadd.f32 %v1793, %v1812
    %1814 = vdwg.mxu0
    %1815 = vmatpush.msra.mxu0 %v538
    %1816 = vmatpush.msra.mxu0 %v534
    %1817 = vmatpush.msra.mxu0 %v530
    %1818 = vmatpush.msra.mxu0 %v526
    %1819 = vmatpush.msra.mxu0 %v522
    %1820 = vmatpush.msra.mxu0 %v518
    %1821 = vmatpush.msra.mxu0 %v514
    %1822 = vmatpush.msra.mxu0 %v510
    %1823 = vmatpush.msra.mxu0 %v506
    %1824 = vmatpush.msra.mxu0 %v502
    %1825 = vmatpush.msra.mxu0 %v498
    %1826 = vmatpush.msra.mxu0 %v494
    %1827 = vmatpush.msra.mxu0 %v490
    %1828 = vmatpush.msra.mxu0 %v486
    %1829 = vmatpush.msra.mxu0 %v482
    %1830 = vmatpush.msra.mxu0 %v478
    %1831 = vmatmul.f32.gmra.mxu0 %v1625
    %v1832 = vpop.f32.mrf.mxu0
    %v1833 = vadd.f32 %v1813, %v1832
    %1834 = vdwg.mxu0
    %1835 = vmatpush.msra.mxu0 %v602
    %1836 = vmatpush.msra.mxu0 %v598
    %1837 = vmatpush.msra.mxu0 %v594
    %1838 = vmatpush.msra.mxu0 %v590
    %1839 = vmatpush.msra.mxu0 %v586
    %1840 = vmatpush.msra.mxu0 %v582
    %1841 = vmatpush.msra.mxu0 %v578
    %1842 = vmatpush.msra.mxu0 %v574
    %1843 = vmatpush.msra.mxu0 %v570
    %1844 = vmatpush.msra.mxu0 %v566
    %1845 = vmatpush.msra.mxu0 %v562
    %1846 = vmatpush.msra.mxu0 %v558
    %1847 = vmatpush.msra.mxu0 %v554
    %1848 = vmatpush.msra.mxu0 %v550
    %1849 = vmatpush.msra.mxu0 %v546
    %1850 = vmatpush.msra.mxu0 %v542
    %1851 = vmatmul.f32.gmra.mxu0 %v1628
    %v1852 = vpop.f32.mrf.mxu0
    %v1853 = vadd.f32 %v1833, %v1852
    %1854 = vdwg.mxu0
    %1855 = vmatpush.msra.mxu0 %v666
    %1856 = vmatpush.msra.mxu0 %v662
    %1857 = vmatpush.msra.mxu0 %v658
    %1858 = vmatpush.msra.mxu0 %v654
    %1859 = vmatpush.msra.mxu0 %v650
    %1860 = vmatpush.msra.mxu0 %v646
    %1861 = vmatpush.msra.mxu0 %v642
    %1862 = vmatpush.msra.mxu0 %v638
    %1863 = vmatpush.msra.mxu0 %v634
    %1864 = vmatpush.msra.mxu0 %v630
    %1865 = vmatpush.msra.mxu0 %v626
    %1866 = vmatpush.msra.mxu0 %v622
    %1867 = vmatpush.msra.mxu0 %v618
    %1868 = vmatpush.msra.mxu0 %v614
    %1869 = vmatpush.msra.mxu0 %v610
    %1870 = vmatpush.msra.mxu0 %v606
    %1871 = vmatmul.f32.gmra.mxu0 %v1629
    %v1872 = vpop.f32.mrf.mxu0
    %v1873 = vadd.f32 %v1853, %v1872
    %1874 = vdwg.mxu0
    %1875 = vmatpush.msra.mxu0 %v730
    %1876 = vmatpush.msra.mxu0 %v726
    %1877 = vmatpush.msra.mxu0 %v722
    %1878 = vmatpush.msra.mxu0 %v718
    %1879 = vmatpush.msra.mxu0 %v714
    %1880 = vmatpush.msra.mxu0 %v710
    %1881 = vmatpush.msra.mxu0 %v706
    %1882 = vmatpush.msra.mxu0 %v702
    %1883 = vmatpush.msra.mxu0 %v698
    %1884 = vmatpush.msra.mxu0 %v694
    %1885 = vmatpush.msra.mxu0 %v690
    %1886 = vmatpush.msra.mxu0 %v686
    %1887 = vmatpush.msra.mxu0 %v682
    %1888 = vmatpush.msra.mxu0 %v678
    %1889 = vmatpush.msra.mxu0 %v674
    %1890 = vmatpush.msra.mxu0 %v670
    %1891 = vmatmul.f32.gmra.mxu0 %v1630
    %v1892 = vpop.f32.mrf.mxu0
    %v1893 = vadd.f32 %v1873, %v1892
    %1894 = vdwg.mxu0
    %1895 = vmatpush.msra.mxu0 %v794
    %1896 = vmatpush.msra.mxu0 %v790
    %1897 = vmatpush.msra.mxu0 %v786
    %1898 = vmatpush.msra.mxu0 %v782
    %1899 = vmatpush.msra.mxu0 %v778
    %1900 = vmatpush.msra.mxu0 %v774
    %1901 = vmatpush.msra.mxu0 %v770
    %1902 = vmatpush.msra.mxu0 %v766
    %1903 = vmatpush.msra.mxu0 %v762
    %1904 = vmatpush.msra.mxu0 %v758
    %1905 = vmatpush.msra.mxu0 %v754
    %1906 = vmatpush.msra.mxu0 %v750
    %1907 = vmatpush.msra.mxu0 %v746
    %1908 = vmatpush.msra.mxu0 %v742
    %1909 = vmatpush.msra.mxu0 %v738
    %1910 = vmatpush.msra.mxu0 %v734
    %1911 = vmatmul.f32.gmra.mxu0 %v1631
    %v1912 = vpop.f32.mrf.mxu0
    %v1913 = vadd.f32 %v1893, %v1912
    %1914 = vdwg.mxu0
    %1915 = vmatpush.msra.mxu0 %v858
    %1916 = vmatpush.msra.mxu0 %v854
    %1917 = vmatpush.msra.mxu0 %v850
    %1918 = vmatpush.msra.mxu0 %v846
    %1919 = vmatpush.msra.mxu0 %v842
    %1920 = vmatpush.msra.mxu0 %v838
    %1921 = vmatpush.msra.mxu0 %v834
    %1922 = vmatpush.msra.mxu0 %v830
    %1923 = vmatpush.msra.mxu0 %v826
    %1924 = vmatpush.msra.mxu0 %v822
    %1925 = vmatpush.msra.mxu0 %v818
    %1926 = vmatpush.msra.mxu0 %v814
    %1927 = vmatpush.msra.mxu0 %v810
    %1928 = vmatpush.msra.mxu0 %v806
    %1929 = vmatpush.msra.mxu0 %v802
    %1930 = vmatpush.msra.mxu0 %v798
    %1931 = vmatmul.f32.gmra.mxu0 %v1632
    %v1932 = vpop.f32.mrf.mxu0
    %v1933 = vadd.f32 %v1913, %v1932
    %1934 = vdwg.mxu0
    %1935 = vmatpush.msra.mxu0 %v922
    %1936 = vmatpush.msra.mxu0 %v918
    %1937 = vmatpush.msra.mxu0 %v914
    %1938 = vmatpush.msra.mxu0 %v910
    %1939 = vmatpush.msra.mxu0 %v906
    %1940 = vmatpush.msra.mxu0 %v902
    %1941 = vmatpush.msra.mxu0 %v898
    %1942 = vmatpush.msra.mxu0 %v894
    %1943 = vmatpush.msra.mxu0 %v890
    %1944 = vmatpush.msra.mxu0 %v886
    %1945 = vmatpush.msra.mxu0 %v882
    %1946 = vmatpush.msra.mxu0 %v878
    %1947 = vmatpush.msra.mxu0 %v874
    %1948 = vmatpush.msra.mxu0 %v870
    %1949 = vmatpush.msra.mxu0 %v866
    %1950 = vmatpush.msra.mxu0 %v862
    %1951 = vmatmul.f32.gmra.mxu0 %v1633
    %v1952 = vpop.f32.mrf.mxu0
    %v1953 = vadd.f32 %v1933, %v1952
    %1954 = vdwg.mxu0
    %1955 = vmatpush.msra.mxu0 %v986
    %1956 = vmatpush.msra.mxu0 %v982
    %1957 = vmatpush.msra.mxu0 %v978
    %1958 = vmatpush.msra.mxu0 %v974
    %1959 = vmatpush.msra.mxu0 %v970
    %1960 = vmatpush.msra.mxu0 %v966
    %1961 = vmatpush.msra.mxu0 %v962
    %1962 = vmatpush.msra.mxu0 %v958
    %1963 = vmatpush.msra.mxu0 %v954
    %1964 = vmatpush.msra.mxu0 %v950
    %1965 = vmatpush.msra.mxu0 %v946
    %1966 = vmatpush.msra.mxu0 %v942
    %1967 = vmatpush.msra.mxu0 %v938
    %1968 = vmatpush.msra.mxu0 %v934
    %1969 = vmatpush.msra.mxu0 %v930
    %1970 = vmatpush.msra.mxu0 %v926
    %1971 = vmatmul.f32.gmra.mxu0 %v1634
    %v1972 = vpop.f32.mrf.mxu0
    %v1973 = vadd.f32 %v1953, %v1972
    %1974 = vdwg.mxu0
    %1975 = vmatpush.msra.mxu0 %v1050
    %1976 = vmatpush.msra.mxu0 %v1046
    %1977 = vmatpush.msra.mxu0 %v1042
    %1978 = vmatpush.msra.mxu0 %v1038
    %1979 = vmatpush.msra.mxu0 %v1034
    %1980 = vmatpush.msra.mxu0 %v1030
    %1981 = vmatpush.msra.mxu0 %v1026
    %1982 = vmatpush.msra.mxu0 %v1022
    %1983 = vmatpush.msra.mxu0 %v1018
    %1984 = vmatpush.msra.mxu0 %v1014
    %1985 = vmatpush.msra.mxu0 %v1010
    %1986 = vmatpush.msra.mxu0 %v1006
    %1987 = vmatpush.msra.mxu0 %v1002
    %1988 = vmatpush.msra.mxu0 %v998
    %1989 = vmatpush.msra.mxu0 %v994
    %1990 = vmatpush.msra.mxu0 %v990
    %1991 = vmatmul.f32.gmra.mxu0 %v1635
    %v1992 = vpop.f32.mrf.mxu0
    %v1993 = vadd.f32 %v1973, %v1992
    %1994 = vdwg.mxu0
    %1995 = vmatpush.msra.mxu0 %v1114
    %1996 = vmatpush.msra.mxu0 %v1110
    %1997 = vmatpush.msra.mxu0 %v1106
    %1998 = vmatpush.msra.mxu0 %v1102
    %1999 = vmatpush.msra.mxu0 %v1098
    %2000 = vmatpush.msra.mxu0 %v1094
    %2001 = vmatpush.msra.mxu0 %v1090
    %2002 = vmatpush.msra.mxu0 %v1086
    %2003 = vmatpush.msra.mxu0 %v1082
    %2004 = vmatpush.msra.mxu0 %v1078
    %2005 = vmatpush.msra.mxu0 %v1074
    %2006 = vmatpush.msra.mxu0 %v1070
    %2007 = vmatpush.msra.mxu0 %v1066
    %2008 = vmatpush.msra.mxu0 %v1062
    %2009 = vmatpush.msra.mxu0 %v1058
    %2010 = vmatpush.msra.mxu0 %v1054
    %2011 = vmatmul.f32.gmra.mxu0 %v1638
    %v2012 = vpop.f32.mrf.mxu0
    %v2013 = vadd.f32 %v1993, %v2012
    %2014 = vdwg.mxu0
    %2015 = vmatpush.msra.mxu0 %v1178
    %2016 = vmatpush.msra.mxu0 %v1174
    %2017 = vmatpush.msra.mxu0 %v1170
    %2018 = vmatpush.msra.mxu0 %v1166
    %2019 = vmatpush.msra.mxu0 %v1162
    %2020 = vmatpush.msra.mxu0 %v1158
    %2021 = vmatpush.msra.mxu0 %v1154
    %2022 = vmatpush.msra.mxu0 %v1150
    %2023 = vmatpush.msra.mxu0 %v1146
    %2024 = vmatpush.msra.mxu0 %v1142
    %2025 = vmatpush.msra.mxu0 %v1138
    %2026 = vmatpush.msra.mxu0 %v1134
    %2027 = vmatpush.msra.mxu0 %v1130
    %2028 = vmatpush.msra.mxu0 %v1126
    %2029 = vmatpush.msra.mxu0 %v1122
    %2030 = vmatpush.msra.mxu0 %v1118
    %2031 = vmatmul.f32.gmra.mxu0 %v1639
    %v2032 = vpop.f32.mrf.mxu0
    %v2033 = vadd.f32 %v2013, %v2032
    %2034 = vdwg.mxu0
    %2035 = vmatpush.msra.mxu0 %v1242
    %2036 = vmatpush.msra.mxu0 %v1238
    %2037 = vmatpush.msra.mxu0 %v1234
    %2038 = vmatpush.msra.mxu0 %v1230
    %2039 = vmatpush.msra.mxu0 %v1226
    %2040 = vmatpush.msra.mxu0 %v1222
    %2041 = vmatpush.msra.mxu0 %v1218
    %2042 = vmatpush.msra.mxu0 %v1214
    %2043 = vmatpush.msra.mxu0 %v1210
    %2044 = vmatpush.msra.mxu0 %v1206
    %2045 = vmatpush.msra.mxu0 %v1202
    %2046 = vmatpush.msra.mxu0 %v1198
    %2047 = vmatpush.msra.mxu0 %v1194
    %2048 = vmatpush.msra.mxu0 %v1190
    %2049 = vmatpush.msra.mxu0 %v1186
    %2050 = vmatpush.msra.mxu0 %v1182
    %2051 = vmatmul.f32.gmra.mxu0 %v1640
    %v2052 = vpop.f32.mrf.mxu0
    %v2053 = vadd.f32 %v2033, %v2052
    %2054 = vdwg.mxu0
    %2055 = vmatpush.msra.mxu0 %v1306
    %2056 = vmatpush.msra.mxu0 %v1302
    %2057 = vmatpush.msra.mxu0 %v1298
    %2058 = vmatpush.msra.mxu0 %v1294
    %2059 = vmatpush.msra.mxu0 %v1290
    %2060 = vmatpush.msra.mxu0 %v1286
    %2061 = vmatpush.msra.mxu0 %v1282
    %2062 = vmatpush.msra.mxu0 %v1278
    %2063 = vmatpush.msra.mxu0 %v1274
    %2064 = vmatpush.msra.mxu0 %v1270
    %2065 = vmatpush.msra.mxu0 %v1266
    %2066 = vmatpush.msra.mxu0 %v1262
    %2067 = vmatpush.msra.mxu0 %v1258
    %2068 = vmatpush.msra.mxu0 %v1254
    %2069 = vmatpush.msra.mxu0 %v1250
    %2070 = vmatpush.msra.mxu0 %v1246
    %2071 = vmatmul.f32.gmra.mxu0 %v1641
    %v2072 = vpop.f32.mrf.mxu0
    %v2073 = vadd.f32 %v2053, %v2072
    %2074 = vdwg.mxu0
    %2075 = vmatpush.msra.mxu0 %v1370
    %2076 = vmatpush.msra.mxu0 %v1366
    %2077 = vmatpush.msra.mxu0 %v1362
    %2078 = vmatpush.msra.mxu0 %v1358
    %2079 = vmatpush.msra.mxu0 %v1354
    %2080 = vmatpush.msra.mxu0 %v1350
    %2081 = vmatpush.msra.mxu0 %v1346
    %2082 = vmatpush.msra.mxu0 %v1342
    %2083 = vmatpush.msra.mxu0 %v1338
    %2084 = vmatpush.msra.mxu0 %v1334
    %2085 = vmatpush.msra.mxu0 %v1330
    %2086 = vmatpush.msra.mxu0 %v1326
    %2087 = vmatpush.msra.mxu0 %v1322
    %2088 = vmatpush.msra.mxu0 %v1318
    %2089 = vmatpush.msra.mxu0 %v1314
    %2090 = vmatpush.msra.mxu0 %v1310
    %2091 = vmatmul.f32.gmra.mxu0 %v1642
    %v2092 = vpop.f32.mrf.mxu0
    %v2093 = vadd.f32 %v2073, %v2092
    %2094 = vdwg.mxu0
    %2095 = vmatpush.msra.mxu0 %v1434
    %2096 = vmatpush.msra.mxu0 %v1430
    %2097 = vmatpush.msra.mxu0 %v1426
    %2098 = vmatpush.msra.mxu0 %v1422
    %2099 = vmatpush.msra.mxu0 %v1418
    %2100 = vmatpush.msra.mxu0 %v1414
    %2101 = vmatpush.msra.mxu0 %v1410
    %2102 = vmatpush.msra.mxu0 %v1406
    %2103 = vmatpush.msra.mxu0 %v1402
    %2104 = vmatpush.msra.mxu0 %v1398
    %2105 = vmatpush.msra.mxu0 %v1394
    %2106 = vmatpush.msra.mxu0 %v1390
    %2107 = vmatpush.msra.mxu0 %v1386
    %2108 = vmatpush.msra.mxu0 %v1382
    %2109 = vmatpush.msra.mxu0 %v1378
    %2110 = vmatpush.msra.mxu0 %v1374
    %2111 = vmatmul.f32.gmra.mxu0 %v1643
    %v2112 = vpop.f32.mrf.mxu0
    %v2113 = vadd.f32 %v2093, %v2112
    %2114 = vdwg.mxu0
    %2115 = vmatpush.msra.mxu0 %v1498
    %2116 = vmatpush.msra.mxu0 %v1494
    %2117 = vmatpush.msra.mxu0 %v1490
    %2118 = vmatpush.msra.mxu0 %v1486
    %2119 = vmatpush.msra.mxu0 %v1482
    %2120 = vmatpush.msra.mxu0 %v1478
    %2121 = vmatpush.msra.mxu0 %v1474
    %2122 = vmatpush.msra.mxu0 %v1470
    %2123 = vmatpush.msra.mxu0 %v1466
    %2124 = vmatpush.msra.mxu0 %v1462
    %2125 = vmatpush.msra.mxu0 %v1458
    %2126 = vmatpush.msra.mxu0 %v1454
    %2127 = vmatpush.msra.mxu0 %v1450
    %2128 = vmatpush.msra.mxu0 %v1446
    %2129 = vmatpush.msra.mxu0 %v1442
    %2130 = vmatpush.msra.mxu0 %v1438
    %2131 = vmatmul.f32.gmra.mxu0 %v1644
    %v2132 = vpop.f32.mrf.mxu0
    %v2133 = vadd.f32 %v2113, %v2132
    %2134 = vdwg.mxu0
    %2135 = vmatpush.msra.mxu0 %v1562
    %2136 = vmatpush.msra.mxu0 %v1558
    %2137 = vmatpush.msra.mxu0 %v1554
    %2138 = vmatpush.msra.mxu0 %v1550
    %2139 = vmatpush.msra.mxu0 %v1546
    %2140 = vmatpush.msra.mxu0 %v1542
    %2141 = vmatpush.msra.mxu0 %v1538
    %2142 = vmatpush.msra.mxu0 %v1534
    %2143 = vmatpush.msra.mxu0 %v1530
    %2144 = vmatpush.msra.mxu0 %v1526
    %2145 = vmatpush.msra.mxu0 %v1522
    %2146 = vmatpush.msra.mxu0 %v1518
    %2147 = vmatpush.msra.mxu0 %v1514
    %2148 = vmatpush.msra.mxu0 %v1510
    %2149 = vmatpush.msra.mxu0 %v1506
    %2150 = vmatpush.msra.mxu0 %v1502
    %2151 = vmatmul.f32.gmra.mxu0 %v1645
    %v2152 = vpop.f32.mrf.mxu0
    %v2153 = vadd.f32 %v2133, %v2152
    %2154 = vdwg.mxu0
    %2155 = vmatpush.msra.mxu0 0.0
    %2156 = vmatpush.msra.mxu0 0.0
    %2157 = vmatpush.msra.mxu0 0.0
    %2158 = vmatpush.msra.mxu0 0.0
    %2159 = vmatpush.msra.mxu0 0.0
    %2160 = vmatpush.msra.mxu0 0.0
    %2161 = vmatpush.msra.mxu0 0.0
    %2162 = vmatpush.msra.mxu0 0.0
    %2163 = vmatpush.msra.mxu0 %v1594
    %2164 = vmatpush.msra.mxu0 %v1590
    %2165 = vmatpush.msra.mxu0 %v1586
    %2166 = vmatpush.msra.mxu0 %v1582
    %2167 = vmatpush.msra.mxu0 %v1578
    %2168 = vmatpush.msra.mxu0 %v1574
    %2169 = vmatpush.msra.mxu0 %v1570
    %2170 = vmatpush.msra.mxu0 %v1566
    %2171 = vmatmul.f32.gmra.mxu0 %v1673
    %v2172 = vpop.f32.mrf.mxu0
    %v2173 = vadd.f32 %v2153, %v2172
    %2174 = vdwg.mxu0
    %2175 = vmatpush.msra.mxu0 %v91
    %2176 = vmatpush.msra.mxu0 %v87
    %2177 = vmatpush.msra.mxu0 %v83
    %2178 = vmatpush.msra.mxu0 %v79
    %2179 = vmatpush.msra.mxu0 %v75
    %2180 = vmatpush.msra.mxu0 %v71
    %2181 = vmatpush.msra.mxu0 %v67
    %2182 = vmatpush.msra.mxu0 %v63
    %2183 = vmatpush.msra.mxu0 %v59
    %2184 = vmatpush.msra.mxu0 %v55
    %2185 = vmatpush.msra.mxu0 %v51
    %2186 = vmatpush.msra.mxu0 %v47
    %2187 = vmatpush.msra.mxu0 %v43
    %2188 = vmatpush.msra.mxu0 %v39
    %2189 = vmatpush.msra.mxu0 %v35
    %2190 = vmatpush.msra.mxu0 %v31
    %2191 = vmatmul.f32.gmra.mxu0 %v1618
    %v2192 = vpop.f32.mrf.mxu0
    %v2193 = vadd.f32 %v1601, %v2192
    %2194 = vdwg.mxu0
    %2195 = vmatpush.msra.mxu0 %v155
    %2196 = vmatpush.msra.mxu0 %v151
    %2197 = vmatpush.msra.mxu0 %v147
    %2198 = vmatpush.msra.mxu0 %v143
    %2199 = vmatpush.msra.mxu0 %v139
    %2200 = vmatpush.msra.mxu0 %v135
    %2201 = vmatpush.msra.mxu0 %v131
    %2202 = vmatpush.msra.mxu0 %v127
    %2203 = vmatpush.msra.mxu0 %v123
    %2204 = vmatpush.msra.mxu0 %v119
    %2205 = vmatpush.msra.mxu0 %v115
    %2206 = vmatpush.msra.mxu0 %v111
    %2207 = vmatpush.msra.mxu0 %v107
    %2208 = vmatpush.msra.mxu0 %v103
    %2209 = vmatpush.msra.mxu0 %v99
    %2210 = vmatpush.msra.mxu0 %v95
    %2211 = vmatmul.f32.gmra.mxu0 %v1619
    %v2212 = vpop.f32.mrf.mxu0
    %v2213 = vadd.f32 %v2193, %v2212
    %2214 = vdwg.mxu0
    %2215 = vmatpush.msra.mxu0 %v219
    %2216 = vmatpush.msra.mxu0 %v215
    %2217 = vmatpush.msra.mxu0 %v211
    %2218 = vmatpush.msra.mxu0 %v207
    %2219 = vmatpush.msra.mxu0 %v203
    %2220 = vmatpush.msra.mxu0 %v199
    %2221 = vmatpush.msra.mxu0 %v195
    %2222 = vmatpush.msra.mxu0 %v191
    %2223 = vmatpush.msra.mxu0 %v187
    %2224 = vmatpush.msra.mxu0 %v183
    %2225 = vmatpush.msra.mxu0 %v179
    %2226 = vmatpush.msra.mxu0 %v175
    %2227 = vmatpush.msra.mxu0 %v171
    %2228 = vmatpush.msra.mxu0 %v167
    %2229 = vmatpush.msra.mxu0 %v163
    %2230 = vmatpush.msra.mxu0 %v159
    %2231 = vmatmul.f32.gmra.mxu0 %v1620
    %v2232 = vpop.f32.mrf.mxu0
    %v2233 = vadd.f32 %v2213, %v2232
    %2234 = vdwg.mxu0
    %2235 = vmatpush.msra.mxu0 %v283
    %2236 = vmatpush.msra.mxu0 %v279
    %2237 = vmatpush.msra.mxu0 %v275
    %2238 = vmatpush.msra.mxu0 %v271
    %2239 = vmatpush.msra.mxu0 %v267
    %2240 = vmatpush.msra.mxu0 %v263
    %2241 = vmatpush.msra.mxu0 %v259
    %2242 = vmatpush.msra.mxu0 %v255
    %2243 = vmatpush.msra.mxu0 %v251
    %2244 = vmatpush.msra.mxu0 %v247
    %2245 = vmatpush.msra.mxu0 %v243
    %2246 = vmatpush.msra.mxu0 %v239
    %2247 = vmatpush.msra.mxu0 %v235
    %2248 = vmatpush.msra.mxu0 %v231
    %2249 = vmatpush.msra.mxu0 %v227
    %2250 = vmatpush.msra.mxu0 %v223
    %2251 = vmatmul.f32.gmra.mxu0 %v1621
    %v2252 = vpop.f32.mrf.mxu0
    %v2253 = vadd.f32 %v2233, %v2252
    %2254 = vdwg.mxu0
    %2255 = vmatpush.msra.mxu0 %v347
    %2256 = vmatpush.msra.mxu0 %v343
    %2257 = vmatpush.msra.mxu0 %v339
    %2258 = vmatpush.msra.mxu0 %v335
    %2259 = vmatpush.msra.mxu0 %v331
    %2260 = vmatpush.msra.mxu0 %v327
    %2261 = vmatpush.msra.mxu0 %v323
    %2262 = vmatpush.msra.mxu0 %v319
    %2263 = vmatpush.msra.mxu0 %v315
    %2264 = vmatpush.msra.mxu0 %v311
    %2265 = vmatpush.msra.mxu0 %v307
    %2266 = vmatpush.msra.mxu0 %v303
    %2267 = vmatpush.msra.mxu0 %v299
    %2268 = vmatpush.msra.mxu0 %v295
    %2269 = vmatpush.msra.mxu0 %v291
    %2270 = vmatpush.msra.mxu0 %v287
    %2271 = vmatmul.f32.gmra.mxu0 %v1622
    %v2272 = vpop.f32.mrf.mxu0
    %v2273 = vadd.f32 %v2253, %v2272
    %2274 = vdwg.mxu0
    %2275 = vmatpush.msra.mxu0 %v411
    %2276 = vmatpush.msra.mxu0 %v407
    %2277 = vmatpush.msra.mxu0 %v403
    %2278 = vmatpush.msra.mxu0 %v399
    %2279 = vmatpush.msra.mxu0 %v395
    %2280 = vmatpush.msra.mxu0 %v391
    %2281 = vmatpush.msra.mxu0 %v387
    %2282 = vmatpush.msra.mxu0 %v383
    %2283 = vmatpush.msra.mxu0 %v379
    %2284 = vmatpush.msra.mxu0 %v375
    %2285 = vmatpush.msra.mxu0 %v371
    %2286 = vmatpush.msra.mxu0 %v367
    %2287 = vmatpush.msra.mxu0 %v363
    %2288 = vmatpush.msra.mxu0 %v359
    %2289 = vmatpush.msra.mxu0 %v355
    %2290 = vmatpush.msra.mxu0 %v351
    %2291 = vmatmul.f32.gmra.mxu0 %v1623
    %v2292 = vpop.f32.mrf.mxu0
    %v2293 = vadd.f32 %v2273, %v2292
    %2294 = vdwg.mxu0
    %2295 = vmatpush.msra.mxu0 %v475
    %2296 = vmatpush.msra.mxu0 %v471
    %2297 = vmatpush.msra.mxu0 %v467
    %2298 = vmatpush.msra.mxu0 %v463
    %2299 = vmatpush.msra.mxu0 %v459
    %2300 = vmatpush.msra.mxu0 %v455
    %2301 = vmatpush.msra.mxu0 %v451
    %2302 = vmatpush.msra.mxu0 %v447
    %2303 = vmatpush.msra.mxu0 %v443
    %2304 = vmatpush.msra.mxu0 %v439
    %2305 = vmatpush.msra.mxu0 %v435
    %2306 = vmatpush.msra.mxu0 %v431
    %2307 = vmatpush.msra.mxu0 %v427
    %2308 = vmatpush.msra.mxu0 %v423
    %2309 = vmatpush.msra.mxu0 %v419
    %2310 = vmatpush.msra.mxu0 %v415
    %2311 = vmatmul.f32.gmra.mxu0 %v1624
    %v2312 = vpop.f32.mrf.mxu0
    %v2313 = vadd.f32 %v2293, %v2312
    %2314 = vdwg.mxu0
    %2315 = vmatpush.msra.mxu0 %v539
    %2316 = vmatpush.msra.mxu0 %v535
    %2317 = vmatpush.msra.mxu0 %v531
    %2318 = vmatpush.msra.mxu0 %v527
    %2319 = vmatpush.msra.mxu0 %v523
    %2320 = vmatpush.msra.mxu0 %v519
    %2321 = vmatpush.msra.mxu0 %v515
    %2322 = vmatpush.msra.mxu0 %v511
    %2323 = vmatpush.msra.mxu0 %v507
    %2324 = vmatpush.msra.mxu0 %v503
    %2325 = vmatpush.msra.mxu0 %v499
    %2326 = vmatpush.msra.mxu0 %v495
    %2327 = vmatpush.msra.mxu0 %v491
    %2328 = vmatpush.msra.mxu0 %v487
    %2329 = vmatpush.msra.mxu0 %v483
    %2330 = vmatpush.msra.mxu0 %v479
    %2331 = vmatmul.f32.gmra.mxu0 %v1625
    %v2332 = vpop.f32.mrf.mxu0
    %v2333 = vadd.f32 %v2313, %v2332
    %2334 = vdwg.mxu0
    %2335 = vmatpush.msra.mxu0 %v603
    %2336 = vmatpush.msra.mxu0 %v599
    %2337 = vmatpush.msra.mxu0 %v595
    %2338 = vmatpush.msra.mxu0 %v591
    %2339 = vmatpush.msra.mxu0 %v587
    %2340 = vmatpush.msra.mxu0 %v583
    %2341 = vmatpush.msra.mxu0 %v579
    %2342 = vmatpush.msra.mxu0 %v575
    %2343 = vmatpush.msra.mxu0 %v571
    %2344 = vmatpush.msra.mxu0 %v567
    %2345 = vmatpush.msra.mxu0 %v563
    %2346 = vmatpush.msra.mxu0 %v559
    %2347 = vmatpush.msra.mxu0 %v555
    %2348 = vmatpush.msra.mxu0 %v551
    %2349 = vmatpush.msra.mxu0 %v547
    %2350 = vmatpush.msra.mxu0 %v543
    %2351 = vmatmul.f32.gmra.mxu0 %v1628
    %v2352 = vpop.f32.mrf.mxu0
    %v2353 = vadd.f32 %v2333, %v2352
    %2354 = vdwg.mxu0
    %2355 = vmatpush.msra.mxu0 %v667
    %2356 = vmatpush.msra.mxu0 %v663
    %2357 = vmatpush.msra.mxu0 %v659
    %2358 = vmatpush.msra.mxu0 %v655
    %2359 = vmatpush.msra.mxu0 %v651
    %2360 = vmatpush.msra.mxu0 %v647
    %2361 = vmatpush.msra.mxu0 %v643
    %2362 = vmatpush.msra.mxu0 %v639
    %2363 = vmatpush.msra.mxu0 %v635
    %2364 = vmatpush.msra.mxu0 %v631
    %2365 = vmatpush.msra.mxu0 %v627
    %2366 = vmatpush.msra.mxu0 %v623
    %2367 = vmatpush.msra.mxu0 %v619
    %2368 = vmatpush.msra.mxu0 %v615
    %2369 = vmatpush.msra.mxu0 %v611
    %2370 = vmatpush.msra.mxu0 %v607
    %2371 = vmatmul.f32.gmra.mxu0 %v1629
    %v2372 = vpop.f32.mrf.mxu0
    %v2373 = vadd.f32 %v2353, %v2372
    %2374 = vdwg.mxu0
    %2375 = vmatpush.msra.mxu0 %v731
    %2376 = vmatpush.msra.mxu0 %v727
    %2377 = vmatpush.msra.mxu0 %v723
    %2378 = vmatpush.msra.mxu0 %v719
    %2379 = vmatpush.msra.mxu0 %v715
    %2380 = vmatpush.msra.mxu0 %v711
    %2381 = vmatpush.msra.mxu0 %v707
    %2382 = vmatpush.msra.mxu0 %v703
    %2383 = vmatpush.msra.mxu0 %v699
    %2384 = vmatpush.msra.mxu0 %v695
    %2385 = vmatpush.msra.mxu0 %v691
    %2386 = vmatpush.msra.mxu0 %v687
    %2387 = vmatpush.msra.mxu0 %v683
    %2388 = vmatpush.msra.mxu0 %v679
    %2389 = vmatpush.msra.mxu0 %v675
    %2390 = vmatpush.msra.mxu0 %v671
    %2391 = vmatmul.f32.gmra.mxu0 %v1630
    %v2392 = vpop.f32.mrf.mxu0
    %v2393 = vadd.f32 %v2373, %v2392
    %2394 = vdwg.mxu0
    %2395 = vmatpush.msra.mxu0 %v795
    %2396 = vmatpush.msra.mxu0 %v791
    %2397 = vmatpush.msra.mxu0 %v787
    %2398 = vmatpush.msra.mxu0 %v783
    %2399 = vmatpush.msra.mxu0 %v779
    %2400 = vmatpush.msra.mxu0 %v775
    %2401 = vmatpush.msra.mxu0 %v771
    %2402 = vmatpush.msra.mxu0 %v767
    %2403 = vmatpush.msra.mxu0 %v763
    %2404 = vmatpush.msra.mxu0 %v759
    %2405 = vmatpush.msra.mxu0 %v755
    %2406 = vmatpush.msra.mxu0 %v751
    %2407 = vmatpush.msra.mxu0 %v747
    %2408 = vmatpush.msra.mxu0 %v743
    %2409 = vmatpush.msra.mxu0 %v739
    %2410 = vmatpush.msra.mxu0 %v735
    %2411 = vmatmul.f32.gmra.mxu0 %v1631
    %v2412 = vpop.f32.mrf.mxu0
    %v2413 = vadd.f32 %v2393, %v2412
    %2414 = vdwg.mxu0
    %2415 = vmatpush.msra.mxu0 %v859
    %2416 = vmatpush.msra.mxu0 %v855
    %2417 = vmatpush.msra.mxu0 %v851
    %2418 = vmatpush.msra.mxu0 %v847
    %2419 = vmatpush.msra.mxu0 %v843
    %2420 = vmatpush.msra.mxu0 %v839
    %2421 = vmatpush.msra.mxu0 %v835
    %2422 = vmatpush.msra.mxu0 %v831
    %2423 = vmatpush.msra.mxu0 %v827
    %2424 = vmatpush.msra.mxu0 %v823
    %2425 = vmatpush.msra.mxu0 %v819
    %2426 = vmatpush.msra.mxu0 %v815
    %2427 = vmatpush.msra.mxu0 %v811
    %2428 = vmatpush.msra.mxu0 %v807
    %2429 = vmatpush.msra.mxu0 %v803
    %2430 = vmatpush.msra.mxu0 %v799
    %2431 = vmatmul.f32.gmra.mxu0 %v1632
    %v2432 = vpop.f32.mrf.mxu0
    %v2433 = vadd.f32 %v2413, %v2432
    %2434 = vdwg.mxu0
    %2435 = vmatpush.msra.mxu0 %v923
    %2436 = vmatpush.msra.mxu0 %v919
    %2437 = vmatpush.msra.mxu0 %v915
    %2438 = vmatpush.msra.mxu0 %v911
    %2439 = vmatpush.msra.mxu0 %v907
    %2440 = vmatpush.msra.mxu0 %v903
    %2441 = vmatpush.msra.mxu0 %v899
    %2442 = vmatpush.msra.mxu0 %v895
    %2443 = vmatpush.msra.mxu0 %v891
    %2444 = vmatpush.msra.mxu0 %v887
    %2445 = vmatpush.msra.mxu0 %v883
    %2446 = vmatpush.msra.mxu0 %v879
    %2447 = vmatpush.msra.mxu0 %v875
    %2448 = vmatpush.msra.mxu0 %v871
    %2449 = vmatpush.msra.mxu0 %v867
    %2450 = vmatpush.msra.mxu0 %v863
    %2451 = vmatmul.f32.gmra.mxu0 %v1633
    %v2452 = vpop.f32.mrf.mxu0
    %v2453 = vadd.f32 %v2433, %v2452
    %2454 = vdwg.mxu0
    %2455 = vmatpush.msra.mxu0 %v987
    %2456 = vmatpush.msra.mxu0 %v983
    %2457 = vmatpush.msra.mxu0 %v979
    %2458 = vmatpush.msra.mxu0 %v975
    %2459 = vmatpush.msra.mxu0 %v971
    %2460 = vmatpush.msra.mxu0 %v967
    %2461 = vmatpush.msra.mxu0 %v963
    %2462 = vmatpush.msra.mxu0 %v959
    %2463 = vmatpush.msra.mxu0 %v955
    %2464 = vmatpush.msra.mxu0 %v951
    %2465 = vmatpush.msra.mxu0 %v947
    %2466 = vmatpush.msra.mxu0 %v943
    %2467 = vmatpush.msra.mxu0 %v939
    %2468 = vmatpush.msra.mxu0 %v935
    %2469 = vmatpush.msra.mxu0 %v931
    %2470 = vmatpush.msra.mxu0 %v927
    %2471 = vmatmul.f32.gmra.mxu0 %v1634
    %v2472 = vpop.f32.mrf.mxu0
    %v2473 = vadd.f32 %v2453, %v2472
    %2474 = vdwg.mxu0
    %2475 = vmatpush.msra.mxu0 %v1051
    %2476 = vmatpush.msra.mxu0 %v1047
    %2477 = vmatpush.msra.mxu0 %v1043
    %2478 = vmatpush.msra.mxu0 %v1039
    %2479 = vmatpush.msra.mxu0 %v1035
    %2480 = vmatpush.msra.mxu0 %v1031
    %2481 = vmatpush.msra.mxu0 %v1027
    %2482 = vmatpush.msra.mxu0 %v1023
    %2483 = vmatpush.msra.mxu0 %v1019
    %2484 = vmatpush.msra.mxu0 %v1015
    %2485 = vmatpush.msra.mxu0 %v1011
    %2486 = vmatpush.msra.mxu0 %v1007
    %2487 = vmatpush.msra.mxu0 %v1003
    %2488 = vmatpush.msra.mxu0 %v999
    %2489 = vmatpush.msra.mxu0 %v995
    %2490 = vmatpush.msra.mxu0 %v991
    %2491 = vmatmul.f32.gmra.mxu0 %v1635
    %v2492 = vpop.f32.mrf.mxu0
    %v2493 = vadd.f32 %v2473, %v2492
    %2494 = vdwg.mxu0
    %2495 = vmatpush.msra.mxu0 %v1115
    %2496 = vmatpush.msra.mxu0 %v1111
    %2497 = vmatpush.msra.mxu0 %v1107
    %2498 = vmatpush.msra.mxu0 %v1103
    %2499 = vmatpush.msra.mxu0 %v1099
    %2500 = vmatpush.msra.mxu0 %v1095
    %2501 = vmatpush.msra.mxu0 %v1091
    %2502 = vmatpush.msra.mxu0 %v1087
    %2503 = vmatpush.msra.mxu0 %v1083
    %2504 = vmatpush.msra.mxu0 %v1079
    %2505 = vmatpush.msra.mxu0 %v1075
    %2506 = vmatpush.msra.mxu0 %v1071
    %2507 = vmatpush.msra.mxu0 %v1067
    %2508 = vmatpush.msra.mxu0 %v1063
    %2509 = vmatpush.msra.mxu0 %v1059
    %2510 = vmatpush.msra.mxu0 %v1055
    %2511 = vmatmul.f32.gmra.mxu0 %v1638
    %v2512 = vpop.f32.mrf.mxu0
    %v2513 = vadd.f32 %v2493, %v2512
    %2514 = vdwg.mxu0
    %2515 = vmatpush.msra.mxu0 %v1179
    %2516 = vmatpush.msra.mxu0 %v1175
    %2517 = vmatpush.msra.mxu0 %v1171
    %2518 = vmatpush.msra.mxu0 %v1167
    %2519 = vmatpush.msra.mxu0 %v1163
    %2520 = vmatpush.msra.mxu0 %v1159
    %2521 = vmatpush.msra.mxu0 %v1155
    %2522 = vmatpush.msra.mxu0 %v1151
    %2523 = vmatpush.msra.mxu0 %v1147
    %2524 = vmatpush.msra.mxu0 %v1143
    %2525 = vmatpush.msra.mxu0 %v1139
    %2526 = vmatpush.msra.mxu0 %v1135
    %2527 = vmatpush.msra.mxu0 %v1131
    %2528 = vmatpush.msra.mxu0 %v1127
    %2529 = vmatpush.msra.mxu0 %v1123
    %2530 = vmatpush.msra.mxu0 %v1119
    %2531 = vmatmul.f32.gmra.mxu0 %v1639
    %v2532 = vpop.f32.mrf.mxu0
    %v2533 = vadd.f32 %v2513, %v2532
    %2534 = vdwg.mxu0
    %2535 = vmatpush.msra.mxu0 %v1243
    %2536 = vmatpush.msra.mxu0 %v1239
    %2537 = vmatpush.msra.mxu0 %v1235
    %2538 = vmatpush.msra.mxu0 %v1231
    %2539 = vmatpush.msra.mxu0 %v1227
    %2540 = vmatpush.msra.mxu0 %v1223
    %2541 = vmatpush.msra.mxu0 %v1219
    %2542 = vmatpush.msra.mxu0 %v1215
    %2543 = vmatpush.msra.mxu0 %v1211
    %2544 = vmatpush.msra.mxu0 %v1207
    %2545 = vmatpush.msra.mxu0 %v1203
    %2546 = vmatpush.msra.mxu0 %v1199
    %2547 = vmatpush.msra.mxu0 %v1195
    %2548 = vmatpush.msra.mxu0 %v1191
    %2549 = vmatpush.msra.mxu0 %v1187
    %2550 = vmatpush.msra.mxu0 %v1183
    %2551 = vmatmul.f32.gmra.mxu0 %v1640
    %v2552 = vpop.f32.mrf.mxu0
    %v2553 = vadd.f32 %v2533, %v2552
    %2554 = vdwg.mxu0
    %2555 = vmatpush.msra.mxu0 %v1307
    %2556 = vmatpush.msra.mxu0 %v1303
    %2557 = vmatpush.msra.mxu0 %v1299
    %2558 = vmatpush.msra.mxu0 %v1295
    %2559 = vmatpush.msra.mxu0 %v1291
    %2560 = vmatpush.msra.mxu0 %v1287
    %2561 = vmatpush.msra.mxu0 %v1283
    %2562 = vmatpush.msra.mxu0 %v1279
    %2563 = vmatpush.msra.mxu0 %v1275
    %2564 = vmatpush.msra.mxu0 %v1271
    %2565 = vmatpush.msra.mxu0 %v1267
    %2566 = vmatpush.msra.mxu0 %v1263
    %2567 = vmatpush.msra.mxu0 %v1259
    %2568 = vmatpush.msra.mxu0 %v1255
    %2569 = vmatpush.msra.mxu0 %v1251
    %2570 = vmatpush.msra.mxu0 %v1247
    %2571 = vmatmul.f32.gmra.mxu0 %v1641
    %v2572 = vpop.f32.mrf.mxu0
    %v2573 = vadd.f32 %v2553, %v2572
    %2574 = vdwg.mxu0
    %2575 = vmatpush.msra.mxu0 %v1371
    %2576 = vmatpush.msra.mxu0 %v1367
    %2577 = vmatpush.msra.mxu0 %v1363
    %2578 = vmatpush.msra.mxu0 %v1359
    %2579 = vmatpush.msra.mxu0 %v1355
    %2580 = vmatpush.msra.mxu0 %v1351
    %2581 = vmatpush.msra.mxu0 %v1347
    %2582 = vmatpush.msra.mxu0 %v1343
    %2583 = vmatpush.msra.mxu0 %v1339
    %2584 = vmatpush.msra.mxu0 %v1335
    %2585 = vmatpush.msra.mxu0 %v1331
    %2586 = vmatpush.msra.mxu0 %v1327
    %2587 = vmatpush.msra.mxu0 %v1323
    %2588 = vmatpush.msra.mxu0 %v1319
    %2589 = vmatpush.msra.mxu0 %v1315
    %2590 = vmatpush.msra.mxu0 %v1311
    %2591 = vmatmul.f32.gmra.mxu0 %v1642
    %v2592 = vpop.f32.mrf.mxu0
    %v2593 = vadd.f32 %v2573, %v2592
    %2594 = vdwg.mxu0
    %2595 = vmatpush.msra.mxu0 %v1435
    %2596 = vmatpush.msra.mxu0 %v1431
    %2597 = vmatpush.msra.mxu0 %v1427
    %2598 = vmatpush.msra.mxu0 %v1423
    %2599 = vmatpush.msra.mxu0 %v1419
    %2600 = vmatpush.msra.mxu0 %v1415
    %2601 = vmatpush.msra.mxu0 %v1411
    %2602 = vmatpush.msra.mxu0 %v1407
    %2603 = vmatpush.msra.mxu0 %v1403
    %2604 = vmatpush.msra.mxu0 %v1399
    %2605 = vmatpush.msra.mxu0 %v1395
    %2606 = vmatpush.msra.mxu0 %v1391
    %2607 = vmatpush.msra.mxu0 %v1387
    %2608 = vmatpush.msra.mxu0 %v1383
    %2609 = vmatpush.msra.mxu0 %v1379
    %2610 = vmatpush.msra.mxu0 %v1375
    %2611 = vmatmul.f32.gmra.mxu0 %v1643
    %v2612 = vpop.f32.mrf.mxu0
    %v2613 = vadd.f32 %v2593, %v2612
    %2614 = vdwg.mxu0
    %2615 = vmatpush.msra.mxu0 %v1499
    %2616 = vmatpush.msra.mxu0 %v1495
    %2617 = vmatpush.msra.mxu0 %v1491
    %2618 = vmatpush.msra.mxu0 %v1487
    %2619 = vmatpush.msra.mxu0 %v1483
    %2620 = vmatpush.msra.mxu0 %v1479
    %2621 = vmatpush.msra.mxu0 %v1475
    %2622 = vmatpush.msra.mxu0 %v1471
    %2623 = vmatpush.msra.mxu0 %v1467
    %2624 = vmatpush.msra.mxu0 %v1463
    %2625 = vmatpush.msra.mxu0 %v1459
    %2626 = vmatpush.msra.mxu0 %v1455
    %2627 = vmatpush.msra.mxu0 %v1451
    %2628 = vmatpush.msra.mxu0 %v1447
    %2629 = vmatpush.msra.mxu0 %v1443
    %2630 = vmatpush.msra.mxu0 %v1439
    %2631 = vmatmul.f32.gmra.mxu0 %v1644
    %v2632 = vpop.f32.mrf.mxu0
    %v2633 = vadd.f32 %v2613, %v2632
    %2634 = vdwg.mxu0
    %2635 = vmatpush.msra.mxu0 %v1563
    %2636 = vmatpush.msra.mxu0 %v1559
    %2637 = vmatpush.msra.mxu0 %v1555
    %2638 = vmatpush.msra.mxu0 %v1551
    %2639 = vmatpush.msra.mxu0 %v1547
    %2640 = vmatpush.msra.mxu0 %v1543
    %2641 = vmatpush.msra.mxu0 %v1539
    %2642 = vmatpush.msra.mxu0 %v1535
    %2643 = vmatpush.msra.mxu0 %v1531
    %2644 = vmatpush.msra.mxu0 %v1527
    %2645 = vmatpush.msra.mxu0 %v1523
    %2646 = vmatpush.msra.mxu0 %v1519
    %2647 = vmatpush.msra.mxu0 %v1515
    %2648 = vmatpush.msra.mxu0 %v1511
    %2649 = vmatpush.msra.mxu0 %v1507
    %2650 = vmatpush.msra.mxu0 %v1503
    %2651 = vmatmul.f32.gmra.mxu0 %v1645
    %v2652 = vpop.f32.mrf.mxu0
    %v2653 = vadd.f32 %v2633, %v2652
    %2654 = vdwg.mxu0
    %2655 = vmatpush.msra.mxu0 0.0
    %2656 = vmatpush.msra.mxu0 0.0
    %2657 = vmatpush.msra.mxu0 0.0
    %2658 = vmatpush.msra.mxu0 0.0
    %2659 = vmatpush.msra.mxu0 0.0
    %2660 = vmatpush.msra.mxu0 0.0
    %2661 = vmatpush.msra.mxu0 0.0
    %2662 = vmatpush.msra.mxu0 0.0
    %2663 = vmatpush.msra.mxu0 %v1595
    %2664 = vmatpush.msra.mxu0 %v1591
    %2665 = vmatpush.msra.mxu0 %v1587
    %2666 = vmatpush.msra.mxu0 %v1583
    %2667 = vmatpush.msra.mxu0 %v1579
    %2668 = vmatpush.msra.mxu0 %v1575
    %2669 = vmatpush.msra.mxu0 %v1571
    %2670 = vmatpush.msra.mxu0 %v1567
    %2671 = vmatmul.f32.gmra.mxu0 %v1673
    %v2672 = vpop.f32.mrf.mxu0
    %v2673 = vadd.f32 %v2653, %v2672
    %2674 = vdwg.mxu0
    %2675 = vmatpush.msra.mxu0 %v92
    %2676 = vmatpush.msra.mxu0 %v88
    %2677 = vmatpush.msra.mxu0 %v84
    %2678 = vmatpush.msra.mxu0 %v80
    %2679 = vmatpush.msra.mxu0 %v76
    %2680 = vmatpush.msra.mxu0 %v72
    %2681 = vmatpush.msra.mxu0 %v68
    %2682 = vmatpush.msra.mxu0 %v64
    %2683 = vmatpush.msra.mxu0 %v60
    %2684 = vmatpush.msra.mxu0 %v56
    %2685 = vmatpush.msra.mxu0 %v52
    %2686 = vmatpush.msra.mxu0 %v48
    %2687 = vmatpush.msra.mxu0 %v44
    %2688 = vmatpush.msra.mxu0 %v40
    %2689 = vmatpush.msra.mxu0 %v36
    %2690 = vmatpush.msra.mxu0 %v32
    %2691 = vmatmul.f32.gmra.mxu0 %v1618
    %v2692 = vpop.f32.mrf.mxu0
    %v2693 = vadd.f32 %v1602, %v2692
    %2694 = vdwg.mxu0
    %2695 = vmatpush.msra.mxu0 %v156
    %2696 = vmatpush.msra.mxu0 %v152
    %2697 = vmatpush.msra.mxu0 %v148
    %2698 = vmatpush.msra.mxu0 %v144
    %2699 = vmatpush.msra.mxu0 %v140
    %2700 = vmatpush.msra.mxu0 %v136
    %2701 = vmatpush.msra.mxu0 %v132
    %2702 = vmatpush.msra.mxu0 %v128
    %2703 = vmatpush.msra.mxu0 %v124
    %2704 = vmatpush.msra.mxu0 %v120
    %2705 = vmatpush.msra.mxu0 %v116
    %2706 = vmatpush.msra.mxu0 %v112
    %2707 = vmatpush.msra.mxu0 %v108
    %2708 = vmatpush.msra.mxu0 %v104
    %2709 = vmatpush.msra.mxu0 %v100
    %2710 = vmatpush.msra.mxu0 %v96
    %2711 = vmatmul.f32.gmra.mxu0 %v1619
    %v2712 = vpop.f32.mrf.mxu0
    %v2713 = vadd.f32 %v2693, %v2712
    %2714 = vdwg.mxu0
    %2715 = vmatpush.msra.mxu0 %v220
    %2716 = vmatpush.msra.mxu0 %v216
    %2717 = vmatpush.msra.mxu0 %v212
    %2718 = vmatpush.msra.mxu0 %v208
    %2719 = vmatpush.msra.mxu0 %v204
    %2720 = vmatpush.msra.mxu0 %v200
    %2721 = vmatpush.msra.mxu0 %v196
    %2722 = vmatpush.msra.mxu0 %v192
    %2723 = vmatpush.msra.mxu0 %v188
    %2724 = vmatpush.msra.mxu0 %v184
    %2725 = vmatpush.msra.mxu0 %v180
    %2726 = vmatpush.msra.mxu0 %v176
    %2727 = vmatpush.msra.mxu0 %v172
    %2728 = vmatpush.msra.mxu0 %v168
    %2729 = vmatpush.msra.mxu0 %v164
    %2730 = vmatpush.msra.mxu0 %v160
    %2731 = vmatmul.f32.gmra.mxu0 %v1620
    %v2732 = vpop.f32.mrf.mxu0
    %v2733 = vadd.f32 %v2713, %v2732
    %2734 = vdwg.mxu0
    %2735 = vmatpush.msra.mxu0 %v284
    %2736 = vmatpush.msra.mxu0 %v280
    %2737 = vmatpush.msra.mxu0 %v276
    %2738 = vmatpush.msra.mxu0 %v272
    %2739 = vmatpush.msra.mxu0 %v268
    %2740 = vmatpush.msra.mxu0 %v264
    %2741 = vmatpush.msra.mxu0 %v260
    %2742 = vmatpush.msra.mxu0 %v256
    %2743 = vmatpush.msra.mxu0 %v252
    %2744 = vmatpush.msra.mxu0 %v248
    %2745 = vmatpush.msra.mxu0 %v244
    %2746 = vmatpush.msra.mxu0 %v240
    %2747 = vmatpush.msra.mxu0 %v236
    %2748 = vmatpush.msra.mxu0 %v232
    %2749 = vmatpush.msra.mxu0 %v228
    %2750 = vmatpush.msra.mxu0 %v224
    %2751 = vmatmul.f32.gmra.mxu0 %v1621
    %v2752 = vpop.f32.mrf.mxu0
    %v2753 = vadd.f32 %v2733, %v2752
    %2754 = vdwg.mxu0
    %2755 = vmatpush.msra.mxu0 %v348
    %2756 = vmatpush.msra.mxu0 %v344
    %2757 = vmatpush.msra.mxu0 %v340
    %2758 = vmatpush.msra.mxu0 %v336
    %2759 = vmatpush.msra.mxu0 %v332
    %2760 = vmatpush.msra.mxu0 %v328
    %2761 = vmatpush.msra.mxu0 %v324
    %2762 = vmatpush.msra.mxu0 %v320
    %2763 = vmatpush.msra.mxu0 %v316
    %2764 = vmatpush.msra.mxu0 %v312
    %2765 = vmatpush.msra.mxu0 %v308
    %2766 = vmatpush.msra.mxu0 %v304
    %2767 = vmatpush.msra.mxu0 %v300
    %2768 = vmatpush.msra.mxu0 %v296
    %2769 = vmatpush.msra.mxu0 %v292
    %2770 = vmatpush.msra.mxu0 %v288
    %2771 = vmatmul.f32.gmra.mxu0 %v1622
    %v2772 = vpop.f32.mrf.mxu0
    %v2773 = vadd.f32 %v2753, %v2772
    %2774 = vdwg.mxu0
    %2775 = vmatpush.msra.mxu0 %v412
    %2776 = vmatpush.msra.mxu0 %v408
    %2777 = vmatpush.msra.mxu0 %v404
    %2778 = vmatpush.msra.mxu0 %v400
    %2779 = vmatpush.msra.mxu0 %v396
    %2780 = vmatpush.msra.mxu0 %v392
    %2781 = vmatpush.msra.mxu0 %v388
    %2782 = vmatpush.msra.mxu0 %v384
    %2783 = vmatpush.msra.mxu0 %v380
    %2784 = vmatpush.msra.mxu0 %v376
    %2785 = vmatpush.msra.mxu0 %v372
    %2786 = vmatpush.msra.mxu0 %v368
    %2787 = vmatpush.msra.mxu0 %v364
    %2788 = vmatpush.msra.mxu0 %v360
    %2789 = vmatpush.msra.mxu0 %v356
    %2790 = vmatpush.msra.mxu0 %v352
    %2791 = vmatmul.f32.gmra.mxu0 %v1623
    %v2792 = vpop.f32.mrf.mxu0
    %v2793 = vadd.f32 %v2773, %v2792
    %2794 = vdwg.mxu0
    %2795 = vmatpush.msra.mxu0 %v476
    %2796 = vmatpush.msra.mxu0 %v472
    %2797 = vmatpush.msra.mxu0 %v468
    %2798 = vmatpush.msra.mxu0 %v464
    %2799 = vmatpush.msra.mxu0 %v460
    %2800 = vmatpush.msra.mxu0 %v456
    %2801 = vmatpush.msra.mxu0 %v452
    %2802 = vmatpush.msra.mxu0 %v448
    %2803 = vmatpush.msra.mxu0 %v444
    %2804 = vmatpush.msra.mxu0 %v440
    %2805 = vmatpush.msra.mxu0 %v436
    %2806 = vmatpush.msra.mxu0 %v432
    %2807 = vmatpush.msra.mxu0 %v428
    %2808 = vmatpush.msra.mxu0 %v424
    %2809 = vmatpush.msra.mxu0 %v420
    %2810 = vmatpush.msra.mxu0 %v416
    %2811 = vmatmul.f32.gmra.mxu0 %v1624
    %v2812 = vpop.f32.mrf.mxu0
    %v2813 = vadd.f32 %v2793, %v2812
    %2814 = vdwg.mxu0
    %2815 = vmatpush.msra.mxu0 %v540
    %2816 = vmatpush.msra.mxu0 %v536
    %2817 = vmatpush.msra.mxu0 %v532
    %2818 = vmatpush.msra.mxu0 %v528
    %2819 = vmatpush.msra.mxu0 %v524
    %2820 = vmatpush.msra.mxu0 %v520
    %2821 = vmatpush.msra.mxu0 %v516
    %2822 = vmatpush.msra.mxu0 %v512
    %2823 = vmatpush.msra.mxu0 %v508
    %2824 = vmatpush.msra.mxu0 %v504
    %2825 = vmatpush.msra.mxu0 %v500
    %2826 = vmatpush.msra.mxu0 %v496
    %2827 = vmatpush.msra.mxu0 %v492
    %2828 = vmatpush.msra.mxu0 %v488
    %2829 = vmatpush.msra.mxu0 %v484
    %2830 = vmatpush.msra.mxu0 %v480
    %2831 = vmatmul.f32.gmra.mxu0 %v1625
    %v2832 = vpop.f32.mrf.mxu0
    %v2833 = vadd.f32 %v2813, %v2832
    %2834 = vdwg.mxu0
    %2835 = vmatpush.msra.mxu0 %v604
    %2836 = vmatpush.msra.mxu0 %v600
    %2837 = vmatpush.msra.mxu0 %v596
    %2838 = vmatpush.msra.mxu0 %v592
    %2839 = vmatpush.msra.mxu0 %v588
    %2840 = vmatpush.msra.mxu0 %v584
    %2841 = vmatpush.msra.mxu0 %v580
    %2842 = vmatpush.msra.mxu0 %v576
    %2843 = vmatpush.msra.mxu0 %v572
    %2844 = vmatpush.msra.mxu0 %v568
    %2845 = vmatpush.msra.mxu0 %v564
    %2846 = vmatpush.msra.mxu0 %v560
    %2847 = vmatpush.msra.mxu0 %v556
    %2848 = vmatpush.msra.mxu0 %v552
    %2849 = vmatpush.msra.mxu0 %v548
    %2850 = vmatpush.msra.mxu0 %v544
    %2851 = vmatmul.f32.gmra.mxu0 %v1628
    %v2852 = vpop.f32.mrf.mxu0
    %v2853 = vadd.f32 %v2833, %v2852
    %2854 = vdwg.mxu0
    %2855 = vmatpush.msra.mxu0 %v668
    %2856 = vmatpush.msra.mxu0 %v664
    %2857 = vmatpush.msra.mxu0 %v660
    %2858 = vmatpush.msra.mxu0 %v656
    %2859 = vmatpush.msra.mxu0 %v652
    %2860 = vmatpush.msra.mxu0 %v648
    %2861 = vmatpush.msra.mxu0 %v644
    %2862 = vmatpush.msra.mxu0 %v640
    %2863 = vmatpush.msra.mxu0 %v636
    %2864 = vmatpush.msra.mxu0 %v632
    %2865 = vmatpush.msra.mxu0 %v628
    %2866 = vmatpush.msra.mxu0 %v624
    %2867 = vmatpush.msra.mxu0 %v620
    %2868 = vmatpush.msra.mxu0 %v616
    %2869 = vmatpush.msra.mxu0 %v612
    %2870 = vmatpush.msra.mxu0 %v608
    %2871 = vmatmul.f32.gmra.mxu0 %v1629
    %v2872 = vpop.f32.mrf.mxu0
    %v2873 = vadd.f32 %v2853, %v2872
    %2874 = vdwg.mxu0
    %2875 = vmatpush.msra.mxu0 %v732
    %2876 = vmatpush.msra.mxu0 %v728
    %2877 = vmatpush.msra.mxu0 %v724
    %2878 = vmatpush.msra.mxu0 %v720
    %2879 = vmatpush.msra.mxu0 %v716
    %2880 = vmatpush.msra.mxu0 %v712
    %2881 = vmatpush.msra.mxu0 %v708
    %2882 = vmatpush.msra.mxu0 %v704
    %2883 = vmatpush.msra.mxu0 %v700
    %2884 = vmatpush.msra.mxu0 %v696
    %2885 = vmatpush.msra.mxu0 %v692
    %2886 = vmatpush.msra.mxu0 %v688
    %2887 = vmatpush.msra.mxu0 %v684
    %2888 = vmatpush.msra.mxu0 %v680
    %2889 = vmatpush.msra.mxu0 %v676
    %2890 = vmatpush.msra.mxu0 %v672
    %2891 = vmatmul.f32.gmra.mxu0 %v1630
    %v2892 = vpop.f32.mrf.mxu0
    %v2893 = vadd.f32 %v2873, %v2892
    %2894 = vdwg.mxu0
    %2895 = vmatpush.msra.mxu0 %v796
    %2896 = vmatpush.msra.mxu0 %v792
    %2897 = vmatpush.msra.mxu0 %v788
    %2898 = vmatpush.msra.mxu0 %v784
    %2899 = vmatpush.msra.mxu0 %v780
    %2900 = vmatpush.msra.mxu0 %v776
    %2901 = vmatpush.msra.mxu0 %v772
    %2902 = vmatpush.msra.mxu0 %v768
    %2903 = vmatpush.msra.mxu0 %v764
    %2904 = vmatpush.msra.mxu0 %v760
    %2905 = vmatpush.msra.mxu0 %v756
    %2906 = vmatpush.msra.mxu0 %v752
    %2907 = vmatpush.msra.mxu0 %v748
    %2908 = vmatpush.msra.mxu0 %v744
    %2909 = vmatpush.msra.mxu0 %v740
    %2910 = vmatpush.msra.mxu0 %v736
    %2911 = vmatmul.f32.gmra.mxu0 %v1631
    %v2912 = vpop.f32.mrf.mxu0
    %v2913 = vadd.f32 %v2893, %v2912
    %2914 = vdwg.mxu0
    %2915 = vmatpush.msra.mxu0 %v860
    %2916 = vmatpush.msra.mxu0 %v856
    %2917 = vmatpush.msra.mxu0 %v852
    %2918 = vmatpush.msra.mxu0 %v848
    %2919 = vmatpush.msra.mxu0 %v844
    %2920 = vmatpush.msra.mxu0 %v840
    %2921 = vmatpush.msra.mxu0 %v836
    %2922 = vmatpush.msra.mxu0 %v832
    %2923 = vmatpush.msra.mxu0 %v828
    %2924 = vmatpush.msra.mxu0 %v824
    %2925 = vmatpush.msra.mxu0 %v820
    %2926 = vmatpush.msra.mxu0 %v816
    %2927 = vmatpush.msra.mxu0 %v812
    %2928 = vmatpush.msra.mxu0 %v808
    %2929 = vmatpush.msra.mxu0 %v804
    %2930 = vmatpush.msra.mxu0 %v800
    %2931 = vmatmul.f32.gmra.mxu0 %v1632
    %v2932 = vpop.f32.mrf.mxu0
    %v2933 = vadd.f32 %v2913, %v2932
    %2934 = vdwg.mxu0
    %2935 = vmatpush.msra.mxu0 %v924
    %2936 = vmatpush.msra.mxu0 %v920
    %2937 = vmatpush.msra.mxu0 %v916
    %2938 = vmatpush.msra.mxu0 %v912
    %2939 = vmatpush.msra.mxu0 %v908
    %2940 = vmatpush.msra.mxu0 %v904
    %2941 = vmatpush.msra.mxu0 %v900
    %2942 = vmatpush.msra.mxu0 %v896
    %2943 = vmatpush.msra.mxu0 %v892
    %2944 = vmatpush.msra.mxu0 %v888
    %2945 = vmatpush.msra.mxu0 %v884
    %2946 = vmatpush.msra.mxu0 %v880
    %2947 = vmatpush.msra.mxu0 %v876
    %2948 = vmatpush.msra.mxu0 %v872
    %2949 = vmatpush.msra.mxu0 %v868
    %2950 = vmatpush.msra.mxu0 %v864
    %2951 = vmatmul.f32.gmra.mxu0 %v1633
    %v2952 = vpop.f32.mrf.mxu0
    %v2953 = vadd.f32 %v2933, %v2952
    %2954 = vdwg.mxu0
    %2955 = vmatpush.msra.mxu0 %v988
    %2956 = vmatpush.msra.mxu0 %v984
    %2957 = vmatpush.msra.mxu0 %v980
    %2958 = vmatpush.msra.mxu0 %v976
    %2959 = vmatpush.msra.mxu0 %v972
    %2960 = vmatpush.msra.mxu0 %v968
    %2961 = vmatpush.msra.mxu0 %v964
    %2962 = vmatpush.msra.mxu0 %v960
    %2963 = vmatpush.msra.mxu0 %v956
    %2964 = vmatpush.msra.mxu0 %v952
    %2965 = vmatpush.msra.mxu0 %v948
    %2966 = vmatpush.msra.mxu0 %v944
    %2967 = vmatpush.msra.mxu0 %v940
    %2968 = vmatpush.msra.mxu0 %v936
    %2969 = vmatpush.msra.mxu0 %v932
    %2970 = vmatpush.msra.mxu0 %v928
    %2971 = vmatmul.f32.gmra.mxu0 %v1634
    %v2972 = vpop.f32.mrf.mxu0
    %v2973 = vadd.f32 %v2953, %v2972
    %2974 = vdwg.mxu0
    %2975 = vmatpush.msra.mxu0 %v1052
    %2976 = vmatpush.msra.mxu0 %v1048
    %2977 = vmatpush.msra.mxu0 %v1044
    %2978 = vmatpush.msra.mxu0 %v1040
    %2979 = vmatpush.msra.mxu0 %v1036
    %2980 = vmatpush.msra.mxu0 %v1032
    %2981 = vmatpush.msra.mxu0 %v1028
    %2982 = vmatpush.msra.mxu0 %v1024
    %2983 = vmatpush.msra.mxu0 %v1020
    %2984 = vmatpush.msra.mxu0 %v1016
    %2985 = vmatpush.msra.mxu0 %v1012
    %2986 = vmatpush.msra.mxu0 %v1008
    %2987 = vmatpush.msra.mxu0 %v1004
    %2988 = vmatpush.msra.mxu0 %v1000
    %2989 = vmatpush.msra.mxu0 %v996
    %2990 = vmatpush.msra.mxu0 %v992
    %2991 = vmatmul.f32.gmra.mxu0 %v1635
    %v2992 = vpop.f32.mrf.mxu0
    %v2993 = vadd.f32 %v2973, %v2992
    %2994 = vdwg.mxu0
    %2995 = vmatpush.msra.mxu0 %v1116
    %2996 = vmatpush.msra.mxu0 %v1112
    %2997 = vmatpush.msra.mxu0 %v1108
    %2998 = vmatpush.msra.mxu0 %v1104
    %2999 = vmatpush.msra.mxu0 %v1100
    %3000 = vmatpush.msra.mxu0 %v1096
    %3001 = vmatpush.msra.mxu0 %v1092
    %3002 = vmatpush.msra.mxu0 %v1088
    %3003 = vmatpush.msra.mxu0 %v1084
    %3004 = vmatpush.msra.mxu0 %v1080
    %3005 = vmatpush.msra.mxu0 %v1076
    %3006 = vmatpush.msra.mxu0 %v1072
    %3007 = vmatpush.msra.mxu0 %v1068
    %3008 = vmatpush.msra.mxu0 %v1064
    %3009 = vmatpush.msra.mxu0 %v1060
    %3010 = vmatpush.msra.mxu0 %v1056
    %3011 = vmatmul.f32.gmra.mxu0 %v1638
    %v3012 = vpop.f32.mrf.mxu0
    %v3013 = vadd.f32 %v2993, %v3012
    %3014 = vdwg.mxu0
    %3015 = vmatpush.msra.mxu0 %v1180
    %3016 = vmatpush.msra.mxu0 %v1176
    %3017 = vmatpush.msra.mxu0 %v1172
    %3018 = vmatpush.msra.mxu0 %v1168
    %3019 = vmatpush.msra.mxu0 %v1164
    %3020 = vmatpush.msra.mxu0 %v1160
    %3021 = vmatpush.msra.mxu0 %v1156
    %3022 = vmatpush.msra.mxu0 %v1152
    %3023 = vmatpush.msra.mxu0 %v1148
    %3024 = vmatpush.msra.mxu0 %v1144
    %3025 = vmatpush.msra.mxu0 %v1140
    %3026 = vmatpush.msra.mxu0 %v1136
    %3027 = vmatpush.msra.mxu0 %v1132
    %3028 = vmatpush.msra.mxu0 %v1128
    %3029 = vmatpush.msra.mxu0 %v1124
    %3030 = vmatpush.msra.mxu0 %v1120
    %3031 = vmatmul.f32.gmra.mxu0 %v1639
    %v3032 = vpop.f32.mrf.mxu0
    %v3033 = vadd.f32 %v3013, %v3032
    %3034 = vdwg.mxu0
    %3035 = vmatpush.msra.mxu0 %v1244
    %3036 = vmatpush.msra.mxu0 %v1240
    %3037 = vmatpush.msra.mxu0 %v1236
    %3038 = vmatpush.msra.mxu0 %v1232
    %3039 = vmatpush.msra.mxu0 %v1228
    %3040 = vmatpush.msra.mxu0 %v1224
    %3041 = vmatpush.msra.mxu0 %v1220
    %3042 = vmatpush.msra.mxu0 %v1216
    %3043 = vmatpush.msra.mxu0 %v1212
    %3044 = vmatpush.msra.mxu0 %v1208
    %3045 = vmatpush.msra.mxu0 %v1204
    %3046 = vmatpush.msra.mxu0 %v1200
    %3047 = vmatpush.msra.mxu0 %v1196
    %3048 = vmatpush.msra.mxu0 %v1192
    %3049 = vmatpush.msra.mxu0 %v1188
    %3050 = vmatpush.msra.mxu0 %v1184
    %3051 = vmatmul.f32.gmra.mxu0 %v1640
    %v3052 = vpop.f32.mrf.mxu0
    %v3053 = vadd.f32 %v3033, %v3052
    %3054 = vdwg.mxu0
    %3055 = vmatpush.msra.mxu0 %v1308
    %3056 = vmatpush.msra.mxu0 %v1304
    %3057 = vmatpush.msra.mxu0 %v1300
    %3058 = vmatpush.msra.mxu0 %v1296
    %3059 = vmatpush.msra.mxu0 %v1292
    %3060 = vmatpush.msra.mxu0 %v1288
    %3061 = vmatpush.msra.mxu0 %v1284
    %3062 = vmatpush.msra.mxu0 %v1280
    %3063 = vmatpush.msra.mxu0 %v1276
    %3064 = vmatpush.msra.mxu0 %v1272
    %3065 = vmatpush.msra.mxu0 %v1268
    %3066 = vmatpush.msra.mxu0 %v1264
    %3067 = vmatpush.msra.mxu0 %v1260
    %3068 = vmatpush.msra.mxu0 %v1256
    %3069 = vmatpush.msra.mxu0 %v1252
    %3070 = vmatpush.msra.mxu0 %v1248
    %3071 = vmatmul.f32.gmra.mxu0 %v1641
    %v3072 = vpop.f32.mrf.mxu0
    %v3073 = vadd.f32 %v3053, %v3072
    %3074 = vdwg.mxu0
    %3075 = vmatpush.msra.mxu0 %v1372
    %3076 = vmatpush.msra.mxu0 %v1368
    %3077 = vmatpush.msra.mxu0 %v1364
    %3078 = vmatpush.msra.mxu0 %v1360
    %3079 = vmatpush.msra.mxu0 %v1356
    %3080 = vmatpush.msra.mxu0 %v1352
    %3081 = vmatpush.msra.mxu0 %v1348
    %3082 = vmatpush.msra.mxu0 %v1344
    %3083 = vmatpush.msra.mxu0 %v1340
    %3084 = vmatpush.msra.mxu0 %v1336
    %3085 = vmatpush.msra.mxu0 %v1332
    %3086 = vmatpush.msra.mxu0 %v1328
    %3087 = vmatpush.msra.mxu0 %v1324
    %3088 = vmatpush.msra.mxu0 %v1320
    %3089 = vmatpush.msra.mxu0 %v1316
    %3090 = vmatpush.msra.mxu0 %v1312
    %3091 = vmatmul.f32.gmra.mxu0 %v1642
    %v3092 = vpop.f32.mrf.mxu0
    %v3093 = vadd.f32 %v3073, %v3092
    %3094 = vdwg.mxu0
    %3095 = vmatpush.msra.mxu0 %v1436
    %3096 = vmatpush.msra.mxu0 %v1432
    %3097 = vmatpush.msra.mxu0 %v1428
    %3098 = vmatpush.msra.mxu0 %v1424
    %3099 = vmatpush.msra.mxu0 %v1420
    %3100 = vmatpush.msra.mxu0 %v1416
    %3101 = vmatpush.msra.mxu0 %v1412
    %3102 = vmatpush.msra.mxu0 %v1408
    %3103 = vmatpush.msra.mxu0 %v1404
    %3104 = vmatpush.msra.mxu0 %v1400
    %3105 = vmatpush.msra.mxu0 %v1396
    %3106 = vmatpush.msra.mxu0 %v1392
    %3107 = vmatpush.msra.mxu0 %v1388
    %3108 = vmatpush.msra.mxu0 %v1384
    %3109 = vmatpush.msra.mxu0 %v1380
    %3110 = vmatpush.msra.mxu0 %v1376
    %3111 = vmatmul.f32.gmra.mxu0 %v1643
    %v3112 = vpop.f32.mrf.mxu0
    %v3113 = vadd.f32 %v3093, %v3112
    %3114 = vdwg.mxu0
    %3115 = vmatpush.msra.mxu0 %v1500
    %3116 = vmatpush.msra.mxu0 %v1496
    %3117 = vmatpush.msra.mxu0 %v1492
    %3118 = vmatpush.msra.mxu0 %v1488
    %3119 = vmatpush.msra.mxu0 %v1484
    %3120 = vmatpush.msra.mxu0 %v1480
    %3121 = vmatpush.msra.mxu0 %v1476
    %3122 = vmatpush.msra.mxu0 %v1472
    %3123 = vmatpush.msra.mxu0 %v1468
    %3124 = vmatpush.msra.mxu0 %v1464
    %3125 = vmatpush.msra.mxu0 %v1460
    %3126 = vmatpush.msra.mxu0 %v1456
    %3127 = vmatpush.msra.mxu0 %v1452
    %3128 = vmatpush.msra.mxu0 %v1448
    %3129 = vmatpush.msra.mxu0 %v1444
    %3130 = vmatpush.msra.mxu0 %v1440
    %3131 = vmatmul.f32.gmra.mxu0 %v1644
    %v3132 = vpop.f32.mrf.mxu0
    %v3133 = vadd.f32 %v3113, %v3132
    %3134 = vdwg.mxu0
    %3135 = vmatpush.msra.mxu0 %v1564
    %3136 = vmatpush.msra.mxu0 %v1560
    %3137 = vmatpush.msra.mxu0 %v1556
    %3138 = vmatpush.msra.mxu0 %v1552
    %3139 = vmatpush.msra.mxu0 %v1548
    %3140 = vmatpush.msra.mxu0 %v1544
    %3141 = vmatpush.msra.mxu0 %v1540
    %3142 = vmatpush.msra.mxu0 %v1536
    %3143 = vmatpush.msra.mxu0 %v1532
    %3144 = vmatpush.msra.mxu0 %v1528
    %3145 = vmatpush.msra.mxu0 %v1524
    %3146 = vmatpush.msra.mxu0 %v1520
    %3147 = vmatpush.msra.mxu0 %v1516
    %3148 = vmatpush.msra.mxu0 %v1512
    %3149 = vmatpush.msra.mxu0 %v1508
    %3150 = vmatpush.msra.mxu0 %v1504
    %3151 = vmatmul.f32.gmra.mxu0 %v1645
    %v3152 = vpop.f32.mrf.mxu0
    %v3153 = vadd.f32 %v3133, %v3152
    %3154 = vdwg.mxu0
    %3155 = vmatpush.msra.mxu0 0.0
    %3156 = vmatpush.msra.mxu0 0.0
    %3157 = vmatpush.msra.mxu0 0.0
    %3158 = vmatpush.msra.mxu0 0.0
    %3159 = vmatpush.msra.mxu0 0.0
    %3160 = vmatpush.msra.mxu0 0.0
    %3161 = vmatpush.msra.mxu0 0.0
    %3162 = vmatpush.msra.mxu0 0.0
    %3163 = vmatpush.msra.mxu0 %v1596
    %3164 = vmatpush.msra.mxu0 %v1592
    %3165 = vmatpush.msra.mxu0 %v1588
    %3166 = vmatpush.msra.mxu0 %v1584
    %3167 = vmatpush.msra.mxu0 %v1580
    %3168 = vmatpush.msra.mxu0 %v1576
    %3169 = vmatpush.msra.mxu0 %v1572
    %3170 = vmatpush.msra.mxu0 %v1568
    %3171 = vmatmul.f32.gmra.mxu0 %v1673
    %v3172 = vpop.f32.mrf.mxu0
    %v3173 = vadd.f32 %v3153, %v3172
    %3174 = vdwg.mxu0
    %3175 = vmatpush.msra.mxu0 %v93
    %3176 = vmatpush.msra.mxu0 %v89
    %3177 = vmatpush.msra.mxu0 %v85
    %3178 = vmatpush.msra.mxu0 %v81
    %3179 = vmatpush.msra.mxu0 %v77
    %3180 = vmatpush.msra.mxu0 %v73
    %3181 = vmatpush.msra.mxu0 %v69
    %3182 = vmatpush.msra.mxu0 %v65
    %3183 = vmatpush.msra.mxu0 %v61
    %3184 = vmatpush.msra.mxu0 %v57
    %3185 = vmatpush.msra.mxu0 %v53
    %3186 = vmatpush.msra.mxu0 %v49
    %3187 = vmatpush.msra.mxu0 %v45
    %3188 = vmatpush.msra.mxu0 %v41
    %3189 = vmatpush.msra.mxu0 %v37
    %3190 = vmatpush.msra.mxu0 %v33
    %3191 = vmatmul.f32.gmra.mxu0 %v1618
    %v3192 = vpop.f32.mrf.mxu0
    %v3193 = vadd.f32 %v1603, %v3192
    %3194 = vdwg.mxu0
    %3195 = vmatpush.msra.mxu0 %v157
    %3196 = vmatpush.msra.mxu0 %v153
    %3197 = vmatpush.msra.mxu0 %v149
    %3198 = vmatpush.msra.mxu0 %v145
    %3199 = vmatpush.msra.mxu0 %v141
    %3200 = vmatpush.msra.mxu0 %v137
    %3201 = vmatpush.msra.mxu0 %v133
    %3202 = vmatpush.msra.mxu0 %v129
    %3203 = vmatpush.msra.mxu0 %v125
    %3204 = vmatpush.msra.mxu0 %v121
    %3205 = vmatpush.msra.mxu0 %v117
    %3206 = vmatpush.msra.mxu0 %v113
    %3207 = vmatpush.msra.mxu0 %v109
    %3208 = vmatpush.msra.mxu0 %v105
    %3209 = vmatpush.msra.mxu0 %v101
    %3210 = vmatpush.msra.mxu0 %v97
    %3211 = vmatmul.f32.gmra.mxu0 %v1619
    %v3212 = vpop.f32.mrf.mxu0
    %v3213 = vadd.f32 %v3193, %v3212
    %3214 = vdwg.mxu0
    %3215 = vmatpush.msra.mxu0 %v221
    %3216 = vmatpush.msra.mxu0 %v217
    %3217 = vmatpush.msra.mxu0 %v213
    %3218 = vmatpush.msra.mxu0 %v209
    %3219 = vmatpush.msra.mxu0 %v205
    %3220 = vmatpush.msra.mxu0 %v201
    %3221 = vmatpush.msra.mxu0 %v197
    %3222 = vmatpush.msra.mxu0 %v193
    %3223 = vmatpush.msra.mxu0 %v189
    %3224 = vmatpush.msra.mxu0 %v185
    %3225 = vmatpush.msra.mxu0 %v181
    %3226 = vmatpush.msra.mxu0 %v177
    %3227 = vmatpush.msra.mxu0 %v173
    %3228 = vmatpush.msra.mxu0 %v169
    %3229 = vmatpush.msra.mxu0 %v165
    %3230 = vmatpush.msra.mxu0 %v161
    %3231 = vmatmul.f32.gmra.mxu0 %v1620
    %v3232 = vpop.f32.mrf.mxu0
    %v3233 = vadd.f32 %v3213, %v3232
    %3234 = vdwg.mxu0
    %3235 = vmatpush.msra.mxu0 %v285
    %3236 = vmatpush.msra.mxu0 %v281
    %3237 = vmatpush.msra.mxu0 %v277
    %3238 = vmatpush.msra.mxu0 %v273
    %3239 = vmatpush.msra.mxu0 %v269
    %3240 = vmatpush.msra.mxu0 %v265
    %3241 = vmatpush.msra.mxu0 %v261
    %3242 = vmatpush.msra.mxu0 %v257
    %3243 = vmatpush.msra.mxu0 %v253
    %3244 = vmatpush.msra.mxu0 %v249
    %3245 = vmatpush.msra.mxu0 %v245
    %3246 = vmatpush.msra.mxu0 %v241
    %3247 = vmatpush.msra.mxu0 %v237
    %3248 = vmatpush.msra.mxu0 %v233
    %3249 = vmatpush.msra.mxu0 %v229
    %3250 = vmatpush.msra.mxu0 %v225
    %3251 = vmatmul.f32.gmra.mxu0 %v1621
    %v3252 = vpop.f32.mrf.mxu0
    %v3253 = vadd.f32 %v3233, %v3252
    %3254 = vdwg.mxu0
    %3255 = vmatpush.msra.mxu0 %v349
    %3256 = vmatpush.msra.mxu0 %v345
    %3257 = vmatpush.msra.mxu0 %v341
    %3258 = vmatpush.msra.mxu0 %v337
    %3259 = vmatpush.msra.mxu0 %v333
    %3260 = vmatpush.msra.mxu0 %v329
    %3261 = vmatpush.msra.mxu0 %v325
    %3262 = vmatpush.msra.mxu0 %v321
    %3263 = vmatpush.msra.mxu0 %v317
    %3264 = vmatpush.msra.mxu0 %v313
    %3265 = vmatpush.msra.mxu0 %v309
    %3266 = vmatpush.msra.mxu0 %v305
    %3267 = vmatpush.msra.mxu0 %v301
    %3268 = vmatpush.msra.mxu0 %v297
    %3269 = vmatpush.msra.mxu0 %v293
    %3270 = vmatpush.msra.mxu0 %v289
    %3271 = vmatmul.f32.gmra.mxu0 %v1622
    %v3272 = vpop.f32.mrf.mxu0
    %v3273 = vadd.f32 %v3253, %v3272
    %3274 = vdwg.mxu0
    %3275 = vmatpush.msra.mxu0 %v413
    %3276 = vmatpush.msra.mxu0 %v409
    %3277 = vmatpush.msra.mxu0 %v405
    %3278 = vmatpush.msra.mxu0 %v401
    %3279 = vmatpush.msra.mxu0 %v397
    %3280 = vmatpush.msra.mxu0 %v393
    %3281 = vmatpush.msra.mxu0 %v389
    %3282 = vmatpush.msra.mxu0 %v385
    %3283 = vmatpush.msra.mxu0 %v381
    %3284 = vmatpush.msra.mxu0 %v377
    %3285 = vmatpush.msra.mxu0 %v373
    %3286 = vmatpush.msra.mxu0 %v369
    %3287 = vmatpush.msra.mxu0 %v365
    %3288 = vmatpush.msra.mxu0 %v361
    %3289 = vmatpush.msra.mxu0 %v357
    %3290 = vmatpush.msra.mxu0 %v353
    %3291 = vmatmul.f32.gmra.mxu0 %v1623
    %v3292 = vpop.f32.mrf.mxu0
    %v3293 = vadd.f32 %v3273, %v3292
    %3294 = vdwg.mxu0
    %3295 = vmatpush.msra.mxu0 %v477
    %3296 = vmatpush.msra.mxu0 %v473
    %3297 = vmatpush.msra.mxu0 %v469
    %3298 = vmatpush.msra.mxu0 %v465
    %3299 = vmatpush.msra.mxu0 %v461
    %3300 = vmatpush.msra.mxu0 %v457
    %3301 = vmatpush.msra.mxu0 %v453
    %3302 = vmatpush.msra.mxu0 %v449
    %3303 = vmatpush.msra.mxu0 %v445
    %3304 = vmatpush.msra.mxu0 %v441
    %3305 = vmatpush.msra.mxu0 %v437
    %3306 = vmatpush.msra.mxu0 %v433
    %3307 = vmatpush.msra.mxu0 %v429
    %3308 = vmatpush.msra.mxu0 %v425
    %3309 = vmatpush.msra.mxu0 %v421
    %3310 = vmatpush.msra.mxu0 %v417
    %3311 = vmatmul.f32.gmra.mxu0 %v1624
    %v3312 = vpop.f32.mrf.mxu0
    %v3313 = vadd.f32 %v3293, %v3312
    %3314 = vdwg.mxu0
    %3315 = vmatpush.msra.mxu0 %v541
    %3316 = vmatpush.msra.mxu0 %v537
    %3317 = vmatpush.msra.mxu0 %v533
    %3318 = vmatpush.msra.mxu0 %v529
    %3319 = vmatpush.msra.mxu0 %v525
    %3320 = vmatpush.msra.mxu0 %v521
    %3321 = vmatpush.msra.mxu0 %v517
    %3322 = vmatpush.msra.mxu0 %v513
    %3323 = vmatpush.msra.mxu0 %v509
    %3324 = vmatpush.msra.mxu0 %v505
    %3325 = vmatpush.msra.mxu0 %v501
    %3326 = vmatpush.msra.mxu0 %v497
    %3327 = vmatpush.msra.mxu0 %v493
    %3328 = vmatpush.msra.mxu0 %v489
    %3329 = vmatpush.msra.mxu0 %v485
    %3330 = vmatpush.msra.mxu0 %v481
    %3331 = vmatmul.f32.gmra.mxu0 %v1625
    %v3332 = vpop.f32.mrf.mxu0
    %v3333 = vadd.f32 %v3313, %v3332
    %3334 = vdwg.mxu0
    %3335 = vmatpush.msra.mxu0 %v605
    %3336 = vmatpush.msra.mxu0 %v601
    %3337 = vmatpush.msra.mxu0 %v597
    %3338 = vmatpush.msra.mxu0 %v593
    %3339 = vmatpush.msra.mxu0 %v589
    %3340 = vmatpush.msra.mxu0 %v585
    %3341 = vmatpush.msra.mxu0 %v581
    %3342 = vmatpush.msra.mxu0 %v577
    %3343 = vmatpush.msra.mxu0 %v573
    %3344 = vmatpush.msra.mxu0 %v569
    %3345 = vmatpush.msra.mxu0 %v565
    %3346 = vmatpush.msra.mxu0 %v561
    %3347 = vmatpush.msra.mxu0 %v557
    %3348 = vmatpush.msra.mxu0 %v553
    %3349 = vmatpush.msra.mxu0 %v549
    %3350 = vmatpush.msra.mxu0 %v545
    %3351 = vmatmul.f32.gmra.mxu0 %v1628
    %v3352 = vpop.f32.mrf.mxu0
    %v3353 = vadd.f32 %v3333, %v3352
    %3354 = vdwg.mxu0
    %3355 = vmatpush.msra.mxu0 %v669
    %3356 = vmatpush.msra.mxu0 %v665
    %3357 = vmatpush.msra.mxu0 %v661
    %3358 = vmatpush.msra.mxu0 %v657
    %3359 = vmatpush.msra.mxu0 %v653
    %3360 = vmatpush.msra.mxu0 %v649
    %3361 = vmatpush.msra.mxu0 %v645
    %3362 = vmatpush.msra.mxu0 %v641
    %3363 = vmatpush.msra.mxu0 %v637
    %3364 = vmatpush.msra.mxu0 %v633
    %3365 = vmatpush.msra.mxu0 %v629
    %3366 = vmatpush.msra.mxu0 %v625
    %3367 = vmatpush.msra.mxu0 %v621
    %3368 = vmatpush.msra.mxu0 %v617
    %3369 = vmatpush.msra.mxu0 %v613
    %3370 = vmatpush.msra.mxu0 %v609
    %3371 = vmatmul.f32.gmra.mxu0 %v1629
    %v3372 = vpop.f32.mrf.mxu0
    %v3373 = vadd.f32 %v3353, %v3372
    %3374 = vdwg.mxu0
    %3375 = vmatpush.msra.mxu0 %v733
    %3376 = vmatpush.msra.mxu0 %v729
    %3377 = vmatpush.msra.mxu0 %v725
    %3378 = vmatpush.msra.mxu0 %v721
    %3379 = vmatpush.msra.mxu0 %v717
    %3380 = vmatpush.msra.mxu0 %v713
    %3381 = vmatpush.msra.mxu0 %v709
    %3382 = vmatpush.msra.mxu0 %v705
    %3383 = vmatpush.msra.mxu0 %v701
    %3384 = vmatpush.msra.mxu0 %v697
    %3385 = vmatpush.msra.mxu0 %v693
    %3386 = vmatpush.msra.mxu0 %v689
    %3387 = vmatpush.msra.mxu0 %v685
    %3388 = vmatpush.msra.mxu0 %v681
    %3389 = vmatpush.msra.mxu0 %v677
    %3390 = vmatpush.msra.mxu0 %v673
    %3391 = vmatmul.f32.gmra.mxu0 %v1630
    %v3392 = vpop.f32.mrf.mxu0
    %v3393 = vadd.f32 %v3373, %v3392
    %3394 = vdwg.mxu0
    %3395 = vmatpush.msra.mxu0 %v797
    %3396 = vmatpush.msra.mxu0 %v793
    %3397 = vmatpush.msra.mxu0 %v789
    %3398 = vmatpush.msra.mxu0 %v785
    %3399 = vmatpush.msra.mxu0 %v781
    %3400 = vmatpush.msra.mxu0 %v777
    %3401 = vmatpush.msra.mxu0 %v773
    %3402 = vmatpush.msra.mxu0 %v769
    %3403 = vmatpush.msra.mxu0 %v765
    %3404 = vmatpush.msra.mxu0 %v761
    %3405 = vmatpush.msra.mxu0 %v757
    %3406 = vmatpush.msra.mxu0 %v753
    %3407 = vmatpush.msra.mxu0 %v749
    %3408 = vmatpush.msra.mxu0 %v745
    %3409 = vmatpush.msra.mxu0 %v741
    %3410 = vmatpush.msra.mxu0 %v737
    %3411 = vmatmul.f32.gmra.mxu0 %v1631
    %v3412 = vpop.f32.mrf.mxu0
    %v3413 = vadd.f32 %v3393, %v3412
    %3414 = vdwg.mxu0
    %3415 = vmatpush.msra.mxu0 %v861
    %3416 = vmatpush.msra.mxu0 %v857
    %3417 = vmatpush.msra.mxu0 %v853
    %3418 = vmatpush.msra.mxu0 %v849
    %3419 = vmatpush.msra.mxu0 %v845
    %3420 = vmatpush.msra.mxu0 %v841
    %3421 = vmatpush.msra.mxu0 %v837
    %3422 = vmatpush.msra.mxu0 %v833
    %3423 = vmatpush.msra.mxu0 %v829
    %3424 = vmatpush.msra.mxu0 %v825
    %3425 = vmatpush.msra.mxu0 %v821
    %3426 = vmatpush.msra.mxu0 %v817
    %3427 = vmatpush.msra.mxu0 %v813
    %3428 = vmatpush.msra.mxu0 %v809
    %3429 = vmatpush.msra.mxu0 %v805
    %3430 = vmatpush.msra.mxu0 %v801
    %3431 = vmatmul.f32.gmra.mxu0 %v1632
    %v3432 = vpop.f32.mrf.mxu0
    %v3433 = vadd.f32 %v3413, %v3432
    %3434 = vdwg.mxu0
    %3435 = vmatpush.msra.mxu0 %v925
    %3436 = vmatpush.msra.mxu0 %v921
    %3437 = vmatpush.msra.mxu0 %v917
    %3438 = vmatpush.msra.mxu0 %v913
    %3439 = vmatpush.msra.mxu0 %v909
    %3440 = vmatpush.msra.mxu0 %v905
    %3441 = vmatpush.msra.mxu0 %v901
    %3442 = vmatpush.msra.mxu0 %v897
    %3443 = vmatpush.msra.mxu0 %v893
    %3444 = vmatpush.msra.mxu0 %v889
    %3445 = vmatpush.msra.mxu0 %v885
    %3446 = vmatpush.msra.mxu0 %v881
    %3447 = vmatpush.msra.mxu0 %v877
    %3448 = vmatpush.msra.mxu0 %v873
    %3449 = vmatpush.msra.mxu0 %v869
    %3450 = vmatpush.msra.mxu0 %v865
    %3451 = vmatmul.f32.gmra.mxu0 %v1633
    %v3452 = vpop.f32.mrf.mxu0
    %v3453 = vadd.f32 %v3433, %v3452
    %3454 = vdwg.mxu0
    %3455 = vmatpush.msra.mxu0 %v989
    %3456 = vmatpush.msra.mxu0 %v985
    %3457 = vmatpush.msra.mxu0 %v981
    %3458 = vmatpush.msra.mxu0 %v977
    %3459 = vmatpush.msra.mxu0 %v973
    %3460 = vmatpush.msra.mxu0 %v969
    %3461 = vmatpush.msra.mxu0 %v965
    %3462 = vmatpush.msra.mxu0 %v961
    %3463 = vmatpush.msra.mxu0 %v957
    %3464 = vmatpush.msra.mxu0 %v953
    %3465 = vmatpush.msra.mxu0 %v949
    %3466 = vmatpush.msra.mxu0 %v945
    %3467 = vmatpush.msra.mxu0 %v941
    %3468 = vmatpush.msra.mxu0 %v937
    %3469 = vmatpush.msra.mxu0 %v933
    %3470 = vmatpush.msra.mxu0 %v929
    %3471 = vmatmul.f32.gmra.mxu0 %v1634
    %v3472 = vpop.f32.mrf.mxu0
    %v3473 = vadd.f32 %v3453, %v3472
    %3474 = vdwg.mxu0
    %3475 = vmatpush.msra.mxu0 %v1053
    %3476 = vmatpush.msra.mxu0 %v1049
    %3477 = vmatpush.msra.mxu0 %v1045
    %3478 = vmatpush.msra.mxu0 %v1041
    %3479 = vmatpush.msra.mxu0 %v1037
    %3480 = vmatpush.msra.mxu0 %v1033
    %3481 = vmatpush.msra.mxu0 %v1029
    %3482 = vmatpush.msra.mxu0 %v1025
    %3483 = vmatpush.msra.mxu0 %v1021
    %3484 = vmatpush.msra.mxu0 %v1017
    %3485 = vmatpush.msra.mxu0 %v1013
    %3486 = vmatpush.msra.mxu0 %v1009
    %3487 = vmatpush.msra.mxu0 %v1005
    %3488 = vmatpush.msra.mxu0 %v1001
    %3489 = vmatpush.msra.mxu0 %v997
    %3490 = vmatpush.msra.mxu0 %v993
    %3491 = vmatmul.f32.gmra.mxu0 %v1635
    %v3492 = vpop.f32.mrf.mxu0
    %v3493 = vadd.f32 %v3473, %v3492
    %3494 = vdwg.mxu0
    %3495 = vmatpush.msra.mxu0 %v1117
    %3496 = vmatpush.msra.mxu0 %v1113
    %3497 = vmatpush.msra.mxu0 %v1109
    %3498 = vmatpush.msra.mxu0 %v1105
    %3499 = vmatpush.msra.mxu0 %v1101
    %3500 = vmatpush.msra.mxu0 %v1097
    %3501 = vmatpush.msra.mxu0 %v1093
    %3502 = vmatpush.msra.mxu0 %v1089
    %3503 = vmatpush.msra.mxu0 %v1085
    %3504 = vmatpush.msra.mxu0 %v1081
    %3505 = vmatpush.msra.mxu0 %v1077
    %3506 = vmatpush.msra.mxu0 %v1073
    %3507 = vmatpush.msra.mxu0 %v1069
    %3508 = vmatpush.msra.mxu0 %v1065
    %3509 = vmatpush.msra.mxu0 %v1061
    %3510 = vmatpush.msra.mxu0 %v1057
    %3511 = vmatmul.f32.gmra.mxu0 %v1638
    %v3512 = vpop.f32.mrf.mxu0
    %v3513 = vadd.f32 %v3493, %v3512
    %3514 = vdwg.mxu0
    %3515 = vmatpush.msra.mxu0 %v1181
    %3516 = vmatpush.msra.mxu0 %v1177
    %3517 = vmatpush.msra.mxu0 %v1173
    %3518 = vmatpush.msra.mxu0 %v1169
    %3519 = vmatpush.msra.mxu0 %v1165
    %3520 = vmatpush.msra.mxu0 %v1161
    %3521 = vmatpush.msra.mxu0 %v1157
    %3522 = vmatpush.msra.mxu0 %v1153
    %3523 = vmatpush.msra.mxu0 %v1149
    %3524 = vmatpush.msra.mxu0 %v1145
    %3525 = vmatpush.msra.mxu0 %v1141
    %3526 = vmatpush.msra.mxu0 %v1137
    %3527 = vmatpush.msra.mxu0 %v1133
    %3528 = vmatpush.msra.mxu0 %v1129
    %3529 = vmatpush.msra.mxu0 %v1125
    %3530 = vmatpush.msra.mxu0 %v1121
    %3531 = vmatmul.f32.gmra.mxu0 %v1639
    %v3532 = vpop.f32.mrf.mxu0
    %v3533 = vadd.f32 %v3513, %v3532
    %3534 = vdwg.mxu0
    %3535 = vmatpush.msra.mxu0 %v1245
    %3536 = vmatpush.msra.mxu0 %v1241
    %3537 = vmatpush.msra.mxu0 %v1237
    %3538 = vmatpush.msra.mxu0 %v1233
    %3539 = vmatpush.msra.mxu0 %v1229
    %3540 = vmatpush.msra.mxu0 %v1225
    %3541 = vmatpush.msra.mxu0 %v1221
    %3542 = vmatpush.msra.mxu0 %v1217
    %3543 = vmatpush.msra.mxu0 %v1213
    %3544 = vmatpush.msra.mxu0 %v1209
    %3545 = vmatpush.msra.mxu0 %v1205
    %3546 = vmatpush.msra.mxu0 %v1201
    %3547 = vmatpush.msra.mxu0 %v1197
    %3548 = vmatpush.msra.mxu0 %v1193
    %3549 = vmatpush.msra.mxu0 %v1189
    %3550 = vmatpush.msra.mxu0 %v1185
    %3551 = vmatmul.f32.gmra.mxu0 %v1640
    %v3552 = vpop.f32.mrf.mxu0
    %v3553 = vadd.f32 %v3533, %v3552
    %3554 = vdwg.mxu0
    %3555 = vmatpush.msra.mxu0 %v1309
    %3556 = vmatpush.msra.mxu0 %v1305
    %3557 = vmatpush.msra.mxu0 %v1301
    %3558 = vmatpush.msra.mxu0 %v1297
    %3559 = vmatpush.msra.mxu0 %v1293
    %3560 = vmatpush.msra.mxu0 %v1289
    %3561 = vmatpush.msra.mxu0 %v1285
    %3562 = vmatpush.msra.mxu0 %v1281
    %3563 = vmatpush.msra.mxu0 %v1277
    %3564 = vmatpush.msra.mxu0 %v1273
    %3565 = vmatpush.msra.mxu0 %v1269
    %3566 = vmatpush.msra.mxu0 %v1265
    %3567 = vmatpush.msra.mxu0 %v1261
    %3568 = vmatpush.msra.mxu0 %v1257
    %3569 = vmatpush.msra.mxu0 %v1253
    %3570 = vmatpush.msra.mxu0 %v1249
    %3571 = vmatmul.f32.gmra.mxu0 %v1641
    %v3572 = vpop.f32.mrf.mxu0
    %v3573 = vadd.f32 %v3553, %v3572
    %3574 = vdwg.mxu0
    %3575 = vmatpush.msra.mxu0 %v1373
    %3576 = vmatpush.msra.mxu0 %v1369
    %3577 = vmatpush.msra.mxu0 %v1365
    %3578 = vmatpush.msra.mxu0 %v1361
    %3579 = vmatpush.msra.mxu0 %v1357
    %3580 = vmatpush.msra.mxu0 %v1353
    %3581 = vmatpush.msra.mxu0 %v1349
    %3582 = vmatpush.msra.mxu0 %v1345
    %3583 = vmatpush.msra.mxu0 %v1341
    %3584 = vmatpush.msra.mxu0 %v1337
    %3585 = vmatpush.msra.mxu0 %v1333
    %3586 = vmatpush.msra.mxu0 %v1329
    %3587 = vmatpush.msra.mxu0 %v1325
    %3588 = vmatpush.msra.mxu0 %v1321
    %3589 = vmatpush.msra.mxu0 %v1317
    %3590 = vmatpush.msra.mxu0 %v1313
    %3591 = vmatmul.f32.gmra.mxu0 %v1642
    %v3592 = vpop.f32.mrf.mxu0
    %v3593 = vadd.f32 %v3573, %v3592
    %3594 = vdwg.mxu0
    %3595 = vmatpush.msra.mxu0 %v1437
    %3596 = vmatpush.msra.mxu0 %v1433
    %3597 = vmatpush.msra.mxu0 %v1429
    %3598 = vmatpush.msra.mxu0 %v1425
    %3599 = vmatpush.msra.mxu0 %v1421
    %3600 = vmatpush.msra.mxu0 %v1417
    %3601 = vmatpush.msra.mxu0 %v1413
    %3602 = vmatpush.msra.mxu0 %v1409
    %3603 = vmatpush.msra.mxu0 %v1405
    %3604 = vmatpush.msra.mxu0 %v1401
    %3605 = vmatpush.msra.mxu0 %v1397
    %3606 = vmatpush.msra.mxu0 %v1393
    %3607 = vmatpush.msra.mxu0 %v1389
    %3608 = vmatpush.msra.mxu0 %v1385
    %3609 = vmatpush.msra.mxu0 %v1381
    %3610 = vmatpush.msra.mxu0 %v1377
    %3611 = vmatmul.f32.gmra.mxu0 %v1643
    %v3612 = vpop.f32.mrf.mxu0
    %v3613 = vadd.f32 %v3593, %v3612
    %3614 = vdwg.mxu0
    %3615 = vmatpush.msra.mxu0 %v1501
    %3616 = vmatpush.msra.mxu0 %v1497
    %3617 = vmatpush.msra.mxu0 %v1493
    %3618 = vmatpush.msra.mxu0 %v1489
    %3619 = vmatpush.msra.mxu0 %v1485
    %3620 = vmatpush.msra.mxu0 %v1481
    %3621 = vmatpush.msra.mxu0 %v1477
    %3622 = vmatpush.msra.mxu0 %v1473
    %3623 = vmatpush.msra.mxu0 %v1469
    %3624 = vmatpush.msra.mxu0 %v1465
    %3625 = vmatpush.msra.mxu0 %v1461
    %3626 = vmatpush.msra.mxu0 %v1457
    %3627 = vmatpush.msra.mxu0 %v1453
    %3628 = vmatpush.msra.mxu0 %v1449
    %3629 = vmatpush.msra.mxu0 %v1445
    %3630 = vmatpush.msra.mxu0 %v1441
    %3631 = vmatmul.f32.gmra.mxu0 %v1644
    %v3632 = vpop.f32.mrf.mxu0
    %v3633 = vadd.f32 %v3613, %v3632
    %3634 = vdwg.mxu0
    %3635 = vmatpush.msra.mxu0 %v1565
    %3636 = vmatpush.msra.mxu0 %v1561
    %3637 = vmatpush.msra.mxu0 %v1557
    %3638 = vmatpush.msra.mxu0 %v1553
    %3639 = vmatpush.msra.mxu0 %v1549
    %3640 = vmatpush.msra.mxu0 %v1545
    %3641 = vmatpush.msra.mxu0 %v1541
    %3642 = vmatpush.msra.mxu0 %v1537
    %3643 = vmatpush.msra.mxu0 %v1533
    %3644 = vmatpush.msra.mxu0 %v1529
    %3645 = vmatpush.msra.mxu0 %v1525
    %3646 = vmatpush.msra.mxu0 %v1521
    %3647 = vmatpush.msra.mxu0 %v1517
    %3648 = vmatpush.msra.mxu0 %v1513
    %3649 = vmatpush.msra.mxu0 %v1509
    %3650 = vmatpush.msra.mxu0 %v1505
    %3651 = vmatmul.f32.gmra.mxu0 %v1645
    %v3652 = vpop.f32.mrf.mxu0
    %v3653 = vadd.f32 %v3633, %v3652
    %3654 = vdwg.mxu0
    %3655 = vmatpush.msra.mxu0 0.0
    %3656 = vmatpush.msra.mxu0 0.0
    %3657 = vmatpush.msra.mxu0 0.0
    %3658 = vmatpush.msra.mxu0 0.0
    %3659 = vmatpush.msra.mxu0 0.0
    %3660 = vmatpush.msra.mxu0 0.0
    %3661 = vmatpush.msra.mxu0 0.0
    %3662 = vmatpush.msra.mxu0 0.0
    %3663 = vmatpush.msra.mxu0 %v1597
    %3664 = vmatpush.msra.mxu0 %v1593
    %3665 = vmatpush.msra.mxu0 %v1589
    %3666 = vmatpush.msra.mxu0 %v1585
    %3667 = vmatpush.msra.mxu0 %v1581
    %3668 = vmatpush.msra.mxu0 %v1577
    %3669 = vmatpush.msra.mxu0 %v1573
    %3670 = vmatpush.msra.mxu0 %v1569
    %3671 = vmatmul.f32.gmra.mxu0 %v1673
    %v3672 = vpop.f32.mrf.mxu0
    %v3673 = vadd.f32 %v3653, %v3672
    %3674 = vdwg.mxu0
    %v3675 = vmax.f32 %v2173, 0.0
    %v3676 = vmax.f32 %v2673, 0.0
    %v3677 = vmax.f32 %v3173, 0.0
    %v3678 = vmax.f32 %v3673, 0.0
    %v3679 = vld [vmem:[%s3] sm:$0xff]
    %v3680 = vld [vmem:[%s3 + $0x8] sm:$0xff]
    %v3681 = vld [vmem:[%s3 + $0x10] sm:$0xff]
    %v3682 = vld [vmem:[%s3 + $0x18] sm:$0xff]
    %v3683 = vld [vmem:[%s3 + $0x20] sm:$0xff]
    %v3684 = vld [vmem:[%s3 + $0x28] sm:$0xff]
    %v3685 = vld [vmem:[%s3 + $0x30] sm:$0xff]
    %v3686 = vld [vmem:[%s3 + $0x38] sm:$0xff]
    %v3687 = vld [vmem:[%s3 + $0x40] sm:$0xff]
    %v3688 = vld [vmem:[%s3 + $0x48] sm:$0xff]
    %v3689 = vld [vmem:[%s3 + $0x50] sm:$0xff]
    %v3690 = vld [vmem:[%s3 + $0x58] sm:$0xff]
    %v3691 = vld [vmem:[%s3 + $0x60] sm:$0xff]
    %v3692 = vld [vmem:[%s3 + $0x68] sm:$0xff]
    %v3693 = vld [vmem:[%s3 + $0x70] sm:$0xff]
    %v3694 = vld [vmem:[%s3 + $0x78] sm:$0xff]
    %v3695 = vld [vmem:[%s3 + $0x80] sm:$0xff]
    %v3696 = vld [vmem:[%s3 + $0x88] sm:$0xff]
    %v3697 = vld [vmem:[%s3 + $0x90] sm:$0xff]
    %v3698 = vld [vmem:[%s3 + $0x98] sm:$0xff]
    %v3699 = vld [vmem:[%s3 + $0xa0] sm:$0xff]
    %v3700 = vld [vmem:[%s3 + $0xa8] sm:$0xff]
    %v3701 = vld [vmem:[%s3 + $0xb0] sm:$0xff]
    %v3702 = vld [vmem:[%s3 + $0xb8] sm:$0xff]
    %v3703 = vld [vmem:[%s3 + $0xc0] sm:$0xff]
    %v3704 = vld [vmem:[%s3 + $0xc8] sm:$0xff]
    %v3705 = vld [vmem:[%s3 + $0xd0] sm:$0xff]
    %v3706 = vld [vmem:[%s3 + $0xd8] sm:$0xff]
    %v3707 = vld [vmem:[%s3 + $0xe0] sm:$0xff]
    %v3708 = vld [vmem:[%s3 + $0xe8] sm:$0xff]
    %v3709 = vld [vmem:[%s3 + $0xf0] sm:$0xff]
    %v3710 = vld [vmem:[%s3 + $0xf8] sm:$0xff]
    %v3711 = vld [vmem:[%s3 + $0x100] sm:$0xff]
    %v3712 = vld [vmem:[%s3 + $0x108] sm:$0xff]
    %v3713 = vld [vmem:[%s3 + $0x110] sm:$0xff]
    %v3714 = vld [vmem:[%s3 + $0x118] sm:$0xff]
    %v3715 = vld [vmem:[%s3 + $0x120] sm:$0xff]
    %v3716 = vld [vmem:[%s3 + $0x128] sm:$0xff]
    %v3717 = vld [vmem:[%s3 + $0x130] sm:$0xff]
    %v3718 = vld [vmem:[%s3 + $0x138] sm:$0xff]
    %v3719 = vld [vmem:[%s3 + $0x140] sm:$0xff]
    %v3720 = vld [vmem:[%s3 + $0x148] sm:$0xff]
    %v3721 = vld [vmem:[%s3 + $0x150] sm:$0xff]
    %v3722 = vld [vmem:[%s3 + $0x158] sm:$0xff]
    %v3723 = vld [vmem:[%s3 + $0x160] sm:$0xff]
    %v3724 = vld [vmem:[%s3 + $0x168] sm:$0xff]
    %v3725 = vld [vmem:[%s3 + $0x170] sm:$0xff]
    %v3726 = vld [vmem:[%s3 + $0x178] sm:$0xff]
    %v3727 = vld [vmem:[%s3 + $0x180] sm:$0xff]
    %v3728 = vld [vmem:[%s3 + $0x188] sm:$0xff]
    %v3729 = vld [vmem:[%s3 + $0x190] sm:$0xff]
    %v3730 = vld [vmem:[%s3 + $0x198] sm:$0xff]
    %v3731 = vld [vmem:[%s3 + $0x1a0] sm:$0xff]
    %v3732 = vld [vmem:[%s3 + $0x1a8] sm:$0xff]
    %v3733 = vld [vmem:[%s3 + $0x1b0] sm:$0xff]
    %v3734 = vld [vmem:[%s3 + $0x1b8] sm:$0xff]
    %v3735 = vld [vmem:[%s3 + $0x1c0] sm:$0xff]
    %v3736 = vld [vmem:[%s3 + $0x1c8] sm:$0xff]
    %v3737 = vld [vmem:[%s3 + $0x1d0] sm:$0xff]
    %v3738 = vld [vmem:[%s3 + $0x1d8] sm:$0xff]
    %v3739 = vld [vmem:[%s3 + $0x1e0] sm:$0xff]
    %v3740 = vld [vmem:[%s3 + $0x1e8] sm:$0xff]
    %v3741 = vld [vmem:[%s3 + $0x1f0] sm:$0xff]
    %v3742 = vld [vmem:[%s3 + $0x1f8] sm:$0xff]
    %v3743 = vld [vmem:[%s4] sm:$0x1]
    %v3745 = vperm.slane %v3743, 0
    %3747 = vmatpush.msra.mxu0 %v3694
    %3748 = vmatpush.msra.mxu0 %v3693
    %3749 = vmatpush.msra.mxu0 %v3692
    %3750 = vmatpush.msra.mxu0 %v3691
    %3751 = vmatpush.msra.mxu0 %v3690
    %3752 = vmatpush.msra.mxu0 %v3689
    %3753 = vmatpush.msra.mxu0 %v3688
    %3754 = vmatpush.msra.mxu0 %v3687
    %3755 = vmatpush.msra.mxu0 %v3686
    %3756 = vmatpush.msra.mxu0 %v3685
    %3757 = vmatpush.msra.mxu0 %v3684
    %3758 = vmatpush.msra.mxu0 %v3683
    %3759 = vmatpush.msra.mxu0 %v3682
    %3760 = vmatpush.msra.mxu0 %v3681
    %3761 = vmatpush.msra.mxu0 %v3680
    %3762 = vmatpush.msra.mxu0 %v3679
    %3763 = vmatmul.f32.gmra.mxu0 %v3675
    %v3764 = vpop.f32.mrf.mxu0
    %v3765 = vadd.f32 %v3745, %v3764
    %3766 = vdwg.mxu0
    %3767 = vmatpush.msra.mxu0 %v3710
    %3768 = vmatpush.msra.mxu0 %v3709
    %3769 = vmatpush.msra.mxu0 %v3708
    %3770 = vmatpush.msra.mxu0 %v3707
    %3771 = vmatpush.msra.mxu0 %v3706
    %3772 = vmatpush.msra.mxu0 %v3705
    %3773 = vmatpush.msra.mxu0 %v3704
    %3774 = vmatpush.msra.mxu0 %v3703
    %3775 = vmatpush.msra.mxu0 %v3702
    %3776 = vmatpush.msra.mxu0 %v3701
    %3777 = vmatpush.msra.mxu0 %v3700
    %3778 = vmatpush.msra.mxu0 %v3699
    %3779 = vmatpush.msra.mxu0 %v3698
    %3780 = vmatpush.msra.mxu0 %v3697
    %3781 = vmatpush.msra.mxu0 %v3696
    %3782 = vmatpush.msra.mxu0 %v3695
    %3783 = vmatmul.f32.gmra.mxu0 %v3676
    %v3784 = vpop.f32.mrf.mxu0
    %v3785 = vadd.f32 %v3765, %v3784
    %3786 = vdwg.mxu0
    %3787 = vmatpush.msra.mxu0 %v3726
    %3788 = vmatpush.msra.mxu0 %v3725
    %3789 = vmatpush.msra.mxu0 %v3724
    %3790 = vmatpush.msra.mxu0 %v3723
    %3791 = vmatpush.msra.mxu0 %v3722
    %3792 = vmatpush.msra.mxu0 %v3721
    %3793 = vmatpush.msra.mxu0 %v3720
    %3794 = vmatpush.msra.mxu0 %v3719
    %3795 = vmatpush.msra.mxu0 %v3718
    %3796 = vmatpush.msra.mxu0 %v3717
    %3797 = vmatpush.msra.mxu0 %v3716
    %3798 = vmatpush.msra.mxu0 %v3715
    %3799 = vmatpush.msra.mxu0 %v3714
    %3800 = vmatpush.msra.mxu0 %v3713
    %3801 = vmatpush.msra.mxu0 %v3712
    %3802 = vmatpush.msra.mxu0 %v3711
    %3803 = vmatmul.f32.gmra.mxu0 %v3677
    %v3804 = vpop.f32.mrf.mxu0
    %v3805 = vadd.f32 %v3785, %v3804
    %3806 = vdwg.mxu0
    %3807 = vmatpush.msra.mxu0 %v3742
    %3808 = vmatpush.msra.mxu0 %v3741
    %3809 = vmatpush.msra.mxu0 %v3740
    %3810 = vmatpush.msra.mxu0 %v3739
    %3811 = vmatpush.msra.mxu0 %v3738
    %3812 = vmatpush.msra.mxu0 %v3737
    %3813 = vmatpush.msra.mxu0 %v3736
    %3814 = vmatpush.msra.mxu0 %v3735
    %3815 = vmatpush.msra.mxu0 %v3734
    %3816 = vmatpush.msra.mxu0 %v3733
    %3817 = vmatpush.msra.mxu0 %v3732
    %3818 = vmatpush.msra.mxu0 %v3731
    %3819 = vmatpush.msra.mxu0 %v3730
    %3820 = vmatpush.msra.mxu0 %v3729
    %3821 = vmatpush.msra.mxu0 %v3728
    %3822 = vmatpush.msra.mxu0 %v3727
    %3823 = vmatmul.f32.gmra.mxu0 %v3678
    %v3824 = vpop.f32.mrf.mxu0
    %v3825 = vadd.f32 %v3805, %v3824
    %3826 = vdwg.mxu0
    %vm3827 = vcmask 140288
    %3828 = vst.msk [vmem:[#allocation2] sm:$0x3] %vm3827, %v3825
    %v3829 = vlaneseq
    %v3830 = vand.u32 %v3829, 127
    %v3831 = vsel %vm3827, %v3825, -inf
    %3832 = vmax.xlane.f32.xlu0 %v3831
    %v3833 = vpop.xlane.xlu0 %3832
    %vm3834 = vcmp.eq.f32.partialorder %v3825, %v3833
    %v3835 = vsel %vm3834, %v3830, 18
    %v3836 = vsel %vm3827, %v3835, 2147483647
    %v3837 = vand.u32 %v3836, 65535
    %v3838 = vshra.s32 %v3836, 16
    %v3839 = vcvt.s32.f32 %v3837
    %v3840 = vcvt.s32.f32 %v3838
    %3841 = vmin.xlane.f32.xlu0 %v3840
    %v3842 = vpop.xlane.xlu0 %3841
    %vm3843 = vcmp.eq.f32.partialorder %v3840, %v3842
    %v3844 = vsel %vm3843, %v3839, inf
    %3845 = vmin.xlane.f32.xlu0 %v3844
    %v3846 = vpop.xlane.xlu0 %3845
    %v3847 = vcvt.f32.s32 %v3846
    %v3848 = vcvt.f32.s32 %v3842
    %v3849 = vshll.u32 %v3848, 16
    %v3850 = vadd.s32 %v3849, %v3847
    %vm3851 = vcmask 1024
    %3852 = vst.msk [vmem:[%s5] sm:$0x3] %vm3851, %v3850
    // Predicated region
    $region22: #{policy_network.3} parent=1 // pred_check
      _
    $region23: #{policy_network.3} parent=1 // pred_check_branch
      %3854 = sbr.rel (0) target = $region25
    $region24: #{policy_network.3} parent=1 // pred_region
      _
    $region25: #{policy_network.3} parent=1 // pred_fallthru
      _
    // Predicated region
    $region26: #{policy_network.3} parent=1 // pred_check
      _
    $region27: #{policy_network.3} parent=1 // pred_check_branch
      %3856 = sbr.rel (0) target = $region29
    $region28: #{policy_network.3} parent=1 // pred_region
      %3858 = vsyncadd [#allocation3], 0
      %s3860 = sshll.u32 [#allocation2], 4
      %s3861 = int_to_ptr.vmem [resolvable:$true] %s3860
      %s3862 = sshll.u32 %s6, 4
      %s3863 = int_to_ptr.hbm [resolvable:$true] %s3862
      %3865 = dma.vmem_to_hbm [thread:$0]  %s3861, 32, %s3863, [#allocation3]
    $region29: #{policy_network.3} parent=1 // pred_fallthru
      _
    // Predicated region
    $region30: #{policy_network.3} parent=1 // pred_check
      _
    $region31: #{policy_network.3} parent=1 // pred_check_branch
      %3867 = sbr.rel (0) target = $region33
    $region32: #{policy_network.3} parent=1 // pred_region
      _
    $region33: #{policy_network.3} parent=1 // pred_fallthru
      _
    // Predicated region
    $region34: #{policy_network.3} parent=1 // pred_check
      _
    $region35: #{policy_network.3} parent=1 // pred_check_branch
      %3869 = sbr.rel (0) target = $region37
    $region36: #{policy_network.3} parent=1 // pred_region
      %3871 = dma.done [#allocation3], 32
    $region37: #{policy_network.3} parent=1 // pred_fallthru
      _
    %3872 = vsyncpa [#allocation3], 1

</llo_original>
